<compile_context>
chip_gen: v5e
topology: v5e:2x2
jax: 0.10.0
libtpu: 0.0.40
codegen_flags: <defaults>
</compile_context>

<pallas_src>
import jax
import jax.numpy as jnp
from jax import lax
from jax.experimental import pallas as pl
from jax.experimental.pallas import tpu as pltpu

DIM = 128
BN_EPS = 1e-5


# ----------------------------------------------------------------------------
# Row-tile picker: largest tile <= cap that divides M, is a multiple of
# `multiple` (spatial period of a deferred BN) and 8-sublane friendly.
# ----------------------------------------------------------------------------
def _pick_row_tile(M, cap, multiple=1):
    if M <= cap:
        return M
    step = max(multiple, 8)
    for t in range(cap - cap % step, 0, -step):
        if M % t == 0:
            return t
    return M


# ----------------------------------------------------------------------------
# Fused layer kernel:
#   y = act( relu(x * in_scale + in_shift) @ w + b )           (prologue optional)
#   stats[tile] = [sum(y, rows), sum(y*y, rows)]               (optional)
# ----------------------------------------------------------------------------
def fused_layer(x, w, b2d, *, in_scale=None, in_shift=None, act="none",
                stats_groups=0, out_dtype=jnp.bfloat16, tm_cap=512):
    M, K = x.shape
    Kw, Nc = w.shape
    assert Kw == K
    has_in_bn = in_scale is not None
    period = int(in_scale.shape[0]) if has_in_bn else 1
    tm = _pick_row_tile(M, tm_cap, multiple=period)
    grid_m = M // tm
    emit_stats = stats_groups > 0

    def kernel(*refs):
        it = iter(refs)
        x_ref = next(it)
        w_ref = next(it)
        b_ref = next(it)
        sc_ref = next(it) if has_in_bn else None
        sh_ref = next(it) if has_in_bn else None
        y_ref = next(it)
        st_ref = next(it) if emit_stats else None

        xv = x_ref[...].astype(jnp.float32)
        if has_in_bn:
            # Previous layer's BatchNorm affine + ReLU (f32 VPU math).
            if period == 1:
                xv = xv * sc_ref[...] + sh_ref[...]
            else:
                # scale/shift repeat with spatial period `period` along rows
                # (row tiles start at multiples of `period`).
                xv = xv.reshape(tm // period, period, K)
                xv = xv * sc_ref[...] + sh_ref[...]
                xv = xv.reshape(tm, K)
            xv = jnp.maximum(xv, 0.0)

        # bf16 MXU matmul, f32 accumulation.
        y = jnp.dot(xv.astype(w_ref.dtype), w_ref[...],
                    preferred_element_type=jnp.float32)
        y = y + b_ref[...]
        if act == "tanh":
            y = jnp.tanh(y)
        y_ref[...] = y.astype(y_ref.dtype)

        if emit_stats:
            # Single-pass partial stats (sum and sum of squares) per column;
            # cross-tile + kh/kw-group reduction happens outside (tiny).
            s1 = jnp.sum(y, axis=0, keepdims=True)
            s2 = jnp.sum(y * y, axis=0, keepdims=True)
            st_ref[...] = jnp.concatenate([s1, s2], axis=0)[None]

    in_specs = [
        pl.BlockSpec((tm, K), lambda i: (i, 0)),      # x row tile
        pl.BlockSpec((K, Nc), lambda i: (0, 0)),      # weight: VMEM resident
        pl.BlockSpec((1, Nc), lambda i: (0, 0)),      # bias
    ]
    args = [x, w, b2d]
    if has_in_bn:
        in_specs += [pl.BlockSpec((period, K), lambda i: (0, 0)),
                     pl.BlockSpec((period, K), lambda i: (0, 0))]
        args += [in_scale, in_shift]

    out_shape = [jax.ShapeDtypeStruct((M, Nc), out_dtype)]
    out_specs = [pl.BlockSpec((tm, Nc), lambda i: (i, 0))]
    if emit_stats:
        out_shape.append(jax.ShapeDtypeStruct((grid_m, 2, Nc), jnp.float32))
        out_specs.append(pl.BlockSpec((1, 2, Nc), lambda i: (i, 0, 0)))

    outs = pl.pallas_call(
        kernel,
        out_shape=out_shape,
        grid=(grid_m,),
        in_specs=in_specs,
        out_specs=out_specs,
        compiler_params=pltpu.CompilerParams(
            dimension_semantics=("parallel",)),
    )(*args)

    if emit_stats:
        return outs[0], outs[1]
    return outs[0], None


# ----------------------------------------------------------------------------
# BatchNorm finalize (tiny): reduce per-tile partials -> per-channel scale/shift
# ----------------------------------------------------------------------------
def finalize_bn(stats, gamma, beta, groups, count):
    s = jnp.sum(stats, axis=0)                        # (2, Nc)
    C = gamma.shape[0]
    s = s.reshape(2, C, groups).sum(axis=2)           # (2, C): fold (kh,kw) groups
    mean = s[0] / count
    var = jnp.maximum(s[1] / count - mean * mean, 0.0)   # biased (training) var
    scale = gamma * lax.rsqrt(var + BN_EPS)
    shift = beta - mean * scale
    return scale, shift


# ----------------------------------------------------------------------------
# ConvTranspose2d(k=2, s=2) spatial scatter: pre-scatter matmul output
# (N*H*W, Cout*4) -> NHWC rows (N*2H*2W, Cout).  Pure layout (XLA).
# ----------------------------------------------------------------------------
def _scatter_2x2(y, N, H, W, Cout):
    y = y.reshape(N, H, W, Cout, 2, 2).transpose(0, 1, 4, 2, 5, 3)
    return y.reshape(N * 2 * H * 2 * W, Cout)


# ----------------------------------------------------------------------------
# Generator forward: z (N,128) f32 -> (N,3,32,32) f32 (NCHW, like PyTorch)
# ----------------------------------------------------------------------------
def generator_forward(params, z):
    p = params
    N = z.shape[0]

    # preprocess: Linear(128 -> 8192); its BN+ReLU is deferred into block1.
    y0, st0 = fused_layer(z, p["w0"], p["b0"], stats_groups=1, tm_cap=256)
    scale0, shift0 = finalize_bn(st0, p["g0"], p["be0"], groups=1, count=N)
    # After view(N,512,4,4)+NHWC, feature f = c*16 + (h*4+w) becomes a
    # (spatial-position p, channel c) pattern with period 16 along rows.
    sc0 = scale0.reshape(4 * DIM, 16).T               # (16, 512)
    sh0 = shift0.reshape(4 * DIM, 16).T
    x1 = y0.reshape(N, 4 * DIM, 4, 4).transpose(0, 2, 3, 1).reshape(N * 16, 4 * DIM)

    # block1: [BN0+ReLU fused] ConvTranspose2d(512->256, 2, s=2) as matmul.
    y1, st1 = fused_layer(x1, p["w1"], p["b1"], in_scale=sc0, in_shift=sh0,
                          stats_groups=4)
    scale1, shift1 = finalize_bn(st1, p["g1"], p["be1"], groups=4, count=N * 64)
    x2 = _scatter_2x2(y1, N, 4, 4, 2 * DIM)           # (N*64, 256)

    # block2: [BN1+ReLU fused] ConvTranspose2d(256->128, 2, s=2).
    y2, st2 = fused_layer(x2, p["w2"], p["b2"],
                          in_scale=scale1.reshape(1, -1),
                          in_shift=shift1.reshape(1, -1), stats_groups=4)
    scale2, shift2 = finalize_bn(st2, p["g2"], p["be2"], groups=4, count=N * 256)
    x3 = _scatter_2x2(y2, N, 8, 8, DIM)               # (N*256, 128)

    # deconv_out: [BN2+ReLU fused] ConvTranspose2d(128->3, 2, s=2) + tanh,
    # output columns zero-padded to 128 for lane-dense stores.
    y3, _ = fused_layer(x3, p["w3"], p["b3"],
                        in_scale=scale2.reshape(1, -1),
                        in_shift=shift2.reshape(1, -1),
                        act="tanh", stats_groups=0, out_dtype=jnp.float32)
    y3 = y3[:, :3 * 4]                                # real (cout=3, kh, kw) cols
    out = _scatter_2x2(y3, N, 16, 16, 3).reshape(N, 32, 32, 3)
    return out.transpose(0, 3, 1, 2)                  # NCHW (N,3,32,32)


# ----------------------------------------------------------------------------
# Deterministic parameter init, pre-reshaped/padded for the kernels (hoisted).
# ----------------------------------------------------------------------------
def init_params(key):
    ks = jax.random.split(key, 8)

    def u(k, shape, fan_in):
        bound = 1.0 / jnp.sqrt(jnp.asarray(fan_in, jnp.float32))
        return jax.random.uniform(k, shape, jnp.float32, -bound, bound)

    feat = 4 * 4 * 4 * DIM  # 8192
    p = {}
    # Linear(128, 8192): weights stored bf16 (MXU), bias f32 (VPU epilogue).
    p["w0"] = u(ks[0], (128, feat), 128).astype(jnp.bfloat16)
    p["b0"] = u(ks[1], (feat,), 128).reshape(1, feat)
    p["g0"] = jnp.ones((feat,), jnp.float32)
    p["be0"] = jnp.zeros((feat,), jnp.float32)

    def convt_params(kw, kb, cin, cout, pad_to=None):
        # PyTorch ConvTranspose2d weight (Cin, Cout, 2, 2) -> (Cin, Cout*4),
        # columns ordered (cout, kh, kw); bias repeated per (kh, kw).
        w = u(kw, (cin, cout, 2, 2), cin * 4).reshape(cin, cout * 4)
        b = jnp.repeat(u(kb, (cout,), cin * 4), 4)
        if pad_to is not None:
            w = jnp.pad(w, ((0, 0), (0, pad_to - cout * 4)))
            b = jnp.pad(b, (0, pad_to - cout * 4))
        return w.astype(jnp.bfloat16), b.reshape(1, -1).astype(jnp.float32)

    p["w1"], p["b1"] = convt_params(ks[2], ks[3], 4 * DIM, 2 * DIM)
    p["g1"] = jnp.ones((2 * DIM,), jnp.float32)
    p["be1"] = jnp.zeros((2 * DIM,), jnp.float32)
    p["w2"], p["b2"] = convt_params(ks[4], ks[5], 2 * DIM, DIM)
    p["g2"] = jnp.ones((DIM,), jnp.float32)
    p["be2"] = jnp.zeros((DIM,), jnp.float32)
    # Final deconv padded to 128 output columns (lane-dense stores).
    p["w3"], p["b3"] = convt_params(ks[6], ks[7], DIM, 3, pad_to=128)
    return p


if __name__ == "__main__":
    key = jax.random.PRNGKey(0)
    pkey, zkey = jax.random.split(key)
    params = init_params(pkey)

    batch = 2
    z = jax.random.normal(zkey, (batch, 128), jnp.float32)   # latent noise

    fwd = jax.jit(generator_forward)
    out = fwd(params, z)
    out = jax.block_until_ready(out)

    assert out.shape == (batch, 3, 32, 32), out.shape
    assert out.dtype == jnp.float32
    assert bool(jnp.all(jnp.isfinite(out)))
    assert bool(jnp.all(jnp.abs(out) <= 1.0))  # tanh range
    print("KERNEL_OK")
</pallas_src>

<mosaic_0001>
module attributes {stable_mosaic.version = 11 : i64} {
  func.func @kernel(%arg0: i32, %arg1: memref<2x128xf32, #tpu.memory_space<vmem>>, %arg2: memref<128x8192xbf16, #tpu.memory_space<vmem>>, %arg3: memref<1x8192xf32, #tpu.memory_space<vmem>>, %arg4: memref<2x8192xbf16, #tpu.memory_space<vmem>>, %arg5: memref<1x2x8192xf32, #tpu.memory_space<vmem>>) attributes {dimension_semantics = [#tpu.dimension_semantics<parallel>], iteration_bounds = array<i64: 1>, scalar_prefetch = 0 : i64, scratch_operands = 0 : i64, tpu.core_type = #tpu.core_type<tc>, window_params = [{transform_indices = @transform_0, window_bounds = array<i64: 2, 128>}, {pipeline_mode = #tpu.pipeline_mode<synchronous>, transform_indices = @transform_1, window_bounds = array<i64: 128, 8192>}, {pipeline_mode = #tpu.pipeline_mode<synchronous>, transform_indices = @transform_2, window_bounds = array<i64: 1, 8192>}, {transform_indices = @transform_3, window_bounds = array<i64: 2, 8192>}, {transform_indices = @transform_4, window_bounds = array<i64: 1, 2, 8192>}]} {
    %c0 = arith.constant 0 : index
    %c0_0 = arith.constant 0 : index
    %0 = vector.load %arg1[%c0, %c0_0] : memref<2x128xf32, #tpu.memory_space<vmem>>, vector<2x128xf32>
    %1 = arith.truncf %0 : vector<2x128xf32> to vector<2x128xbf16>
    %c0_1 = arith.constant 0 : index
    %c0_2 = arith.constant 0 : index
    %2 = vector.load %arg2[%c0_1, %c0_2] : memref<128x8192xbf16, #tpu.memory_space<vmem>>, vector<128x8192xbf16>
    %cst = arith.constant dense<0.000000e+00> : vector<2x8192xf32>
    %3 = tpu.matmul %1, %2, %cst {dimension_numbers = #tpu.dot_dimension_numbers<[1], [0], [0], [1], [0, 0, 1, 1], [], []>} : vector<2x128xbf16>, vector<128x8192xbf16>, vector<2x8192xf32> -> vector<2x8192xf32>
    %c0_3 = arith.constant 0 : index
    %c0_4 = arith.constant 0 : index
    %4 = vector.load %arg3[%c0_3, %c0_4] : memref<1x8192xf32, #tpu.memory_space<vmem>>, vector<1x8192xf32>
    %5 = vector.broadcast %4 : vector<1x8192xf32> to vector<2x8192xf32>
    %6 = arith.addf %3, %5 : vector<2x8192xf32>
    %7 = arith.truncf %6 : vector<2x8192xf32> to vector<2x8192xbf16>
    %c0_5 = arith.constant 0 : index
    %c0_6 = arith.constant 0 : index
    %8 = vector.load %arg4[%c0_5, %c0_6] : memref<2x8192xbf16, #tpu.memory_space<vmem>>, vector<2x8192xbf16>
    tpu.vector_store %arg4[%c0_5, %c0_6], %7 {strides = array<i32>} : memref<2x8192xbf16, #tpu.memory_space<vmem>>, vector<2x8192xbf16>,
    %cst_7 = arith.constant dense<0.000000e+00> : vector<8192xf32>
    %9 = vector.multi_reduction <add>, %6, %cst_7 [0] : vector<2x8192xf32> to vector<8192xf32>
    %10 = vector.shape_cast %9 : vector<8192xf32> to vector<1x8192xf32>
    %11 = arith.mulf %6, %6 : vector<2x8192xf32>
    %cst_8 = arith.constant dense<0.000000e+00> : vector<8192xf32>
    %12 = vector.multi_reduction <add>, %11, %cst_8 [0] : vector<2x8192xf32> to vector<8192xf32>
    %13 = vector.shape_cast %12 : vector<8192xf32> to vector<1x8192xf32>
    %14 = tpu.concatenate %10, %13 in 0 : vector<1x8192xf32>, vector<1x8192xf32> -> vector<2x8192xf32>
    %15 = vector.shape_cast %14 : vector<2x8192xf32> to vector<1x2x8192xf32>
    %c0_9 = arith.constant 0 : index
    %c0_10 = arith.constant 0 : index
    %c0_11 = arith.constant 0 : index
    %16 = vector.load %arg5[%c0_9, %c0_10, %c0_11] : memref<1x2x8192xf32, #tpu.memory_space<vmem>>, vector<1x2x8192xf32>
    tpu.vector_store %arg5[%c0_9, %c0_10, %c0_11], %15 {strides = array<i32>} : memref<1x2x8192xf32, #tpu.memory_space<vmem>>, vector<1x2x8192xf32>,
    return
  }
  func.func @transform_0(%arg0: i32) -> (i32, i32) {
    %c0_i32 = arith.constant 0 : i32
    %c0_i32_0 = arith.constant 0 : i32
    return %arg0, %c0_i32 : i32, i32
  }
  func.func @transform_1(%arg0: i32) -> (i32, i32) {
    %c0_i32 = arith.constant 0 : i32
    %c0_i32_0 = arith.constant 0 : i32
    %c0_i32_1 = arith.constant 0 : i32
    return %c0_i32, %c0_i32_0 : i32, i32
  }
  func.func @transform_2(%arg0: i32) -> (i32, i32) {
    %c0_i32 = arith.constant 0 : i32
    %c0_i32_0 = arith.constant 0 : i32
    %c0_i32_1 = arith.constant 0 : i32
    return %c0_i32, %c0_i32_0 : i32, i32
  }
  func.func @transform_3(%arg0: i32) -> (i32, i32) {
    %c0_i32 = arith.constant 0 : i32
    %c0_i32_0 = arith.constant 0 : i32
    return %arg0, %c0_i32 : i32, i32
  }
  func.func @transform_4(%arg0: i32) -> (i32, i32, i32) {
    %c0_i32 = arith.constant 0 : i32
    %c0_i32_0 = arith.constant 0 : i32
    %c0_i32_1 = arith.constant 0 : i32
    return %arg0, %c0_i32, %c0_i32_0 : i32, i32, i32
  }
}

module attributes {stable_mosaic.version = 11 : i64} {
  func.func @kernel(%arg0: i32, %arg1: memref<32x512xbf16, #tpu.memory_space<vmem>>, %arg2: memref<512x1024xbf16, #tpu.memory_space<vmem>>, %arg3: memref<1x1024xf32, #tpu.memory_space<vmem>>, %arg4: memref<16x512xf32, #tpu.memory_space<vmem>>, %arg5: memref<16x512xf32, #tpu.memory_space<vmem>>, %arg6: memref<32x1024xbf16, #tpu.memory_space<vmem>>, %arg7: memref<1x2x1024xf32, #tpu.memory_space<vmem>>) attributes {dimension_semantics = [#tpu.dimension_semantics<parallel>], iteration_bounds = array<i64: 1>, scalar_prefetch = 0 : i64, scratch_operands = 0 : i64, tpu.core_type = #tpu.core_type<tc>, window_params = [{transform_indices = @transform_0, window_bounds = array<i64: 32, 512>}, {pipeline_mode = #tpu.pipeline_mode<synchronous>, transform_indices = @transform_1, window_bounds = array<i64: 512, 1024>}, {pipeline_mode = #tpu.pipeline_mode<synchronous>, transform_indices = @transform_2, window_bounds = array<i64: 1, 1024>}, {pipeline_mode = #tpu.pipeline_mode<synchronous>, transform_indices = @transform_3, window_bounds = array<i64: 16, 512>}, {pipeline_mode = #tpu.pipeline_mode<synchronous>, transform_indices = @transform_4, window_bounds = array<i64: 16, 512>}, {transform_indices = @transform_5, window_bounds = array<i64: 32, 1024>}, {transform_indices = @transform_6, window_bounds = array<i64: 1, 2, 1024>}]} {
    %c0 = arith.constant 0 : index
    %c0_0 = arith.constant 0 : index
    %0 = vector.load %arg1[%c0, %c0_0] : memref<32x512xbf16, #tpu.memory_space<vmem>>, vector<32x512xbf16>
    %1 = arith.extf %0 : vector<32x512xbf16> to vector<32x512xf32>
    %2 = vector.shape_cast %1 : vector<32x512xf32> to vector<2x16x512xf32>
    %c0_1 = arith.constant 0 : index
    %c0_2 = arith.constant 0 : index
    %3 = vector.load %arg4[%c0_1, %c0_2] : memref<16x512xf32, #tpu.memory_space<vmem>>, vector<16x512xf32>
    %4 = vector.shape_cast %3 : vector<16x512xf32> to vector<1x16x512xf32>
    %5 = vector.broadcast %4 : vector<1x16x512xf32> to vector<2x16x512xf32>
    %6 = arith.mulf %2, %5 : vector<2x16x512xf32>
    %c0_3 = arith.constant 0 : index
    %c0_4 = arith.constant 0 : index
    %7 = vector.load %arg5[%c0_3, %c0_4] : memref<16x512xf32, #tpu.memory_space<vmem>>, vector<16x512xf32>
    %8 = vector.shape_cast %7 : vector<16x512xf32> to vector<1x16x512xf32>
    %9 = vector.broadcast %8 : vector<1x16x512xf32> to vector<2x16x512xf32>
    %10 = arith.addf %6, %9 : vector<2x16x512xf32>
    %11 = vector.shape_cast %10 : vector<2x16x512xf32> to vector<32x512xf32>
    %cst = arith.constant 0.000000e+00 : f32
    %12 = vector.broadcast %cst : f32 to vector<32x512xf32>
    %13 = arith.maximumf %11, %12 : vector<32x512xf32>
    %14 = arith.truncf %13 : vector<32x512xf32> to vector<32x512xbf16>
    %c0_5 = arith.constant 0 : index
    %c0_6 = arith.constant 0 : index
    %15 = vector.load %arg2[%c0_5, %c0_6] : memref<512x1024xbf16, #tpu.memory_space<vmem>>, vector<512x1024xbf16>
    %cst_7 = arith.constant dense<0.000000e+00> : vector<32x1024xf32>
    %16 = tpu.matmul %14, %15, %cst_7 {dimension_numbers = #tpu.dot_dimension_numbers<[1], [0], [0], [1], [0, 0, 1, 1], [], []>} : vector<32x512xbf16>, vector<512x1024xbf16>, vector<32x1024xf32> -> vector<32x1024xf32>
    %c0_8 = arith.constant 0 : index
    %c0_9 = arith.constant 0 : index
    %17 = vector.load %arg3[%c0_8, %c0_9] : memref<1x1024xf32, #tpu.memory_space<vmem>>, vector<1x1024xf32>
    %18 = vector.broadcast %17 : vector<1x1024xf32> to vector<32x1024xf32>
    %19 = arith.addf %16, %18 : vector<32x1024xf32>
    %20 = arith.truncf %19 : vector<32x1024xf32> to vector<32x1024xbf16>
    %c0_10 = arith.constant 0 : index
    %c0_11 = arith.constant 0 : index
    %21 = vector.load %arg6[%c0_10, %c0_11] : memref<32x1024xbf16, #tpu.memory_space<vmem>>, vector<32x1024xbf16>
    tpu.vector_store %arg6[%c0_10, %c0_11], %20 {strides = array<i32>} : memref<32x1024xbf16, #tpu.memory_space<vmem>>, vector<32x1024xbf16>,
    %cst_12 = arith.constant dense<0.000000e+00> : vector<1024xf32>
    %22 = vector.multi_reduction <add>, %19, %cst_12 [0] : vector<32x1024xf32> to vector<1024xf32>
    %23 = vector.shape_cast %22 : vector<1024xf32> to vector<1x1024xf32>
    %24 = arith.mulf %19, %19 : vector<32x1024xf32>
    %cst_13 = arith.constant dense<0.000000e+00> : vector<1024xf32>
    %25 = vector.multi_reduction <add>, %24, %cst_13 [0] : vector<32x1024xf32> to vector<1024xf32>
    %26 = vector.shape_cast %25 : vector<1024xf32> to vector<1x1024xf32>
    %27 = tpu.concatenate %23, %26 in 0 : vector<1x1024xf32>, vector<1x1024xf32> -> vector<2x1024xf32>
    %28 = vector.shape_cast %27 : vector<2x1024xf32> to vector<1x2x1024xf32>
    %c0_14 = arith.constant 0 : index
    %c0_15 = arith.constant 0 : index
    %c0_16 = arith.constant 0 : index
    %29 = vector.load %arg7[%c0_14, %c0_15, %c0_16] : memref<1x2x1024xf32, #tpu.memory_space<vmem>>, vector<1x2x1024xf32>
    tpu.vector_store %arg7[%c0_14, %c0_15, %c0_16], %28 {strides = array<i32>} : memref<1x2x1024xf32, #tpu.memory_space<vmem>>, vector<1x2x1024xf32>,
    return
  }
  func.func @transform_0(%arg0: i32) -> (i32, i32) {
    %c0_i32 = arith.constant 0 : i32
    %c0_i32_0 = arith.constant 0 : i32
    return %arg0, %c0_i32 : i32, i32
  }
  func.func @transform_1(%arg0: i32) -> (i32, i32) {
    %c0_i32 = arith.constant 0 : i32
    %c0_i32_0 = arith.constant 0 : i32
    %c0_i32_1 = arith.constant 0 : i32
    return %c0_i32, %c0_i32_0 : i32, i32
  }
  func.func @transform_2(%arg0: i32) -> (i32, i32) {
    %c0_i32 = arith.constant 0 : i32
    %c0_i32_0 = arith.constant 0 : i32
    %c0_i32_1 = arith.constant 0 : i32
    return %c0_i32, %c0_i32_0 : i32, i32
  }
  func.func @transform_3(%arg0: i32) -> (i32, i32) {
    %c0_i32 = arith.constant 0 : i32
    %c0_i32_0 = arith.constant 0 : i32
    %c0_i32_1 = arith.constant 0 : i32
    return %c0_i32, %c0_i32_0 : i32, i32
  }
  func.func @transform_4(%arg0: i32) -> (i32, i32) {
    %c0_i32 = arith.constant 0 : i32
    %c0_i32_0 = arith.constant 0 : i32
    %c0_i32_1 = arith.constant 0 : i32
    return %c0_i32, %c0_i32_0 : i32, i32
  }
  func.func @transform_5(%arg0: i32) -> (i32, i32) {
    %c0_i32 = arith.constant 0 : i32
    %c0_i32_0 = arith.constant 0 : i32
    return %arg0, %c0_i32 : i32, i32
  }
  func.func @transform_6(%arg0: i32) -> (i32, i32, i32) {
    %c0_i32 = arith.constant 0 : i32
    %c0_i32_0 = arith.constant 0 : i32
    %c0_i32_1 = arith.constant 0 : i32
    return %arg0, %c0_i32, %c0_i32_0 : i32, i32, i32
  }
}

module attributes {stable_mosaic.version = 11 : i64} {
  func.func @kernel(%arg0: i32, %arg1: memref<128x256xbf16, #tpu.memory_space<vmem>>, %arg2: memref<256x512xbf16, #tpu.memory_space<vmem>>, %arg3: memref<1x512xf32, #tpu.memory_space<vmem>>, %arg4: memref<1x256xf32, #tpu.memory_space<vmem>>, %arg5: memref<1x256xf32, #tpu.memory_space<vmem>>, %arg6: memref<128x512xbf16, #tpu.memory_space<vmem>>, %arg7: memref<1x2x512xf32, #tpu.memory_space<vmem>>) attributes {dimension_semantics = [#tpu.dimension_semantics<parallel>], iteration_bounds = array<i64: 1>, scalar_prefetch = 0 : i64, scratch_operands = 0 : i64, tpu.core_type = #tpu.core_type<tc>, window_params = [{transform_indices = @transform_0, window_bounds = array<i64: 128, 256>}, {pipeline_mode = #tpu.pipeline_mode<synchronous>, transform_indices = @transform_1, window_bounds = array<i64: 256, 512>}, {pipeline_mode = #tpu.pipeline_mode<synchronous>, transform_indices = @transform_2, window_bounds = array<i64: 1, 512>}, {pipeline_mode = #tpu.pipeline_mode<synchronous>, transform_indices = @transform_3, window_bounds = array<i64: 1, 256>}, {pipeline_mode = #tpu.pipeline_mode<synchronous>, transform_indices = @transform_4, window_bounds = array<i64: 1, 256>}, {transform_indices = @transform_5, window_bounds = array<i64: 128, 512>}, {transform_indices = @transform_6, window_bounds = array<i64: 1, 2, 512>}]} {
    %c0 = arith.constant 0 : index
    %c0_0 = arith.constant 0 : index
    %0 = vector.load %arg1[%c0, %c0_0] : memref<128x256xbf16, #tpu.memory_space<vmem>>, vector<128x256xbf16>
    %1 = arith.extf %0 : vector<128x256xbf16> to vector<128x256xf32>
    %c0_1 = arith.constant 0 : index
    %c0_2 = arith.constant 0 : index
    %2 = vector.load %arg4[%c0_1, %c0_2] : memref<1x256xf32, #tpu.memory_space<vmem>>, vector<1x256xf32>
    %3 = vector.broadcast %2 : vector<1x256xf32> to vector<128x256xf32>
    %4 = arith.mulf %1, %3 : vector<128x256xf32>
    %c0_3 = arith.constant 0 : index
    %c0_4 = arith.constant 0 : index
    %5 = vector.load %arg5[%c0_3, %c0_4] : memref<1x256xf32, #tpu.memory_space<vmem>>, vector<1x256xf32>
    %6 = vector.broadcast %5 : vector<1x256xf32> to vector<128x256xf32>
    %7 = arith.addf %4, %6 : vector<128x256xf32>
    %cst = arith.constant 0.000000e+00 : f32
    %8 = vector.broadcast %cst : f32 to vector<128x256xf32>
    %9 = arith.maximumf %7, %8 : vector<128x256xf32>
    %10 = arith.truncf %9 : vector<128x256xf32> to vector<128x256xbf16>
    %c0_5 = arith.constant 0 : index
    %c0_6 = arith.constant 0 : index
    %11 = vector.load %arg2[%c0_5, %c0_6] : memref<256x512xbf16, #tpu.memory_space<vmem>>, vector<256x512xbf16>
    %cst_7 = arith.constant dense<0.000000e+00> : vector<128x512xf32>
    %12 = tpu.matmul %10, %11, %cst_7 {dimension_numbers = #tpu.dot_dimension_numbers<[1], [0], [0], [1], [0, 0, 1, 1], [], []>} : vector<128x256xbf16>, vector<256x512xbf16>, vector<128x512xf32> -> vector<128x512xf32>
    %c0_8 = arith.constant 0 : index
    %c0_9 = arith.constant 0 : index
    %13 = vector.load %arg3[%c0_8, %c0_9] : memref<1x512xf32, #tpu.memory_space<vmem>>, vector<1x512xf32>
    %14 = vector.broadcast %13 : vector<1x512xf32> to vector<128x512xf32>
    %15 = arith.addf %12, %14 : vector<128x512xf32>
    %16 = arith.truncf %15 : vector<128x512xf32> to vector<128x512xbf16>
    %c0_10 = arith.constant 0 : index
    %c0_11 = arith.constant 0 : index
    %17 = vector.load %arg6[%c0_10, %c0_11] : memref<128x512xbf16, #tpu.memory_space<vmem>>, vector<128x512xbf16>
    tpu.vector_store %arg6[%c0_10, %c0_11], %16 {strides = array<i32>} : memref<128x512xbf16, #tpu.memory_space<vmem>>, vector<128x512xbf16>,
    %cst_12 = arith.constant dense<0.000000e+00> : vector<512xf32>
    %18 = vector.multi_reduction <add>, %15, %cst_12 [0] : vector<128x512xf32> to vector<512xf32>
    %19 = vector.shape_cast %18 : vector<512xf32> to vector<1x512xf32>
    %20 = arith.mulf %15, %15 : vector<128x512xf32>
    %cst_13 = arith.constant dense<0.000000e+00> : vector<512xf32>
    %21 = vector.multi_reduction <add>, %20, %cst_13 [0] : vector<128x512xf32> to vector<512xf32>
    %22 = vector.shape_cast %21 : vector<512xf32> to vector<1x512xf32>
    %23 = tpu.concatenate %19, %22 in 0 : vector<1x512xf32>, vector<1x512xf32> -> vector<2x512xf32>
    %24 = vector.shape_cast %23 : vector<2x512xf32> to vector<1x2x512xf32>
    %c0_14 = arith.constant 0 : index
    %c0_15 = arith.constant 0 : index
    %c0_16 = arith.constant 0 : index
    %25 = vector.load %arg7[%c0_14, %c0_15, %c0_16] : memref<1x2x512xf32, #tpu.memory_space<vmem>>, vector<1x2x512xf32>
    tpu.vector_store %arg7[%c0_14, %c0_15, %c0_16], %24 {strides = array<i32>} : memref<1x2x512xf32, #tpu.memory_space<vmem>>, vector<1x2x512xf32>,
    return
  }
  func.func @transform_0(%arg0: i32) -> (i32, i32) {
    %c0_i32 = arith.constant 0 : i32
    %c0_i32_0 = arith.constant 0 : i32
    return %arg0, %c0_i32 : i32, i32
  }
  func.func @transform_1(%arg0: i32) -> (i32, i32) {
    %c0_i32 = arith.constant 0 : i32
    %c0_i32_0 = arith.constant 0 : i32
    %c0_i32_1 = arith.constant 0 : i32
    return %c0_i32, %c0_i32_0 : i32, i32
  }
  func.func @transform_2(%arg0: i32) -> (i32, i32) {
    %c0_i32 = arith.constant 0 : i32
    %c0_i32_0 = arith.constant 0 : i32
    %c0_i32_1 = arith.constant 0 : i32
    return %c0_i32, %c0_i32_0 : i32, i32
  }
  func.func @transform_3(%arg0: i32) -> (i32, i32) {
    %c0_i32 = arith.constant 0 : i32
    %c0_i32_0 = arith.constant 0 : i32
    %c0_i32_1 = arith.constant 0 : i32
    return %c0_i32, %c0_i32_0 : i32, i32
  }
  func.func @transform_4(%arg0: i32) -> (i32, i32) {
    %c0_i32 = arith.constant 0 : i32
    %c0_i32_0 = arith.constant 0 : i32
    %c0_i32_1 = arith.constant 0 : i32
    return %c0_i32, %c0_i32_0 : i32, i32
  }
  func.func @transform_5(%arg0: i32) -> (i32, i32) {
    %c0_i32 = arith.constant 0 : i32
    %c0_i32_0 = arith.constant 0 : i32
    return %arg0, %c0_i32 : i32, i32
  }
  func.func @transform_6(%arg0: i32) -> (i32, i32, i32) {
    %c0_i32 = arith.constant 0 : i32
    %c0_i32_0 = arith.constant 0 : i32
    %c0_i32_1 = arith.constant 0 : i32
    return %arg0, %c0_i32, %c0_i32_0 : i32, i32, i32
  }
}

module attributes {stable_mosaic.version = 11 : i64} {
  func.func @kernel(%arg0: i32, %arg1: memref<512x128xbf16, #tpu.memory_space<vmem>>, %arg2: memref<128x128xbf16, #tpu.memory_space<vmem>>, %arg3: memref<1x128xf32, #tpu.memory_space<vmem>>, %arg4: memref<1x128xf32, #tpu.memory_space<vmem>>, %arg5: memref<1x128xf32, #tpu.memory_space<vmem>>, %arg6: memref<512x128xf32, #tpu.memory_space<vmem>>) attributes {dimension_semantics = [#tpu.dimension_semantics<parallel>], iteration_bounds = array<i64: 1>, scalar_prefetch = 0 : i64, scratch_operands = 0 : i64, tpu.core_type = #tpu.core_type<tc>, window_params = [{transform_indices = @transform_0, window_bounds = array<i64: 512, 128>}, {pipeline_mode = #tpu.pipeline_mode<synchronous>, transform_indices = @transform_1, window_bounds = array<i64: 128, 128>}, {pipeline_mode = #tpu.pipeline_mode<synchronous>, transform_indices = @transform_2, window_bounds = array<i64: 1, 128>}, {pipeline_mode = #tpu.pipeline_mode<synchronous>, transform_indices = @transform_3, window_bounds = array<i64: 1, 128>}, {pipeline_mode = #tpu.pipeline_mode<synchronous>, transform_indices = @transform_4, window_bounds = array<i64: 1, 128>}, {transform_indices = @transform_5, window_bounds = array<i64: 512, 128>}]} {
    %c0 = arith.constant 0 : index
    %c0_0 = arith.constant 0 : index
    %0 = vector.load %arg1[%c0, %c0_0] : memref<512x128xbf16, #tpu.memory_space<vmem>>, vector<512x128xbf16>
    %1 = arith.extf %0 : vector<512x128xbf16> to vector<512x128xf32>
    %c0_1 = arith.constant 0 : index
    %c0_2 = arith.constant 0 : index
    %2 = vector.load %arg4[%c0_1, %c0_2] : memref<1x128xf32, #tpu.memory_space<vmem>>, vector<1x128xf32>
    %3 = vector.broadcast %2 : vector<1x128xf32> to vector<512x128xf32>
    %4 = arith.mulf %1, %3 : vector<512x128xf32>
    %c0_3 = arith.constant 0 : index
    %c0_4 = arith.constant 0 : index
    %5 = vector.load %arg5[%c0_3, %c0_4] : memref<1x128xf32, #tpu.memory_space<vmem>>, vector<1x128xf32>
    %6 = vector.broadcast %5 : vector<1x128xf32> to vector<512x128xf32>
    %7 = arith.addf %4, %6 : vector<512x128xf32>
    %cst = arith.constant 0.000000e+00 : f32
    %8 = vector.broadcast %cst : f32 to vector<512x128xf32>
    %9 = arith.maximumf %7, %8 : vector<512x128xf32>
    %10 = arith.truncf %9 : vector<512x128xf32> to vector<512x128xbf16>
    %c0_5 = arith.constant 0 : index
    %c0_6 = arith.constant 0 : index
    %11 = vector.load %arg2[%c0_5, %c0_6] : memref<128x128xbf16, #tpu.memory_space<vmem>>, vector<128x128xbf16>
    %cst_7 = arith.constant dense<0.000000e+00> : vector<512x128xf32>
    %12 = tpu.matmul %10, %11, %cst_7 {dimension_numbers = #tpu.dot_dimension_numbers<[1], [0], [0], [1], [0, 0, 1, 1], [], []>} : vector<512x128xbf16>, vector<128x128xbf16>, vector<512x128xf32> -> vector<512x128xf32>
    %c0_8 = arith.constant 0 : index
    %c0_9 = arith.constant 0 : index
    %13 = vector.load %arg3[%c0_8, %c0_9] : memref<1x128xf32, #tpu.memory_space<vmem>>, vector<1x128xf32>
    %14 = vector.broadcast %13 : vector<1x128xf32> to vector<512x128xf32>
    %15 = arith.addf %12, %14 : vector<512x128xf32>
    %16 = math.tanh %15 : vector<512x128xf32>
    %c0_10 = arith.constant 0 : index
    %c0_11 = arith.constant 0 : index
    %17 = vector.load %arg6[%c0_10, %c0_11] : memref<512x128xf32, #tpu.memory_space<vmem>>, vector<512x128xf32>
    tpu.vector_store %arg6[%c0_10, %c0_11], %16 {strides = array<i32>} : memref<512x128xf32, #tpu.memory_space<vmem>>, vector<512x128xf32>,
    return
  }
  func.func @transform_0(%arg0: i32) -> (i32, i32) {
    %c0_i32 = arith.constant 0 : i32
    %c0_i32_0 = arith.constant 0 : i32
    return %arg0, %c0_i32 : i32, i32
  }
  func.func @transform_1(%arg0: i32) -> (i32, i32) {
    %c0_i32 = arith.constant 0 : i32
    %c0_i32_0 = arith.constant 0 : i32
    %c0_i32_1 = arith.constant 0 : i32
    return %c0_i32, %c0_i32_0 : i32, i32
  }
  func.func @transform_2(%arg0: i32) -> (i32, i32) {
    %c0_i32 = arith.constant 0 : i32
    %c0_i32_0 = arith.constant 0 : i32
    %c0_i32_1 = arith.constant 0 : i32
    return %c0_i32, %c0_i32_0 : i32, i32
  }
  func.func @transform_3(%arg0: i32) -> (i32, i32) {
    %c0_i32 = arith.constant 0 : i32
    %c0_i32_0 = arith.constant 0 : i32
    %c0_i32_1 = arith.constant 0 : i32
    return %c0_i32, %c0_i32_0 : i32, i32
  }
  func.func @transform_4(%arg0: i32) -> (i32, i32) {
    %c0_i32 = arith.constant 0 : i32
    %c0_i32_0 = arith.constant 0 : i32
    %c0_i32_1 = arith.constant 0 : i32
    return %c0_i32, %c0_i32_0 : i32, i32
  }
  func.func @transform_5(%arg0: i32) -> (i32, i32) {
    %c0_i32 = arith.constant 0 : i32
    %c0_i32_0 = arith.constant 0 : i32
    return %arg0, %c0_i32 : i32, i32
  }
}

</mosaic_0001>

<llo_original>
// kernel: generator_forward.5
$region0: #{generator_forward.5}
  #allocation0 [shape = 'u32[]', space=smem, size = 0x4, offset = 0x4, fixed_abs, tag = 'smem constant byte address 0x4 - core index']
  #allocation1 [shape = 'u32[72,128]{1,0:T(1,128)}', space=vmem, size = 0x9000, scoped, tag = 'internal scratch']
  %s0 = inlined_call_operand.vmem [shape: bf16[32,512], index: 0, kind: input, shape index: {}]
  %s1 = inlined_call_operand.vmem [shape: bf16[512,1024], index: 1, kind: input, shape index: {}]
  %s2 = inlined_call_operand.vmem [shape: f32[1,1024], index: 2, kind: input, shape index: {}]
  %s3 = inlined_call_operand.vmem [shape: f32[16,512], index: 3, kind: input, shape index: {}]
  %s4 = inlined_call_operand.vmem [shape: f32[16,512], index: 4, kind: input, shape index: {}]
  %s5 = inlined_call_operand.vmem [shape: bf16[32,1024], index: 5, kind: output, shape index: {0}]
  %s6 = inlined_call_operand.vmem [shape: f32[1,2,1024], index: 6, kind: output, shape index: {1}]
  %7 = xla_tuple %s5, %s6
  %s8 = sld [smem:[#allocation0]]
  $region38: #{generator_forward.5} parent=0
    _
  %s10 = ssub.s32 1, %s8
  %s11 = scalar_select 0, %s10, %s8
  // Predicated region
  $region2: #{generator_forward.5} parent=0 // pred_check
    _
  $region3: #{generator_forward.5} parent=0 // pred_check_branch
    %13 = sbr.rel (0) target = $region5
  $region4: #{generator_forward.5} parent=0 // pred_region
    _
  $region5: #{generator_forward.5} parent=0 // pred_fallthru
    _
  // Predicated region
  $region6: #{generator_forward.5} parent=0 // pred_check
    _
  $region7: #{generator_forward.5} parent=0 // pred_check_branch
    %15 = sbr.rel (0) target = $region9
  $region8: #{generator_forward.5} parent=0 // pred_region
    _
  $region9: #{generator_forward.5} parent=0 // pred_fallthru
    _
  // Predicated region
  $region10: #{generator_forward.5} parent=0 // pred_check
    _
  $region11: #{generator_forward.5} parent=0 // pred_check_branch
    %17 = sbr.rel (0) target = $region13
  $region12: #{generator_forward.5} parent=0 // pred_region
    _
  $region13: #{generator_forward.5} parent=0 // pred_fallthru
    _
  // Predicated region
  $region14: #{generator_forward.5} parent=0 // pred_check
    _
  $region15: #{generator_forward.5} parent=0 // pred_check_branch
    %19 = sbr.rel (0) target = $region17
  $region16: #{generator_forward.5} parent=0 // pred_region
    _
  $region17: #{generator_forward.5} parent=0 // pred_fallthru
    _
  // Predicated region
  $region18: #{generator_forward.5} parent=0 // pred_check
    _
  $region19: #{generator_forward.5} parent=0 // pred_check_branch
    %21 = sbr.rel (0) target = $region21
  $region20: #{generator_forward.5} parent=0 // pred_region
    _
  $region21: #{generator_forward.5} parent=0 // pred_fallthru
    _
  %v22 = vld [vmem:[%s0] sm:$0xff]
  %v23 = vld [vmem:[%s0 + $0x8] sm:$0xff]
  %v24 = vld [vmem:[%s0 + $0x10] sm:$0xff]
  %v25 = vld [vmem:[%s0 + $0x18] sm:$0xff]
  %v26 = vld [vmem:[%s0 + $0x20] sm:$0xff]
  %v27 = vld [vmem:[%s0 + $0x28] sm:$0xff]
  %v28 = vld [vmem:[%s0 + $0x30] sm:$0xff]
  %v29 = vld [vmem:[%s0 + $0x38] sm:$0xff]
  %v30 = vunpack.c.l.bf16 %v22
  %v31 = vunpack.c.h.bf16 %v22
  %v32 = vunpack.c.l.bf16 %v23
  %v33 = vunpack.c.h.bf16 %v23
  %v34 = vunpack.c.l.bf16 %v24
  %v35 = vunpack.c.h.bf16 %v24
  %v36 = vunpack.c.l.bf16 %v25
  %v37 = vunpack.c.h.bf16 %v25
  %v38 = vunpack.c.l.bf16 %v26
  %v39 = vunpack.c.h.bf16 %v26
  %v40 = vunpack.c.l.bf16 %v27
  %v41 = vunpack.c.h.bf16 %v27
  %v42 = vunpack.c.l.bf16 %v28
  %v43 = vunpack.c.h.bf16 %v28
  %v44 = vunpack.c.l.bf16 %v29
  %v45 = vunpack.c.h.bf16 %v29
  %v46 = vld [vmem:[%s3] sm:$0xff]
  %v47 = vld [vmem:[%s3 + $0x8] sm:$0xff]
  %v48 = vld [vmem:[%s3 + $0x10] sm:$0xff]
  %v49 = vld [vmem:[%s3 + $0x18] sm:$0xff]
  %v50 = vld [vmem:[%s3 + $0x20] sm:$0xff]
  %v51 = vld [vmem:[%s3 + $0x28] sm:$0xff]
  %v52 = vld [vmem:[%s3 + $0x30] sm:$0xff]
  %v53 = vld [vmem:[%s3 + $0x38] sm:$0xff]
  %v54 = vmul.f32 %v30, %v46
  %v55 = vmul.f32 %v31, %v47
  %v56 = vmul.f32 %v32, %v48
  %v57 = vmul.f32 %v33, %v49
  %v58 = vmul.f32 %v34, %v50
  %v59 = vmul.f32 %v35, %v51
  %v60 = vmul.f32 %v36, %v52
  %v61 = vmul.f32 %v37, %v53
  %v62 = vmul.f32 %v38, %v46
  %v63 = vmul.f32 %v39, %v47
  %v64 = vmul.f32 %v40, %v48
  %v65 = vmul.f32 %v41, %v49
  %v66 = vmul.f32 %v42, %v50
  %v67 = vmul.f32 %v43, %v51
  %v68 = vmul.f32 %v44, %v52
  %v69 = vmul.f32 %v45, %v53
  %v70 = vld [vmem:[%s4] sm:$0xff]
  %v71 = vld [vmem:[%s4 + $0x8] sm:$0xff]
  %v72 = vld [vmem:[%s4 + $0x10] sm:$0xff]
  %v73 = vld [vmem:[%s4 + $0x18] sm:$0xff]
  %v74 = vld [vmem:[%s4 + $0x20] sm:$0xff]
  %v75 = vld [vmem:[%s4 + $0x28] sm:$0xff]
  %v76 = vld [vmem:[%s4 + $0x30] sm:$0xff]
  %v77 = vld [vmem:[%s4 + $0x38] sm:$0xff]
  %v78 = vadd.f32 %v54, %v70
  %v79 = vadd.f32 %v55, %v71
  %v80 = vadd.f32 %v56, %v72
  %v81 = vadd.f32 %v57, %v73
  %v82 = vadd.f32 %v58, %v74
  %v83 = vadd.f32 %v59, %v75
  %v84 = vadd.f32 %v60, %v76
  %v85 = vadd.f32 %v61, %v77
  %v86 = vadd.f32 %v62, %v70
  %v87 = vadd.f32 %v63, %v71
  %v88 = vadd.f32 %v64, %v72
  %v89 = vadd.f32 %v65, %v73
  %v90 = vadd.f32 %v66, %v74
  %v91 = vadd.f32 %v67, %v75
  %v92 = vadd.f32 %v68, %v76
  %v93 = vadd.f32 %v69, %v77
  %v94 = vmax.f32 %v78, 0.0
  %v95 = vmax.f32 %v79, 0.0
  %v96 = vmax.f32 %v80, 0.0
  %v97 = vmax.f32 %v81, 0.0
  %v98 = vmax.f32 %v82, 0.0
  %v99 = vmax.f32 %v83, 0.0
  %v100 = vmax.f32 %v84, 0.0
  %v101 = vmax.f32 %v85, 0.0
  %v102 = vmax.f32 %v86, 0.0
  %v103 = vmax.f32 %v87, 0.0
  %v104 = vmax.f32 %v88, 0.0
  %v105 = vmax.f32 %v89, 0.0
  %v106 = vmax.f32 %v90, 0.0
  %v107 = vmax.f32 %v91, 0.0
  %v108 = vmax.f32 %v92, 0.0
  %v109 = vmax.f32 %v93, 0.0
  %v110 = vpack.c.bf16 %v98, %v94
  %v111 = vpack.c.bf16 %v99, %v95
  %v112 = vpack.c.bf16 %v100, %v96
  %v113 = vpack.c.bf16 %v101, %v97
  %v114 = vpack.c.bf16 %v106, %v102
  %v115 = vpack.c.bf16 %v107, %v103
  %v116 = vpack.c.bf16 %v108, %v104
  %v117 = vpack.c.bf16 %v109, %v105
  %v118 = vld [vmem:[%s1] sm:$0xff]
  %v119 = vld [vmem:[%s1 + $0x8] sm:$0xff]
  %v120 = vld [vmem:[%s1 + $0x10] sm:$0xff]
  %v121 = vld [vmem:[%s1 + $0x18] sm:$0xff]
  %v122 = vld [vmem:[%s1 + $0x20] sm:$0xff]
  %v123 = vld [vmem:[%s1 + $0x28] sm:$0xff]
  %v124 = vld [vmem:[%s1 + $0x30] sm:$0xff]
  %v125 = vld [vmem:[%s1 + $0x38] sm:$0xff]
  %v126 = vld [vmem:[%s1 + $0x40] sm:$0xff]
  %v127 = vld [vmem:[%s1 + $0x48] sm:$0xff]
  %v128 = vld [vmem:[%s1 + $0x50] sm:$0xff]
  %v129 = vld [vmem:[%s1 + $0x58] sm:$0xff]
  %v130 = vld [vmem:[%s1 + $0x60] sm:$0xff]
  %v131 = vld [vmem:[%s1 + $0x68] sm:$0xff]
  %v132 = vld [vmem:[%s1 + $0x70] sm:$0xff]
  %v133 = vld [vmem:[%s1 + $0x78] sm:$0xff]
  %v134 = vld [vmem:[%s1 + $0x80] sm:$0xff]
  %v135 = vld [vmem:[%s1 + $0x88] sm:$0xff]
  %v136 = vld [vmem:[%s1 + $0x90] sm:$0xff]
  %v137 = vld [vmem:[%s1 + $0x98] sm:$0xff]
  %v138 = vld [vmem:[%s1 + $0xa0] sm:$0xff]
  %v139 = vld [vmem:[%s1 + $0xa8] sm:$0xff]
  %v140 = vld [vmem:[%s1 + $0xb0] sm:$0xff]
  %v141 = vld [vmem:[%s1 + $0xb8] sm:$0xff]
  %v142 = vld [vmem:[%s1 + $0xc0] sm:$0xff]
  %v143 = vld [vmem:[%s1 + $0xc8] sm:$0xff]
  %v144 = vld [vmem:[%s1 + $0xd0] sm:$0xff]
  %v145 = vld [vmem:[%s1 + $0xd8] sm:$0xff]
  %v146 = vld [vmem:[%s1 + $0xe0] sm:$0xff]
  %v147 = vld [vmem:[%s1 + $0xe8] sm:$0xff]
  %v148 = vld [vmem:[%s1 + $0xf0] sm:$0xff]
  %v149 = vld [vmem:[%s1 + $0xf8] sm:$0xff]
  %v150 = vld [vmem:[%s1 + $0x100] sm:$0xff]
  %v151 = vld [vmem:[%s1 + $0x108] sm:$0xff]
  %v152 = vld [vmem:[%s1 + $0x110] sm:$0xff]
  %v153 = vld [vmem:[%s1 + $0x118] sm:$0xff]
  %v154 = vld [vmem:[%s1 + $0x120] sm:$0xff]
  %v155 = vld [vmem:[%s1 + $0x128] sm:$0xff]
  %v156 = vld [vmem:[%s1 + $0x130] sm:$0xff]
  %v157 = vld [vmem:[%s1 + $0x138] sm:$0xff]
  %v158 = vld [vmem:[%s1 + $0x140] sm:$0xff]
  %v159 = vld [vmem:[%s1 + $0x148] sm:$0xff]
  %v160 = vld [vmem:[%s1 + $0x150] sm:$0xff]
  %v161 = vld [vmem:[%s1 + $0x158] sm:$0xff]
  %v162 = vld [vmem:[%s1 + $0x160] sm:$0xff]
  %v163 = vld [vmem:[%s1 + $0x168] sm:$0xff]
  %v164 = vld [vmem:[%s1 + $0x170] sm:$0xff]
  %v165 = vld [vmem:[%s1 + $0x178] sm:$0xff]
  %v166 = vld [vmem:[%s1 + $0x180] sm:$0xff]
  %v167 = vld [vmem:[%s1 + $0x188] sm:$0xff]
  %v168 = vld [vmem:[%s1 + $0x190] sm:$0xff]
  %v169 = vld [vmem:[%s1 + $0x198] sm:$0xff]
  %v170 = vld [vmem:[%s1 + $0x1a0] sm:$0xff]
  %v171 = vld [vmem:[%s1 + $0x1a8] sm:$0xff]
  %v172 = vld [vmem:[%s1 + $0x1b0] sm:$0xff]
  %v173 = vld [vmem:[%s1 + $0x1b8] sm:$0xff]
  %v174 = vld [vmem:[%s1 + $0x1c0] sm:$0xff]
  %v175 = vld [vmem:[%s1 + $0x1c8] sm:$0xff]
  %v176 = vld [vmem:[%s1 + $0x1d0] sm:$0xff]
  %v177 = vld [vmem:[%s1 + $0x1d8] sm:$0xff]
  %v178 = vld [vmem:[%s1 + $0x1e0] sm:$0xff]
  %v179 = vld [vmem:[%s1 + $0x1e8] sm:$0xff]
  %v180 = vld [vmem:[%s1 + $0x1f0] sm:$0xff]
  %v181 = vld [vmem:[%s1 + $0x1f8] sm:$0xff]
  %v182 = vld [vmem:[%s1 + $0x200] sm:$0xff]
  %v183 = vld [vmem:[%s1 + $0x208] sm:$0xff]
  %v184 = vld [vmem:[%s1 + $0x210] sm:$0xff]
  %v185 = vld [vmem:[%s1 + $0x218] sm:$0xff]
  %v186 = vld [vmem:[%s1 + $0x220] sm:$0xff]
  %v187 = vld [vmem:[%s1 + $0x228] sm:$0xff]
  %v188 = vld [vmem:[%s1 + $0x230] sm:$0xff]
  %v189 = vld [vmem:[%s1 + $0x238] sm:$0xff]
  %v190 = vld [vmem:[%s1 + $0x240] sm:$0xff]
  %v191 = vld [vmem:[%s1 + $0x248] sm:$0xff]
  %v192 = vld [vmem:[%s1 + $0x250] sm:$0xff]
  %v193 = vld [vmem:[%s1 + $0x258] sm:$0xff]
  %v194 = vld [vmem:[%s1 + $0x260] sm:$0xff]
  %v195 = vld [vmem:[%s1 + $0x268] sm:$0xff]
  %v196 = vld [vmem:[%s1 + $0x270] sm:$0xff]
  %v197 = vld [vmem:[%s1 + $0x278] sm:$0xff]
  %v198 = vld [vmem:[%s1 + $0x280] sm:$0xff]
  %v199 = vld [vmem:[%s1 + $0x288] sm:$0xff]
  %v200 = vld [vmem:[%s1 + $0x290] sm:$0xff]
  %v201 = vld [vmem:[%s1 + $0x298] sm:$0xff]
  %v202 = vld [vmem:[%s1 + $0x2a0] sm:$0xff]
  %v203 = vld [vmem:[%s1 + $0x2a8] sm:$0xff]
  %v204 = vld [vmem:[%s1 + $0x2b0] sm:$0xff]
  %v205 = vld [vmem:[%s1 + $0x2b8] sm:$0xff]
  %v206 = vld [vmem:[%s1 + $0x2c0] sm:$0xff]
  %v207 = vld [vmem:[%s1 + $0x2c8] sm:$0xff]
  %v208 = vld [vmem:[%s1 + $0x2d0] sm:$0xff]
  %v209 = vld [vmem:[%s1 + $0x2d8] sm:$0xff]
  %v210 = vld [vmem:[%s1 + $0x2e0] sm:$0xff]
  %v211 = vld [vmem:[%s1 + $0x2e8] sm:$0xff]
  %v212 = vld [vmem:[%s1 + $0x2f0] sm:$0xff]
  %v213 = vld [vmem:[%s1 + $0x2f8] sm:$0xff]
  %v214 = vld [vmem:[%s1 + $0x300] sm:$0xff]
  %v215 = vld [vmem:[%s1 + $0x308] sm:$0xff]
  %v216 = vld [vmem:[%s1 + $0x310] sm:$0xff]
  %v217 = vld [vmem:[%s1 + $0x318] sm:$0xff]
  %v218 = vld [vmem:[%s1 + $0x320] sm:$0xff]
  %v219 = vld [vmem:[%s1 + $0x328] sm:$0xff]
  %v220 = vld [vmem:[%s1 + $0x330] sm:$0xff]
  %v221 = vld [vmem:[%s1 + $0x338] sm:$0xff]
  %v222 = vld [vmem:[%s1 + $0x340] sm:$0xff]
  %v223 = vld [vmem:[%s1 + $0x348] sm:$0xff]
  %v224 = vld [vmem:[%s1 + $0x350] sm:$0xff]
  %v225 = vld [vmem:[%s1 + $0x358] sm:$0xff]
  %v226 = vld [vmem:[%s1 + $0x360] sm:$0xff]
  %v227 = vld [vmem:[%s1 + $0x368] sm:$0xff]
  %v228 = vld [vmem:[%s1 + $0x370] sm:$0xff]
  %v229 = vld [vmem:[%s1 + $0x378] sm:$0xff]
  %v230 = vld [vmem:[%s1 + $0x380] sm:$0xff]
  %v231 = vld [vmem:[%s1 + $0x388] sm:$0xff]
  %v232 = vld [vmem:[%s1 + $0x390] sm:$0xff]
  %v233 = vld [vmem:[%s1 + $0x398] sm:$0xff]
  %v234 = vld [vmem:[%s1 + $0x3a0] sm:$0xff]
  %v235 = vld [vmem:[%s1 + $0x3a8] sm:$0xff]
  %v236 = vld [vmem:[%s1 + $0x3b0] sm:$0xff]
  %v237 = vld [vmem:[%s1 + $0x3b8] sm:$0xff]
  %v238 = vld [vmem:[%s1 + $0x3c0] sm:$0xff]
  %v239 = vld [vmem:[%s1 + $0x3c8] sm:$0xff]
  %v240 = vld [vmem:[%s1 + $0x3d0] sm:$0xff]
  %v241 = vld [vmem:[%s1 + $0x3d8] sm:$0xff]
  %v242 = vld [vmem:[%s1 + $0x3e0] sm:$0xff]
  %v243 = vld [vmem:[%s1 + $0x3e8] sm:$0xff]
  %v244 = vld [vmem:[%s1 + $0x3f0] sm:$0xff]
  %v245 = vld [vmem:[%s1 + $0x3f8] sm:$0xff]
  %v246 = vld [vmem:[%s1 + $0x400] sm:$0xff]
  %v247 = vld [vmem:[%s1 + $0x408] sm:$0xff]
  %v248 = vld [vmem:[%s1 + $0x410] sm:$0xff]
  %v249 = vld [vmem:[%s1 + $0x418] sm:$0xff]
  %v250 = vld [vmem:[%s1 + $0x420] sm:$0xff]
  %v251 = vld [vmem:[%s1 + $0x428] sm:$0xff]
  %v252 = vld [vmem:[%s1 + $0x430] sm:$0xff]
  %v253 = vld [vmem:[%s1 + $0x438] sm:$0xff]
  %v254 = vld [vmem:[%s1 + $0x440] sm:$0xff]
  %v255 = vld [vmem:[%s1 + $0x448] sm:$0xff]
  %v256 = vld [vmem:[%s1 + $0x450] sm:$0xff]
  %v257 = vld [vmem:[%s1 + $0x458] sm:$0xff]
  %v258 = vld [vmem:[%s1 + $0x460] sm:$0xff]
  %v259 = vld [vmem:[%s1 + $0x468] sm:$0xff]
  %v260 = vld [vmem:[%s1 + $0x470] sm:$0xff]
  %v261 = vld [vmem:[%s1 + $0x478] sm:$0xff]
  %v262 = vld [vmem:[%s1 + $0x480] sm:$0xff]
  %v263 = vld [vmem:[%s1 + $0x488] sm:$0xff]
  %v264 = vld [vmem:[%s1 + $0x490] sm:$0xff]
  %v265 = vld [vmem:[%s1 + $0x498] sm:$0xff]
  %v266 = vld [vmem:[%s1 + $0x4a0] sm:$0xff]
  %v267 = vld [vmem:[%s1 + $0x4a8] sm:$0xff]
  %v268 = vld [vmem:[%s1 + $0x4b0] sm:$0xff]
  %v269 = vld [vmem:[%s1 + $0x4b8] sm:$0xff]
  %v270 = vld [vmem:[%s1 + $0x4c0] sm:$0xff]
  %v271 = vld [vmem:[%s1 + $0x4c8] sm:$0xff]
  %v272 = vld [vmem:[%s1 + $0x4d0] sm:$0xff]
  %v273 = vld [vmem:[%s1 + $0x4d8] sm:$0xff]
  %v274 = vld [vmem:[%s1 + $0x4e0] sm:$0xff]
  %v275 = vld [vmem:[%s1 + $0x4e8] sm:$0xff]
  %v276 = vld [vmem:[%s1 + $0x4f0] sm:$0xff]
  %v277 = vld [vmem:[%s1 + $0x4f8] sm:$0xff]
  %v278 = vld [vmem:[%s1 + $0x500] sm:$0xff]
  %v279 = vld [vmem:[%s1 + $0x508] sm:$0xff]
  %v280 = vld [vmem:[%s1 + $0x510] sm:$0xff]
  %v281 = vld [vmem:[%s1 + $0x518] sm:$0xff]
  %v282 = vld [vmem:[%s1 + $0x520] sm:$0xff]
  %v283 = vld [vmem:[%s1 + $0x528] sm:$0xff]
  %v284 = vld [vmem:[%s1 + $0x530] sm:$0xff]
  %v285 = vld [vmem:[%s1 + $0x538] sm:$0xff]
  %v286 = vld [vmem:[%s1 + $0x540] sm:$0xff]
  %v287 = vld [vmem:[%s1 + $0x548] sm:$0xff]
  %v288 = vld [vmem:[%s1 + $0x550] sm:$0xff]
  %v289 = vld [vmem:[%s1 + $0x558] sm:$0xff]
  %v290 = vld [vmem:[%s1 + $0x560] sm:$0xff]
  %v291 = vld [vmem:[%s1 + $0x568] sm:$0xff]
  %v292 = vld [vmem:[%s1 + $0x570] sm:$0xff]
  %v293 = vld [vmem:[%s1 + $0x578] sm:$0xff]
  %v294 = vld [vmem:[%s1 + $0x580] sm:$0xff]
  %v295 = vld [vmem:[%s1 + $0x588] sm:$0xff]
  %v296 = vld [vmem:[%s1 + $0x590] sm:$0xff]
  %v297 = vld [vmem:[%s1 + $0x598] sm:$0xff]
  %v298 = vld [vmem:[%s1 + $0x5a0] sm:$0xff]
  %v299 = vld [vmem:[%s1 + $0x5a8] sm:$0xff]
  %v300 = vld [vmem:[%s1 + $0x5b0] sm:$0xff]
  %v301 = vld [vmem:[%s1 + $0x5b8] sm:$0xff]
  %v302 = vld [vmem:[%s1 + $0x5c0] sm:$0xff]
  %v303 = vld [vmem:[%s1 + $0x5c8] sm:$0xff]
  %v304 = vld [vmem:[%s1 + $0x5d0] sm:$0xff]
  %v305 = vld [vmem:[%s1 + $0x5d8] sm:$0xff]
  %v306 = vld [vmem:[%s1 + $0x5e0] sm:$0xff]
  %v307 = vld [vmem:[%s1 + $0x5e8] sm:$0xff]
  %v308 = vld [vmem:[%s1 + $0x5f0] sm:$0xff]
  %v309 = vld [vmem:[%s1 + $0x5f8] sm:$0xff]
  %v310 = vld [vmem:[%s1 + $0x600] sm:$0xff]
  %v311 = vld [vmem:[%s1 + $0x608] sm:$0xff]
  %v312 = vld [vmem:[%s1 + $0x610] sm:$0xff]
  %v313 = vld [vmem:[%s1 + $0x618] sm:$0xff]
  %v314 = vld [vmem:[%s1 + $0x620] sm:$0xff]
  %v315 = vld [vmem:[%s1 + $0x628] sm:$0xff]
  %v316 = vld [vmem:[%s1 + $0x630] sm:$0xff]
  %v317 = vld [vmem:[%s1 + $0x638] sm:$0xff]
  %v318 = vld [vmem:[%s1 + $0x640] sm:$0xff]
  %v319 = vld [vmem:[%s1 + $0x648] sm:$0xff]
  %v320 = vld [vmem:[%s1 + $0x650] sm:$0xff]
  %v321 = vld [vmem:[%s1 + $0x658] sm:$0xff]
  %v322 = vld [vmem:[%s1 + $0x660] sm:$0xff]
  %v323 = vld [vmem:[%s1 + $0x668] sm:$0xff]
  %v324 = vld [vmem:[%s1 + $0x670] sm:$0xff]
  %v325 = vld [vmem:[%s1 + $0x678] sm:$0xff]
  %v326 = vld [vmem:[%s1 + $0x680] sm:$0xff]
  %v327 = vld [vmem:[%s1 + $0x688] sm:$0xff]
  %v328 = vld [vmem:[%s1 + $0x690] sm:$0xff]
  %v329 = vld [vmem:[%s1 + $0x698] sm:$0xff]
  %v330 = vld [vmem:[%s1 + $0x6a0] sm:$0xff]
  %v331 = vld [vmem:[%s1 + $0x6a8] sm:$0xff]
  %v332 = vld [vmem:[%s1 + $0x6b0] sm:$0xff]
  %v333 = vld [vmem:[%s1 + $0x6b8] sm:$0xff]
  %v334 = vld [vmem:[%s1 + $0x6c0] sm:$0xff]
  %v335 = vld [vmem:[%s1 + $0x6c8] sm:$0xff]
  %v336 = vld [vmem:[%s1 + $0x6d0] sm:$0xff]
  %v337 = vld [vmem:[%s1 + $0x6d8] sm:$0xff]
  %v338 = vld [vmem:[%s1 + $0x6e0] sm:$0xff]
  %v339 = vld [vmem:[%s1 + $0x6e8] sm:$0xff]
  %v340 = vld [vmem:[%s1 + $0x6f0] sm:$0xff]
  %v341 = vld [vmem:[%s1 + $0x6f8] sm:$0xff]
  %v342 = vld [vmem:[%s1 + $0x700] sm:$0xff]
  %v343 = vld [vmem:[%s1 + $0x708] sm:$0xff]
  %v344 = vld [vmem:[%s1 + $0x710] sm:$0xff]
  %v345 = vld [vmem:[%s1 + $0x718] sm:$0xff]
  %v346 = vld [vmem:[%s1 + $0x720] sm:$0xff]
  %v347 = vld [vmem:[%s1 + $0x728] sm:$0xff]
  %v348 = vld [vmem:[%s1 + $0x730] sm:$0xff]
  %v349 = vld [vmem:[%s1 + $0x738] sm:$0xff]
  %v350 = vld [vmem:[%s1 + $0x740] sm:$0xff]
  %v351 = vld [vmem:[%s1 + $0x748] sm:$0xff]
  %v352 = vld [vmem:[%s1 + $0x750] sm:$0xff]
  %v353 = vld [vmem:[%s1 + $0x758] sm:$0xff]
  %v354 = vld [vmem:[%s1 + $0x760] sm:$0xff]
  %v355 = vld [vmem:[%s1 + $0x768] sm:$0xff]
  %v356 = vld [vmem:[%s1 + $0x770] sm:$0xff]
  %v357 = vld [vmem:[%s1 + $0x778] sm:$0xff]
  %v358 = vld [vmem:[%s1 + $0x780] sm:$0xff]
  %v359 = vld [vmem:[%s1 + $0x788] sm:$0xff]
  %v360 = vld [vmem:[%s1 + $0x790] sm:$0xff]
  %v361 = vld [vmem:[%s1 + $0x798] sm:$0xff]
  %v362 = vld [vmem:[%s1 + $0x7a0] sm:$0xff]
  %v363 = vld [vmem:[%s1 + $0x7a8] sm:$0xff]
  %v364 = vld [vmem:[%s1 + $0x7b0] sm:$0xff]
  %v365 = vld [vmem:[%s1 + $0x7b8] sm:$0xff]
  %v366 = vld [vmem:[%s1 + $0x7c0] sm:$0xff]
  %v367 = vld [vmem:[%s1 + $0x7c8] sm:$0xff]
  %v368 = vld [vmem:[%s1 + $0x7d0] sm:$0xff]
  %v369 = vld [vmem:[%s1 + $0x7d8] sm:$0xff]
  %v370 = vld [vmem:[%s1 + $0x7e0] sm:$0xff]
  %v371 = vld [vmem:[%s1 + $0x7e8] sm:$0xff]
  %v372 = vld [vmem:[%s1 + $0x7f0] sm:$0xff]
  %v373 = vld [vmem:[%s1 + $0x7f8] sm:$0xff]
  %v374 = vld [vmem:[%s2] sm:$0xff]
  %v376 = vperm.slane %v374, 0
  %v377 = vperm.slane %v374, 1
  %v378 = vperm.slane %v374, 2
  %v379 = vperm.slane %v374, 3
  %v380 = vperm.slane %v374, 4
  %v381 = vperm.slane %v374, 5
  %v382 = vperm.slane %v374, 6
  %v383 = vperm.slane %v374, 7
  %v648 = vunpack.c.l.b16 %v118
  %v649 = vunpack.c.h.b16 %v118
  %v650 = vunpack.c.l.b16 %v119
  %v651 = vunpack.c.h.b16 %v119
  %v652 = vunpack.c.l.b16 %v120
  %v653 = vunpack.c.h.b16 %v120
  %v654 = vunpack.c.l.b16 %v121
  %v655 = vunpack.c.h.b16 %v121
  %v656 = vunpack.c.l.b16 %v122
  %v657 = vunpack.c.h.b16 %v122
  %v658 = vunpack.c.l.b16 %v123
  %v659 = vunpack.c.h.b16 %v123
  %v660 = vunpack.c.l.b16 %v124
  %v661 = vunpack.c.h.b16 %v124
  %v662 = vunpack.c.l.b16 %v125
  %v663 = vunpack.c.h.b16 %v125
  %v664 = vunpack.c.l.b16 %v126
  %v665 = vunpack.c.h.b16 %v126
  %v666 = vunpack.c.l.b16 %v127
  %v667 = vunpack.c.h.b16 %v127
  %v668 = vunpack.c.l.b16 %v128
  %v669 = vunpack.c.h.b16 %v128
  %v670 = vunpack.c.l.b16 %v129
  %v671 = vunpack.c.h.b16 %v129
  %v672 = vunpack.c.l.b16 %v130
  %v673 = vunpack.c.h.b16 %v130
  %v674 = vunpack.c.l.b16 %v131
  %v675 = vunpack.c.h.b16 %v131
  %v676 = vunpack.c.l.b16 %v132
  %v677 = vunpack.c.h.b16 %v132
  %v678 = vunpack.c.l.b16 %v133
  %v679 = vunpack.c.h.b16 %v133
  %v680 = vunpack.c.l.b16 %v134
  %v681 = vunpack.c.h.b16 %v134
  %v682 = vunpack.c.l.b16 %v135
  %v683 = vunpack.c.h.b16 %v135
  %v684 = vunpack.c.l.b16 %v136
  %v685 = vunpack.c.h.b16 %v136
  %v686 = vunpack.c.l.b16 %v137
  %v687 = vunpack.c.h.b16 %v137
  %v688 = vunpack.c.l.b16 %v138
  %v689 = vunpack.c.h.b16 %v138
  %v690 = vunpack.c.l.b16 %v139
  %v691 = vunpack.c.h.b16 %v139
  %v692 = vunpack.c.l.b16 %v140
  %v693 = vunpack.c.h.b16 %v140
  %v694 = vunpack.c.l.b16 %v141
  %v695 = vunpack.c.h.b16 %v141
  %v696 = vunpack.c.l.b16 %v142
  %v697 = vunpack.c.h.b16 %v142
  %v698 = vunpack.c.l.b16 %v143
  %v699 = vunpack.c.h.b16 %v143
  %v700 = vunpack.c.l.b16 %v144
  %v701 = vunpack.c.h.b16 %v144
  %v702 = vunpack.c.l.b16 %v145
  %v703 = vunpack.c.h.b16 %v145
  %v704 = vunpack.c.l.b16 %v146
  %v705 = vunpack.c.h.b16 %v146
  %v706 = vunpack.c.l.b16 %v147
  %v707 = vunpack.c.h.b16 %v147
  %v708 = vunpack.c.l.b16 %v148
  %v709 = vunpack.c.h.b16 %v148
  %v710 = vunpack.c.l.b16 %v149
  %v711 = vunpack.c.h.b16 %v149
  %v712 = vunpack.c.l.b16 %v150
  %v713 = vunpack.c.h.b16 %v150
  %v714 = vunpack.c.l.b16 %v151
  %v715 = vunpack.c.h.b16 %v151
  %v716 = vunpack.c.l.b16 %v152
  %v717 = vunpack.c.h.b16 %v152
  %v718 = vunpack.c.l.b16 %v153
  %v719 = vunpack.c.h.b16 %v153
  %v720 = vunpack.c.l.b16 %v154
  %v721 = vunpack.c.h.b16 %v154
  %v722 = vunpack.c.l.b16 %v155
  %v723 = vunpack.c.h.b16 %v155
  %v724 = vunpack.c.l.b16 %v156
  %v725 = vunpack.c.h.b16 %v156
  %v726 = vunpack.c.l.b16 %v157
  %v727 = vunpack.c.h.b16 %v157
  %v728 = vunpack.c.l.b16 %v158
  %v729 = vunpack.c.h.b16 %v158
  %v730 = vunpack.c.l.b16 %v159
  %v731 = vunpack.c.h.b16 %v159
  %v732 = vunpack.c.l.b16 %v160
  %v733 = vunpack.c.h.b16 %v160
  %v734 = vunpack.c.l.b16 %v161
  %v735 = vunpack.c.h.b16 %v161
  %v736 = vunpack.c.l.b16 %v162
  %v737 = vunpack.c.h.b16 %v162
  %v738 = vunpack.c.l.b16 %v163
  %v739 = vunpack.c.h.b16 %v163
  %v740 = vunpack.c.l.b16 %v164
  %v741 = vunpack.c.h.b16 %v164
  %v742 = vunpack.c.l.b16 %v165
  %v743 = vunpack.c.h.b16 %v165
  %v744 = vunpack.c.l.b16 %v166
  %v745 = vunpack.c.h.b16 %v166
  %v746 = vunpack.c.l.b16 %v167
  %v747 = vunpack.c.h.b16 %v167
  %v748 = vunpack.c.l.b16 %v168
  %v749 = vunpack.c.h.b16 %v168
  %v750 = vunpack.c.l.b16 %v169
  %v751 = vunpack.c.h.b16 %v169
  %v752 = vunpack.c.l.b16 %v170
  %v753 = vunpack.c.h.b16 %v170
  %v754 = vunpack.c.l.b16 %v171
  %v755 = vunpack.c.h.b16 %v171
  %v756 = vunpack.c.l.b16 %v172
  %v757 = vunpack.c.h.b16 %v172
  %v758 = vunpack.c.l.b16 %v173
  %v759 = vunpack.c.h.b16 %v173
  %v760 = vunpack.c.l.b16 %v174
  %v761 = vunpack.c.h.b16 %v174
  %v762 = vunpack.c.l.b16 %v175
  %v763 = vunpack.c.h.b16 %v175
  %v764 = vunpack.c.l.b16 %v176
  %v765 = vunpack.c.h.b16 %v176
  %v766 = vunpack.c.l.b16 %v177
  %v767 = vunpack.c.h.b16 %v177
  %v768 = vunpack.c.l.b16 %v178
  %v769 = vunpack.c.h.b16 %v178
  %v770 = vunpack.c.l.b16 %v179
  %v771 = vunpack.c.h.b16 %v179
  %v772 = vunpack.c.l.b16 %v180
  %v773 = vunpack.c.h.b16 %v180
  %v774 = vunpack.c.l.b16 %v181
  %v775 = vunpack.c.h.b16 %v181
  %v776 = vunpack.c.l.b16 %v182
  %v777 = vunpack.c.h.b16 %v182
  %v778 = vunpack.c.l.b16 %v183
  %v779 = vunpack.c.h.b16 %v183
  %v780 = vunpack.c.l.b16 %v184
  %v781 = vunpack.c.h.b16 %v184
  %v782 = vunpack.c.l.b16 %v185
  %v783 = vunpack.c.h.b16 %v185
  %v784 = vunpack.c.l.b16 %v186
  %v785 = vunpack.c.h.b16 %v186
  %v786 = vunpack.c.l.b16 %v187
  %v787 = vunpack.c.h.b16 %v187
  %v788 = vunpack.c.l.b16 %v188
  %v789 = vunpack.c.h.b16 %v188
  %v790 = vunpack.c.l.b16 %v189
  %v791 = vunpack.c.h.b16 %v189
  %v792 = vunpack.c.l.b16 %v190
  %v793 = vunpack.c.h.b16 %v190
  %v794 = vunpack.c.l.b16 %v191
  %v795 = vunpack.c.h.b16 %v191
  %v796 = vunpack.c.l.b16 %v192
  %v797 = vunpack.c.h.b16 %v192
  %v798 = vunpack.c.l.b16 %v193
  %v799 = vunpack.c.h.b16 %v193
  %v800 = vunpack.c.l.b16 %v194
  %v801 = vunpack.c.h.b16 %v194
  %v802 = vunpack.c.l.b16 %v195
  %v803 = vunpack.c.h.b16 %v195
  %v804 = vunpack.c.l.b16 %v196
  %v805 = vunpack.c.h.b16 %v196
  %v806 = vunpack.c.l.b16 %v197
  %v807 = vunpack.c.h.b16 %v197
  %v808 = vunpack.c.l.b16 %v198
  %v809 = vunpack.c.h.b16 %v198
  %v810 = vunpack.c.l.b16 %v199
  %v811 = vunpack.c.h.b16 %v199
  %v812 = vunpack.c.l.b16 %v200
  %v813 = vunpack.c.h.b16 %v200
  %v814 = vunpack.c.l.b16 %v201
  %v815 = vunpack.c.h.b16 %v201
  %v816 = vunpack.c.l.b16 %v202
  %v817 = vunpack.c.h.b16 %v202
  %v818 = vunpack.c.l.b16 %v203
  %v819 = vunpack.c.h.b16 %v203
  %v820 = vunpack.c.l.b16 %v204
  %v821 = vunpack.c.h.b16 %v204
  %v822 = vunpack.c.l.b16 %v205
  %v823 = vunpack.c.h.b16 %v205
  %v824 = vunpack.c.l.b16 %v206
  %v825 = vunpack.c.h.b16 %v206
  %v826 = vunpack.c.l.b16 %v207
  %v827 = vunpack.c.h.b16 %v207
  %v828 = vunpack.c.l.b16 %v208
  %v829 = vunpack.c.h.b16 %v208
  %v830 = vunpack.c.l.b16 %v209
  %v831 = vunpack.c.h.b16 %v209
  %v832 = vunpack.c.l.b16 %v210
  %v833 = vunpack.c.h.b16 %v210
  %v834 = vunpack.c.l.b16 %v211
  %v835 = vunpack.c.h.b16 %v211
  %v836 = vunpack.c.l.b16 %v212
  %v837 = vunpack.c.h.b16 %v212
  %v838 = vunpack.c.l.b16 %v213
  %v839 = vunpack.c.h.b16 %v213
  %v840 = vunpack.c.l.b16 %v214
  %v841 = vunpack.c.h.b16 %v214
  %v842 = vunpack.c.l.b16 %v215
  %v843 = vunpack.c.h.b16 %v215
  %v844 = vunpack.c.l.b16 %v216
  %v845 = vunpack.c.h.b16 %v216
  %v846 = vunpack.c.l.b16 %v217
  %v847 = vunpack.c.h.b16 %v217
  %v848 = vunpack.c.l.b16 %v218
  %v849 = vunpack.c.h.b16 %v218
  %v850 = vunpack.c.l.b16 %v219
  %v851 = vunpack.c.h.b16 %v219
  %v852 = vunpack.c.l.b16 %v220
  %v853 = vunpack.c.h.b16 %v220
  %v854 = vunpack.c.l.b16 %v221
  %v855 = vunpack.c.h.b16 %v221
  %v856 = vunpack.c.l.b16 %v222
  %v857 = vunpack.c.h.b16 %v222
  %v858 = vunpack.c.l.b16 %v223
  %v859 = vunpack.c.h.b16 %v223
  %v860 = vunpack.c.l.b16 %v224
  %v861 = vunpack.c.h.b16 %v224
  %v862 = vunpack.c.l.b16 %v225
  %v863 = vunpack.c.h.b16 %v225
  %v864 = vunpack.c.l.b16 %v226
  %v865 = vunpack.c.h.b16 %v226
  %v866 = vunpack.c.l.b16 %v227
  %v867 = vunpack.c.h.b16 %v227
  %v868 = vunpack.c.l.b16 %v228
  %v869 = vunpack.c.h.b16 %v228
  %v870 = vunpack.c.l.b16 %v229
  %v871 = vunpack.c.h.b16 %v229
  %v872 = vunpack.c.l.b16 %v230
  %v873 = vunpack.c.h.b16 %v230
  %v874 = vunpack.c.l.b16 %v231
  %v875 = vunpack.c.h.b16 %v231
  %v876 = vunpack.c.l.b16 %v232
  %v877 = vunpack.c.h.b16 %v232
  %v878 = vunpack.c.l.b16 %v233
  %v879 = vunpack.c.h.b16 %v233
  %v880 = vunpack.c.l.b16 %v234
  %v881 = vunpack.c.h.b16 %v234
  %v882 = vunpack.c.l.b16 %v235
  %v883 = vunpack.c.h.b16 %v235
  %v884 = vunpack.c.l.b16 %v236
  %v885 = vunpack.c.h.b16 %v236
  %v886 = vunpack.c.l.b16 %v237
  %v887 = vunpack.c.h.b16 %v237
  %v888 = vunpack.c.l.b16 %v238
  %v889 = vunpack.c.h.b16 %v238
  %v890 = vunpack.c.l.b16 %v239
  %v891 = vunpack.c.h.b16 %v239
  %v892 = vunpack.c.l.b16 %v240
  %v893 = vunpack.c.h.b16 %v240
  %v894 = vunpack.c.l.b16 %v241
  %v895 = vunpack.c.h.b16 %v241
  %v896 = vunpack.c.l.b16 %v242
  %v897 = vunpack.c.h.b16 %v242
  %v898 = vunpack.c.l.b16 %v243
  %v899 = vunpack.c.h.b16 %v243
  %v900 = vunpack.c.l.b16 %v244
  %v901 = vunpack.c.h.b16 %v244
  %v902 = vunpack.c.l.b16 %v245
  %v903 = vunpack.c.h.b16 %v245
  %v904 = vunpack.c.l.b16 %v246
  %v905 = vunpack.c.h.b16 %v246
  %v906 = vunpack.c.l.b16 %v247
  %v907 = vunpack.c.h.b16 %v247
  %v908 = vunpack.c.l.b16 %v248
  %v909 = vunpack.c.h.b16 %v248
  %v910 = vunpack.c.l.b16 %v249
  %v911 = vunpack.c.h.b16 %v249
  %v912 = vunpack.c.l.b16 %v250
  %v913 = vunpack.c.h.b16 %v250
  %v914 = vunpack.c.l.b16 %v251
  %v915 = vunpack.c.h.b16 %v251
  %v916 = vunpack.c.l.b16 %v252
  %v917 = vunpack.c.h.b16 %v252
  %v918 = vunpack.c.l.b16 %v253
  %v919 = vunpack.c.h.b16 %v253
  %v920 = vunpack.c.l.b16 %v254
  %v921 = vunpack.c.h.b16 %v254
  %v922 = vunpack.c.l.b16 %v255
  %v923 = vunpack.c.h.b16 %v255
  %v924 = vunpack.c.l.b16 %v256
  %v925 = vunpack.c.h.b16 %v256
  %v926 = vunpack.c.l.b16 %v257
  %v927 = vunpack.c.h.b16 %v257
  %v928 = vunpack.c.l.b16 %v258
  %v929 = vunpack.c.h.b16 %v258
  %v930 = vunpack.c.l.b16 %v259
  %v931 = vunpack.c.h.b16 %v259
  %v932 = vunpack.c.l.b16 %v260
  %v933 = vunpack.c.h.b16 %v260
  %v934 = vunpack.c.l.b16 %v261
  %v935 = vunpack.c.h.b16 %v261
  %v936 = vunpack.c.l.b16 %v262
  %v937 = vunpack.c.h.b16 %v262
  %v938 = vunpack.c.l.b16 %v263
  %v939 = vunpack.c.h.b16 %v263
  %v940 = vunpack.c.l.b16 %v264
  %v941 = vunpack.c.h.b16 %v264
  %v942 = vunpack.c.l.b16 %v265
  %v943 = vunpack.c.h.b16 %v265
  %v944 = vunpack.c.l.b16 %v266
  %v945 = vunpack.c.h.b16 %v266
  %v946 = vunpack.c.l.b16 %v267
  %v947 = vunpack.c.h.b16 %v267
  %v948 = vunpack.c.l.b16 %v268
  %v949 = vunpack.c.h.b16 %v268
  %v950 = vunpack.c.l.b16 %v269
  %v951 = vunpack.c.h.b16 %v269
  %v952 = vunpack.c.l.b16 %v270
  %v953 = vunpack.c.h.b16 %v270
  %v954 = vunpack.c.l.b16 %v271
  %v955 = vunpack.c.h.b16 %v271
  %v956 = vunpack.c.l.b16 %v272
  %v957 = vunpack.c.h.b16 %v272
  %v958 = vunpack.c.l.b16 %v273
  %v959 = vunpack.c.h.b16 %v273
  %v960 = vunpack.c.l.b16 %v274
  %v961 = vunpack.c.h.b16 %v274
  %v962 = vunpack.c.l.b16 %v275
  %v963 = vunpack.c.h.b16 %v275
  %v964 = vunpack.c.l.b16 %v276
  %v965 = vunpack.c.h.b16 %v276
  %v966 = vunpack.c.l.b16 %v277
  %v967 = vunpack.c.h.b16 %v277
  %v968 = vunpack.c.l.b16 %v278
  %v969 = vunpack.c.h.b16 %v278
  %v970 = vunpack.c.l.b16 %v279
  %v971 = vunpack.c.h.b16 %v279
  %v972 = vunpack.c.l.b16 %v280
  %v973 = vunpack.c.h.b16 %v280
  %v974 = vunpack.c.l.b16 %v281
  %v975 = vunpack.c.h.b16 %v281
  %v976 = vunpack.c.l.b16 %v282
  %v977 = vunpack.c.h.b16 %v282
  %v978 = vunpack.c.l.b16 %v283
  %v979 = vunpack.c.h.b16 %v283
  %v980 = vunpack.c.l.b16 %v284
  %v981 = vunpack.c.h.b16 %v284
  %v982 = vunpack.c.l.b16 %v285
  %v983 = vunpack.c.h.b16 %v285
  %v984 = vunpack.c.l.b16 %v286
  %v985 = vunpack.c.h.b16 %v286
  %v986 = vunpack.c.l.b16 %v287
  %v987 = vunpack.c.h.b16 %v287
  %v988 = vunpack.c.l.b16 %v288
  %v989 = vunpack.c.h.b16 %v288
  %v990 = vunpack.c.l.b16 %v289
  %v991 = vunpack.c.h.b16 %v289
  %v992 = vunpack.c.l.b16 %v290
  %v993 = vunpack.c.h.b16 %v290
  %v994 = vunpack.c.l.b16 %v291
  %v995 = vunpack.c.h.b16 %v291
  %v996 = vunpack.c.l.b16 %v292
  %v997 = vunpack.c.h.b16 %v292
  %v998 = vunpack.c.l.b16 %v293
  %v999 = vunpack.c.h.b16 %v293
  %v1000 = vunpack.c.l.b16 %v294
  %v1001 = vunpack.c.h.b16 %v294
  %v1002 = vunpack.c.l.b16 %v295
  %v1003 = vunpack.c.h.b16 %v295
  %v1004 = vunpack.c.l.b16 %v296
  %v1005 = vunpack.c.h.b16 %v296
  %v1006 = vunpack.c.l.b16 %v297
  %v1007 = vunpack.c.h.b16 %v297
  %v1008 = vunpack.c.l.b16 %v298
  %v1009 = vunpack.c.h.b16 %v298
  %v1010 = vunpack.c.l.b16 %v299
  %v1011 = vunpack.c.h.b16 %v299
  %v1012 = vunpack.c.l.b16 %v300
  %v1013 = vunpack.c.h.b16 %v300
  %v1014 = vunpack.c.l.b16 %v301
  %v1015 = vunpack.c.h.b16 %v301
  %v1016 = vunpack.c.l.b16 %v302
  %v1017 = vunpack.c.h.b16 %v302
  %v1018 = vunpack.c.l.b16 %v303
  %v1019 = vunpack.c.h.b16 %v303
  %v1020 = vunpack.c.l.b16 %v304
  %v1021 = vunpack.c.h.b16 %v304
  %v1022 = vunpack.c.l.b16 %v305
  %v1023 = vunpack.c.h.b16 %v305
  %v1024 = vunpack.c.l.b16 %v306
  %v1025 = vunpack.c.h.b16 %v306
  %v1026 = vunpack.c.l.b16 %v307
  %v1027 = vunpack.c.h.b16 %v307
  %v1028 = vunpack.c.l.b16 %v308
  %v1029 = vunpack.c.h.b16 %v308
  %v1030 = vunpack.c.l.b16 %v309
  %v1031 = vunpack.c.h.b16 %v309
  %v1032 = vunpack.c.l.b16 %v310
  %v1033 = vunpack.c.h.b16 %v310
  %v1034 = vunpack.c.l.b16 %v311
  %v1035 = vunpack.c.h.b16 %v311
  %v1036 = vunpack.c.l.b16 %v312
  %v1037 = vunpack.c.h.b16 %v312
  %v1038 = vunpack.c.l.b16 %v313
  %v1039 = vunpack.c.h.b16 %v313
  %v1040 = vunpack.c.l.b16 %v314
  %v1041 = vunpack.c.h.b16 %v314
  %v1042 = vunpack.c.l.b16 %v315
  %v1043 = vunpack.c.h.b16 %v315
  %v1044 = vunpack.c.l.b16 %v316
  %v1045 = vunpack.c.h.b16 %v316
  %v1046 = vunpack.c.l.b16 %v317
  %v1047 = vunpack.c.h.b16 %v317
  %v1048 = vunpack.c.l.b16 %v318
  %v1049 = vunpack.c.h.b16 %v318
  %v1050 = vunpack.c.l.b16 %v319
  %v1051 = vunpack.c.h.b16 %v319
  %v1052 = vunpack.c.l.b16 %v320
  %v1053 = vunpack.c.h.b16 %v320
  %v1054 = vunpack.c.l.b16 %v321
  %v1055 = vunpack.c.h.b16 %v321
  %v1056 = vunpack.c.l.b16 %v322
  %v1057 = vunpack.c.h.b16 %v322
  %v1058 = vunpack.c.l.b16 %v323
  %v1059 = vunpack.c.h.b16 %v323
  %v1060 = vunpack.c.l.b16 %v324
  %v1061 = vunpack.c.h.b16 %v324
  %v1062 = vunpack.c.l.b16 %v325
  %v1063 = vunpack.c.h.b16 %v325
  %v1064 = vunpack.c.l.b16 %v326
  %v1065 = vunpack.c.h.b16 %v326
  %v1066 = vunpack.c.l.b16 %v327
  %v1067 = vunpack.c.h.b16 %v327
  %v1068 = vunpack.c.l.b16 %v328
  %v1069 = vunpack.c.h.b16 %v328
  %v1070 = vunpack.c.l.b16 %v329
  %v1071 = vunpack.c.h.b16 %v329
  %v1072 = vunpack.c.l.b16 %v330
  %v1073 = vunpack.c.h.b16 %v330
  %v1074 = vunpack.c.l.b16 %v331
  %v1075 = vunpack.c.h.b16 %v331
  %v1076 = vunpack.c.l.b16 %v332
  %v1077 = vunpack.c.h.b16 %v332
  %v1078 = vunpack.c.l.b16 %v333
  %v1079 = vunpack.c.h.b16 %v333
  %v1080 = vunpack.c.l.b16 %v334
  %v1081 = vunpack.c.h.b16 %v334
  %v1082 = vunpack.c.l.b16 %v335
  %v1083 = vunpack.c.h.b16 %v335
  %v1084 = vunpack.c.l.b16 %v336
  %v1085 = vunpack.c.h.b16 %v336
  %v1086 = vunpack.c.l.b16 %v337
  %v1087 = vunpack.c.h.b16 %v337
  %v1088 = vunpack.c.l.b16 %v338
  %v1089 = vunpack.c.h.b16 %v338
  %v1090 = vunpack.c.l.b16 %v339
  %v1091 = vunpack.c.h.b16 %v339
  %v1092 = vunpack.c.l.b16 %v340
  %v1093 = vunpack.c.h.b16 %v340
  %v1094 = vunpack.c.l.b16 %v341
  %v1095 = vunpack.c.h.b16 %v341
  %v1096 = vunpack.c.l.b16 %v342
  %v1097 = vunpack.c.h.b16 %v342
  %v1098 = vunpack.c.l.b16 %v343
  %v1099 = vunpack.c.h.b16 %v343
  %v1100 = vunpack.c.l.b16 %v344
  %v1101 = vunpack.c.h.b16 %v344
  %v1102 = vunpack.c.l.b16 %v345
  %v1103 = vunpack.c.h.b16 %v345
  %v1104 = vunpack.c.l.b16 %v346
  %v1105 = vunpack.c.h.b16 %v346
  %v1106 = vunpack.c.l.b16 %v347
  %v1107 = vunpack.c.h.b16 %v347
  %v1108 = vunpack.c.l.b16 %v348
  %v1109 = vunpack.c.h.b16 %v348
  %v1110 = vunpack.c.l.b16 %v349
  %v1111 = vunpack.c.h.b16 %v349
  %v1112 = vunpack.c.l.b16 %v350
  %v1113 = vunpack.c.h.b16 %v350
  %v1114 = vunpack.c.l.b16 %v351
  %v1115 = vunpack.c.h.b16 %v351
  %v1116 = vunpack.c.l.b16 %v352
  %v1117 = vunpack.c.h.b16 %v352
  %v1118 = vunpack.c.l.b16 %v353
  %v1119 = vunpack.c.h.b16 %v353
  %v1120 = vunpack.c.l.b16 %v354
  %v1121 = vunpack.c.h.b16 %v354
  %v1122 = vunpack.c.l.b16 %v355
  %v1123 = vunpack.c.h.b16 %v355
  %v1124 = vunpack.c.l.b16 %v356
  %v1125 = vunpack.c.h.b16 %v356
  %v1126 = vunpack.c.l.b16 %v357
  %v1127 = vunpack.c.h.b16 %v357
  %v1128 = vunpack.c.l.b16 %v358
  %v1129 = vunpack.c.h.b16 %v358
  %v1130 = vunpack.c.l.b16 %v359
  %v1131 = vunpack.c.h.b16 %v359
  %v1132 = vunpack.c.l.b16 %v360
  %v1133 = vunpack.c.h.b16 %v360
  %v1134 = vunpack.c.l.b16 %v361
  %v1135 = vunpack.c.h.b16 %v361
  %v1136 = vunpack.c.l.b16 %v362
  %v1137 = vunpack.c.h.b16 %v362
  %v1138 = vunpack.c.l.b16 %v363
  %v1139 = vunpack.c.h.b16 %v363
  %v1140 = vunpack.c.l.b16 %v364
  %v1141 = vunpack.c.h.b16 %v364
  %v1142 = vunpack.c.l.b16 %v365
  %v1143 = vunpack.c.h.b16 %v365
  %v1144 = vunpack.c.l.b16 %v366
  %v1145 = vunpack.c.h.b16 %v366
  %v1146 = vunpack.c.l.b16 %v367
  %v1147 = vunpack.c.h.b16 %v367
  %v1148 = vunpack.c.l.b16 %v368
  %v1149 = vunpack.c.h.b16 %v368
  %v1150 = vunpack.c.l.b16 %v369
  %v1151 = vunpack.c.h.b16 %v369
  %v1152 = vunpack.c.l.b16 %v370
  %v1153 = vunpack.c.h.b16 %v370
  %v1154 = vunpack.c.l.b16 %v371
  %v1155 = vunpack.c.h.b16 %v371
  %v1156 = vunpack.c.l.b16 %v372
  %v1157 = vunpack.c.h.b16 %v372
  %v1158 = vunpack.c.l.b16 %v373
  %v1159 = vunpack.c.h.b16 %v373
  %v1160 = vpack.c.b16 %v656, %v648
  %v1161 = vpack.c.b16 %v657, %v649
  %v1162 = vpack.c.b16 %v658, %v650
  %v1163 = vpack.c.b16 %v659, %v651
  %v1164 = vpack.c.b16 %v660, %v652
  %v1165 = vpack.c.b16 %v661, %v653
  %v1166 = vpack.c.b16 %v662, %v654
  %v1167 = vpack.c.b16 %v663, %v655
  %v1168 = vpack.c.b16 %v672, %v664
  %v1169 = vpack.c.b16 %v673, %v665
  %v1170 = vpack.c.b16 %v674, %v666
  %v1171 = vpack.c.b16 %v675, %v667
  %v1172 = vpack.c.b16 %v676, %v668
  %v1173 = vpack.c.b16 %v677, %v669
  %v1174 = vpack.c.b16 %v678, %v670
  %v1175 = vpack.c.b16 %v679, %v671
  %v1176 = vpack.c.b16 %v688, %v680
  %v1177 = vpack.c.b16 %v689, %v681
  %v1178 = vpack.c.b16 %v690, %v682
  %v1179 = vpack.c.b16 %v691, %v683
  %v1180 = vpack.c.b16 %v692, %v684
  %v1181 = vpack.c.b16 %v693, %v685
  %v1182 = vpack.c.b16 %v694, %v686
  %v1183 = vpack.c.b16 %v695, %v687
  %v1184 = vpack.c.b16 %v704, %v696
  %v1185 = vpack.c.b16 %v705, %v697
  %v1186 = vpack.c.b16 %v706, %v698
  %v1187 = vpack.c.b16 %v707, %v699
  %v1188 = vpack.c.b16 %v708, %v700
  %v1189 = vpack.c.b16 %v709, %v701
  %v1190 = vpack.c.b16 %v710, %v702
  %v1191 = vpack.c.b16 %v711, %v703
  %v1192 = vpack.c.b16 %v720, %v712
  %v1193 = vpack.c.b16 %v721, %v713
  %v1194 = vpack.c.b16 %v722, %v714
  %v1195 = vpack.c.b16 %v723, %v715
  %v1196 = vpack.c.b16 %v724, %v716
  %v1197 = vpack.c.b16 %v725, %v717
  %v1198 = vpack.c.b16 %v726, %v718
  %v1199 = vpack.c.b16 %v727, %v719
  %v1200 = vpack.c.b16 %v736, %v728
  %v1201 = vpack.c.b16 %v737, %v729
  %v1202 = vpack.c.b16 %v738, %v730
  %v1203 = vpack.c.b16 %v739, %v731
  %v1204 = vpack.c.b16 %v740, %v732
  %v1205 = vpack.c.b16 %v741, %v733
  %v1206 = vpack.c.b16 %v742, %v734
  %v1207 = vpack.c.b16 %v743, %v735
  %v1208 = vpack.c.b16 %v752, %v744
  %v1209 = vpack.c.b16 %v753, %v745
  %v1210 = vpack.c.b16 %v754, %v746
  %v1211 = vpack.c.b16 %v755, %v747
  %v1212 = vpack.c.b16 %v756, %v748
  %v1213 = vpack.c.b16 %v757, %v749
  %v1214 = vpack.c.b16 %v758, %v750
  %v1215 = vpack.c.b16 %v759, %v751
  %v1216 = vpack.c.b16 %v768, %v760
  %v1217 = vpack.c.b16 %v769, %v761
  %v1218 = vpack.c.b16 %v770, %v762
  %v1219 = vpack.c.b16 %v771, %v763
  %v1220 = vpack.c.b16 %v772, %v764
  %v1221 = vpack.c.b16 %v773, %v765
  %v1222 = vpack.c.b16 %v774, %v766
  %v1223 = vpack.c.b16 %v775, %v767
  %v1224 = vpack.c.b16 %v784, %v776
  %v1225 = vpack.c.b16 %v785, %v777
  %v1226 = vpack.c.b16 %v786, %v778
  %v1227 = vpack.c.b16 %v787, %v779
  %v1228 = vpack.c.b16 %v788, %v780
  %v1229 = vpack.c.b16 %v789, %v781
  %v1230 = vpack.c.b16 %v790, %v782
  %v1231 = vpack.c.b16 %v791, %v783
  %v1232 = vpack.c.b16 %v800, %v792
  %v1233 = vpack.c.b16 %v801, %v793
  %v1234 = vpack.c.b16 %v802, %v794
  %v1235 = vpack.c.b16 %v803, %v795
  %v1236 = vpack.c.b16 %v804, %v796
  %v1237 = vpack.c.b16 %v805, %v797
  %v1238 = vpack.c.b16 %v806, %v798
  %v1239 = vpack.c.b16 %v807, %v799
  %v1240 = vpack.c.b16 %v816, %v808
  %v1241 = vpack.c.b16 %v817, %v809
  %v1242 = vpack.c.b16 %v818, %v810
  %v1243 = vpack.c.b16 %v819, %v811
  %v1244 = vpack.c.b16 %v820, %v812
  %v1245 = vpack.c.b16 %v821, %v813
  %v1246 = vpack.c.b16 %v822, %v814
  %v1247 = vpack.c.b16 %v823, %v815
  %v1248 = vpack.c.b16 %v832, %v824
  %v1249 = vpack.c.b16 %v833, %v825
  %v1250 = vpack.c.b16 %v834, %v826
  %v1251 = vpack.c.b16 %v835, %v827
  %v1252 = vpack.c.b16 %v836, %v828
  %v1253 = vpack.c.b16 %v837, %v829
  %v1254 = vpack.c.b16 %v838, %v830
  %v1255 = vpack.c.b16 %v839, %v831
  %v1256 = vpack.c.b16 %v848, %v840
  %v1257 = vpack.c.b16 %v849, %v841
  %v1258 = vpack.c.b16 %v850, %v842
  %v1259 = vpack.c.b16 %v851, %v843
  %v1260 = vpack.c.b16 %v852, %v844
  %v1261 = vpack.c.b16 %v853, %v845
  %v1262 = vpack.c.b16 %v854, %v846
  %v1263 = vpack.c.b16 %v855, %v847
  %v1264 = vpack.c.b16 %v864, %v856
  %v1265 = vpack.c.b16 %v865, %v857
  %v1266 = vpack.c.b16 %v866, %v858
  %v1267 = vpack.c.b16 %v867, %v859
  %v1268 = vpack.c.b16 %v868, %v860
  %v1269 = vpack.c.b16 %v869, %v861
  %v1270 = vpack.c.b16 %v870, %v862
  %v1271 = vpack.c.b16 %v871, %v863
  %v1272 = vpack.c.b16 %v880, %v872
  %v1273 = vpack.c.b16 %v881, %v873
  %v1274 = vpack.c.b16 %v882, %v874
  %v1275 = vpack.c.b16 %v883, %v875
  %v1276 = vpack.c.b16 %v884, %v876
  %v1277 = vpack.c.b16 %v885, %v877
  %v1278 = vpack.c.b16 %v886, %v878
  %v1279 = vpack.c.b16 %v887, %v879
  %v1280 = vpack.c.b16 %v896, %v888
  %v1281 = vpack.c.b16 %v897, %v889
  %v1282 = vpack.c.b16 %v898, %v890
  %v1283 = vpack.c.b16 %v899, %v891
  %v1284 = vpack.c.b16 %v900, %v892
  %v1285 = vpack.c.b16 %v901, %v893
  %v1286 = vpack.c.b16 %v902, %v894
  %v1287 = vpack.c.b16 %v903, %v895
  %v1288 = vpack.c.b16 %v912, %v904
  %v1289 = vpack.c.b16 %v913, %v905
  %v1290 = vpack.c.b16 %v914, %v906
  %v1291 = vpack.c.b16 %v915, %v907
  %v1292 = vpack.c.b16 %v916, %v908
  %v1293 = vpack.c.b16 %v917, %v909
  %v1294 = vpack.c.b16 %v918, %v910
  %v1295 = vpack.c.b16 %v919, %v911
  %v1296 = vpack.c.b16 %v928, %v920
  %v1297 = vpack.c.b16 %v929, %v921
  %v1298 = vpack.c.b16 %v930, %v922
  %v1299 = vpack.c.b16 %v931, %v923
  %v1300 = vpack.c.b16 %v932, %v924
  %v1301 = vpack.c.b16 %v933, %v925
  %v1302 = vpack.c.b16 %v934, %v926
  %v1303 = vpack.c.b16 %v935, %v927
  %v1304 = vpack.c.b16 %v944, %v936
  %v1305 = vpack.c.b16 %v945, %v937
  %v1306 = vpack.c.b16 %v946, %v938
  %v1307 = vpack.c.b16 %v947, %v939
  %v1308 = vpack.c.b16 %v948, %v940
  %v1309 = vpack.c.b16 %v949, %v941
  %v1310 = vpack.c.b16 %v950, %v942
  %v1311 = vpack.c.b16 %v951, %v943
  %v1312 = vpack.c.b16 %v960, %v952
  %v1313 = vpack.c.b16 %v961, %v953
  %v1314 = vpack.c.b16 %v962, %v954
  %v1315 = vpack.c.b16 %v963, %v955
  %v1316 = vpack.c.b16 %v964, %v956
  %v1317 = vpack.c.b16 %v965, %v957
  %v1318 = vpack.c.b16 %v966, %v958
  %v1319 = vpack.c.b16 %v967, %v959
  %v1320 = vpack.c.b16 %v976, %v968
  %v1321 = vpack.c.b16 %v977, %v969
  %v1322 = vpack.c.b16 %v978, %v970
  %v1323 = vpack.c.b16 %v979, %v971
  %v1324 = vpack.c.b16 %v980, %v972
  %v1325 = vpack.c.b16 %v981, %v973
  %v1326 = vpack.c.b16 %v982, %v974
  %v1327 = vpack.c.b16 %v983, %v975
  %v1328 = vpack.c.b16 %v992, %v984
  %v1329 = vpack.c.b16 %v993, %v985
  %v1330 = vpack.c.b16 %v994, %v986
  %v1331 = vpack.c.b16 %v995, %v987
  %v1332 = vpack.c.b16 %v996, %v988
  %v1333 = vpack.c.b16 %v997, %v989
  %v1334 = vpack.c.b16 %v998, %v990
  %v1335 = vpack.c.b16 %v999, %v991
  %v1336 = vpack.c.b16 %v1008, %v1000
  %v1337 = vpack.c.b16 %v1009, %v1001
  %v1338 = vpack.c.b16 %v1010, %v1002
  %v1339 = vpack.c.b16 %v1011, %v1003
  %v1340 = vpack.c.b16 %v1012, %v1004
  %v1341 = vpack.c.b16 %v1013, %v1005
  %v1342 = vpack.c.b16 %v1014, %v1006
  %v1343 = vpack.c.b16 %v1015, %v1007
  %v1344 = vpack.c.b16 %v1024, %v1016
  %v1345 = vpack.c.b16 %v1025, %v1017
  %v1346 = vpack.c.b16 %v1026, %v1018
  %v1347 = vpack.c.b16 %v1027, %v1019
  %v1348 = vpack.c.b16 %v1028, %v1020
  %v1349 = vpack.c.b16 %v1029, %v1021
  %v1350 = vpack.c.b16 %v1030, %v1022
  %v1351 = vpack.c.b16 %v1031, %v1023
  %v1352 = vpack.c.b16 %v1040, %v1032
  %v1353 = vpack.c.b16 %v1041, %v1033
  %v1354 = vpack.c.b16 %v1042, %v1034
  %v1355 = vpack.c.b16 %v1043, %v1035
  %v1356 = vpack.c.b16 %v1044, %v1036
  %v1357 = vpack.c.b16 %v1045, %v1037
  %v1358 = vpack.c.b16 %v1046, %v1038
  %v1359 = vpack.c.b16 %v1047, %v1039
  %v1360 = vpack.c.b16 %v1056, %v1048
  %v1361 = vpack.c.b16 %v1057, %v1049
  %v1362 = vpack.c.b16 %v1058, %v1050
  %v1363 = vpack.c.b16 %v1059, %v1051
  %v1364 = vpack.c.b16 %v1060, %v1052
  %v1365 = vpack.c.b16 %v1061, %v1053
  %v1366 = vpack.c.b16 %v1062, %v1054
  %v1367 = vpack.c.b16 %v1063, %v1055
  %v1368 = vpack.c.b16 %v1072, %v1064
  %v1369 = vpack.c.b16 %v1073, %v1065
  %v1370 = vpack.c.b16 %v1074, %v1066
  %v1371 = vpack.c.b16 %v1075, %v1067
  %v1372 = vpack.c.b16 %v1076, %v1068
  %v1373 = vpack.c.b16 %v1077, %v1069
  %v1374 = vpack.c.b16 %v1078, %v1070
  %v1375 = vpack.c.b16 %v1079, %v1071
  %v1376 = vpack.c.b16 %v1088, %v1080
  %v1377 = vpack.c.b16 %v1089, %v1081
  %v1378 = vpack.c.b16 %v1090, %v1082
  %v1379 = vpack.c.b16 %v1091, %v1083
  %v1380 = vpack.c.b16 %v1092, %v1084
  %v1381 = vpack.c.b16 %v1093, %v1085
  %v1382 = vpack.c.b16 %v1094, %v1086
  %v1383 = vpack.c.b16 %v1095, %v1087
  %v1384 = vpack.c.b16 %v1104, %v1096
  %v1385 = vpack.c.b16 %v1105, %v1097
  %v1386 = vpack.c.b16 %v1106, %v1098
  %v1387 = vpack.c.b16 %v1107, %v1099
  %v1388 = vpack.c.b16 %v1108, %v1100
  %v1389 = vpack.c.b16 %v1109, %v1101
  %v1390 = vpack.c.b16 %v1110, %v1102
  %v1391 = vpack.c.b16 %v1111, %v1103
  %v1392 = vpack.c.b16 %v1120, %v1112
  %v1393 = vpack.c.b16 %v1121, %v1113
  %v1394 = vpack.c.b16 %v1122, %v1114
  %v1395 = vpack.c.b16 %v1123, %v1115
  %v1396 = vpack.c.b16 %v1124, %v1116
  %v1397 = vpack.c.b16 %v1125, %v1117
  %v1398 = vpack.c.b16 %v1126, %v1118
  %v1399 = vpack.c.b16 %v1127, %v1119
  %v1400 = vpack.c.b16 %v1136, %v1128
  %v1401 = vpack.c.b16 %v1137, %v1129
  %v1402 = vpack.c.b16 %v1138, %v1130
  %v1403 = vpack.c.b16 %v1139, %v1131
  %v1404 = vpack.c.b16 %v1140, %v1132
  %v1405 = vpack.c.b16 %v1141, %v1133
  %v1406 = vpack.c.b16 %v1142, %v1134
  %v1407 = vpack.c.b16 %v1143, %v1135
  %v1408 = vpack.c.b16 %v1152, %v1144
  %v1409 = vpack.c.b16 %v1153, %v1145
  %v1410 = vpack.c.b16 %v1154, %v1146
  %v1411 = vpack.c.b16 %v1155, %v1147
  %v1412 = vpack.c.b16 %v1156, %v1148
  %v1413 = vpack.c.b16 %v1157, %v1149
  %v1414 = vpack.c.b16 %v1158, %v1150
  %v1415 = vpack.c.b16 %v1159, %v1151
  %1672 = vmatpush.bf16.msra.mxu0 %v1216
  %1673 = vmatpush.bf16.msra.mxu0 %v1208
  %1674 = vmatpush.bf16.msra.mxu0 %v1200
  %1675 = vmatpush.bf16.msra.mxu0 %v1192
  %1676 = vmatpush.bf16.msra.mxu0 %v1184
  %1677 = vmatpush.bf16.msra.mxu0 %v1176
  %1678 = vmatpush.bf16.msra.mxu0 %v1168
  %1679 = vmatpush.bf16.msra.mxu0 %v1160
  %1680 = vmatmul.bf16.gmra.mxu0 %v110
  %v1681 = vpop.f32.mrf.mxu0
  %v1682 = vadd.f32 %v376, %v1681
  %v1683 = vpop.f32.mrf.mxu0
  %v1684 = vadd.f32 %v376, %v1683
  %1685 = vmatmul.bf16.gmra.mxu0 %v114
  %v1686 = vpop.f32.mrf.mxu0
  %v1687 = vadd.f32 %v376, %v1686
  %v1688 = vpop.f32.mrf.mxu0
  %v1689 = vadd.f32 %v376, %v1688
  %1690 = vdwg.mxu0
  %1691 = vmatpush.bf16.msra.mxu0 %v1280
  %1692 = vmatpush.bf16.msra.mxu0 %v1272
  %1693 = vmatpush.bf16.msra.mxu0 %v1264
  %1694 = vmatpush.bf16.msra.mxu0 %v1256
  %1695 = vmatpush.bf16.msra.mxu0 %v1248
  %1696 = vmatpush.bf16.msra.mxu0 %v1240
  %1697 = vmatpush.bf16.msra.mxu0 %v1232
  %1698 = vmatpush.bf16.msra.mxu0 %v1224
  %1699 = vmatmul.bf16.gmra.mxu0 %v111
  %v1700 = vpop.f32.mrf.mxu0
  %v1701 = vadd.f32 %v1682, %v1700
  %v1702 = vpop.f32.mrf.mxu0
  %v1703 = vadd.f32 %v1684, %v1702
  %1704 = vmatmul.bf16.gmra.mxu0 %v115
  %v1705 = vpop.f32.mrf.mxu0
  %v1706 = vadd.f32 %v1687, %v1705
  %v1707 = vpop.f32.mrf.mxu0
  %v1708 = vadd.f32 %v1689, %v1707
  %1709 = vdwg.mxu0
  %1710 = vmatpush.bf16.msra.mxu0 %v1344
  %1711 = vmatpush.bf16.msra.mxu0 %v1336
  %1712 = vmatpush.bf16.msra.mxu0 %v1328
  %1713 = vmatpush.bf16.msra.mxu0 %v1320
  %1714 = vmatpush.bf16.msra.mxu0 %v1312
  %1715 = vmatpush.bf16.msra.mxu0 %v1304
  %1716 = vmatpush.bf16.msra.mxu0 %v1296
  %1717 = vmatpush.bf16.msra.mxu0 %v1288
  %1718 = vmatmul.bf16.gmra.mxu0 %v112
  %v1719 = vpop.f32.mrf.mxu0
  %v1720 = vadd.f32 %v1701, %v1719
  %v1721 = vpop.f32.mrf.mxu0
  %v1722 = vadd.f32 %v1703, %v1721
  %1723 = vmatmul.bf16.gmra.mxu0 %v116
  %v1724 = vpop.f32.mrf.mxu0
  %v1725 = vadd.f32 %v1706, %v1724
  %v1726 = vpop.f32.mrf.mxu0
  %v1727 = vadd.f32 %v1708, %v1726
  %1728 = vdwg.mxu0
  %1729 = vmatpush.bf16.msra.mxu0 %v1408
  %1730 = vmatpush.bf16.msra.mxu0 %v1400
  %1731 = vmatpush.bf16.msra.mxu0 %v1392
  %1732 = vmatpush.bf16.msra.mxu0 %v1384
  %1733 = vmatpush.bf16.msra.mxu0 %v1376
  %1734 = vmatpush.bf16.msra.mxu0 %v1368
  %1735 = vmatpush.bf16.msra.mxu0 %v1360
  %1736 = vmatpush.bf16.msra.mxu0 %v1352
  %1737 = vmatmul.bf16.gmra.mxu0 %v113
  %v1738 = vpop.f32.mrf.mxu0
  %v1739 = vadd.f32 %v1720, %v1738
  %v1740 = vpop.f32.mrf.mxu0
  %v1741 = vadd.f32 %v1722, %v1740
  %1742 = vmatmul.bf16.gmra.mxu0 %v117
  %v1743 = vpop.f32.mrf.mxu0
  %v1744 = vadd.f32 %v1725, %v1743
  %v1745 = vpop.f32.mrf.mxu0
  %v1746 = vadd.f32 %v1727, %v1745
  %1747 = vdwg.mxu0
  %1748 = vmatpush.bf16.msra.mxu0 %v1217
  %1749 = vmatpush.bf16.msra.mxu0 %v1209
  %1750 = vmatpush.bf16.msra.mxu0 %v1201
  %1751 = vmatpush.bf16.msra.mxu0 %v1193
  %1752 = vmatpush.bf16.msra.mxu0 %v1185
  %1753 = vmatpush.bf16.msra.mxu0 %v1177
  %1754 = vmatpush.bf16.msra.mxu0 %v1169
  %1755 = vmatpush.bf16.msra.mxu0 %v1161
  %1756 = vmatmul.bf16.gmra.mxu0 %v110
  %v1757 = vpop.f32.mrf.mxu0
  %v1758 = vadd.f32 %v377, %v1757
  %v1759 = vpop.f32.mrf.mxu0
  %v1760 = vadd.f32 %v377, %v1759
  %1761 = vmatmul.bf16.gmra.mxu0 %v114
  %v1762 = vpop.f32.mrf.mxu0
  %v1763 = vadd.f32 %v377, %v1762
  %v1764 = vpop.f32.mrf.mxu0
  %v1765 = vadd.f32 %v377, %v1764
  %1766 = vdwg.mxu0
  %1767 = vmatpush.bf16.msra.mxu0 %v1281
  %1768 = vmatpush.bf16.msra.mxu0 %v1273
  %1769 = vmatpush.bf16.msra.mxu0 %v1265
  %1770 = vmatpush.bf16.msra.mxu0 %v1257
  %1771 = vmatpush.bf16.msra.mxu0 %v1249
  %1772 = vmatpush.bf16.msra.mxu0 %v1241
  %1773 = vmatpush.bf16.msra.mxu0 %v1233
  %1774 = vmatpush.bf16.msra.mxu0 %v1225
  %1775 = vmatmul.bf16.gmra.mxu0 %v111
  %v1776 = vpop.f32.mrf.mxu0
  %v1777 = vadd.f32 %v1758, %v1776
  %v1778 = vpop.f32.mrf.mxu0
  %v1779 = vadd.f32 %v1760, %v1778
  %1780 = vmatmul.bf16.gmra.mxu0 %v115
  %v1781 = vpop.f32.mrf.mxu0
  %v1782 = vadd.f32 %v1763, %v1781
  %v1783 = vpop.f32.mrf.mxu0
  %v1784 = vadd.f32 %v1765, %v1783
  %1785 = vdwg.mxu0
  %1786 = vmatpush.bf16.msra.mxu0 %v1345
  %1787 = vmatpush.bf16.msra.mxu0 %v1337
  %1788 = vmatpush.bf16.msra.mxu0 %v1329
  %1789 = vmatpush.bf16.msra.mxu0 %v1321
  %1790 = vmatpush.bf16.msra.mxu0 %v1313
  %1791 = vmatpush.bf16.msra.mxu0 %v1305
  %1792 = vmatpush.bf16.msra.mxu0 %v1297
  %1793 = vmatpush.bf16.msra.mxu0 %v1289
  %1794 = vmatmul.bf16.gmra.mxu0 %v112
  %v1795 = vpop.f32.mrf.mxu0
  %v1796 = vadd.f32 %v1777, %v1795
  %v1797 = vpop.f32.mrf.mxu0
  %v1798 = vadd.f32 %v1779, %v1797
  %1799 = vmatmul.bf16.gmra.mxu0 %v116
  %v1800 = vpop.f32.mrf.mxu0
  %v1801 = vadd.f32 %v1782, %v1800
  %v1802 = vpop.f32.mrf.mxu0
  %v1803 = vadd.f32 %v1784, %v1802
  %1804 = vdwg.mxu0
  %1805 = vmatpush.bf16.msra.mxu0 %v1409
  %1806 = vmatpush.bf16.msra.mxu0 %v1401
  %1807 = vmatpush.bf16.msra.mxu0 %v1393
  %1808 = vmatpush.bf16.msra.mxu0 %v1385
  %1809 = vmatpush.bf16.msra.mxu0 %v1377
  %1810 = vmatpush.bf16.msra.mxu0 %v1369
  %1811 = vmatpush.bf16.msra.mxu0 %v1361
  %1812 = vmatpush.bf16.msra.mxu0 %v1353
  %1813 = vmatmul.bf16.gmra.mxu0 %v113
  %v1814 = vpop.f32.mrf.mxu0
  %v1815 = vadd.f32 %v1796, %v1814
  %v1816 = vpop.f32.mrf.mxu0
  %v1817 = vadd.f32 %v1798, %v1816
  %1818 = vmatmul.bf16.gmra.mxu0 %v117
  %v1819 = vpop.f32.mrf.mxu0
  %v1820 = vadd.f32 %v1801, %v1819
  %v1821 = vpop.f32.mrf.mxu0
  %v1822 = vadd.f32 %v1803, %v1821
  %1823 = vdwg.mxu0
  %1824 = vmatpush.bf16.msra.mxu0 %v1218
  %1825 = vmatpush.bf16.msra.mxu0 %v1210
  %1826 = vmatpush.bf16.msra.mxu0 %v1202
  %1827 = vmatpush.bf16.msra.mxu0 %v1194
  %1828 = vmatpush.bf16.msra.mxu0 %v1186
  %1829 = vmatpush.bf16.msra.mxu0 %v1178
  %1830 = vmatpush.bf16.msra.mxu0 %v1170
  %1831 = vmatpush.bf16.msra.mxu0 %v1162
  %1832 = vmatmul.bf16.gmra.mxu0 %v110
  %v1833 = vpop.f32.mrf.mxu0
  %v1834 = vadd.f32 %v378, %v1833
  %v1835 = vpop.f32.mrf.mxu0
  %v1836 = vadd.f32 %v378, %v1835
  %1837 = vmatmul.bf16.gmra.mxu0 %v114
  %v1838 = vpop.f32.mrf.mxu0
  %v1839 = vadd.f32 %v378, %v1838
  %v1840 = vpop.f32.mrf.mxu0
  %v1841 = vadd.f32 %v378, %v1840
  %1842 = vdwg.mxu0
  %1843 = vmatpush.bf16.msra.mxu0 %v1282
  %1844 = vmatpush.bf16.msra.mxu0 %v1274
  %1845 = vmatpush.bf16.msra.mxu0 %v1266
  %1846 = vmatpush.bf16.msra.mxu0 %v1258
  %1847 = vmatpush.bf16.msra.mxu0 %v1250
  %1848 = vmatpush.bf16.msra.mxu0 %v1242
  %1849 = vmatpush.bf16.msra.mxu0 %v1234
  %1850 = vmatpush.bf16.msra.mxu0 %v1226
  %1851 = vmatmul.bf16.gmra.mxu0 %v111
  %v1852 = vpop.f32.mrf.mxu0
  %v1853 = vadd.f32 %v1834, %v1852
  %v1854 = vpop.f32.mrf.mxu0
  %v1855 = vadd.f32 %v1836, %v1854
  %1856 = vmatmul.bf16.gmra.mxu0 %v115
  %v1857 = vpop.f32.mrf.mxu0
  %v1858 = vadd.f32 %v1839, %v1857
  %v1859 = vpop.f32.mrf.mxu0
  %v1860 = vadd.f32 %v1841, %v1859
  %1861 = vdwg.mxu0
  %1862 = vmatpush.bf16.msra.mxu0 %v1346
  %1863 = vmatpush.bf16.msra.mxu0 %v1338
  %1864 = vmatpush.bf16.msra.mxu0 %v1330
  %1865 = vmatpush.bf16.msra.mxu0 %v1322
  %1866 = vmatpush.bf16.msra.mxu0 %v1314
  %1867 = vmatpush.bf16.msra.mxu0 %v1306
  %1868 = vmatpush.bf16.msra.mxu0 %v1298
  %1869 = vmatpush.bf16.msra.mxu0 %v1290
  %1870 = vmatmul.bf16.gmra.mxu0 %v112
  %v1871 = vpop.f32.mrf.mxu0
  %v1872 = vadd.f32 %v1853, %v1871
  %v1873 = vpop.f32.mrf.mxu0
  %v1874 = vadd.f32 %v1855, %v1873
  %1875 = vmatmul.bf16.gmra.mxu0 %v116
  %v1876 = vpop.f32.mrf.mxu0
  %v1877 = vadd.f32 %v1858, %v1876
  %v1878 = vpop.f32.mrf.mxu0
  %v1879 = vadd.f32 %v1860, %v1878
  %1880 = vdwg.mxu0
  %1881 = vmatpush.bf16.msra.mxu0 %v1410
  %1882 = vmatpush.bf16.msra.mxu0 %v1402
  %1883 = vmatpush.bf16.msra.mxu0 %v1394
  %1884 = vmatpush.bf16.msra.mxu0 %v1386
  %1885 = vmatpush.bf16.msra.mxu0 %v1378
  %1886 = vmatpush.bf16.msra.mxu0 %v1370
  %1887 = vmatpush.bf16.msra.mxu0 %v1362
  %1888 = vmatpush.bf16.msra.mxu0 %v1354
  %1889 = vmatmul.bf16.gmra.mxu0 %v113
  %v1890 = vpop.f32.mrf.mxu0
  %v1891 = vadd.f32 %v1872, %v1890
  %v1892 = vpop.f32.mrf.mxu0
  %v1893 = vadd.f32 %v1874, %v1892
  %1894 = vmatmul.bf16.gmra.mxu0 %v117
  %v1895 = vpop.f32.mrf.mxu0
  %v1896 = vadd.f32 %v1877, %v1895
  %v1897 = vpop.f32.mrf.mxu0
  %v1898 = vadd.f32 %v1879, %v1897
  %1899 = vdwg.mxu0
  %1900 = vmatpush.bf16.msra.mxu0 %v1219
  %1901 = vmatpush.bf16.msra.mxu0 %v1211
  %1902 = vmatpush.bf16.msra.mxu0 %v1203
  %1903 = vmatpush.bf16.msra.mxu0 %v1195
  %1904 = vmatpush.bf16.msra.mxu0 %v1187
  %1905 = vmatpush.bf16.msra.mxu0 %v1179
  %1906 = vmatpush.bf16.msra.mxu0 %v1171
  %1907 = vmatpush.bf16.msra.mxu0 %v1163
  %1908 = vmatmul.bf16.gmra.mxu0 %v110
  %v1909 = vpop.f32.mrf.mxu0
  %v1910 = vadd.f32 %v379, %v1909
  %v1911 = vpop.f32.mrf.mxu0
  %v1912 = vadd.f32 %v379, %v1911
  %1913 = vmatmul.bf16.gmra.mxu0 %v114
  %v1914 = vpop.f32.mrf.mxu0
  %v1915 = vadd.f32 %v379, %v1914
  %v1916 = vpop.f32.mrf.mxu0
  %v1917 = vadd.f32 %v379, %v1916
  %1918 = vdwg.mxu0
  %1919 = vmatpush.bf16.msra.mxu0 %v1283
  %1920 = vmatpush.bf16.msra.mxu0 %v1275
  %1921 = vmatpush.bf16.msra.mxu0 %v1267
  %1922 = vmatpush.bf16.msra.mxu0 %v1259
  %1923 = vmatpush.bf16.msra.mxu0 %v1251
  %1924 = vmatpush.bf16.msra.mxu0 %v1243
  %1925 = vmatpush.bf16.msra.mxu0 %v1235
  %1926 = vmatpush.bf16.msra.mxu0 %v1227
  %1927 = vmatmul.bf16.gmra.mxu0 %v111
  %v1928 = vpop.f32.mrf.mxu0
  %v1929 = vadd.f32 %v1910, %v1928
  %v1930 = vpop.f32.mrf.mxu0
  %v1931 = vadd.f32 %v1912, %v1930
  %1932 = vmatmul.bf16.gmra.mxu0 %v115
  %v1933 = vpop.f32.mrf.mxu0
  %v1934 = vadd.f32 %v1915, %v1933
  %v1935 = vpop.f32.mrf.mxu0
  %v1936 = vadd.f32 %v1917, %v1935
  %1937 = vdwg.mxu0
  %1938 = vmatpush.bf16.msra.mxu0 %v1347
  %1939 = vmatpush.bf16.msra.mxu0 %v1339
  %1940 = vmatpush.bf16.msra.mxu0 %v1331
  %1941 = vmatpush.bf16.msra.mxu0 %v1323
  %1942 = vmatpush.bf16.msra.mxu0 %v1315
  %1943 = vmatpush.bf16.msra.mxu0 %v1307
  %1944 = vmatpush.bf16.msra.mxu0 %v1299
  %1945 = vmatpush.bf16.msra.mxu0 %v1291
  %1946 = vmatmul.bf16.gmra.mxu0 %v112
  %v1947 = vpop.f32.mrf.mxu0
  %v1948 = vadd.f32 %v1929, %v1947
  %v1949 = vpop.f32.mrf.mxu0
  %v1950 = vadd.f32 %v1931, %v1949
  %1951 = vmatmul.bf16.gmra.mxu0 %v116
  %v1952 = vpop.f32.mrf.mxu0
  %v1953 = vadd.f32 %v1934, %v1952
  %v1954 = vpop.f32.mrf.mxu0
  %v1955 = vadd.f32 %v1936, %v1954
  %1956 = vdwg.mxu0
  %1957 = vmatpush.bf16.msra.mxu0 %v1411
  %1958 = vmatpush.bf16.msra.mxu0 %v1403
  %1959 = vmatpush.bf16.msra.mxu0 %v1395
  %1960 = vmatpush.bf16.msra.mxu0 %v1387
  %1961 = vmatpush.bf16.msra.mxu0 %v1379
  %1962 = vmatpush.bf16.msra.mxu0 %v1371
  %1963 = vmatpush.bf16.msra.mxu0 %v1363
  %1964 = vmatpush.bf16.msra.mxu0 %v1355
  %1965 = vmatmul.bf16.gmra.mxu0 %v113
  %v1966 = vpop.f32.mrf.mxu0
  %v1967 = vadd.f32 %v1948, %v1966
  %v1968 = vpop.f32.mrf.mxu0
  %v1969 = vadd.f32 %v1950, %v1968
  %1970 = vmatmul.bf16.gmra.mxu0 %v117
  %v1971 = vpop.f32.mrf.mxu0
  %v1972 = vadd.f32 %v1953, %v1971
  %v1973 = vpop.f32.mrf.mxu0
  %v1974 = vadd.f32 %v1955, %v1973
  %1975 = vdwg.mxu0
  %1976 = vmatpush.bf16.msra.mxu0 %v1220
  %1977 = vmatpush.bf16.msra.mxu0 %v1212
  %1978 = vmatpush.bf16.msra.mxu0 %v1204
  %1979 = vmatpush.bf16.msra.mxu0 %v1196
  %1980 = vmatpush.bf16.msra.mxu0 %v1188
  %1981 = vmatpush.bf16.msra.mxu0 %v1180
  %1982 = vmatpush.bf16.msra.mxu0 %v1172
  %1983 = vmatpush.bf16.msra.mxu0 %v1164
  %1984 = vmatmul.bf16.gmra.mxu0 %v110
  %v1985 = vpop.f32.mrf.mxu0
  %v1986 = vadd.f32 %v380, %v1985
  %v1987 = vpop.f32.mrf.mxu0
  %v1988 = vadd.f32 %v380, %v1987
  %1989 = vmatmul.bf16.gmra.mxu0 %v114
  %v1990 = vpop.f32.mrf.mxu0
  %v1991 = vadd.f32 %v380, %v1990
  %v1992 = vpop.f32.mrf.mxu0
  %v1993 = vadd.f32 %v380, %v1992
  %1994 = vdwg.mxu0
  %1995 = vmatpush.bf16.msra.mxu0 %v1284
  %1996 = vmatpush.bf16.msra.mxu0 %v1276
  %1997 = vmatpush.bf16.msra.mxu0 %v1268
  %1998 = vmatpush.bf16.msra.mxu0 %v1260
  %1999 = vmatpush.bf16.msra.mxu0 %v1252
  %2000 = vmatpush.bf16.msra.mxu0 %v1244
  %2001 = vmatpush.bf16.msra.mxu0 %v1236
  %2002 = vmatpush.bf16.msra.mxu0 %v1228
  %2003 = vmatmul.bf16.gmra.mxu0 %v111
  %v2004 = vpop.f32.mrf.mxu0
  %v2005 = vadd.f32 %v1986, %v2004
  %v2006 = vpop.f32.mrf.mxu0
  %v2007 = vadd.f32 %v1988, %v2006
  %2008 = vmatmul.bf16.gmra.mxu0 %v115
  %v2009 = vpop.f32.mrf.mxu0
  %v2010 = vadd.f32 %v1991, %v2009
  %v2011 = vpop.f32.mrf.mxu0
  %v2012 = vadd.f32 %v1993, %v2011
  %2013 = vdwg.mxu0
  %2014 = vmatpush.bf16.msra.mxu0 %v1348
  %2015 = vmatpush.bf16.msra.mxu0 %v1340
  %2016 = vmatpush.bf16.msra.mxu0 %v1332
  %2017 = vmatpush.bf16.msra.mxu0 %v1324
  %2018 = vmatpush.bf16.msra.mxu0 %v1316
  %2019 = vmatpush.bf16.msra.mxu0 %v1308
  %2020 = vmatpush.bf16.msra.mxu0 %v1300
  %2021 = vmatpush.bf16.msra.mxu0 %v1292
  %2022 = vmatmul.bf16.gmra.mxu0 %v112
  %v2023 = vpop.f32.mrf.mxu0
  %v2024 = vadd.f32 %v2005, %v2023
  %v2025 = vpop.f32.mrf.mxu0
  %v2026 = vadd.f32 %v2007, %v2025
  %2027 = vmatmul.bf16.gmra.mxu0 %v116
  %v2028 = vpop.f32.mrf.mxu0
  %v2029 = vadd.f32 %v2010, %v2028
  %v2030 = vpop.f32.mrf.mxu0
  %v2031 = vadd.f32 %v2012, %v2030
  %2032 = vdwg.mxu0
  %2033 = vmatpush.bf16.msra.mxu0 %v1412
  %2034 = vmatpush.bf16.msra.mxu0 %v1404
  %2035 = vmatpush.bf16.msra.mxu0 %v1396
  %2036 = vmatpush.bf16.msra.mxu0 %v1388
  %2037 = vmatpush.bf16.msra.mxu0 %v1380
  %2038 = vmatpush.bf16.msra.mxu0 %v1372
  %2039 = vmatpush.bf16.msra.mxu0 %v1364
  %2040 = vmatpush.bf16.msra.mxu0 %v1356
  %2041 = vmatmul.bf16.gmra.mxu0 %v113
  %v2042 = vpop.f32.mrf.mxu0
  %v2043 = vadd.f32 %v2024, %v2042
  %v2044 = vpop.f32.mrf.mxu0
  %v2045 = vadd.f32 %v2026, %v2044
  %2046 = vmatmul.bf16.gmra.mxu0 %v117
  %v2047 = vpop.f32.mrf.mxu0
  %v2048 = vadd.f32 %v2029, %v2047
  %v2049 = vpop.f32.mrf.mxu0
  %v2050 = vadd.f32 %v2031, %v2049
  %2051 = vdwg.mxu0
  %2052 = vmatpush.bf16.msra.mxu0 %v1221
  %2053 = vmatpush.bf16.msra.mxu0 %v1213
  %2054 = vmatpush.bf16.msra.mxu0 %v1205
  %2055 = vmatpush.bf16.msra.mxu0 %v1197
  %2056 = vmatpush.bf16.msra.mxu0 %v1189
  %2057 = vmatpush.bf16.msra.mxu0 %v1181
  %2058 = vmatpush.bf16.msra.mxu0 %v1173
  %2059 = vmatpush.bf16.msra.mxu0 %v1165
  %2060 = vmatmul.bf16.gmra.mxu0 %v110
  %v2061 = vpop.f32.mrf.mxu0
  %v2062 = vadd.f32 %v381, %v2061
  %v2063 = vpop.f32.mrf.mxu0
  %v2064 = vadd.f32 %v381, %v2063
  %2065 = vmatmul.bf16.gmra.mxu0 %v114
  %v2066 = vpop.f32.mrf.mxu0
  %v2067 = vadd.f32 %v381, %v2066
  %v2068 = vpop.f32.mrf.mxu0
  %v2069 = vadd.f32 %v381, %v2068
  %2070 = vdwg.mxu0
  %2071 = vmatpush.bf16.msra.mxu0 %v1285
  %2072 = vmatpush.bf16.msra.mxu0 %v1277
  %2073 = vmatpush.bf16.msra.mxu0 %v1269
  %2074 = vmatpush.bf16.msra.mxu0 %v1261
  %2075 = vmatpush.bf16.msra.mxu0 %v1253
  %2076 = vmatpush.bf16.msra.mxu0 %v1245
  %2077 = vmatpush.bf16.msra.mxu0 %v1237
  %2078 = vmatpush.bf16.msra.mxu0 %v1229
  %2079 = vmatmul.bf16.gmra.mxu0 %v111
  %v2080 = vpop.f32.mrf.mxu0
  %v2081 = vadd.f32 %v2062, %v2080
  %v2082 = vpop.f32.mrf.mxu0
  %v2083 = vadd.f32 %v2064, %v2082
  %2084 = vmatmul.bf16.gmra.mxu0 %v115
  %v2085 = vpop.f32.mrf.mxu0
  %v2086 = vadd.f32 %v2067, %v2085
  %v2087 = vpop.f32.mrf.mxu0
  %v2088 = vadd.f32 %v2069, %v2087
  %2089 = vdwg.mxu0
  %2090 = vmatpush.bf16.msra.mxu0 %v1349
  %2091 = vmatpush.bf16.msra.mxu0 %v1341
  %2092 = vmatpush.bf16.msra.mxu0 %v1333
  %2093 = vmatpush.bf16.msra.mxu0 %v1325
  %2094 = vmatpush.bf16.msra.mxu0 %v1317
  %2095 = vmatpush.bf16.msra.mxu0 %v1309
  %2096 = vmatpush.bf16.msra.mxu0 %v1301
  %2097 = vmatpush.bf16.msra.mxu0 %v1293
  %2098 = vmatmul.bf16.gmra.mxu0 %v112
  %v2099 = vpop.f32.mrf.mxu0
  %v2100 = vadd.f32 %v2081, %v2099
  %v2101 = vpop.f32.mrf.mxu0
  %v2102 = vadd.f32 %v2083, %v2101
  %2103 = vmatmul.bf16.gmra.mxu0 %v116
  %v2104 = vpop.f32.mrf.mxu0
  %v2105 = vadd.f32 %v2086, %v2104
  %v2106 = vpop.f32.mrf.mxu0
  %v2107 = vadd.f32 %v2088, %v2106
  %2108 = vdwg.mxu0
  %2109 = vmatpush.bf16.msra.mxu0 %v1413
  %2110 = vmatpush.bf16.msra.mxu0 %v1405
  %2111 = vmatpush.bf16.msra.mxu0 %v1397
  %2112 = vmatpush.bf16.msra.mxu0 %v1389
  %2113 = vmatpush.bf16.msra.mxu0 %v1381
  %2114 = vmatpush.bf16.msra.mxu0 %v1373
  %2115 = vmatpush.bf16.msra.mxu0 %v1365
  %2116 = vmatpush.bf16.msra.mxu0 %v1357
  %2117 = vmatmul.bf16.gmra.mxu0 %v113
  %v2118 = vpop.f32.mrf.mxu0
  %v2119 = vadd.f32 %v2100, %v2118
  %v2120 = vpop.f32.mrf.mxu0
  %v2121 = vadd.f32 %v2102, %v2120
  %2122 = vmatmul.bf16.gmra.mxu0 %v117
  %v2123 = vpop.f32.mrf.mxu0
  %v2124 = vadd.f32 %v2105, %v2123
  %v2125 = vpop.f32.mrf.mxu0
  %v2126 = vadd.f32 %v2107, %v2125
  %2127 = vdwg.mxu0
  %2128 = vmatpush.bf16.msra.mxu0 %v1222
  %2129 = vmatpush.bf16.msra.mxu0 %v1214
  %2130 = vmatpush.bf16.msra.mxu0 %v1206
  %2131 = vmatpush.bf16.msra.mxu0 %v1198
  %2132 = vmatpush.bf16.msra.mxu0 %v1190
  %2133 = vmatpush.bf16.msra.mxu0 %v1182
  %2134 = vmatpush.bf16.msra.mxu0 %v1174
  %2135 = vmatpush.bf16.msra.mxu0 %v1166
  %2136 = vmatmul.bf16.gmra.mxu0 %v110
  %v2137 = vpop.f32.mrf.mxu0
  %v2138 = vadd.f32 %v382, %v2137
  %v2139 = vpop.f32.mrf.mxu0
  %v2140 = vadd.f32 %v382, %v2139
  %2141 = vmatmul.bf16.gmra.mxu0 %v114
  %v2142 = vpop.f32.mrf.mxu0
  %v2143 = vadd.f32 %v382, %v2142
  %v2144 = vpop.f32.mrf.mxu0
  %v2145 = vadd.f32 %v382, %v2144
  %2146 = vdwg.mxu0
  %2147 = vmatpush.bf16.msra.mxu0 %v1286
  %2148 = vmatpush.bf16.msra.mxu0 %v1278
  %2149 = vmatpush.bf16.msra.mxu0 %v1270
  %2150 = vmatpush.bf16.msra.mxu0 %v1262
  %2151 = vmatpush.bf16.msra.mxu0 %v1254
  %2152 = vmatpush.bf16.msra.mxu0 %v1246
  %2153 = vmatpush.bf16.msra.mxu0 %v1238
  %2154 = vmatpush.bf16.msra.mxu0 %v1230
  %2155 = vmatmul.bf16.gmra.mxu0 %v111
  %v2156 = vpop.f32.mrf.mxu0
  %v2157 = vadd.f32 %v2138, %v2156
  %v2158 = vpop.f32.mrf.mxu0
  %v2159 = vadd.f32 %v2140, %v2158
  %2160 = vmatmul.bf16.gmra.mxu0 %v115
  %v2161 = vpop.f32.mrf.mxu0
  %v2162 = vadd.f32 %v2143, %v2161
  %v2163 = vpop.f32.mrf.mxu0
  %v2164 = vadd.f32 %v2145, %v2163
  %2165 = vdwg.mxu0
  %2166 = vmatpush.bf16.msra.mxu0 %v1350
  %2167 = vmatpush.bf16.msra.mxu0 %v1342
  %2168 = vmatpush.bf16.msra.mxu0 %v1334
  %2169 = vmatpush.bf16.msra.mxu0 %v1326
  %2170 = vmatpush.bf16.msra.mxu0 %v1318
  %2171 = vmatpush.bf16.msra.mxu0 %v1310
  %2172 = vmatpush.bf16.msra.mxu0 %v1302
  %2173 = vmatpush.bf16.msra.mxu0 %v1294
  %2174 = vmatmul.bf16.gmra.mxu0 %v112
  %v2175 = vpop.f32.mrf.mxu0
  %v2176 = vadd.f32 %v2157, %v2175
  %v2177 = vpop.f32.mrf.mxu0
  %v2178 = vadd.f32 %v2159, %v2177
  %2179 = vmatmul.bf16.gmra.mxu0 %v116
  %v2180 = vpop.f32.mrf.mxu0
  %v2181 = vadd.f32 %v2162, %v2180
  %v2182 = vpop.f32.mrf.mxu0
  %v2183 = vadd.f32 %v2164, %v2182
  %2184 = vdwg.mxu0
  %2185 = vmatpush.bf16.msra.mxu0 %v1414
  %2186 = vmatpush.bf16.msra.mxu0 %v1406
  %2187 = vmatpush.bf16.msra.mxu0 %v1398
  %2188 = vmatpush.bf16.msra.mxu0 %v1390
  %2189 = vmatpush.bf16.msra.mxu0 %v1382
  %2190 = vmatpush.bf16.msra.mxu0 %v1374
  %2191 = vmatpush.bf16.msra.mxu0 %v1366
  %2192 = vmatpush.bf16.msra.mxu0 %v1358
  %2193 = vmatmul.bf16.gmra.mxu0 %v113
  %v2194 = vpop.f32.mrf.mxu0
  %v2195 = vadd.f32 %v2176, %v2194
  %v2196 = vpop.f32.mrf.mxu0
  %v2197 = vadd.f32 %v2178, %v2196
  %2198 = vmatmul.bf16.gmra.mxu0 %v117
  %v2199 = vpop.f32.mrf.mxu0
  %v2200 = vadd.f32 %v2181, %v2199
  %v2201 = vpop.f32.mrf.mxu0
  %v2202 = vadd.f32 %v2183, %v2201
  %2203 = vdwg.mxu0
  %2204 = vmatpush.bf16.msra.mxu0 %v1223
  %2205 = vmatpush.bf16.msra.mxu0 %v1215
  %2206 = vmatpush.bf16.msra.mxu0 %v1207
  %2207 = vmatpush.bf16.msra.mxu0 %v1199
  %2208 = vmatpush.bf16.msra.mxu0 %v1191
  %2209 = vmatpush.bf16.msra.mxu0 %v1183
  %2210 = vmatpush.bf16.msra.mxu0 %v1175
  %2211 = vmatpush.bf16.msra.mxu0 %v1167
  %2212 = vmatmul.bf16.gmra.mxu0 %v110
  %v2213 = vpop.f32.mrf.mxu0
  %v2214 = vadd.f32 %v383, %v2213
  %v2215 = vpop.f32.mrf.mxu0
  %v2216 = vadd.f32 %v383, %v2215
  %2217 = vmatmul.bf16.gmra.mxu0 %v114
  %v2218 = vpop.f32.mrf.mxu0
  %v2219 = vadd.f32 %v383, %v2218
  %v2220 = vpop.f32.mrf.mxu0
  %v2221 = vadd.f32 %v383, %v2220
  %2222 = vdwg.mxu0
  %2223 = vmatpush.bf16.msra.mxu0 %v1287
  %2224 = vmatpush.bf16.msra.mxu0 %v1279
  %2225 = vmatpush.bf16.msra.mxu0 %v1271
  %2226 = vmatpush.bf16.msra.mxu0 %v1263
  %2227 = vmatpush.bf16.msra.mxu0 %v1255
  %2228 = vmatpush.bf16.msra.mxu0 %v1247
  %2229 = vmatpush.bf16.msra.mxu0 %v1239
  %2230 = vmatpush.bf16.msra.mxu0 %v1231
  %2231 = vmatmul.bf16.gmra.mxu0 %v111
  %v2232 = vpop.f32.mrf.mxu0
  %v2233 = vadd.f32 %v2214, %v2232
  %v2234 = vpop.f32.mrf.mxu0
  %v2235 = vadd.f32 %v2216, %v2234
  %2236 = vmatmul.bf16.gmra.mxu0 %v115
  %v2237 = vpop.f32.mrf.mxu0
  %v2238 = vadd.f32 %v2219, %v2237
  %v2239 = vpop.f32.mrf.mxu0
  %v2240 = vadd.f32 %v2221, %v2239
  %2241 = vdwg.mxu0
  %2242 = vmatpush.bf16.msra.mxu0 %v1351
  %2243 = vmatpush.bf16.msra.mxu0 %v1343
  %2244 = vmatpush.bf16.msra.mxu0 %v1335
  %2245 = vmatpush.bf16.msra.mxu0 %v1327
  %2246 = vmatpush.bf16.msra.mxu0 %v1319
  %2247 = vmatpush.bf16.msra.mxu0 %v1311
  %2248 = vmatpush.bf16.msra.mxu0 %v1303
  %2249 = vmatpush.bf16.msra.mxu0 %v1295
  %2250 = vmatmul.bf16.gmra.mxu0 %v112
  %v2251 = vpop.f32.mrf.mxu0
  %v2252 = vadd.f32 %v2233, %v2251
  %v2253 = vpop.f32.mrf.mxu0
  %v2254 = vadd.f32 %v2235, %v2253
  %2255 = vmatmul.bf16.gmra.mxu0 %v116
  %v2256 = vpop.f32.mrf.mxu0
  %v2257 = vadd.f32 %v2238, %v2256
  %v2258 = vpop.f32.mrf.mxu0
  %v2259 = vadd.f32 %v2240, %v2258
  %2260 = vdwg.mxu0
  %2261 = vmatpush.bf16.msra.mxu0 %v1415
  %2262 = vmatpush.bf16.msra.mxu0 %v1407
  %2263 = vmatpush.bf16.msra.mxu0 %v1399
  %2264 = vmatpush.bf16.msra.mxu0 %v1391
  %2265 = vmatpush.bf16.msra.mxu0 %v1383
  %2266 = vmatpush.bf16.msra.mxu0 %v1375
  %2267 = vmatpush.bf16.msra.mxu0 %v1367
  %2268 = vmatpush.bf16.msra.mxu0 %v1359
  %2269 = vmatmul.bf16.gmra.mxu0 %v113
  %v2270 = vpop.f32.mrf.mxu0
  %v2271 = vadd.f32 %v2252, %v2270
  %v2272 = vpop.f32.mrf.mxu0
  %v2273 = vadd.f32 %v2254, %v2272
  %2274 = vmatmul.bf16.gmra.mxu0 %v117
  %v2275 = vpop.f32.mrf.mxu0
  %v2276 = vadd.f32 %v2257, %v2275
  %v2277 = vpop.f32.mrf.mxu0
  %v2278 = vadd.f32 %v2259, %v2277
  %2279 = vdwg.mxu0
  %v2280 = vpack.c.bf16 %v1815, %v1739
  %v2281 = vpack.c.bf16 %v1967, %v1891
  %v2282 = vpack.c.bf16 %v2119, %v2043
  %v2283 = vpack.c.bf16 %v2271, %v2195
  %v2284 = vpack.c.bf16 %v1817, %v1741
  %v2285 = vpack.c.bf16 %v1969, %v1893
  %v2286 = vpack.c.bf16 %v2121, %v2045
  %v2287 = vpack.c.bf16 %v2273, %v2197
  %v2288 = vpack.c.bf16 %v1820, %v1744
  %v2289 = vpack.c.bf16 %v1972, %v1896
  %v2290 = vpack.c.bf16 %v2124, %v2048
  %v2291 = vpack.c.bf16 %v2276, %v2200
  %v2292 = vpack.c.bf16 %v1822, %v1746
  %v2293 = vpack.c.bf16 %v1974, %v1898
  %v2294 = vpack.c.bf16 %v2126, %v2050
  %v2295 = vpack.c.bf16 %v2278, %v2202
  %2296 = vst [vmem:[%s5] sm:$0xff] %v2280
  %2297 = vst [vmem:[%s5 + $0x8] sm:$0xff] %v2281
  %2298 = vst [vmem:[%s5 + $0x10] sm:$0xff] %v2282
  %2299 = vst [vmem:[%s5 + $0x18] sm:$0xff] %v2283
  %2300 = vst [vmem:[%s5 + $0x20] sm:$0xff] %v2284
  %2301 = vst [vmem:[%s5 + $0x28] sm:$0xff] %v2285
  %2302 = vst [vmem:[%s5 + $0x30] sm:$0xff] %v2286
  %2303 = vst [vmem:[%s5 + $0x38] sm:$0xff] %v2287
  %2304 = vst [vmem:[%s5 + $0x40] sm:$0xff] %v2288
  %2305 = vst [vmem:[%s5 + $0x48] sm:$0xff] %v2289
  %2306 = vst [vmem:[%s5 + $0x50] sm:$0xff] %v2290
  %2307 = vst [vmem:[%s5 + $0x58] sm:$0xff] %v2291
  %2308 = vst [vmem:[%s5 + $0x60] sm:$0xff] %v2292
  %2309 = vst [vmem:[%s5 + $0x68] sm:$0xff] %v2293
  %2310 = vst [vmem:[%s5 + $0x70] sm:$0xff] %v2294
  %2311 = vst [vmem:[%s5 + $0x78] sm:$0xff] %v2295
  %v2312 = vadd.f32 %v1739, %v1741
  %v2313 = vadd.f32 %v2312, %v1744
  %v2314 = vadd.f32 %v2313, %v1746
  %v2315 = vrot.slane %v2314, 4
  %v2316 = vadd.f32 %v2314, %v2315
  %v2317 = vrot.slane %v2316, 2
  %v2318 = vadd.f32 %v2316, %v2317
  %v2319 = vrot.slane %v2318, 1
  %v2320 = vadd.f32 %v2318, %v2319
  %v2321 = vadd.f32 %v1815, %v1817
  %v2322 = vadd.f32 %v2321, %v1820
  %v2323 = vadd.f32 %v2322, %v1822
  %v2324 = vrot.slane %v2323, 4
  %v2325 = vadd.f32 %v2323, %v2324
  %v2326 = vrot.slane %v2325, 2
  %v2327 = vadd.f32 %v2325, %v2326
  %v2328 = vrot.slane %v2327, 1
  %v2329 = vadd.f32 %v2327, %v2328
  %v2330 = vadd.f32 %v1891, %v1893
  %v2331 = vadd.f32 %v2330, %v1896
  %v2332 = vadd.f32 %v2331, %v1898
  %v2333 = vrot.slane %v2332, 4
  %v2334 = vadd.f32 %v2332, %v2333
  %v2335 = vrot.slane %v2334, 2
  %v2336 = vadd.f32 %v2334, %v2335
  %v2337 = vrot.slane %v2336, 1
  %v2338 = vadd.f32 %v2336, %v2337
  %v2339 = vadd.f32 %v1967, %v1969
  %v2340 = vadd.f32 %v2339, %v1972
  %v2341 = vadd.f32 %v2340, %v1974
  %v2342 = vrot.slane %v2341, 4
  %v2343 = vadd.f32 %v2341, %v2342
  %v2344 = vrot.slane %v2343, 2
  %v2345 = vadd.f32 %v2343, %v2344
  %v2346 = vrot.slane %v2345, 1
  %v2347 = vadd.f32 %v2345, %v2346
  %v2348 = vadd.f32 %v2043, %v2045
  %v2349 = vadd.f32 %v2348, %v2048
  %v2350 = vadd.f32 %v2349, %v2050
  %v2351 = vrot.slane %v2350, 4
  %v2352 = vadd.f32 %v2350, %v2351
  %v2353 = vrot.slane %v2352, 2
  %v2354 = vadd.f32 %v2352, %v2353
  %v2355 = vrot.slane %v2354, 1
  %v2356 = vadd.f32 %v2354, %v2355
  %v2357 = vadd.f32 %v2119, %v2121
  %v2358 = vadd.f32 %v2357, %v2124
  %v2359 = vadd.f32 %v2358, %v2126
  %v2360 = vrot.slane %v2359, 4
  %v2361 = vadd.f32 %v2359, %v2360
  %v2362 = vrot.slane %v2361, 2
  %v2363 = vadd.f32 %v2361, %v2362
  %v2364 = vrot.slane %v2363, 1
  %v2365 = vadd.f32 %v2363, %v2364
  %v2366 = vadd.f32 %v2195, %v2197
  %v2367 = vadd.f32 %v2366, %v2200
  %v2368 = vadd.f32 %v2367, %v2202
  %v2369 = vrot.slane %v2368, 4
  %v2370 = vadd.f32 %v2368, %v2369
  %v2371 = vrot.slane %v2370, 2
  %v2372 = vadd.f32 %v2370, %v2371
  %v2373 = vrot.slane %v2372, 1
  %v2374 = vadd.f32 %v2372, %v2373
  %v2375 = vadd.f32 %v2271, %v2273
  %v2376 = vadd.f32 %v2375, %v2276
  %v2377 = vadd.f32 %v2376, %v2278
  %v2378 = vrot.slane %v2377, 4
  %v2379 = vadd.f32 %v2377, %v2378
  %v2380 = vrot.slane %v2379, 2
  %v2381 = vadd.f32 %v2379, %v2380
  %v2382 = vrot.slane %v2381, 1
  %v2383 = vadd.f32 %v2381, %v2382
  %v2384 = vmul.f32 %v1739, %v1739
  %v2385 = vmul.f32 %v1815, %v1815
  %v2386 = vmul.f32 %v1891, %v1891
  %v2387 = vmul.f32 %v1967, %v1967
  %v2388 = vmul.f32 %v2043, %v2043
  %v2389 = vmul.f32 %v2119, %v2119
  %v2390 = vmul.f32 %v2195, %v2195
  %v2391 = vmul.f32 %v2271, %v2271
  %v2392 = vmul.f32 %v1741, %v1741
  %v2393 = vmul.f32 %v1817, %v1817
  %v2394 = vmul.f32 %v1893, %v1893
  %v2395 = vmul.f32 %v1969, %v1969
  %v2396 = vmul.f32 %v2045, %v2045
  %v2397 = vmul.f32 %v2121, %v2121
  %v2398 = vmul.f32 %v2197, %v2197
  %v2399 = vmul.f32 %v2273, %v2273
  %v2400 = vmul.f32 %v1744, %v1744
  %v2401 = vmul.f32 %v1820, %v1820
  %v2402 = vmul.f32 %v1896, %v1896
  %v2403 = vmul.f32 %v1972, %v1972
  %v2404 = vmul.f32 %v2048, %v2048
  %v2405 = vmul.f32 %v2124, %v2124
  %v2406 = vmul.f32 %v2200, %v2200
  %v2407 = vmul.f32 %v2276, %v2276
  %v2408 = vmul.f32 %v1746, %v1746
  %v2409 = vmul.f32 %v1822, %v1822
  %v2410 = vmul.f32 %v1898, %v1898
  %v2411 = vmul.f32 %v1974, %v1974
  %v2412 = vmul.f32 %v2050, %v2050
  %v2413 = vmul.f32 %v2126, %v2126
  %v2414 = vmul.f32 %v2202, %v2202
  %v2415 = vmul.f32 %v2278, %v2278
  %v2416 = vadd.f32 %v2384, %v2392
  %v2417 = vadd.f32 %v2416, %v2400
  %v2418 = vadd.f32 %v2417, %v2408
  %v2419 = vrot.slane %v2418, 4
  %v2420 = vadd.f32 %v2418, %v2419
  %v2421 = vrot.slane %v2420, 2
  %v2422 = vadd.f32 %v2420, %v2421
  %v2423 = vrot.slane %v2422, 1
  %v2424 = vadd.f32 %v2422, %v2423
  %v2425 = vadd.f32 %v2385, %v2393
  %v2426 = vadd.f32 %v2425, %v2401
  %v2427 = vadd.f32 %v2426, %v2409
  %v2428 = vrot.slane %v2427, 4
  %v2429 = vadd.f32 %v2427, %v2428
  %v2430 = vrot.slane %v2429, 2
  %v2431 = vadd.f32 %v2429, %v2430
  %v2432 = vrot.slane %v2431, 1
  %v2433 = vadd.f32 %v2431, %v2432
  %v2434 = vadd.f32 %v2386, %v2394
  %v2435 = vadd.f32 %v2434, %v2402
  %v2436 = vadd.f32 %v2435, %v2410
  %v2437 = vrot.slane %v2436, 4
  %v2438 = vadd.f32 %v2436, %v2437
  %v2439 = vrot.slane %v2438, 2
  %v2440 = vadd.f32 %v2438, %v2439
  %v2441 = vrot.slane %v2440, 1
  %v2442 = vadd.f32 %v2440, %v2441
  %v2443 = vadd.f32 %v2387, %v2395
  %v2444 = vadd.f32 %v2443, %v2403
  %v2445 = vadd.f32 %v2444, %v2411
  %v2446 = vrot.slane %v2445, 4
  %v2447 = vadd.f32 %v2445, %v2446
  %v2448 = vrot.slane %v2447, 2
  %v2449 = vadd.f32 %v2447, %v2448
  %v2450 = vrot.slane %v2449, 1
  %v2451 = vadd.f32 %v2449, %v2450
  %v2452 = vadd.f32 %v2388, %v2396
  %v2453 = vadd.f32 %v2452, %v2404
  %v2454 = vadd.f32 %v2453, %v2412
  %v2455 = vrot.slane %v2454, 4
  %v2456 = vadd.f32 %v2454, %v2455
  %v2457 = vrot.slane %v2456, 2
  %v2458 = vadd.f32 %v2456, %v2457
  %v2459 = vrot.slane %v2458, 1
  %v2460 = vadd.f32 %v2458, %v2459
  %v2461 = vadd.f32 %v2389, %v2397
  %v2462 = vadd.f32 %v2461, %v2405
  %v2463 = vadd.f32 %v2462, %v2413
  %v2464 = vrot.slane %v2463, 4
  %v2465 = vadd.f32 %v2463, %v2464
  %v2466 = vrot.slane %v2465, 2
  %v2467 = vadd.f32 %v2465, %v2466
  %v2468 = vrot.slane %v2467, 1
  %v2469 = vadd.f32 %v2467, %v2468
  %v2470 = vadd.f32 %v2390, %v2398
  %v2471 = vadd.f32 %v2470, %v2406
  %v2472 = vadd.f32 %v2471, %v2414
  %v2473 = vrot.slane %v2472, 4
  %v2474 = vadd.f32 %v2472, %v2473
  %v2475 = vrot.slane %v2474, 2
  %v2476 = vadd.f32 %v2474, %v2475
  %v2477 = vrot.slane %v2476, 1
  %v2478 = vadd.f32 %v2476, %v2477
  %v2479 = vadd.f32 %v2391, %v2399
  %v2480 = vadd.f32 %v2479, %v2407
  %v2481 = vadd.f32 %v2480, %v2415
  %v2482 = vrot.slane %v2481, 4
  %v2483 = vadd.f32 %v2481, %v2482
  %v2484 = vrot.slane %v2483, 2
  %v2485 = vadd.f32 %v2483, %v2484
  %v2486 = vrot.slane %v2485, 1
  %v2487 = vadd.f32 %v2485, %v2486
  %vm2488 = vcmask 1040384
  %v2489 = vsel %vm2488, %v2320, %v2424
  %v2490 = vsel %vm2488, %v2329, %v2433
  %v2491 = vsel %vm2488, %v2338, %v2442
  %v2492 = vsel %vm2488, %v2347, %v2451
  %v2493 = vsel %vm2488, %v2356, %v2460
  %v2494 = vsel %vm2488, %v2365, %v2469
  %v2495 = vsel %vm2488, %v2374, %v2478
  %v2496 = vsel %vm2488, %v2383, %v2487
  %v2505 = vrot.slane %v2490, 6
  %v2506 = vrot.slane %v2491, 4
  %v2507 = vrot.slane %v2492, 2
  %v2508 = vrot.slane %v2494, 6
  %v2509 = vrot.slane %v2495, 4
  %v2510 = vrot.slane %v2496, 2
  %vm2511 = vcmask 1041408
  %v2512 = vsel %vm2511, %v2489, %v2505
  %vm2513 = vcmask 1045508
  %v2514 = vsel %vm2513, %v2506, %v2507
  %vm2515 = vcmask 1043456
  %v2516 = vsel %vm2515, %v2512, %v2514
  %v2517 = vsel %vm2511, %v2493, %v2508
  %v2518 = vsel %vm2513, %v2509, %v2510
  %v2519 = vsel %vm2515, %v2517, %v2518
  %2522 = vst [vmem:[%s6] sm:$0xff] %v2516
  %2523 = vst [vmem:[%s6 + $0x8] sm:$0xff] %v2519
  // Predicated region
  $region22: #{generator_forward.5} parent=0 // pred_check
    _
  $region23: #{generator_forward.5} parent=0 // pred_check_branch
    %2525 = sbr.rel (0) target = $region25
  $region24: #{generator_forward.5} parent=0 // pred_region
    _
  $region25: #{generator_forward.5} parent=0 // pred_fallthru
    _
  // Predicated region
  $region26: #{generator_forward.5} parent=0 // pred_check
    _
  $region27: #{generator_forward.5} parent=0 // pred_check_branch
    %2527 = sbr.rel (0) target = $region29
  $region28: #{generator_forward.5} parent=0 // pred_region
    _
  $region29: #{generator_forward.5} parent=0 // pred_fallthru
    _
  // Predicated region
  $region30: #{generator_forward.5} parent=0 // pred_check
    _
  $region31: #{generator_forward.5} parent=0 // pred_check_branch
    %2529 = sbr.rel (0) target = $region33
  $region32: #{generator_forward.5} parent=0 // pred_region
    _
  $region33: #{generator_forward.5} parent=0 // pred_fallthru
    _
  // Predicated region
  $region34: #{generator_forward.5} parent=0 // pred_check
    _
  $region35: #{generator_forward.5} parent=0 // pred_check_branch
    %2531 = sbr.rel (0) target = $region37
  $region36: #{generator_forward.5} parent=0 // pred_region
    _
  $region37: #{generator_forward.5} parent=0 // pred_fallthru
    _

// kernel: generator_forward.4
$region0: #{generator_forward.4}
  #allocation0 [shape = 'u32[]', space=smem, size = 0x4, offset = 0x4, fixed_abs, tag = 'smem constant byte address 0x4 - core index']
  #allocation1 [shape = 'u32[72,128]{1,0:T(1,128)}', space=vmem, size = 0x9000, scoped, tag = 'internal scratch']
  %s0 = inlined_call_operand.hbm [shape: f32[2,128], index: 0, kind: input, shape index: {}]
  %s1 = inlined_call_operand.hbm [shape: bf16[128,8192], index: 1, kind: input, shape index: {}]
  %s2 = inlined_call_operand.hbm [shape: f32[1,8192], index: 2, kind: input, shape index: {}]
  %s3 = inlined_call_operand.vmem [shape: bf16[2,8192], index: 3, kind: output, shape index: {0}]
  %s4 = inlined_call_operand.vmem [shape: f32[1,2,8192], index: 4, kind: output, shape index: {1}]
  %5 = xla_tuple %s3, %s4
  %s6 = sld [smem:[#allocation0]]
  $region42: #{generator_forward.4} parent=0
    _
  %s8 = ssub.s32 1, %s6
  %s9 = scalar_select 0, %s8, %s6
  $region1: #{generator_forward.4} parent=0
    #allocation2 [shape = 'u8[1024]{0}', space=vmem, size = 0x400, scoped, tag = 'input window, operand 0, single buffered']
    #allocation3 [shape = 's32[1]{0}', space=sflag, size = 0x4, scoped, tag = 'scoped memory for generator_forward.4']
    #allocation4 [shape = 'u8[2097152]{0}', space=vmem, size = 0x200000, scoped, tag = 'input window, operand 1, single buffered']
    #allocation5 [shape = 's32[1]{0}', space=sflag, size = 0x4, scoped, tag = 'scoped memory for generator_forward.4']
    #allocation6 [shape = 'u8[32768]{0}', space=vmem, size = 0x8000, scoped, tag = 'input window, operand 2, single buffered']
    %10 = vsyncpa [#allocation3], 0
    %11 = vsyncpa [#allocation5], 0
    // Predicated region
    $region2: #{generator_forward.4} parent=1 // pred_check
      _
    $region3: #{generator_forward.4} parent=1 // pred_check_branch
      %13 = sbr.rel (0) target = $region5
    $region4: #{generator_forward.4} parent=1 // pred_region
      %15 = vsyncadd [#allocation3], 0
      %s17 = sshll.u32 %s0, 4
      %s18 = int_to_ptr.hbm [resolvable:$true] %s17
      %s19 = sshll.u32 [#allocation2], 4
      %s20 = int_to_ptr.vmem [resolvable:$true] %s19
      %22 = dma.hbm_to_vmem [thread:$0]  %s18, 32, %s20, [#allocation3]
    $region5: #{generator_forward.4} parent=1 // pred_fallthru
      _
    // Predicated region
    $region6: #{generator_forward.4} parent=1 // pred_check
      _
    $region7: #{generator_forward.4} parent=1 // pred_check_branch
      %24 = sbr.rel (0) target = $region9
    $region8: #{generator_forward.4} parent=1 // pred_region
      %26 = vsyncadd [#allocation5], 0
      %s27 = sshll.u32 %s1, 4
      %s28 = int_to_ptr.hbm [resolvable:$true] %s27
      %s29 = sshll.u32 [#allocation4], 4
      %s30 = int_to_ptr.vmem [resolvable:$true] %s29
      %35 = dma.hbm_to_vmem [thread:$0]  %s28, 65536, %s30, [#allocation5], 4096, 4096, 256
    $region9: #{generator_forward.4} parent=1 // pred_fallthru
      _
    // Predicated region
    $region10: #{generator_forward.4} parent=1 // pred_check
      _
    $region11: #{generator_forward.4} parent=1 // pred_check_branch
      %37 = sbr.rel (0) target = $region13
    $region12: #{generator_forward.4} parent=1 // pred_region
      %39 = vsyncadd [#allocation5], 0
      %s41 = sshll.u32 %s2, 4
      %s42 = int_to_ptr.hbm [resolvable:$true] %s41
      %s43 = sshll.u32 [#allocation6], 4
      %s44 = int_to_ptr.vmem [resolvable:$true] %s43
      %46 = dma.hbm_to_vmem [thread:$0]  %s42, 1024, %s44, [#allocation5]
    $region13: #{generator_forward.4} parent=1 // pred_fallthru
      _
    // Predicated region
    $region14: #{generator_forward.4} parent=1 // pred_check
      _
    $region15: #{generator_forward.4} parent=1 // pred_check_branch
      %48 = sbr.rel (0) target = $region17
    $region16: #{generator_forward.4} parent=1 // pred_region
      %50 = dma.done [#allocation3], 32
    $region17: #{generator_forward.4} parent=1 // pred_fallthru
      _
    // Predicated region
    $region18: #{generator_forward.4} parent=1 // pred_check
      _
    $region19: #{generator_forward.4} parent=1 // pred_check_branch
      %52 = sbr.rel (0) target = $region21
    $region20: #{generator_forward.4} parent=1 // pred_region
      %54 = dma.done [#allocation5], 65536
    $region21: #{generator_forward.4} parent=1 // pred_fallthru
      _
    // Predicated region
    $region22: #{generator_forward.4} parent=1 // pred_check
      _
    $region23: #{generator_forward.4} parent=1 // pred_check_branch
      %56 = sbr.rel (0) target = $region25
    $region24: #{generator_forward.4} parent=1 // pred_region
      %58 = dma.done [#allocation5], 1024
    $region25: #{generator_forward.4} parent=1 // pred_fallthru
      _
    %v59 = vld [vmem:[#allocation2] sm:$0x3]
    %v60 = vpack.c.bf16 %v59, %v59
    %v61 = vld [vmem:[#allocation4] sm:$0xff]
    %v62 = vld [vmem:[#allocation4 + $0x8] sm:$0xff]
    %v63 = vld [vmem:[#allocation4 + $0x10] sm:$0xff]
    %v64 = vld [vmem:[#allocation4 + $0x18] sm:$0xff]
    %v65 = vld [vmem:[#allocation4 + $0x20] sm:$0xff]
    %v66 = vld [vmem:[#allocation4 + $0x28] sm:$0xff]
    %v67 = vld [vmem:[#allocation4 + $0x30] sm:$0xff]
    %v68 = vld [vmem:[#allocation4 + $0x38] sm:$0xff]
    %v69 = vld [vmem:[#allocation4 + $0x40] sm:$0xff]
    %v70 = vld [vmem:[#allocation4 + $0x48] sm:$0xff]
    %v71 = vld [vmem:[#allocation4 + $0x50] sm:$0xff]
    %v72 = vld [vmem:[#allocation4 + $0x58] sm:$0xff]
    %v73 = vld [vmem:[#allocation4 + $0x60] sm:$0xff]
    %v74 = vld [vmem:[#allocation4 + $0x68] sm:$0xff]
    %v75 = vld [vmem:[#allocation4 + $0x70] sm:$0xff]
    %v76 = vld [vmem:[#allocation4 + $0x78] sm:$0xff]
    %v77 = vld [vmem:[#allocation4 + $0x80] sm:$0xff]
    %v78 = vld [vmem:[#allocation4 + $0x88] sm:$0xff]
    %v79 = vld [vmem:[#allocation4 + $0x90] sm:$0xff]
    %v80 = vld [vmem:[#allocation4 + $0x98] sm:$0xff]
    %v81 = vld [vmem:[#allocation4 + $0xa0] sm:$0xff]
    %v82 = vld [vmem:[#allocation4 + $0xa8] sm:$0xff]
    %v83 = vld [vmem:[#allocation4 + $0xb0] sm:$0xff]
    %v84 = vld [vmem:[#allocation4 + $0xb8] sm:$0xff]
    %v85 = vld [vmem:[#allocation4 + $0xc0] sm:$0xff]
    %v86 = vld [vmem:[#allocation4 + $0xc8] sm:$0xff]
    %v87 = vld [vmem:[#allocation4 + $0xd0] sm:$0xff]
    %v88 = vld [vmem:[#allocation4 + $0xd8] sm:$0xff]
    %v89 = vld [vmem:[#allocation4 + $0xe0] sm:$0xff]
    %v90 = vld [vmem:[#allocation4 + $0xe8] sm:$0xff]
    %v91 = vld [vmem:[#allocation4 + $0xf0] sm:$0xff]
    %v92 = vld [vmem:[#allocation4 + $0xf8] sm:$0xff]
    %v93 = vld [vmem:[#allocation4 + $0x100] sm:$0xff]
    %v94 = vld [vmem:[#allocation4 + $0x108] sm:$0xff]
    %v95 = vld [vmem:[#allocation4 + $0x110] sm:$0xff]
    %v96 = vld [vmem:[#allocation4 + $0x118] sm:$0xff]
    %v97 = vld [vmem:[#allocation4 + $0x120] sm:$0xff]
    %v98 = vld [vmem:[#allocation4 + $0x128] sm:$0xff]
    %v99 = vld [vmem:[#allocation4 + $0x130] sm:$0xff]
    %v100 = vld [vmem:[#allocation4 + $0x138] sm:$0xff]
    %v101 = vld [vmem:[#allocation4 + $0x140] sm:$0xff]
    %v102 = vld [vmem:[#allocation4 + $0x148] sm:$0xff]
    %v103 = vld [vmem:[#allocation4 + $0x150] sm:$0xff]
    %v104 = vld [vmem:[#allocation4 + $0x158] sm:$0xff]
    %v105 = vld [vmem:[#allocation4 + $0x160] sm:$0xff]
    %v106 = vld [vmem:[#allocation4 + $0x168] sm:$0xff]
    %v107 = vld [vmem:[#allocation4 + $0x170] sm:$0xff]
    %v108 = vld [vmem:[#allocation4 + $0x178] sm:$0xff]
    %v109 = vld [vmem:[#allocation4 + $0x180] sm:$0xff]
    %v110 = vld [vmem:[#allocation4 + $0x188] sm:$0xff]
    %v111 = vld [vmem:[#allocation4 + $0x190] sm:$0xff]
    %v112 = vld [vmem:[#allocation4 + $0x198] sm:$0xff]
    %v113 = vld [vmem:[#allocation4 + $0x1a0] sm:$0xff]
    %v114 = vld [vmem:[#allocation4 + $0x1a8] sm:$0xff]
    %v115 = vld [vmem:[#allocation4 + $0x1b0] sm:$0xff]
    %v116 = vld [vmem:[#allocation4 + $0x1b8] sm:$0xff]
    %v117 = vld [vmem:[#allocation4 + $0x1c0] sm:$0xff]
    %v118 = vld [vmem:[#allocation4 + $0x1c8] sm:$0xff]
    %v119 = vld [vmem:[#allocation4 + $0x1d0] sm:$0xff]
    %v120 = vld [vmem:[#allocation4 + $0x1d8] sm:$0xff]
    %v121 = vld [vmem:[#allocation4 + $0x1e0] sm:$0xff]
    %v122 = vld [vmem:[#allocation4 + $0x1e8] sm:$0xff]
    %v123 = vld [vmem:[#allocation4 + $0x1f0] sm:$0xff]
    %v124 = vld [vmem:[#allocation4 + $0x1f8] sm:$0xff]
    %v125 = vld [vmem:[#allocation4 + $0x200] sm:$0xff]
    %v126 = vld [vmem:[#allocation4 + $0x208] sm:$0xff]
    %v127 = vld [vmem:[#allocation4 + $0x210] sm:$0xff]
    %v128 = vld [vmem:[#allocation4 + $0x218] sm:$0xff]
    %v129 = vld [vmem:[#allocation4 + $0x220] sm:$0xff]
    %v130 = vld [vmem:[#allocation4 + $0x228] sm:$0xff]
    %v131 = vld [vmem:[#allocation4 + $0x230] sm:$0xff]
    %v132 = vld [vmem:[#allocation4 + $0x238] sm:$0xff]
    %v133 = vld [vmem:[#allocation4 + $0x240] sm:$0xff]
    %v134 = vld [vmem:[#allocation4 + $0x248] sm:$0xff]
    %v135 = vld [vmem:[#allocation4 + $0x250] sm:$0xff]
    %v136 = vld [vmem:[#allocation4 + $0x258] sm:$0xff]
    %v137 = vld [vmem:[#allocation4 + $0x260] sm:$0xff]
    %v138 = vld [vmem:[#allocation4 + $0x268] sm:$0xff]
    %v139 = vld [vmem:[#allocation4 + $0x270] sm:$0xff]
    %v140 = vld [vmem:[#allocation4 + $0x278] sm:$0xff]
    %v141 = vld [vmem:[#allocation4 + $0x280] sm:$0xff]
    %v142 = vld [vmem:[#allocation4 + $0x288] sm:$0xff]
    %v143 = vld [vmem:[#allocation4 + $0x290] sm:$0xff]
    %v144 = vld [vmem:[#allocation4 + $0x298] sm:$0xff]
    %v145 = vld [vmem:[#allocation4 + $0x2a0] sm:$0xff]
    %v146 = vld [vmem:[#allocation4 + $0x2a8] sm:$0xff]
    %v147 = vld [vmem:[#allocation4 + $0x2b0] sm:$0xff]
    %v148 = vld [vmem:[#allocation4 + $0x2b8] sm:$0xff]
    %v149 = vld [vmem:[#allocation4 + $0x2c0] sm:$0xff]
    %v150 = vld [vmem:[#allocation4 + $0x2c8] sm:$0xff]
    %v151 = vld [vmem:[#allocation4 + $0x2d0] sm:$0xff]
    %v152 = vld [vmem:[#allocation4 + $0x2d8] sm:$0xff]
    %v153 = vld [vmem:[#allocation4 + $0x2e0] sm:$0xff]
    %v154 = vld [vmem:[#allocation4 + $0x2e8] sm:$0xff]
    %v155 = vld [vmem:[#allocation4 + $0x2f0] sm:$0xff]
    %v156 = vld [vmem:[#allocation4 + $0x2f8] sm:$0xff]
    %v157 = vld [vmem:[#allocation4 + $0x300] sm:$0xff]
    %v158 = vld [vmem:[#allocation4 + $0x308] sm:$0xff]
    %v159 = vld [vmem:[#allocation4 + $0x310] sm:$0xff]
    %v160 = vld [vmem:[#allocation4 + $0x318] sm:$0xff]
    %v161 = vld [vmem:[#allocation4 + $0x320] sm:$0xff]
    %v162 = vld [vmem:[#allocation4 + $0x328] sm:$0xff]
    %v163 = vld [vmem:[#allocation4 + $0x330] sm:$0xff]
    %v164 = vld [vmem:[#allocation4 + $0x338] sm:$0xff]
    %v165 = vld [vmem:[#allocation4 + $0x340] sm:$0xff]
    %v166 = vld [vmem:[#allocation4 + $0x348] sm:$0xff]
    %v167 = vld [vmem:[#allocation4 + $0x350] sm:$0xff]
    %v168 = vld [vmem:[#allocation4 + $0x358] sm:$0xff]
    %v169 = vld [vmem:[#allocation4 + $0x360] sm:$0xff]
    %v170 = vld [vmem:[#allocation4 + $0x368] sm:$0xff]
    %v171 = vld [vmem:[#allocation4 + $0x370] sm:$0xff]
    %v172 = vld [vmem:[#allocation4 + $0x378] sm:$0xff]
    %v173 = vld [vmem:[#allocation4 + $0x380] sm:$0xff]
    %v174 = vld [vmem:[#allocation4 + $0x388] sm:$0xff]
    %v175 = vld [vmem:[#allocation4 + $0x390] sm:$0xff]
    %v176 = vld [vmem:[#allocation4 + $0x398] sm:$0xff]
    %v177 = vld [vmem:[#allocation4 + $0x3a0] sm:$0xff]
    %v178 = vld [vmem:[#allocation4 + $0x3a8] sm:$0xff]
    %v179 = vld [vmem:[#allocation4 + $0x3b0] sm:$0xff]
    %v180 = vld [vmem:[#allocation4 + $0x3b8] sm:$0xff]
    %v181 = vld [vmem:[#allocation4 + $0x3c0] sm:$0xff]
    %v182 = vld [vmem:[#allocation4 + $0x3c8] sm:$0xff]
    %v183 = vld [vmem:[#allocation4 + $0x3d0] sm:$0xff]
    %v184 = vld [vmem:[#allocation4 + $0x3d8] sm:$0xff]
    %v185 = vld [vmem:[#allocation4 + $0x3e0] sm:$0xff]
    %v186 = vld [vmem:[#allocation4 + $0x3e8] sm:$0xff]
    %v187 = vld [vmem:[#allocation4 + $0x3f0] sm:$0xff]
    %v188 = vld [vmem:[#allocation4 + $0x3f8] sm:$0xff]
    %v189 = vld [vmem:[#allocation4 + $0x400] sm:$0xff]
    %v190 = vld [vmem:[#allocation4 + $0x408] sm:$0xff]
    %v191 = vld [vmem:[#allocation4 + $0x410] sm:$0xff]
    %v192 = vld [vmem:[#allocation4 + $0x418] sm:$0xff]
    %v193 = vld [vmem:[#allocation4 + $0x420] sm:$0xff]
    %v194 = vld [vmem:[#allocation4 + $0x428] sm:$0xff]
    %v195 = vld [vmem:[#allocation4 + $0x430] sm:$0xff]
    %v196 = vld [vmem:[#allocation4 + $0x438] sm:$0xff]
    %v197 = vld [vmem:[#allocation4 + $0x440] sm:$0xff]
    %v198 = vld [vmem:[#allocation4 + $0x448] sm:$0xff]
    %v199 = vld [vmem:[#allocation4 + $0x450] sm:$0xff]
    %v200 = vld [vmem:[#allocation4 + $0x458] sm:$0xff]
    %v201 = vld [vmem:[#allocation4 + $0x460] sm:$0xff]
    %v202 = vld [vmem:[#allocation4 + $0x468] sm:$0xff]
    %v203 = vld [vmem:[#allocation4 + $0x470] sm:$0xff]
    %v204 = vld [vmem:[#allocation4 + $0x478] sm:$0xff]
    %v205 = vld [vmem:[#allocation4 + $0x480] sm:$0xff]
    %v206 = vld [vmem:[#allocation4 + $0x488] sm:$0xff]
    %v207 = vld [vmem:[#allocation4 + $0x490] sm:$0xff]
    %v208 = vld [vmem:[#allocation4 + $0x498] sm:$0xff]
    %v209 = vld [vmem:[#allocation4 + $0x4a0] sm:$0xff]
    %v210 = vld [vmem:[#allocation4 + $0x4a8] sm:$0xff]
    %v211 = vld [vmem:[#allocation4 + $0x4b0] sm:$0xff]
    %v212 = vld [vmem:[#allocation4 + $0x4b8] sm:$0xff]
    %v213 = vld [vmem:[#allocation4 + $0x4c0] sm:$0xff]
    %v214 = vld [vmem:[#allocation4 + $0x4c8] sm:$0xff]
    %v215 = vld [vmem:[#allocation4 + $0x4d0] sm:$0xff]
    %v216 = vld [vmem:[#allocation4 + $0x4d8] sm:$0xff]
    %v217 = vld [vmem:[#allocation4 + $0x4e0] sm:$0xff]
    %v218 = vld [vmem:[#allocation4 + $0x4e8] sm:$0xff]
    %v219 = vld [vmem:[#allocation4 + $0x4f0] sm:$0xff]
    %v220 = vld [vmem:[#allocation4 + $0x4f8] sm:$0xff]
    %v221 = vld [vmem:[#allocation4 + $0x500] sm:$0xff]
    %v222 = vld [vmem:[#allocation4 + $0x508] sm:$0xff]
    %v223 = vld [vmem:[#allocation4 + $0x510] sm:$0xff]
    %v224 = vld [vmem:[#allocation4 + $0x518] sm:$0xff]
    %v225 = vld [vmem:[#allocation4 + $0x520] sm:$0xff]
    %v226 = vld [vmem:[#allocation4 + $0x528] sm:$0xff]
    %v227 = vld [vmem:[#allocation4 + $0x530] sm:$0xff]
    %v228 = vld [vmem:[#allocation4 + $0x538] sm:$0xff]
    %v229 = vld [vmem:[#allocation4 + $0x540] sm:$0xff]
    %v230 = vld [vmem:[#allocation4 + $0x548] sm:$0xff]
    %v231 = vld [vmem:[#allocation4 + $0x550] sm:$0xff]
    %v232 = vld [vmem:[#allocation4 + $0x558] sm:$0xff]
    %v233 = vld [vmem:[#allocation4 + $0x560] sm:$0xff]
    %v234 = vld [vmem:[#allocation4 + $0x568] sm:$0xff]
    %v235 = vld [vmem:[#allocation4 + $0x570] sm:$0xff]
    %v236 = vld [vmem:[#allocation4 + $0x578] sm:$0xff]
    %v237 = vld [vmem:[#allocation4 + $0x580] sm:$0xff]
    %v238 = vld [vmem:[#allocation4 + $0x588] sm:$0xff]
    %v239 = vld [vmem:[#allocation4 + $0x590] sm:$0xff]
    %v240 = vld [vmem:[#allocation4 + $0x598] sm:$0xff]
    %v241 = vld [vmem:[#allocation4 + $0x5a0] sm:$0xff]
    %v242 = vld [vmem:[#allocation4 + $0x5a8] sm:$0xff]
    %v243 = vld [vmem:[#allocation4 + $0x5b0] sm:$0xff]
    %v244 = vld [vmem:[#allocation4 + $0x5b8] sm:$0xff]
    %v245 = vld [vmem:[#allocation4 + $0x5c0] sm:$0xff]
    %v246 = vld [vmem:[#allocation4 + $0x5c8] sm:$0xff]
    %v247 = vld [vmem:[#allocation4 + $0x5d0] sm:$0xff]
    %v248 = vld [vmem:[#allocation4 + $0x5d8] sm:$0xff]
    %v249 = vld [vmem:[#allocation4 + $0x5e0] sm:$0xff]
    %v250 = vld [vmem:[#allocation4 + $0x5e8] sm:$0xff]
    %v251 = vld [vmem:[#allocation4 + $0x5f0] sm:$0xff]
    %v252 = vld [vmem:[#allocation4 + $0x5f8] sm:$0xff]
    %v253 = vld [vmem:[#allocation4 + $0x600] sm:$0xff]
    %v254 = vld [vmem:[#allocation4 + $0x608] sm:$0xff]
    %v255 = vld [vmem:[#allocation4 + $0x610] sm:$0xff]
    %v256 = vld [vmem:[#allocation4 + $0x618] sm:$0xff]
    %v257 = vld [vmem:[#allocation4 + $0x620] sm:$0xff]
    %v258 = vld [vmem:[#allocation4 + $0x628] sm:$0xff]
    %v259 = vld [vmem:[#allocation4 + $0x630] sm:$0xff]
    %v260 = vld [vmem:[#allocation4 + $0x638] sm:$0xff]
    %v261 = vld [vmem:[#allocation4 + $0x640] sm:$0xff]
    %v262 = vld [vmem:[#allocation4 + $0x648] sm:$0xff]
    %v263 = vld [vmem:[#allocation4 + $0x650] sm:$0xff]
    %v264 = vld [vmem:[#allocation4 + $0x658] sm:$0xff]
    %v265 = vld [vmem:[#allocation4 + $0x660] sm:$0xff]
    %v266 = vld [vmem:[#allocation4 + $0x668] sm:$0xff]
    %v267 = vld [vmem:[#allocation4 + $0x670] sm:$0xff]
    %v268 = vld [vmem:[#allocation4 + $0x678] sm:$0xff]
    %v269 = vld [vmem:[#allocation4 + $0x680] sm:$0xff]
    %v270 = vld [vmem:[#allocation4 + $0x688] sm:$0xff]
    %v271 = vld [vmem:[#allocation4 + $0x690] sm:$0xff]
    %v272 = vld [vmem:[#allocation4 + $0x698] sm:$0xff]
    %v273 = vld [vmem:[#allocation4 + $0x6a0] sm:$0xff]
    %v274 = vld [vmem:[#allocation4 + $0x6a8] sm:$0xff]
    %v275 = vld [vmem:[#allocation4 + $0x6b0] sm:$0xff]
    %v276 = vld [vmem:[#allocation4 + $0x6b8] sm:$0xff]
    %v277 = vld [vmem:[#allocation4 + $0x6c0] sm:$0xff]
    %v278 = vld [vmem:[#allocation4 + $0x6c8] sm:$0xff]
    %v279 = vld [vmem:[#allocation4 + $0x6d0] sm:$0xff]
    %v280 = vld [vmem:[#allocation4 + $0x6d8] sm:$0xff]
    %v281 = vld [vmem:[#allocation4 + $0x6e0] sm:$0xff]
    %v282 = vld [vmem:[#allocation4 + $0x6e8] sm:$0xff]
    %v283 = vld [vmem:[#allocation4 + $0x6f0] sm:$0xff]
    %v284 = vld [vmem:[#allocation4 + $0x6f8] sm:$0xff]
    %v285 = vld [vmem:[#allocation4 + $0x700] sm:$0xff]
    %v286 = vld [vmem:[#allocation4 + $0x708] sm:$0xff]
    %v287 = vld [vmem:[#allocation4 + $0x710] sm:$0xff]
    %v288 = vld [vmem:[#allocation4 + $0x718] sm:$0xff]
    %v289 = vld [vmem:[#allocation4 + $0x720] sm:$0xff]
    %v290 = vld [vmem:[#allocation4 + $0x728] sm:$0xff]
    %v291 = vld [vmem:[#allocation4 + $0x730] sm:$0xff]
    %v292 = vld [vmem:[#allocation4 + $0x738] sm:$0xff]
    %v293 = vld [vmem:[#allocation4 + $0x740] sm:$0xff]
    %v294 = vld [vmem:[#allocation4 + $0x748] sm:$0xff]
    %v295 = vld [vmem:[#allocation4 + $0x750] sm:$0xff]
    %v296 = vld [vmem:[#allocation4 + $0x758] sm:$0xff]
    %v297 = vld [vmem:[#allocation4 + $0x760] sm:$0xff]
    %v298 = vld [vmem:[#allocation4 + $0x768] sm:$0xff]
    %v299 = vld [vmem:[#allocation4 + $0x770] sm:$0xff]
    %v300 = vld [vmem:[#allocation4 + $0x778] sm:$0xff]
    %v301 = vld [vmem:[#allocation4 + $0x780] sm:$0xff]
    %v302 = vld [vmem:[#allocation4 + $0x788] sm:$0xff]
    %v303 = vld [vmem:[#allocation4 + $0x790] sm:$0xff]
    %v304 = vld [vmem:[#allocation4 + $0x798] sm:$0xff]
    %v305 = vld [vmem:[#allocation4 + $0x7a0] sm:$0xff]
    %v306 = vld [vmem:[#allocation4 + $0x7a8] sm:$0xff]
    %v307 = vld [vmem:[#allocation4 + $0x7b0] sm:$0xff]
    %v308 = vld [vmem:[#allocation4 + $0x7b8] sm:$0xff]
    %v309 = vld [vmem:[#allocation4 + $0x7c0] sm:$0xff]
    %v310 = vld [vmem:[#allocation4 + $0x7c8] sm:$0xff]
    %v311 = vld [vmem:[#allocation4 + $0x7d0] sm:$0xff]
    %v312 = vld [vmem:[#allocation4 + $0x7d8] sm:$0xff]
    %v313 = vld [vmem:[#allocation4 + $0x7e0] sm:$0xff]
    %v314 = vld [vmem:[#allocation4 + $0x7e8] sm:$0xff]
    %v315 = vld [vmem:[#allocation4 + $0x7f0] sm:$0xff]
    %v316 = vld [vmem:[#allocation4 + $0x7f8] sm:$0xff]
    %v317 = vld [vmem:[#allocation4 + $0x800] sm:$0xff]
    %v318 = vld [vmem:[#allocation4 + $0x808] sm:$0xff]
    %v319 = vld [vmem:[#allocation4 + $0x810] sm:$0xff]
    %v320 = vld [vmem:[#allocation4 + $0x818] sm:$0xff]
    %v321 = vld [vmem:[#allocation4 + $0x820] sm:$0xff]
    %v322 = vld [vmem:[#allocation4 + $0x828] sm:$0xff]
    %v323 = vld [vmem:[#allocation4 + $0x830] sm:$0xff]
    %v324 = vld [vmem:[#allocation4 + $0x838] sm:$0xff]
    %v325 = vld [vmem:[#allocation4 + $0x840] sm:$0xff]
    %v326 = vld [vmem:[#allocation4 + $0x848] sm:$0xff]
    %v327 = vld [vmem:[#allocation4 + $0x850] sm:$0xff]
    %v328 = vld [vmem:[#allocation4 + $0x858] sm:$0xff]
    %v329 = vld [vmem:[#allocation4 + $0x860] sm:$0xff]
    %v330 = vld [vmem:[#allocation4 + $0x868] sm:$0xff]
    %v331 = vld [vmem:[#allocation4 + $0x870] sm:$0xff]
    %v332 = vld [vmem:[#allocation4 + $0x878] sm:$0xff]
    %v333 = vld [vmem:[#allocation4 + $0x880] sm:$0xff]
    %v334 = vld [vmem:[#allocation4 + $0x888] sm:$0xff]
    %v335 = vld [vmem:[#allocation4 + $0x890] sm:$0xff]
    %v336 = vld [vmem:[#allocation4 + $0x898] sm:$0xff]
    %v337 = vld [vmem:[#allocation4 + $0x8a0] sm:$0xff]
    %v338 = vld [vmem:[#allocation4 + $0x8a8] sm:$0xff]
    %v339 = vld [vmem:[#allocation4 + $0x8b0] sm:$0xff]
    %v340 = vld [vmem:[#allocation4 + $0x8b8] sm:$0xff]
    %v341 = vld [vmem:[#allocation4 + $0x8c0] sm:$0xff]
    %v342 = vld [vmem:[#allocation4 + $0x8c8] sm:$0xff]
    %v343 = vld [vmem:[#allocation4 + $0x8d0] sm:$0xff]
    %v344 = vld [vmem:[#allocation4 + $0x8d8] sm:$0xff]
    %v345 = vld [vmem:[#allocation4 + $0x8e0] sm:$0xff]
    %v346 = vld [vmem:[#allocation4 + $0x8e8] sm:$0xff]
    %v347 = vld [vmem:[#allocation4 + $0x8f0] sm:$0xff]
    %v348 = vld [vmem:[#allocation4 + $0x8f8] sm:$0xff]
    %v349 = vld [vmem:[#allocation4 + $0x900] sm:$0xff]
    %v350 = vld [vmem:[#allocation4 + $0x908] sm:$0xff]
    %v351 = vld [vmem:[#allocation4 + $0x910] sm:$0xff]
    %v352 = vld [vmem:[#allocation4 + $0x918] sm:$0xff]
    %v353 = vld [vmem:[#allocation4 + $0x920] sm:$0xff]
    %v354 = vld [vmem:[#allocation4 + $0x928] sm:$0xff]
    %v355 = vld [vmem:[#allocation4 + $0x930] sm:$0xff]
    %v356 = vld [vmem:[#allocation4 + $0x938] sm:$0xff]
    %v357 = vld [vmem:[#allocation4 + $0x940] sm:$0xff]
    %v358 = vld [vmem:[#allocation4 + $0x948] sm:$0xff]
    %v359 = vld [vmem:[#allocation4 + $0x950] sm:$0xff]
    %v360 = vld [vmem:[#allocation4 + $0x958] sm:$0xff]
    %v361 = vld [vmem:[#allocation4 + $0x960] sm:$0xff]
    %v362 = vld [vmem:[#allocation4 + $0x968] sm:$0xff]
    %v363 = vld [vmem:[#allocation4 + $0x970] sm:$0xff]
    %v364 = vld [vmem:[#allocation4 + $0x978] sm:$0xff]
    %v365 = vld [vmem:[#allocation4 + $0x980] sm:$0xff]
    %v366 = vld [vmem:[#allocation4 + $0x988] sm:$0xff]
    %v367 = vld [vmem:[#allocation4 + $0x990] sm:$0xff]
    %v368 = vld [vmem:[#allocation4 + $0x998] sm:$0xff]
    %v369 = vld [vmem:[#allocation4 + $0x9a0] sm:$0xff]
    %v370 = vld [vmem:[#allocation4 + $0x9a8] sm:$0xff]
    %v371 = vld [vmem:[#allocation4 + $0x9b0] sm:$0xff]
    %v372 = vld [vmem:[#allocation4 + $0x9b8] sm:$0xff]
    %v373 = vld [vmem:[#allocation4 + $0x9c0] sm:$0xff]
    %v374 = vld [vmem:[#allocation4 + $0x9c8] sm:$0xff]
    %v375 = vld [vmem:[#allocation4 + $0x9d0] sm:$0xff]
    %v376 = vld [vmem:[#allocation4 + $0x9d8] sm:$0xff]
    %v377 = vld [vmem:[#allocation4 + $0x9e0] sm:$0xff]
    %v378 = vld [vmem:[#allocation4 + $0x9e8] sm:$0xff]
    %v379 = vld [vmem:[#allocation4 + $0x9f0] sm:$0xff]
    %v380 = vld [vmem:[#allocation4 + $0x9f8] sm:$0xff]
    %v381 = vld [vmem:[#allocation4 + $0xa00] sm:$0xff]
    %v382 = vld [vmem:[#allocation4 + $0xa08] sm:$0xff]
    %v383 = vld [vmem:[#allocation4 + $0xa10] sm:$0xff]
    %v384 = vld [vmem:[#allocation4 + $0xa18] sm:$0xff]
    %v385 = vld [vmem:[#allocation4 + $0xa20] sm:$0xff]
    %v386 = vld [vmem:[#allocation4 + $0xa28] sm:$0xff]
    %v387 = vld [vmem:[#allocation4 + $0xa30] sm:$0xff]
    %v388 = vld [vmem:[#allocation4 + $0xa38] sm:$0xff]
    %v389 = vld [vmem:[#allocation4 + $0xa40] sm:$0xff]
    %v390 = vld [vmem:[#allocation4 + $0xa48] sm:$0xff]
    %v391 = vld [vmem:[#allocation4 + $0xa50] sm:$0xff]
    %v392 = vld [vmem:[#allocation4 + $0xa58] sm:$0xff]
    %v393 = vld [vmem:[#allocation4 + $0xa60] sm:$0xff]
    %v394 = vld [vmem:[#allocation4 + $0xa68] sm:$0xff]
    %v395 = vld [vmem:[#allocation4 + $0xa70] sm:$0xff]
    %v396 = vld [vmem:[#allocation4 + $0xa78] sm:$0xff]
    %v397 = vld [vmem:[#allocation4 + $0xa80] sm:$0xff]
    %v398 = vld [vmem:[#allocation4 + $0xa88] sm:$0xff]
    %v399 = vld [vmem:[#allocation4 + $0xa90] sm:$0xff]
    %v400 = vld [vmem:[#allocation4 + $0xa98] sm:$0xff]
    %v401 = vld [vmem:[#allocation4 + $0xaa0] sm:$0xff]
    %v402 = vld [vmem:[#allocation4 + $0xaa8] sm:$0xff]
    %v403 = vld [vmem:[#allocation4 + $0xab0] sm:$0xff]
    %v404 = vld [vmem:[#allocation4 + $0xab8] sm:$0xff]
    %v405 = vld [vmem:[#allocation4 + $0xac0] sm:$0xff]
    %v406 = vld [vmem:[#allocation4 + $0xac8] sm:$0xff]
    %v407 = vld [vmem:[#allocation4 + $0xad0] sm:$0xff]
    %v408 = vld [vmem:[#allocation4 + $0xad8] sm:$0xff]
    %v409 = vld [vmem:[#allocation4 + $0xae0] sm:$0xff]
    %v410 = vld [vmem:[#allocation4 + $0xae8] sm:$0xff]
    %v411 = vld [vmem:[#allocation4 + $0xaf0] sm:$0xff]
    %v412 = vld [vmem:[#allocation4 + $0xaf8] sm:$0xff]
    %v413 = vld [vmem:[#allocation4 + $0xb00] sm:$0xff]
    %v414 = vld [vmem:[#allocation4 + $0xb08] sm:$0xff]
    %v415 = vld [vmem:[#allocation4 + $0xb10] sm:$0xff]
    %v416 = vld [vmem:[#allocation4 + $0xb18] sm:$0xff]
    %v417 = vld [vmem:[#allocation4 + $0xb20] sm:$0xff]
    %v418 = vld [vmem:[#allocation4 + $0xb28] sm:$0xff]
    %v419 = vld [vmem:[#allocation4 + $0xb30] sm:$0xff]
    %v420 = vld [vmem:[#allocation4 + $0xb38] sm:$0xff]
    %v421 = vld [vmem:[#allocation4 + $0xb40] sm:$0xff]
    %v422 = vld [vmem:[#allocation4 + $0xb48] sm:$0xff]
    %v423 = vld [vmem:[#allocation4 + $0xb50] sm:$0xff]
    %v424 = vld [vmem:[#allocation4 + $0xb58] sm:$0xff]
    %v425 = vld [vmem:[#allocation4 + $0xb60] sm:$0xff]
    %v426 = vld [vmem:[#allocation4 + $0xb68] sm:$0xff]
    %v427 = vld [vmem:[#allocation4 + $0xb70] sm:$0xff]
    %v428 = vld [vmem:[#allocation4 + $0xb78] sm:$0xff]
    %v429 = vld [vmem:[#allocation4 + $0xb80] sm:$0xff]
    %v430 = vld [vmem:[#allocation4 + $0xb88] sm:$0xff]
    %v431 = vld [vmem:[#allocation4 + $0xb90] sm:$0xff]
    %v432 = vld [vmem:[#allocation4 + $0xb98] sm:$0xff]
    %v433 = vld [vmem:[#allocation4 + $0xba0] sm:$0xff]
    %v434 = vld [vmem:[#allocation4 + $0xba8] sm:$0xff]
    %v435 = vld [vmem:[#allocation4 + $0xbb0] sm:$0xff]
    %v436 = vld [vmem:[#allocation4 + $0xbb8] sm:$0xff]
    %v437 = vld [vmem:[#allocation4 + $0xbc0] sm:$0xff]
    %v438 = vld [vmem:[#allocation4 + $0xbc8] sm:$0xff]
    %v439 = vld [vmem:[#allocation4 + $0xbd0] sm:$0xff]
    %v440 = vld [vmem:[#allocation4 + $0xbd8] sm:$0xff]
    %v441 = vld [vmem:[#allocation4 + $0xbe0] sm:$0xff]
    %v442 = vld [vmem:[#allocation4 + $0xbe8] sm:$0xff]
    %v443 = vld [vmem:[#allocation4 + $0xbf0] sm:$0xff]
    %v444 = vld [vmem:[#allocation4 + $0xbf8] sm:$0xff]
    %v445 = vld [vmem:[#allocation4 + $0xc00] sm:$0xff]
    %v446 = vld [vmem:[#allocation4 + $0xc08] sm:$0xff]
    %v447 = vld [vmem:[#allocation4 + $0xc10] sm:$0xff]
    %v448 = vld [vmem:[#allocation4 + $0xc18] sm:$0xff]
    %v449 = vld [vmem:[#allocation4 + $0xc20] sm:$0xff]
    %v450 = vld [vmem:[#allocation4 + $0xc28] sm:$0xff]
    %v451 = vld [vmem:[#allocation4 + $0xc30] sm:$0xff]
    %v452 = vld [vmem:[#allocation4 + $0xc38] sm:$0xff]
    %v453 = vld [vmem:[#allocation4 + $0xc40] sm:$0xff]
    %v454 = vld [vmem:[#allocation4 + $0xc48] sm:$0xff]
    %v455 = vld [vmem:[#allocation4 + $0xc50] sm:$0xff]
    %v456 = vld [vmem:[#allocation4 + $0xc58] sm:$0xff]
    %v457 = vld [vmem:[#allocation4 + $0xc60] sm:$0xff]
    %v458 = vld [vmem:[#allocation4 + $0xc68] sm:$0xff]
    %v459 = vld [vmem:[#allocation4 + $0xc70] sm:$0xff]
    %v460 = vld [vmem:[#allocation4 + $0xc78] sm:$0xff]
    %v461 = vld [vmem:[#allocation4 + $0xc80] sm:$0xff]
    %v462 = vld [vmem:[#allocation4 + $0xc88] sm:$0xff]
    %v463 = vld [vmem:[#allocation4 + $0xc90] sm:$0xff]
    %v464 = vld [vmem:[#allocation4 + $0xc98] sm:$0xff]
    %v465 = vld [vmem:[#allocation4 + $0xca0] sm:$0xff]
    %v466 = vld [vmem:[#allocation4 + $0xca8] sm:$0xff]
    %v467 = vld [vmem:[#allocation4 + $0xcb0] sm:$0xff]
    %v468 = vld [vmem:[#allocation4 + $0xcb8] sm:$0xff]
    %v469 = vld [vmem:[#allocation4 + $0xcc0] sm:$0xff]
    %v470 = vld [vmem:[#allocation4 + $0xcc8] sm:$0xff]
    %v471 = vld [vmem:[#allocation4 + $0xcd0] sm:$0xff]
    %v472 = vld [vmem:[#allocation4 + $0xcd8] sm:$0xff]
    %v473 = vld [vmem:[#allocation4 + $0xce0] sm:$0xff]
    %v474 = vld [vmem:[#allocation4 + $0xce8] sm:$0xff]
    %v475 = vld [vmem:[#allocation4 + $0xcf0] sm:$0xff]
    %v476 = vld [vmem:[#allocation4 + $0xcf8] sm:$0xff]
    %v477 = vld [vmem:[#allocation4 + $0xd00] sm:$0xff]
    %v478 = vld [vmem:[#allocation4 + $0xd08] sm:$0xff]
    %v479 = vld [vmem:[#allocation4 + $0xd10] sm:$0xff]
    %v480 = vld [vmem:[#allocation4 + $0xd18] sm:$0xff]
    %v481 = vld [vmem:[#allocation4 + $0xd20] sm:$0xff]
    %v482 = vld [vmem:[#allocation4 + $0xd28] sm:$0xff]
    %v483 = vld [vmem:[#allocation4 + $0xd30] sm:$0xff]
    %v484 = vld [vmem:[#allocation4 + $0xd38] sm:$0xff]
    %v485 = vld [vmem:[#allocation4 + $0xd40] sm:$0xff]
    %v486 = vld [vmem:[#allocation4 + $0xd48] sm:$0xff]
    %v487 = vld [vmem:[#allocation4 + $0xd50] sm:$0xff]
    %v488 = vld [vmem:[#allocation4 + $0xd58] sm:$0xff]
    %v489 = vld [vmem:[#allocation4 + $0xd60] sm:$0xff]
    %v490 = vld [vmem:[#allocation4 + $0xd68] sm:$0xff]
    %v491 = vld [vmem:[#allocation4 + $0xd70] sm:$0xff]
    %v492 = vld [vmem:[#allocation4 + $0xd78] sm:$0xff]
    %v493 = vld [vmem:[#allocation4 + $0xd80] sm:$0xff]
    %v494 = vld [vmem:[#allocation4 + $0xd88] sm:$0xff]
    %v495 = vld [vmem:[#allocation4 + $0xd90] sm:$0xff]
    %v496 = vld [vmem:[#allocation4 + $0xd98] sm:$0xff]
    %v497 = vld [vmem:[#allocation4 + $0xda0] sm:$0xff]
    %v498 = vld [vmem:[#allocation4 + $0xda8] sm:$0xff]
    %v499 = vld [vmem:[#allocation4 + $0xdb0] sm:$0xff]
    %v500 = vld [vmem:[#allocation4 + $0xdb8] sm:$0xff]
    %v501 = vld [vmem:[#allocation4 + $0xdc0] sm:$0xff]
    %v502 = vld [vmem:[#allocation4 + $0xdc8] sm:$0xff]
    %v503 = vld [vmem:[#allocation4 + $0xdd0] sm:$0xff]
    %v504 = vld [vmem:[#allocation4 + $0xdd8] sm:$0xff]
    %v505 = vld [vmem:[#allocation4 + $0xde0] sm:$0xff]
    %v506 = vld [vmem:[#allocation4 + $0xde8] sm:$0xff]
    %v507 = vld [vmem:[#allocation4 + $0xdf0] sm:$0xff]
    %v508 = vld [vmem:[#allocation4 + $0xdf8] sm:$0xff]
    %v509 = vld [vmem:[#allocation4 + $0xe00] sm:$0xff]
    %v510 = vld [vmem:[#allocation4 + $0xe08] sm:$0xff]
    %v511 = vld [vmem:[#allocation4 + $0xe10] sm:$0xff]
    %v512 = vld [vmem:[#allocation4 + $0xe18] sm:$0xff]
    %v513 = vld [vmem:[#allocation4 + $0xe20] sm:$0xff]
    %v514 = vld [vmem:[#allocation4 + $0xe28] sm:$0xff]
    %v515 = vld [vmem:[#allocation4 + $0xe30] sm:$0xff]
    %v516 = vld [vmem:[#allocation4 + $0xe38] sm:$0xff]
    %v517 = vld [vmem:[#allocation4 + $0xe40] sm:$0xff]
    %v518 = vld [vmem:[#allocation4 + $0xe48] sm:$0xff]
    %v519 = vld [vmem:[#allocation4 + $0xe50] sm:$0xff]
    %v520 = vld [vmem:[#allocation4 + $0xe58] sm:$0xff]
    %v521 = vld [vmem:[#allocation4 + $0xe60] sm:$0xff]
    %v522 = vld [vmem:[#allocation4 + $0xe68] sm:$0xff]
    %v523 = vld [vmem:[#allocation4 + $0xe70] sm:$0xff]
    %v524 = vld [vmem:[#allocation4 + $0xe78] sm:$0xff]
    %v525 = vld [vmem:[#allocation4 + $0xe80] sm:$0xff]
    %v526 = vld [vmem:[#allocation4 + $0xe88] sm:$0xff]
    %v527 = vld [vmem:[#allocation4 + $0xe90] sm:$0xff]
    %v528 = vld [vmem:[#allocation4 + $0xe98] sm:$0xff]
    %v529 = vld [vmem:[#allocation4 + $0xea0] sm:$0xff]
    %v530 = vld [vmem:[#allocation4 + $0xea8] sm:$0xff]
    %v531 = vld [vmem:[#allocation4 + $0xeb0] sm:$0xff]
    %v532 = vld [vmem:[#allocation4 + $0xeb8] sm:$0xff]
    %v533 = vld [vmem:[#allocation4 + $0xec0] sm:$0xff]
    %v534 = vld [vmem:[#allocation4 + $0xec8] sm:$0xff]
    %v535 = vld [vmem:[#allocation4 + $0xed0] sm:$0xff]
    %v536 = vld [vmem:[#allocation4 + $0xed8] sm:$0xff]
    %v537 = vld [vmem:[#allocation4 + $0xee0] sm:$0xff]
    %v538 = vld [vmem:[#allocation4 + $0xee8] sm:$0xff]
    %v539 = vld [vmem:[#allocation4 + $0xef0] sm:$0xff]
    %v540 = vld [vmem:[#allocation4 + $0xef8] sm:$0xff]
    %v541 = vld [vmem:[#allocation4 + $0xf00] sm:$0xff]
    %v542 = vld [vmem:[#allocation4 + $0xf08] sm:$0xff]
    %v543 = vld [vmem:[#allocation4 + $0xf10] sm:$0xff]
    %v544 = vld [vmem:[#allocation4 + $0xf18] sm:$0xff]
    %v545 = vld [vmem:[#allocation4 + $0xf20] sm:$0xff]
    %v546 = vld [vmem:[#allocation4 + $0xf28] sm:$0xff]
    %v547 = vld [vmem:[#allocation4 + $0xf30] sm:$0xff]
    %v548 = vld [vmem:[#allocation4 + $0xf38] sm:$0xff]
    %v549 = vld [vmem:[#allocation4 + $0xf40] sm:$0xff]
    %v550 = vld [vmem:[#allocation4 + $0xf48] sm:$0xff]
    %v551 = vld [vmem:[#allocation4 + $0xf50] sm:$0xff]
    %v552 = vld [vmem:[#allocation4 + $0xf58] sm:$0xff]
    %v553 = vld [vmem:[#allocation4 + $0xf60] sm:$0xff]
    %v554 = vld [vmem:[#allocation4 + $0xf68] sm:$0xff]
    %v555 = vld [vmem:[#allocation4 + $0xf70] sm:$0xff]
    %v556 = vld [vmem:[#allocation4 + $0xf78] sm:$0xff]
    %v557 = vld [vmem:[#allocation4 + $0xf80] sm:$0xff]
    %v558 = vld [vmem:[#allocation4 + $0xf88] sm:$0xff]
    %v559 = vld [vmem:[#allocation4 + $0xf90] sm:$0xff]
    %v560 = vld [vmem:[#allocation4 + $0xf98] sm:$0xff]
    %v561 = vld [vmem:[#allocation4 + $0xfa0] sm:$0xff]
    %v562 = vld [vmem:[#allocation4 + $0xfa8] sm:$0xff]
    %v563 = vld [vmem:[#allocation4 + $0xfb0] sm:$0xff]
    %v564 = vld [vmem:[#allocation4 + $0xfb8] sm:$0xff]
    %v565 = vld [vmem:[#allocation4 + $0xfc0] sm:$0xff]
    %v566 = vld [vmem:[#allocation4 + $0xfc8] sm:$0xff]
    %v567 = vld [vmem:[#allocation4 + $0xfd0] sm:$0xff]
    %v568 = vld [vmem:[#allocation4 + $0xfd8] sm:$0xff]
    %v569 = vld [vmem:[#allocation4 + $0xfe0] sm:$0xff]
    %v570 = vld [vmem:[#allocation4 + $0xfe8] sm:$0xff]
    %v571 = vld [vmem:[#allocation4 + $0xff0] sm:$0xff]
    %v572 = vld [vmem:[#allocation4 + $0xff8] sm:$0xff]
    %v573 = vld [vmem:[#allocation6] sm:$0xff]
    %v574 = vld [vmem:[#allocation6 + $0x8] sm:$0xff]
    %v575 = vld [vmem:[#allocation6 + $0x10] sm:$0xff]
    %v576 = vld [vmem:[#allocation6 + $0x18] sm:$0xff]
    %v577 = vld [vmem:[#allocation6 + $0x20] sm:$0xff]
    %v578 = vld [vmem:[#allocation6 + $0x28] sm:$0xff]
    %v579 = vld [vmem:[#allocation6 + $0x30] sm:$0xff]
    %v580 = vld [vmem:[#allocation6 + $0x38] sm:$0xff]
    %v589 = vperm.slane %v573, 0
    %v590 = vperm.slane %v573, 1
    %v591 = vperm.slane %v573, 2
    %v592 = vperm.slane %v573, 3
    %v593 = vperm.slane %v573, 4
    %v594 = vperm.slane %v573, 5
    %v595 = vperm.slane %v573, 6
    %v596 = vperm.slane %v573, 7
    %v597 = vperm.slane %v574, 0
    %v598 = vperm.slane %v574, 1
    %v599 = vperm.slane %v574, 2
    %v600 = vperm.slane %v574, 3
    %v601 = vperm.slane %v574, 4
    %v602 = vperm.slane %v574, 5
    %v603 = vperm.slane %v574, 6
    %v604 = vperm.slane %v574, 7
    %v605 = vperm.slane %v575, 0
    %v606 = vperm.slane %v575, 1
    %v607 = vperm.slane %v575, 2
    %v608 = vperm.slane %v575, 3
    %v609 = vperm.slane %v575, 4
    %v610 = vperm.slane %v575, 5
    %v611 = vperm.slane %v575, 6
    %v612 = vperm.slane %v575, 7
    %v613 = vperm.slane %v576, 0
    %v614 = vperm.slane %v576, 1
    %v615 = vperm.slane %v576, 2
    %v616 = vperm.slane %v576, 3
    %v617 = vperm.slane %v576, 4
    %v618 = vperm.slane %v576, 5
    %v619 = vperm.slane %v576, 6
    %v620 = vperm.slane %v576, 7
    %v621 = vperm.slane %v577, 0
    %v622 = vperm.slane %v577, 1
    %v623 = vperm.slane %v577, 2
    %v624 = vperm.slane %v577, 3
    %v625 = vperm.slane %v577, 4
    %v626 = vperm.slane %v577, 5
    %v627 = vperm.slane %v577, 6
    %v628 = vperm.slane %v577, 7
    %v629 = vperm.slane %v578, 0
    %v630 = vperm.slane %v578, 1
    %v631 = vperm.slane %v578, 2
    %v632 = vperm.slane %v578, 3
    %v633 = vperm.slane %v578, 4
    %v634 = vperm.slane %v578, 5
    %v635 = vperm.slane %v578, 6
    %v636 = vperm.slane %v578, 7
    %v637 = vperm.slane %v579, 0
    %v638 = vperm.slane %v579, 1
    %v639 = vperm.slane %v579, 2
    %v640 = vperm.slane %v579, 3
    %v641 = vperm.slane %v579, 4
    %v642 = vperm.slane %v579, 5
    %v643 = vperm.slane %v579, 6
    %v644 = vperm.slane %v579, 7
    %v645 = vperm.slane %v580, 0
    %v646 = vperm.slane %v580, 1
    %v647 = vperm.slane %v580, 2
    %v648 = vperm.slane %v580, 3
    %v649 = vperm.slane %v580, 4
    %v650 = vperm.slane %v580, 5
    %v651 = vperm.slane %v580, 6
    %v652 = vperm.slane %v580, 7
    %v1229 = vunpack.c.l.b16 %v61
    %v1230 = vunpack.c.h.b16 %v61
    %v1231 = vunpack.c.l.b16 %v62
    %v1232 = vunpack.c.h.b16 %v62
    %v1233 = vunpack.c.l.b16 %v63
    %v1234 = vunpack.c.h.b16 %v63
    %v1235 = vunpack.c.l.b16 %v64
    %v1236 = vunpack.c.h.b16 %v64
    %v1237 = vunpack.c.l.b16 %v65
    %v1238 = vunpack.c.h.b16 %v65
    %v1239 = vunpack.c.l.b16 %v66
    %v1240 = vunpack.c.h.b16 %v66
    %v1241 = vunpack.c.l.b16 %v67
    %v1242 = vunpack.c.h.b16 %v67
    %v1243 = vunpack.c.l.b16 %v68
    %v1244 = vunpack.c.h.b16 %v68
    %v1245 = vunpack.c.l.b16 %v69
    %v1246 = vunpack.c.h.b16 %v69
    %v1247 = vunpack.c.l.b16 %v70
    %v1248 = vunpack.c.h.b16 %v70
    %v1249 = vunpack.c.l.b16 %v71
    %v1250 = vunpack.c.h.b16 %v71
    %v1251 = vunpack.c.l.b16 %v72
    %v1252 = vunpack.c.h.b16 %v72
    %v1253 = vunpack.c.l.b16 %v73
    %v1254 = vunpack.c.h.b16 %v73
    %v1255 = vunpack.c.l.b16 %v74
    %v1256 = vunpack.c.h.b16 %v74
    %v1257 = vunpack.c.l.b16 %v75
    %v1258 = vunpack.c.h.b16 %v75
    %v1259 = vunpack.c.l.b16 %v76
    %v1260 = vunpack.c.h.b16 %v76
    %v1261 = vunpack.c.l.b16 %v77
    %v1262 = vunpack.c.h.b16 %v77
    %v1263 = vunpack.c.l.b16 %v78
    %v1264 = vunpack.c.h.b16 %v78
    %v1265 = vunpack.c.l.b16 %v79
    %v1266 = vunpack.c.h.b16 %v79
    %v1267 = vunpack.c.l.b16 %v80
    %v1268 = vunpack.c.h.b16 %v80
    %v1269 = vunpack.c.l.b16 %v81
    %v1270 = vunpack.c.h.b16 %v81
    %v1271 = vunpack.c.l.b16 %v82
    %v1272 = vunpack.c.h.b16 %v82
    %v1273 = vunpack.c.l.b16 %v83
    %v1274 = vunpack.c.h.b16 %v83
    %v1275 = vunpack.c.l.b16 %v84
    %v1276 = vunpack.c.h.b16 %v84
    %v1277 = vunpack.c.l.b16 %v85
    %v1278 = vunpack.c.h.b16 %v85
    %v1279 = vunpack.c.l.b16 %v86
    %v1280 = vunpack.c.h.b16 %v86
    %v1281 = vunpack.c.l.b16 %v87
    %v1282 = vunpack.c.h.b16 %v87
    %v1283 = vunpack.c.l.b16 %v88
    %v1284 = vunpack.c.h.b16 %v88
    %v1285 = vunpack.c.l.b16 %v89
    %v1286 = vunpack.c.h.b16 %v89
    %v1287 = vunpack.c.l.b16 %v90
    %v1288 = vunpack.c.h.b16 %v90
    %v1289 = vunpack.c.l.b16 %v91
    %v1290 = vunpack.c.h.b16 %v91
    %v1291 = vunpack.c.l.b16 %v92
    %v1292 = vunpack.c.h.b16 %v92
    %v1293 = vunpack.c.l.b16 %v93
    %v1294 = vunpack.c.h.b16 %v93
    %v1295 = vunpack.c.l.b16 %v94
    %v1296 = vunpack.c.h.b16 %v94
    %v1297 = vunpack.c.l.b16 %v95
    %v1298 = vunpack.c.h.b16 %v95
    %v1299 = vunpack.c.l.b16 %v96
    %v1300 = vunpack.c.h.b16 %v96
    %v1301 = vunpack.c.l.b16 %v97
    %v1302 = vunpack.c.h.b16 %v97
    %v1303 = vunpack.c.l.b16 %v98
    %v1304 = vunpack.c.h.b16 %v98
    %v1305 = vunpack.c.l.b16 %v99
    %v1306 = vunpack.c.h.b16 %v99
    %v1307 = vunpack.c.l.b16 %v100
    %v1308 = vunpack.c.h.b16 %v100
    %v1309 = vunpack.c.l.b16 %v101
    %v1310 = vunpack.c.h.b16 %v101
    %v1311 = vunpack.c.l.b16 %v102
    %v1312 = vunpack.c.h.b16 %v102
    %v1313 = vunpack.c.l.b16 %v103
    %v1314 = vunpack.c.h.b16 %v103
    %v1315 = vunpack.c.l.b16 %v104
    %v1316 = vunpack.c.h.b16 %v104
    %v1317 = vunpack.c.l.b16 %v105
    %v1318 = vunpack.c.h.b16 %v105
    %v1319 = vunpack.c.l.b16 %v106
    %v1320 = vunpack.c.h.b16 %v106
    %v1321 = vunpack.c.l.b16 %v107
    %v1322 = vunpack.c.h.b16 %v107
    %v1323 = vunpack.c.l.b16 %v108
    %v1324 = vunpack.c.h.b16 %v108
    %v1325 = vunpack.c.l.b16 %v109
    %v1326 = vunpack.c.h.b16 %v109
    %v1327 = vunpack.c.l.b16 %v110
    %v1328 = vunpack.c.h.b16 %v110
    %v1329 = vunpack.c.l.b16 %v111
    %v1330 = vunpack.c.h.b16 %v111
    %v1331 = vunpack.c.l.b16 %v112
    %v1332 = vunpack.c.h.b16 %v112
    %v1333 = vunpack.c.l.b16 %v113
    %v1334 = vunpack.c.h.b16 %v113
    %v1335 = vunpack.c.l.b16 %v114
    %v1336 = vunpack.c.h.b16 %v114
    %v1337 = vunpack.c.l.b16 %v115
    %v1338 = vunpack.c.h.b16 %v115
    %v1339 = vunpack.c.l.b16 %v116
    %v1340 = vunpack.c.h.b16 %v116
    %v1341 = vunpack.c.l.b16 %v117
    %v1342 = vunpack.c.h.b16 %v117
    %v1343 = vunpack.c.l.b16 %v118
    %v1344 = vunpack.c.h.b16 %v118
    %v1345 = vunpack.c.l.b16 %v119
    %v1346 = vunpack.c.h.b16 %v119
    %v1347 = vunpack.c.l.b16 %v120
    %v1348 = vunpack.c.h.b16 %v120
    %v1349 = vunpack.c.l.b16 %v121
    %v1350 = vunpack.c.h.b16 %v121
    %v1351 = vunpack.c.l.b16 %v122
    %v1352 = vunpack.c.h.b16 %v122
    %v1353 = vunpack.c.l.b16 %v123
    %v1354 = vunpack.c.h.b16 %v123
    %v1355 = vunpack.c.l.b16 %v124
    %v1356 = vunpack.c.h.b16 %v124
    %v1357 = vunpack.c.l.b16 %v125
    %v1358 = vunpack.c.h.b16 %v125
    %v1359 = vunpack.c.l.b16 %v126
    %v1360 = vunpack.c.h.b16 %v126
    %v1361 = vunpack.c.l.b16 %v127
    %v1362 = vunpack.c.h.b16 %v127
    %v1363 = vunpack.c.l.b16 %v128
    %v1364 = vunpack.c.h.b16 %v128
    %v1365 = vunpack.c.l.b16 %v129
    %v1366 = vunpack.c.h.b16 %v129
    %v1367 = vunpack.c.l.b16 %v130
    %v1368 = vunpack.c.h.b16 %v130
    %v1369 = vunpack.c.l.b16 %v131
    %v1370 = vunpack.c.h.b16 %v131
    %v1371 = vunpack.c.l.b16 %v132
    %v1372 = vunpack.c.h.b16 %v132
    %v1373 = vunpack.c.l.b16 %v133
    %v1374 = vunpack.c.h.b16 %v133
    %v1375 = vunpack.c.l.b16 %v134
    %v1376 = vunpack.c.h.b16 %v134
    %v1377 = vunpack.c.l.b16 %v135
    %v1378 = vunpack.c.h.b16 %v135
    %v1379 = vunpack.c.l.b16 %v136
    %v1380 = vunpack.c.h.b16 %v136
    %v1381 = vunpack.c.l.b16 %v137
    %v1382 = vunpack.c.h.b16 %v137
    %v1383 = vunpack.c.l.b16 %v138
    %v1384 = vunpack.c.h.b16 %v138
    %v1385 = vunpack.c.l.b16 %v139
    %v1386 = vunpack.c.h.b16 %v139
    %v1387 = vunpack.c.l.b16 %v140
    %v1388 = vunpack.c.h.b16 %v140
    %v1389 = vunpack.c.l.b16 %v141
    %v1390 = vunpack.c.h.b16 %v141
    %v1391 = vunpack.c.l.b16 %v142
    %v1392 = vunpack.c.h.b16 %v142
    %v1393 = vunpack.c.l.b16 %v143
    %v1394 = vunpack.c.h.b16 %v143
    %v1395 = vunpack.c.l.b16 %v144
    %v1396 = vunpack.c.h.b16 %v144
    %v1397 = vunpack.c.l.b16 %v145
    %v1398 = vunpack.c.h.b16 %v145
    %v1399 = vunpack.c.l.b16 %v146
    %v1400 = vunpack.c.h.b16 %v146
    %v1401 = vunpack.c.l.b16 %v147
    %v1402 = vunpack.c.h.b16 %v147
    %v1403 = vunpack.c.l.b16 %v148
    %v1404 = vunpack.c.h.b16 %v148
    %v1405 = vunpack.c.l.b16 %v149
    %v1406 = vunpack.c.h.b16 %v149
    %v1407 = vunpack.c.l.b16 %v150
    %v1408 = vunpack.c.h.b16 %v150
    %v1409 = vunpack.c.l.b16 %v151
    %v1410 = vunpack.c.h.b16 %v151
    %v1411 = vunpack.c.l.b16 %v152
    %v1412 = vunpack.c.h.b16 %v152
    %v1413 = vunpack.c.l.b16 %v153
    %v1414 = vunpack.c.h.b16 %v153
    %v1415 = vunpack.c.l.b16 %v154
    %v1416 = vunpack.c.h.b16 %v154
    %v1417 = vunpack.c.l.b16 %v155
    %v1418 = vunpack.c.h.b16 %v155
    %v1419 = vunpack.c.l.b16 %v156
    %v1420 = vunpack.c.h.b16 %v156
    %v1421 = vunpack.c.l.b16 %v157
    %v1422 = vunpack.c.h.b16 %v157
    %v1423 = vunpack.c.l.b16 %v158
    %v1424 = vunpack.c.h.b16 %v158
    %v1425 = vunpack.c.l.b16 %v159
    %v1426 = vunpack.c.h.b16 %v159
    %v1427 = vunpack.c.l.b16 %v160
    %v1428 = vunpack.c.h.b16 %v160
    %v1429 = vunpack.c.l.b16 %v161
    %v1430 = vunpack.c.h.b16 %v161
    %v1431 = vunpack.c.l.b16 %v162
    %v1432 = vunpack.c.h.b16 %v162
    %v1433 = vunpack.c.l.b16 %v163
    %v1434 = vunpack.c.h.b16 %v163
    %v1435 = vunpack.c.l.b16 %v164
    %v1436 = vunpack.c.h.b16 %v164
    %v1437 = vunpack.c.l.b16 %v165
    %v1438 = vunpack.c.h.b16 %v165
    %v1439 = vunpack.c.l.b16 %v166
    %v1440 = vunpack.c.h.b16 %v166
    %v1441 = vunpack.c.l.b16 %v167
    %v1442 = vunpack.c.h.b16 %v167
    %v1443 = vunpack.c.l.b16 %v168
    %v1444 = vunpack.c.h.b16 %v168
    %v1445 = vunpack.c.l.b16 %v169
    %v1446 = vunpack.c.h.b16 %v169
    %v1447 = vunpack.c.l.b16 %v170
    %v1448 = vunpack.c.h.b16 %v170
    %v1449 = vunpack.c.l.b16 %v171
    %v1450 = vunpack.c.h.b16 %v171
    %v1451 = vunpack.c.l.b16 %v172
    %v1452 = vunpack.c.h.b16 %v172
    %v1453 = vunpack.c.l.b16 %v173
    %v1454 = vunpack.c.h.b16 %v173
    %v1455 = vunpack.c.l.b16 %v174
    %v1456 = vunpack.c.h.b16 %v174
    %v1457 = vunpack.c.l.b16 %v175
    %v1458 = vunpack.c.h.b16 %v175
    %v1459 = vunpack.c.l.b16 %v176
    %v1460 = vunpack.c.h.b16 %v176
    %v1461 = vunpack.c.l.b16 %v177
    %v1462 = vunpack.c.h.b16 %v177
    %v1463 = vunpack.c.l.b16 %v178
    %v1464 = vunpack.c.h.b16 %v178
    %v1465 = vunpack.c.l.b16 %v179
    %v1466 = vunpack.c.h.b16 %v179
    %v1467 = vunpack.c.l.b16 %v180
    %v1468 = vunpack.c.h.b16 %v180
    %v1469 = vunpack.c.l.b16 %v181
    %v1470 = vunpack.c.h.b16 %v181
    %v1471 = vunpack.c.l.b16 %v182
    %v1472 = vunpack.c.h.b16 %v182
    %v1473 = vunpack.c.l.b16 %v183
    %v1474 = vunpack.c.h.b16 %v183
    %v1475 = vunpack.c.l.b16 %v184
    %v1476 = vunpack.c.h.b16 %v184
    %v1477 = vunpack.c.l.b16 %v185
    %v1478 = vunpack.c.h.b16 %v185
    %v1479 = vunpack.c.l.b16 %v186
    %v1480 = vunpack.c.h.b16 %v186
    %v1481 = vunpack.c.l.b16 %v187
    %v1482 = vunpack.c.h.b16 %v187
    %v1483 = vunpack.c.l.b16 %v188
    %v1484 = vunpack.c.h.b16 %v188
    %v1485 = vunpack.c.l.b16 %v189
    %v1486 = vunpack.c.h.b16 %v189
    %v1487 = vunpack.c.l.b16 %v190
    %v1488 = vunpack.c.h.b16 %v190
    %v1489 = vunpack.c.l.b16 %v191
    %v1490 = vunpack.c.h.b16 %v191
    %v1491 = vunpack.c.l.b16 %v192
    %v1492 = vunpack.c.h.b16 %v192
    %v1493 = vunpack.c.l.b16 %v193
    %v1494 = vunpack.c.h.b16 %v193
    %v1495 = vunpack.c.l.b16 %v194
    %v1496 = vunpack.c.h.b16 %v194
    %v1497 = vunpack.c.l.b16 %v195
    %v1498 = vunpack.c.h.b16 %v195
    %v1499 = vunpack.c.l.b16 %v196
    %v1500 = vunpack.c.h.b16 %v196
    %v1501 = vunpack.c.l.b16 %v197
    %v1502 = vunpack.c.h.b16 %v197
    %v1503 = vunpack.c.l.b16 %v198
    %v1504 = vunpack.c.h.b16 %v198
    %v1505 = vunpack.c.l.b16 %v199
    %v1506 = vunpack.c.h.b16 %v199
    %v1507 = vunpack.c.l.b16 %v200
    %v1508 = vunpack.c.h.b16 %v200
    %v1509 = vunpack.c.l.b16 %v201
    %v1510 = vunpack.c.h.b16 %v201
    %v1511 = vunpack.c.l.b16 %v202
    %v1512 = vunpack.c.h.b16 %v202
    %v1513 = vunpack.c.l.b16 %v203
    %v1514 = vunpack.c.h.b16 %v203
    %v1515 = vunpack.c.l.b16 %v204
    %v1516 = vunpack.c.h.b16 %v204
    %v1517 = vunpack.c.l.b16 %v205
    %v1518 = vunpack.c.h.b16 %v205
    %v1519 = vunpack.c.l.b16 %v206
    %v1520 = vunpack.c.h.b16 %v206
    %v1521 = vunpack.c.l.b16 %v207
    %v1522 = vunpack.c.h.b16 %v207
    %v1523 = vunpack.c.l.b16 %v208
    %v1524 = vunpack.c.h.b16 %v208
    %v1525 = vunpack.c.l.b16 %v209
    %v1526 = vunpack.c.h.b16 %v209
    %v1527 = vunpack.c.l.b16 %v210
    %v1528 = vunpack.c.h.b16 %v210
    %v1529 = vunpack.c.l.b16 %v211
    %v1530 = vunpack.c.h.b16 %v211
    %v1531 = vunpack.c.l.b16 %v212
    %v1532 = vunpack.c.h.b16 %v212
    %v1533 = vunpack.c.l.b16 %v213
    %v1534 = vunpack.c.h.b16 %v213
    %v1535 = vunpack.c.l.b16 %v214
    %v1536 = vunpack.c.h.b16 %v214
    %v1537 = vunpack.c.l.b16 %v215
    %v1538 = vunpack.c.h.b16 %v215
    %v1539 = vunpack.c.l.b16 %v216
    %v1540 = vunpack.c.h.b16 %v216
    %v1541 = vunpack.c.l.b16 %v217
    %v1542 = vunpack.c.h.b16 %v217
    %v1543 = vunpack.c.l.b16 %v218
    %v1544 = vunpack.c.h.b16 %v218
    %v1545 = vunpack.c.l.b16 %v219
    %v1546 = vunpack.c.h.b16 %v219
    %v1547 = vunpack.c.l.b16 %v220
    %v1548 = vunpack.c.h.b16 %v220
    %v1549 = vunpack.c.l.b16 %v221
    %v1550 = vunpack.c.h.b16 %v221
    %v1551 = vunpack.c.l.b16 %v222
    %v1552 = vunpack.c.h.b16 %v222
    %v1553 = vunpack.c.l.b16 %v223
    %v1554 = vunpack.c.h.b16 %v223
    %v1555 = vunpack.c.l.b16 %v224
    %v1556 = vunpack.c.h.b16 %v224
    %v1557 = vunpack.c.l.b16 %v225
    %v1558 = vunpack.c.h.b16 %v225
    %v1559 = vunpack.c.l.b16 %v226
    %v1560 = vunpack.c.h.b16 %v226
    %v1561 = vunpack.c.l.b16 %v227
    %v1562 = vunpack.c.h.b16 %v227
    %v1563 = vunpack.c.l.b16 %v228
    %v1564 = vunpack.c.h.b16 %v228
    %v1565 = vunpack.c.l.b16 %v229
    %v1566 = vunpack.c.h.b16 %v229
    %v1567 = vunpack.c.l.b16 %v230
    %v1568 = vunpack.c.h.b16 %v230
    %v1569 = vunpack.c.l.b16 %v231
    %v1570 = vunpack.c.h.b16 %v231
    %v1571 = vunpack.c.l.b16 %v232
    %v1572 = vunpack.c.h.b16 %v232
    %v1573 = vunpack.c.l.b16 %v233
    %v1574 = vunpack.c.h.b16 %v233
    %v1575 = vunpack.c.l.b16 %v234
    %v1576 = vunpack.c.h.b16 %v234
    %v1577 = vunpack.c.l.b16 %v235
    %v1578 = vunpack.c.h.b16 %v235
    %v1579 = vunpack.c.l.b16 %v236
    %v1580 = vunpack.c.h.b16 %v236
    %v1581 = vunpack.c.l.b16 %v237
    %v1582 = vunpack.c.h.b16 %v237
    %v1583 = vunpack.c.l.b16 %v238
    %v1584 = vunpack.c.h.b16 %v238
    %v1585 = vunpack.c.l.b16 %v239
    %v1586 = vunpack.c.h.b16 %v239
    %v1587 = vunpack.c.l.b16 %v240
    %v1588 = vunpack.c.h.b16 %v240
    %v1589 = vunpack.c.l.b16 %v241
    %v1590 = vunpack.c.h.b16 %v241
    %v1591 = vunpack.c.l.b16 %v242
    %v1592 = vunpack.c.h.b16 %v242
    %v1593 = vunpack.c.l.b16 %v243
    %v1594 = vunpack.c.h.b16 %v243
    %v1595 = vunpack.c.l.b16 %v244
    %v1596 = vunpack.c.h.b16 %v244
    %v1597 = vunpack.c.l.b16 %v245
    %v1598 = vunpack.c.h.b16 %v245
    %v1599 = vunpack.c.l.b16 %v246
    %v1600 = vunpack.c.h.b16 %v246
    %v1601 = vunpack.c.l.b16 %v247
    %v1602 = vunpack.c.h.b16 %v247
    %v1603 = vunpack.c.l.b16 %v248
    %v1604 = vunpack.c.h.b16 %v248
    %v1605 = vunpack.c.l.b16 %v249
    %v1606 = vunpack.c.h.b16 %v249
    %v1607 = vunpack.c.l.b16 %v250
    %v1608 = vunpack.c.h.b16 %v250
    %v1609 = vunpack.c.l.b16 %v251
    %v1610 = vunpack.c.h.b16 %v251
    %v1611 = vunpack.c.l.b16 %v252
    %v1612 = vunpack.c.h.b16 %v252
    %v1613 = vunpack.c.l.b16 %v253
    %v1614 = vunpack.c.h.b16 %v253
    %v1615 = vunpack.c.l.b16 %v254
    %v1616 = vunpack.c.h.b16 %v254
    %v1617 = vunpack.c.l.b16 %v255
    %v1618 = vunpack.c.h.b16 %v255
    %v1619 = vunpack.c.l.b16 %v256
    %v1620 = vunpack.c.h.b16 %v256
    %v1621 = vunpack.c.l.b16 %v257
    %v1622 = vunpack.c.h.b16 %v257
    %v1623 = vunpack.c.l.b16 %v258
    %v1624 = vunpack.c.h.b16 %v258
    %v1625 = vunpack.c.l.b16 %v259
    %v1626 = vunpack.c.h.b16 %v259
    %v1627 = vunpack.c.l.b16 %v260
    %v1628 = vunpack.c.h.b16 %v260
    %v1629 = vunpack.c.l.b16 %v261
    %v1630 = vunpack.c.h.b16 %v261
    %v1631 = vunpack.c.l.b16 %v262
    %v1632 = vunpack.c.h.b16 %v262
    %v1633 = vunpack.c.l.b16 %v263
    %v1634 = vunpack.c.h.b16 %v263
    %v1635 = vunpack.c.l.b16 %v264
    %v1636 = vunpack.c.h.b16 %v264
    %v1637 = vunpack.c.l.b16 %v265
    %v1638 = vunpack.c.h.b16 %v265
    %v1639 = vunpack.c.l.b16 %v266
    %v1640 = vunpack.c.h.b16 %v266
    %v1641 = vunpack.c.l.b16 %v267
    %v1642 = vunpack.c.h.b16 %v267
    %v1643 = vunpack.c.l.b16 %v268
    %v1644 = vunpack.c.h.b16 %v268
    %v1645 = vunpack.c.l.b16 %v269
    %v1646 = vunpack.c.h.b16 %v269
    %v1647 = vunpack.c.l.b16 %v270
    %v1648 = vunpack.c.h.b16 %v270
    %v1649 = vunpack.c.l.b16 %v271
    %v1650 = vunpack.c.h.b16 %v271
    %v1651 = vunpack.c.l.b16 %v272
    %v1652 = vunpack.c.h.b16 %v272
    %v1653 = vunpack.c.l.b16 %v273
    %v1654 = vunpack.c.h.b16 %v273
    %v1655 = vunpack.c.l.b16 %v274
    %v1656 = vunpack.c.h.b16 %v274
    %v1657 = vunpack.c.l.b16 %v275
    %v1658 = vunpack.c.h.b16 %v275
    %v1659 = vunpack.c.l.b16 %v276
    %v1660 = vunpack.c.h.b16 %v276
    %v1661 = vunpack.c.l.b16 %v277
    %v1662 = vunpack.c.h.b16 %v277
    %v1663 = vunpack.c.l.b16 %v278
    %v1664 = vunpack.c.h.b16 %v278
    %v1665 = vunpack.c.l.b16 %v279
    %v1666 = vunpack.c.h.b16 %v279
    %v1667 = vunpack.c.l.b16 %v280
    %v1668 = vunpack.c.h.b16 %v280
    %v1669 = vunpack.c.l.b16 %v281
    %v1670 = vunpack.c.h.b16 %v281
    %v1671 = vunpack.c.l.b16 %v282
    %v1672 = vunpack.c.h.b16 %v282
    %v1673 = vunpack.c.l.b16 %v283
    %v1674 = vunpack.c.h.b16 %v283
    %v1675 = vunpack.c.l.b16 %v284
    %v1676 = vunpack.c.h.b16 %v284
    %v1677 = vunpack.c.l.b16 %v285
    %v1678 = vunpack.c.h.b16 %v285
    %v1679 = vunpack.c.l.b16 %v286
    %v1680 = vunpack.c.h.b16 %v286
    %v1681 = vunpack.c.l.b16 %v287
    %v1682 = vunpack.c.h.b16 %v287
    %v1683 = vunpack.c.l.b16 %v288
    %v1684 = vunpack.c.h.b16 %v288
    %v1685 = vunpack.c.l.b16 %v289
    %v1686 = vunpack.c.h.b16 %v289
    %v1687 = vunpack.c.l.b16 %v290
    %v1688 = vunpack.c.h.b16 %v290
    %v1689 = vunpack.c.l.b16 %v291
    %v1690 = vunpack.c.h.b16 %v291
    %v1691 = vunpack.c.l.b16 %v292
    %v1692 = vunpack.c.h.b16 %v292
    %v1693 = vunpack.c.l.b16 %v293
    %v1694 = vunpack.c.h.b16 %v293
    %v1695 = vunpack.c.l.b16 %v294
    %v1696 = vunpack.c.h.b16 %v294
    %v1697 = vunpack.c.l.b16 %v295
    %v1698 = vunpack.c.h.b16 %v295
    %v1699 = vunpack.c.l.b16 %v296
    %v1700 = vunpack.c.h.b16 %v296
    %v1701 = vunpack.c.l.b16 %v297
    %v1702 = vunpack.c.h.b16 %v297
    %v1703 = vunpack.c.l.b16 %v298
    %v1704 = vunpack.c.h.b16 %v298
    %v1705 = vunpack.c.l.b16 %v299
    %v1706 = vunpack.c.h.b16 %v299
    %v1707 = vunpack.c.l.b16 %v300
    %v1708 = vunpack.c.h.b16 %v300
    %v1709 = vunpack.c.l.b16 %v301
    %v1710 = vunpack.c.h.b16 %v301
    %v1711 = vunpack.c.l.b16 %v302
    %v1712 = vunpack.c.h.b16 %v302
    %v1713 = vunpack.c.l.b16 %v303
    %v1714 = vunpack.c.h.b16 %v303
    %v1715 = vunpack.c.l.b16 %v304
    %v1716 = vunpack.c.h.b16 %v304
    %v1717 = vunpack.c.l.b16 %v305
    %v1718 = vunpack.c.h.b16 %v305
    %v1719 = vunpack.c.l.b16 %v306
    %v1720 = vunpack.c.h.b16 %v306
    %v1721 = vunpack.c.l.b16 %v307
    %v1722 = vunpack.c.h.b16 %v307
    %v1723 = vunpack.c.l.b16 %v308
    %v1724 = vunpack.c.h.b16 %v308
    %v1725 = vunpack.c.l.b16 %v309
    %v1726 = vunpack.c.h.b16 %v309
    %v1727 = vunpack.c.l.b16 %v310
    %v1728 = vunpack.c.h.b16 %v310
    %v1729 = vunpack.c.l.b16 %v311
    %v1730 = vunpack.c.h.b16 %v311
    %v1731 = vunpack.c.l.b16 %v312
    %v1732 = vunpack.c.h.b16 %v312
    %v1733 = vunpack.c.l.b16 %v313
    %v1734 = vunpack.c.h.b16 %v313
    %v1735 = vunpack.c.l.b16 %v314
    %v1736 = vunpack.c.h.b16 %v314
    %v1737 = vunpack.c.l.b16 %v315
    %v1738 = vunpack.c.h.b16 %v315
    %v1739 = vunpack.c.l.b16 %v316
    %v1740 = vunpack.c.h.b16 %v316
    %v1741 = vunpack.c.l.b16 %v317
    %v1742 = vunpack.c.h.b16 %v317
    %v1743 = vunpack.c.l.b16 %v318
    %v1744 = vunpack.c.h.b16 %v318
    %v1745 = vunpack.c.l.b16 %v319
    %v1746 = vunpack.c.h.b16 %v319
    %v1747 = vunpack.c.l.b16 %v320
    %v1748 = vunpack.c.h.b16 %v320
    %v1749 = vunpack.c.l.b16 %v321
    %v1750 = vunpack.c.h.b16 %v321
    %v1751 = vunpack.c.l.b16 %v322
    %v1752 = vunpack.c.h.b16 %v322
    %v1753 = vunpack.c.l.b16 %v323
    %v1754 = vunpack.c.h.b16 %v323
    %v1755 = vunpack.c.l.b16 %v324
    %v1756 = vunpack.c.h.b16 %v324
    %v1757 = vunpack.c.l.b16 %v325
    %v1758 = vunpack.c.h.b16 %v325
    %v1759 = vunpack.c.l.b16 %v326
    %v1760 = vunpack.c.h.b16 %v326
    %v1761 = vunpack.c.l.b16 %v327
    %v1762 = vunpack.c.h.b16 %v327
    %v1763 = vunpack.c.l.b16 %v328
    %v1764 = vunpack.c.h.b16 %v328
    %v1765 = vunpack.c.l.b16 %v329
    %v1766 = vunpack.c.h.b16 %v329
    %v1767 = vunpack.c.l.b16 %v330
    %v1768 = vunpack.c.h.b16 %v330
    %v1769 = vunpack.c.l.b16 %v331
    %v1770 = vunpack.c.h.b16 %v331
    %v1771 = vunpack.c.l.b16 %v332
    %v1772 = vunpack.c.h.b16 %v332
    %v1773 = vunpack.c.l.b16 %v333
    %v1774 = vunpack.c.h.b16 %v333
    %v1775 = vunpack.c.l.b16 %v334
    %v1776 = vunpack.c.h.b16 %v334
    %v1777 = vunpack.c.l.b16 %v335
    %v1778 = vunpack.c.h.b16 %v335
    %v1779 = vunpack.c.l.b16 %v336
    %v1780 = vunpack.c.h.b16 %v336
    %v1781 = vunpack.c.l.b16 %v337
    %v1782 = vunpack.c.h.b16 %v337
    %v1783 = vunpack.c.l.b16 %v338
    %v1784 = vunpack.c.h.b16 %v338
    %v1785 = vunpack.c.l.b16 %v339
    %v1786 = vunpack.c.h.b16 %v339
    %v1787 = vunpack.c.l.b16 %v340
    %v1788 = vunpack.c.h.b16 %v340
    %v1789 = vunpack.c.l.b16 %v341
    %v1790 = vunpack.c.h.b16 %v341
    %v1791 = vunpack.c.l.b16 %v342
    %v1792 = vunpack.c.h.b16 %v342
    %v1793 = vunpack.c.l.b16 %v343
    %v1794 = vunpack.c.h.b16 %v343
    %v1795 = vunpack.c.l.b16 %v344
    %v1796 = vunpack.c.h.b16 %v344
    %v1797 = vunpack.c.l.b16 %v345
    %v1798 = vunpack.c.h.b16 %v345
    %v1799 = vunpack.c.l.b16 %v346
    %v1800 = vunpack.c.h.b16 %v346
    %v1801 = vunpack.c.l.b16 %v347
    %v1802 = vunpack.c.h.b16 %v347
    %v1803 = vunpack.c.l.b16 %v348
    %v1804 = vunpack.c.h.b16 %v348
    %v1805 = vunpack.c.l.b16 %v349
    %v1806 = vunpack.c.h.b16 %v349
    %v1807 = vunpack.c.l.b16 %v350
    %v1808 = vunpack.c.h.b16 %v350
    %v1809 = vunpack.c.l.b16 %v351
    %v1810 = vunpack.c.h.b16 %v351
    %v1811 = vunpack.c.l.b16 %v352
    %v1812 = vunpack.c.h.b16 %v352
    %v1813 = vunpack.c.l.b16 %v353
    %v1814 = vunpack.c.h.b16 %v353
    %v1815 = vunpack.c.l.b16 %v354
    %v1816 = vunpack.c.h.b16 %v354
    %v1817 = vunpack.c.l.b16 %v355
    %v1818 = vunpack.c.h.b16 %v355
    %v1819 = vunpack.c.l.b16 %v356
    %v1820 = vunpack.c.h.b16 %v356
    %v1821 = vunpack.c.l.b16 %v357
    %v1822 = vunpack.c.h.b16 %v357
    %v1823 = vunpack.c.l.b16 %v358
    %v1824 = vunpack.c.h.b16 %v358
    %v1825 = vunpack.c.l.b16 %v359
    %v1826 = vunpack.c.h.b16 %v359
    %v1827 = vunpack.c.l.b16 %v360
    %v1828 = vunpack.c.h.b16 %v360
    %v1829 = vunpack.c.l.b16 %v361
    %v1830 = vunpack.c.h.b16 %v361
    %v1831 = vunpack.c.l.b16 %v362
    %v1832 = vunpack.c.h.b16 %v362
    %v1833 = vunpack.c.l.b16 %v363
    %v1834 = vunpack.c.h.b16 %v363
    %v1835 = vunpack.c.l.b16 %v364
    %v1836 = vunpack.c.h.b16 %v364
    %v1837 = vunpack.c.l.b16 %v365
    %v1838 = vunpack.c.h.b16 %v365
    %v1839 = vunpack.c.l.b16 %v366
    %v1840 = vunpack.c.h.b16 %v366
    %v1841 = vunpack.c.l.b16 %v367
    %v1842 = vunpack.c.h.b16 %v367
    %v1843 = vunpack.c.l.b16 %v368
    %v1844 = vunpack.c.h.b16 %v368
    %v1845 = vunpack.c.l.b16 %v369
    %v1846 = vunpack.c.h.b16 %v369
    %v1847 = vunpack.c.l.b16 %v370
    %v1848 = vunpack.c.h.b16 %v370
    %v1849 = vunpack.c.l.b16 %v371
    %v1850 = vunpack.c.h.b16 %v371
    %v1851 = vunpack.c.l.b16 %v372
    %v1852 = vunpack.c.h.b16 %v372
    %v1853 = vunpack.c.l.b16 %v373
    %v1854 = vunpack.c.h.b16 %v373
    %v1855 = vunpack.c.l.b16 %v374
    %v1856 = vunpack.c.h.b16 %v374
    %v1857 = vunpack.c.l.b16 %v375
    %v1858 = vunpack.c.h.b16 %v375
    %v1859 = vunpack.c.l.b16 %v376
    %v1860 = vunpack.c.h.b16 %v376
    %v1861 = vunpack.c.l.b16 %v377
    %v1862 = vunpack.c.h.b16 %v377
    %v1863 = vunpack.c.l.b16 %v378
    %v1864 = vunpack.c.h.b16 %v378
    %v1865 = vunpack.c.l.b16 %v379
    %v1866 = vunpack.c.h.b16 %v379
    %v1867 = vunpack.c.l.b16 %v380
    %v1868 = vunpack.c.h.b16 %v380
    %v1869 = vunpack.c.l.b16 %v381
    %v1870 = vunpack.c.h.b16 %v381
    %v1871 = vunpack.c.l.b16 %v382
    %v1872 = vunpack.c.h.b16 %v382
    %v1873 = vunpack.c.l.b16 %v383
    %v1874 = vunpack.c.h.b16 %v383
    %v1875 = vunpack.c.l.b16 %v384
    %v1876 = vunpack.c.h.b16 %v384
    %v1877 = vunpack.c.l.b16 %v385
    %v1878 = vunpack.c.h.b16 %v385
    %v1879 = vunpack.c.l.b16 %v386
    %v1880 = vunpack.c.h.b16 %v386
    %v1881 = vunpack.c.l.b16 %v387
    %v1882 = vunpack.c.h.b16 %v387
    %v1883 = vunpack.c.l.b16 %v388
    %v1884 = vunpack.c.h.b16 %v388
    %v1885 = vunpack.c.l.b16 %v389
    %v1886 = vunpack.c.h.b16 %v389
    %v1887 = vunpack.c.l.b16 %v390
    %v1888 = vunpack.c.h.b16 %v390
    %v1889 = vunpack.c.l.b16 %v391
    %v1890 = vunpack.c.h.b16 %v391
    %v1891 = vunpack.c.l.b16 %v392
    %v1892 = vunpack.c.h.b16 %v392
    %v1893 = vunpack.c.l.b16 %v393
    %v1894 = vunpack.c.h.b16 %v393
    %v1895 = vunpack.c.l.b16 %v394
    %v1896 = vunpack.c.h.b16 %v394
    %v1897 = vunpack.c.l.b16 %v395
    %v1898 = vunpack.c.h.b16 %v395
    %v1899 = vunpack.c.l.b16 %v396
    %v1900 = vunpack.c.h.b16 %v396
    %v1901 = vunpack.c.l.b16 %v397
    %v1902 = vunpack.c.h.b16 %v397
    %v1903 = vunpack.c.l.b16 %v398
    %v1904 = vunpack.c.h.b16 %v398
    %v1905 = vunpack.c.l.b16 %v399
    %v1906 = vunpack.c.h.b16 %v399
    %v1907 = vunpack.c.l.b16 %v400
    %v1908 = vunpack.c.h.b16 %v400
    %v1909 = vunpack.c.l.b16 %v401
    %v1910 = vunpack.c.h.b16 %v401
    %v1911 = vunpack.c.l.b16 %v402
    %v1912 = vunpack.c.h.b16 %v402
    %v1913 = vunpack.c.l.b16 %v403
    %v1914 = vunpack.c.h.b16 %v403
    %v1915 = vunpack.c.l.b16 %v404
    %v1916 = vunpack.c.h.b16 %v404
    %v1917 = vunpack.c.l.b16 %v405
    %v1918 = vunpack.c.h.b16 %v405
    %v1919 = vunpack.c.l.b16 %v406
    %v1920 = vunpack.c.h.b16 %v406
    %v1921 = vunpack.c.l.b16 %v407
    %v1922 = vunpack.c.h.b16 %v407
    %v1923 = vunpack.c.l.b16 %v408
    %v1924 = vunpack.c.h.b16 %v408
    %v1925 = vunpack.c.l.b16 %v409
    %v1926 = vunpack.c.h.b16 %v409
    %v1927 = vunpack.c.l.b16 %v410
    %v1928 = vunpack.c.h.b16 %v410
    %v1929 = vunpack.c.l.b16 %v411
    %v1930 = vunpack.c.h.b16 %v411
    %v1931 = vunpack.c.l.b16 %v412
    %v1932 = vunpack.c.h.b16 %v412
    %v1933 = vunpack.c.l.b16 %v413
    %v1934 = vunpack.c.h.b16 %v413
    %v1935 = vunpack.c.l.b16 %v414
    %v1936 = vunpack.c.h.b16 %v414
    %v1937 = vunpack.c.l.b16 %v415
    %v1938 = vunpack.c.h.b16 %v415
    %v1939 = vunpack.c.l.b16 %v416
    %v1940 = vunpack.c.h.b16 %v416
    %v1941 = vunpack.c.l.b16 %v417
    %v1942 = vunpack.c.h.b16 %v417
    %v1943 = vunpack.c.l.b16 %v418
    %v1944 = vunpack.c.h.b16 %v418
    %v1945 = vunpack.c.l.b16 %v419
    %v1946 = vunpack.c.h.b16 %v419
    %v1947 = vunpack.c.l.b16 %v420
    %v1948 = vunpack.c.h.b16 %v420
    %v1949 = vunpack.c.l.b16 %v421
    %v1950 = vunpack.c.h.b16 %v421
    %v1951 = vunpack.c.l.b16 %v422
    %v1952 = vunpack.c.h.b16 %v422
    %v1953 = vunpack.c.l.b16 %v423
    %v1954 = vunpack.c.h.b16 %v423
    %v1955 = vunpack.c.l.b16 %v424
    %v1956 = vunpack.c.h.b16 %v424
    %v1957 = vunpack.c.l.b16 %v425
    %v1958 = vunpack.c.h.b16 %v425
    %v1959 = vunpack.c.l.b16 %v426
    %v1960 = vunpack.c.h.b16 %v426
    %v1961 = vunpack.c.l.b16 %v427
    %v1962 = vunpack.c.h.b16 %v427
    %v1963 = vunpack.c.l.b16 %v428
    %v1964 = vunpack.c.h.b16 %v428
    %v1965 = vunpack.c.l.b16 %v429
    %v1966 = vunpack.c.h.b16 %v429
    %v1967 = vunpack.c.l.b16 %v430
    %v1968 = vunpack.c.h.b16 %v430
    %v1969 = vunpack.c.l.b16 %v431
    %v1970 = vunpack.c.h.b16 %v431
    %v1971 = vunpack.c.l.b16 %v432
    %v1972 = vunpack.c.h.b16 %v432
    %v1973 = vunpack.c.l.b16 %v433
    %v1974 = vunpack.c.h.b16 %v433
    %v1975 = vunpack.c.l.b16 %v434
    %v1976 = vunpack.c.h.b16 %v434
    %v1977 = vunpack.c.l.b16 %v435
    %v1978 = vunpack.c.h.b16 %v435
    %v1979 = vunpack.c.l.b16 %v436
    %v1980 = vunpack.c.h.b16 %v436
    %v1981 = vunpack.c.l.b16 %v437
    %v1982 = vunpack.c.h.b16 %v437
    %v1983 = vunpack.c.l.b16 %v438
    %v1984 = vunpack.c.h.b16 %v438
    %v1985 = vunpack.c.l.b16 %v439
    %v1986 = vunpack.c.h.b16 %v439
    %v1987 = vunpack.c.l.b16 %v440
    %v1988 = vunpack.c.h.b16 %v440
    %v1989 = vunpack.c.l.b16 %v441
    %v1990 = vunpack.c.h.b16 %v441
    %v1991 = vunpack.c.l.b16 %v442
    %v1992 = vunpack.c.h.b16 %v442
    %v1993 = vunpack.c.l.b16 %v443
    %v1994 = vunpack.c.h.b16 %v443
    %v1995 = vunpack.c.l.b16 %v444
    %v1996 = vunpack.c.h.b16 %v444
    %v1997 = vunpack.c.l.b16 %v445
    %v1998 = vunpack.c.h.b16 %v445
    %v1999 = vunpack.c.l.b16 %v446
    %v2000 = vunpack.c.h.b16 %v446
    %v2001 = vunpack.c.l.b16 %v447
    %v2002 = vunpack.c.h.b16 %v447
    %v2003 = vunpack.c.l.b16 %v448
    %v2004 = vunpack.c.h.b16 %v448
    %v2005 = vunpack.c.l.b16 %v449
    %v2006 = vunpack.c.h.b16 %v449
    %v2007 = vunpack.c.l.b16 %v450
    %v2008 = vunpack.c.h.b16 %v450
    %v2009 = vunpack.c.l.b16 %v451
    %v2010 = vunpack.c.h.b16 %v451
    %v2011 = vunpack.c.l.b16 %v452
    %v2012 = vunpack.c.h.b16 %v452
    %v2013 = vunpack.c.l.b16 %v453
    %v2014 = vunpack.c.h.b16 %v453
    %v2015 = vunpack.c.l.b16 %v454
    %v2016 = vunpack.c.h.b16 %v454
    %v2017 = vunpack.c.l.b16 %v455
    %v2018 = vunpack.c.h.b16 %v455
    %v2019 = vunpack.c.l.b16 %v456
    %v2020 = vunpack.c.h.b16 %v456
    %v2021 = vunpack.c.l.b16 %v457
    %v2022 = vunpack.c.h.b16 %v457
    %v2023 = vunpack.c.l.b16 %v458
    %v2024 = vunpack.c.h.b16 %v458
    %v2025 = vunpack.c.l.b16 %v459
    %v2026 = vunpack.c.h.b16 %v459
    %v2027 = vunpack.c.l.b16 %v460
    %v2028 = vunpack.c.h.b16 %v460
    %v2029 = vunpack.c.l.b16 %v461
    %v2030 = vunpack.c.h.b16 %v461
    %v2031 = vunpack.c.l.b16 %v462
    %v2032 = vunpack.c.h.b16 %v462
    %v2033 = vunpack.c.l.b16 %v463
    %v2034 = vunpack.c.h.b16 %v463
    %v2035 = vunpack.c.l.b16 %v464
    %v2036 = vunpack.c.h.b16 %v464
    %v2037 = vunpack.c.l.b16 %v465
    %v2038 = vunpack.c.h.b16 %v465
    %v2039 = vunpack.c.l.b16 %v466
    %v2040 = vunpack.c.h.b16 %v466
    %v2041 = vunpack.c.l.b16 %v467
    %v2042 = vunpack.c.h.b16 %v467
    %v2043 = vunpack.c.l.b16 %v468
    %v2044 = vunpack.c.h.b16 %v468
    %v2045 = vunpack.c.l.b16 %v469
    %v2046 = vunpack.c.h.b16 %v469
    %v2047 = vunpack.c.l.b16 %v470
    %v2048 = vunpack.c.h.b16 %v470
    %v2049 = vunpack.c.l.b16 %v471
    %v2050 = vunpack.c.h.b16 %v471
    %v2051 = vunpack.c.l.b16 %v472
    %v2052 = vunpack.c.h.b16 %v472
    %v2053 = vunpack.c.l.b16 %v473
    %v2054 = vunpack.c.h.b16 %v473
    %v2055 = vunpack.c.l.b16 %v474
    %v2056 = vunpack.c.h.b16 %v474
    %v2057 = vunpack.c.l.b16 %v475
    %v2058 = vunpack.c.h.b16 %v475
    %v2059 = vunpack.c.l.b16 %v476
    %v2060 = vunpack.c.h.b16 %v476
    %v2061 = vunpack.c.l.b16 %v477
    %v2062 = vunpack.c.h.b16 %v477
    %v2063 = vunpack.c.l.b16 %v478
    %v2064 = vunpack.c.h.b16 %v478
    %v2065 = vunpack.c.l.b16 %v479
    %v2066 = vunpack.c.h.b16 %v479
    %v2067 = vunpack.c.l.b16 %v480
    %v2068 = vunpack.c.h.b16 %v480
    %v2069 = vunpack.c.l.b16 %v481
    %v2070 = vunpack.c.h.b16 %v481
    %v2071 = vunpack.c.l.b16 %v482
    %v2072 = vunpack.c.h.b16 %v482
    %v2073 = vunpack.c.l.b16 %v483
    %v2074 = vunpack.c.h.b16 %v483
    %v2075 = vunpack.c.l.b16 %v484
    %v2076 = vunpack.c.h.b16 %v484
    %v2077 = vunpack.c.l.b16 %v485
    %v2078 = vunpack.c.h.b16 %v485
    %v2079 = vunpack.c.l.b16 %v486
    %v2080 = vunpack.c.h.b16 %v486
    %v2081 = vunpack.c.l.b16 %v487
    %v2082 = vunpack.c.h.b16 %v487
    %v2083 = vunpack.c.l.b16 %v488
    %v2084 = vunpack.c.h.b16 %v488
    %v2085 = vunpack.c.l.b16 %v489
    %v2086 = vunpack.c.h.b16 %v489
    %v2087 = vunpack.c.l.b16 %v490
    %v2088 = vunpack.c.h.b16 %v490
    %v2089 = vunpack.c.l.b16 %v491
    %v2090 = vunpack.c.h.b16 %v491
    %v2091 = vunpack.c.l.b16 %v492
    %v2092 = vunpack.c.h.b16 %v492
    %v2093 = vunpack.c.l.b16 %v493
    %v2094 = vunpack.c.h.b16 %v493
    %v2095 = vunpack.c.l.b16 %v494
    %v2096 = vunpack.c.h.b16 %v494
    %v2097 = vunpack.c.l.b16 %v495
    %v2098 = vunpack.c.h.b16 %v495
    %v2099 = vunpack.c.l.b16 %v496
    %v2100 = vunpack.c.h.b16 %v496
    %v2101 = vunpack.c.l.b16 %v497
    %v2102 = vunpack.c.h.b16 %v497
    %v2103 = vunpack.c.l.b16 %v498
    %v2104 = vunpack.c.h.b16 %v498
    %v2105 = vunpack.c.l.b16 %v499
    %v2106 = vunpack.c.h.b16 %v499
    %v2107 = vunpack.c.l.b16 %v500
    %v2108 = vunpack.c.h.b16 %v500
    %v2109 = vunpack.c.l.b16 %v501
    %v2110 = vunpack.c.h.b16 %v501
    %v2111 = vunpack.c.l.b16 %v502
    %v2112 = vunpack.c.h.b16 %v502
    %v2113 = vunpack.c.l.b16 %v503
    %v2114 = vunpack.c.h.b16 %v503
    %v2115 = vunpack.c.l.b16 %v504
    %v2116 = vunpack.c.h.b16 %v504
    %v2117 = vunpack.c.l.b16 %v505
    %v2118 = vunpack.c.h.b16 %v505
    %v2119 = vunpack.c.l.b16 %v506
    %v2120 = vunpack.c.h.b16 %v506
    %v2121 = vunpack.c.l.b16 %v507
    %v2122 = vunpack.c.h.b16 %v507
    %v2123 = vunpack.c.l.b16 %v508
    %v2124 = vunpack.c.h.b16 %v508
    %v2125 = vunpack.c.l.b16 %v509
    %v2126 = vunpack.c.h.b16 %v509
    %v2127 = vunpack.c.l.b16 %v510
    %v2128 = vunpack.c.h.b16 %v510
    %v2129 = vunpack.c.l.b16 %v511
    %v2130 = vunpack.c.h.b16 %v511
    %v2131 = vunpack.c.l.b16 %v512
    %v2132 = vunpack.c.h.b16 %v512
    %v2133 = vunpack.c.l.b16 %v513
    %v2134 = vunpack.c.h.b16 %v513
    %v2135 = vunpack.c.l.b16 %v514
    %v2136 = vunpack.c.h.b16 %v514
    %v2137 = vunpack.c.l.b16 %v515
    %v2138 = vunpack.c.h.b16 %v515
    %v2139 = vunpack.c.l.b16 %v516
    %v2140 = vunpack.c.h.b16 %v516
    %v2141 = vunpack.c.l.b16 %v517
    %v2142 = vunpack.c.h.b16 %v517
    %v2143 = vunpack.c.l.b16 %v518
    %v2144 = vunpack.c.h.b16 %v518
    %v2145 = vunpack.c.l.b16 %v519
    %v2146 = vunpack.c.h.b16 %v519
    %v2147 = vunpack.c.l.b16 %v520
    %v2148 = vunpack.c.h.b16 %v520
    %v2149 = vunpack.c.l.b16 %v521
    %v2150 = vunpack.c.h.b16 %v521
    %v2151 = vunpack.c.l.b16 %v522
    %v2152 = vunpack.c.h.b16 %v522
    %v2153 = vunpack.c.l.b16 %v523
    %v2154 = vunpack.c.h.b16 %v523
    %v2155 = vunpack.c.l.b16 %v524
    %v2156 = vunpack.c.h.b16 %v524
    %v2157 = vunpack.c.l.b16 %v525
    %v2158 = vunpack.c.h.b16 %v525
    %v2159 = vunpack.c.l.b16 %v526
    %v2160 = vunpack.c.h.b16 %v526
    %v2161 = vunpack.c.l.b16 %v527
    %v2162 = vunpack.c.h.b16 %v527
    %v2163 = vunpack.c.l.b16 %v528
    %v2164 = vunpack.c.h.b16 %v528
    %v2165 = vunpack.c.l.b16 %v529
    %v2166 = vunpack.c.h.b16 %v529
    %v2167 = vunpack.c.l.b16 %v530
    %v2168 = vunpack.c.h.b16 %v530
    %v2169 = vunpack.c.l.b16 %v531
    %v2170 = vunpack.c.h.b16 %v531
    %v2171 = vunpack.c.l.b16 %v532
    %v2172 = vunpack.c.h.b16 %v532
    %v2173 = vunpack.c.l.b16 %v533
    %v2174 = vunpack.c.h.b16 %v533
    %v2175 = vunpack.c.l.b16 %v534
    %v2176 = vunpack.c.h.b16 %v534
    %v2177 = vunpack.c.l.b16 %v535
    %v2178 = vunpack.c.h.b16 %v535
    %v2179 = vunpack.c.l.b16 %v536
    %v2180 = vunpack.c.h.b16 %v536
    %v2181 = vunpack.c.l.b16 %v537
    %v2182 = vunpack.c.h.b16 %v537
    %v2183 = vunpack.c.l.b16 %v538
    %v2184 = vunpack.c.h.b16 %v538
    %v2185 = vunpack.c.l.b16 %v539
    %v2186 = vunpack.c.h.b16 %v539
    %v2187 = vunpack.c.l.b16 %v540
    %v2188 = vunpack.c.h.b16 %v540
    %v2189 = vunpack.c.l.b16 %v541
    %v2190 = vunpack.c.h.b16 %v541
    %v2191 = vunpack.c.l.b16 %v542
    %v2192 = vunpack.c.h.b16 %v542
    %v2193 = vunpack.c.l.b16 %v543
    %v2194 = vunpack.c.h.b16 %v543
    %v2195 = vunpack.c.l.b16 %v544
    %v2196 = vunpack.c.h.b16 %v544
    %v2197 = vunpack.c.l.b16 %v545
    %v2198 = vunpack.c.h.b16 %v545
    %v2199 = vunpack.c.l.b16 %v546
    %v2200 = vunpack.c.h.b16 %v546
    %v2201 = vunpack.c.l.b16 %v547
    %v2202 = vunpack.c.h.b16 %v547
    %v2203 = vunpack.c.l.b16 %v548
    %v2204 = vunpack.c.h.b16 %v548
    %v2205 = vunpack.c.l.b16 %v549
    %v2206 = vunpack.c.h.b16 %v549
    %v2207 = vunpack.c.l.b16 %v550
    %v2208 = vunpack.c.h.b16 %v550
    %v2209 = vunpack.c.l.b16 %v551
    %v2210 = vunpack.c.h.b16 %v551
    %v2211 = vunpack.c.l.b16 %v552
    %v2212 = vunpack.c.h.b16 %v552
    %v2213 = vunpack.c.l.b16 %v553
    %v2214 = vunpack.c.h.b16 %v553
    %v2215 = vunpack.c.l.b16 %v554
    %v2216 = vunpack.c.h.b16 %v554
    %v2217 = vunpack.c.l.b16 %v555
    %v2218 = vunpack.c.h.b16 %v555
    %v2219 = vunpack.c.l.b16 %v556
    %v2220 = vunpack.c.h.b16 %v556
    %v2221 = vunpack.c.l.b16 %v557
    %v2222 = vunpack.c.h.b16 %v557
    %v2223 = vunpack.c.l.b16 %v558
    %v2224 = vunpack.c.h.b16 %v558
    %v2225 = vunpack.c.l.b16 %v559
    %v2226 = vunpack.c.h.b16 %v559
    %v2227 = vunpack.c.l.b16 %v560
    %v2228 = vunpack.c.h.b16 %v560
    %v2229 = vunpack.c.l.b16 %v561
    %v2230 = vunpack.c.h.b16 %v561
    %v2231 = vunpack.c.l.b16 %v562
    %v2232 = vunpack.c.h.b16 %v562
    %v2233 = vunpack.c.l.b16 %v563
    %v2234 = vunpack.c.h.b16 %v563
    %v2235 = vunpack.c.l.b16 %v564
    %v2236 = vunpack.c.h.b16 %v564
    %v2237 = vunpack.c.l.b16 %v565
    %v2238 = vunpack.c.h.b16 %v565
    %v2239 = vunpack.c.l.b16 %v566
    %v2240 = vunpack.c.h.b16 %v566
    %v2241 = vunpack.c.l.b16 %v567
    %v2242 = vunpack.c.h.b16 %v567
    %v2243 = vunpack.c.l.b16 %v568
    %v2244 = vunpack.c.h.b16 %v568
    %v2245 = vunpack.c.l.b16 %v569
    %v2246 = vunpack.c.h.b16 %v569
    %v2247 = vunpack.c.l.b16 %v570
    %v2248 = vunpack.c.h.b16 %v570
    %v2249 = vunpack.c.l.b16 %v571
    %v2250 = vunpack.c.h.b16 %v571
    %v2251 = vunpack.c.l.b16 %v572
    %v2252 = vunpack.c.h.b16 %v572
    %v2253 = vpack.c.b16 %v1293, %v1229
    %v2254 = vpack.c.b16 %v1294, %v1230
    %v2255 = vpack.c.b16 %v1295, %v1231
    %v2256 = vpack.c.b16 %v1296, %v1232
    %v2257 = vpack.c.b16 %v1297, %v1233
    %v2258 = vpack.c.b16 %v1298, %v1234
    %v2259 = vpack.c.b16 %v1299, %v1235
    %v2260 = vpack.c.b16 %v1300, %v1236
    %v2261 = vpack.c.b16 %v1301, %v1237
    %v2262 = vpack.c.b16 %v1302, %v1238
    %v2263 = vpack.c.b16 %v1303, %v1239
    %v2264 = vpack.c.b16 %v1304, %v1240
    %v2265 = vpack.c.b16 %v1305, %v1241
    %v2266 = vpack.c.b16 %v1306, %v1242
    %v2267 = vpack.c.b16 %v1307, %v1243
    %v2268 = vpack.c.b16 %v1308, %v1244
    %v2269 = vpack.c.b16 %v1309, %v1245
    %v2270 = vpack.c.b16 %v1310, %v1246
    %v2271 = vpack.c.b16 %v1311, %v1247
    %v2272 = vpack.c.b16 %v1312, %v1248
    %v2273 = vpack.c.b16 %v1313, %v1249
    %v2274 = vpack.c.b16 %v1314, %v1250
    %v2275 = vpack.c.b16 %v1315, %v1251
    %v2276 = vpack.c.b16 %v1316, %v1252
    %v2277 = vpack.c.b16 %v1317, %v1253
    %v2278 = vpack.c.b16 %v1318, %v1254
    %v2279 = vpack.c.b16 %v1319, %v1255
    %v2280 = vpack.c.b16 %v1320, %v1256
    %v2281 = vpack.c.b16 %v1321, %v1257
    %v2282 = vpack.c.b16 %v1322, %v1258
    %v2283 = vpack.c.b16 %v1323, %v1259
    %v2284 = vpack.c.b16 %v1324, %v1260
    %v2285 = vpack.c.b16 %v1325, %v1261
    %v2286 = vpack.c.b16 %v1326, %v1262
    %v2287 = vpack.c.b16 %v1327, %v1263
    %v2288 = vpack.c.b16 %v1328, %v1264
    %v2289 = vpack.c.b16 %v1329, %v1265
    %v2290 = vpack.c.b16 %v1330, %v1266
    %v2291 = vpack.c.b16 %v1331, %v1267
    %v2292 = vpack.c.b16 %v1332, %v1268
    %v2293 = vpack.c.b16 %v1333, %v1269
    %v2294 = vpack.c.b16 %v1334, %v1270
    %v2295 = vpack.c.b16 %v1335, %v1271
    %v2296 = vpack.c.b16 %v1336, %v1272
    %v2297 = vpack.c.b16 %v1337, %v1273
    %v2298 = vpack.c.b16 %v1338, %v1274
    %v2299 = vpack.c.b16 %v1339, %v1275
    %v2300 = vpack.c.b16 %v1340, %v1276
    %v2301 = vpack.c.b16 %v1341, %v1277
    %v2302 = vpack.c.b16 %v1342, %v1278
    %v2303 = vpack.c.b16 %v1343, %v1279
    %v2304 = vpack.c.b16 %v1344, %v1280
    %v2305 = vpack.c.b16 %v1345, %v1281
    %v2306 = vpack.c.b16 %v1346, %v1282
    %v2307 = vpack.c.b16 %v1347, %v1283
    %v2308 = vpack.c.b16 %v1348, %v1284
    %v2309 = vpack.c.b16 %v1349, %v1285
    %v2310 = vpack.c.b16 %v1350, %v1286
    %v2311 = vpack.c.b16 %v1351, %v1287
    %v2312 = vpack.c.b16 %v1352, %v1288
    %v2313 = vpack.c.b16 %v1353, %v1289
    %v2314 = vpack.c.b16 %v1354, %v1290
    %v2315 = vpack.c.b16 %v1355, %v1291
    %v2316 = vpack.c.b16 %v1356, %v1292
    %v2317 = vpack.c.b16 %v1421, %v1357
    %v2318 = vpack.c.b16 %v1422, %v1358
    %v2319 = vpack.c.b16 %v1423, %v1359
    %v2320 = vpack.c.b16 %v1424, %v1360
    %v2321 = vpack.c.b16 %v1425, %v1361
    %v2322 = vpack.c.b16 %v1426, %v1362
    %v2323 = vpack.c.b16 %v1427, %v1363
    %v2324 = vpack.c.b16 %v1428, %v1364
    %v2325 = vpack.c.b16 %v1429, %v1365
    %v2326 = vpack.c.b16 %v1430, %v1366
    %v2327 = vpack.c.b16 %v1431, %v1367
    %v2328 = vpack.c.b16 %v1432, %v1368
    %v2329 = vpack.c.b16 %v1433, %v1369
    %v2330 = vpack.c.b16 %v1434, %v1370
    %v2331 = vpack.c.b16 %v1435, %v1371
    %v2332 = vpack.c.b16 %v1436, %v1372
    %v2333 = vpack.c.b16 %v1437, %v1373
    %v2334 = vpack.c.b16 %v1438, %v1374
    %v2335 = vpack.c.b16 %v1439, %v1375
    %v2336 = vpack.c.b16 %v1440, %v1376
    %v2337 = vpack.c.b16 %v1441, %v1377
    %v2338 = vpack.c.b16 %v1442, %v1378
    %v2339 = vpack.c.b16 %v1443, %v1379
    %v2340 = vpack.c.b16 %v1444, %v1380
    %v2341 = vpack.c.b16 %v1445, %v1381
    %v2342 = vpack.c.b16 %v1446, %v1382
    %v2343 = vpack.c.b16 %v1447, %v1383
    %v2344 = vpack.c.b16 %v1448, %v1384
    %v2345 = vpack.c.b16 %v1449, %v1385
    %v2346 = vpack.c.b16 %v1450, %v1386
    %v2347 = vpack.c.b16 %v1451, %v1387
    %v2348 = vpack.c.b16 %v1452, %v1388
    %v2349 = vpack.c.b16 %v1453, %v1389
    %v2350 = vpack.c.b16 %v1454, %v1390
    %v2351 = vpack.c.b16 %v1455, %v1391
    %v2352 = vpack.c.b16 %v1456, %v1392
    %v2353 = vpack.c.b16 %v1457, %v1393
    %v2354 = vpack.c.b16 %v1458, %v1394
    %v2355 = vpack.c.b16 %v1459, %v1395
    %v2356 = vpack.c.b16 %v1460, %v1396
    %v2357 = vpack.c.b16 %v1461, %v1397
    %v2358 = vpack.c.b16 %v1462, %v1398
    %v2359 = vpack.c.b16 %v1463, %v1399
    %v2360 = vpack.c.b16 %v1464, %v1400
    %v2361 = vpack.c.b16 %v1465, %v1401
    %v2362 = vpack.c.b16 %v1466, %v1402
    %v2363 = vpack.c.b16 %v1467, %v1403
    %v2364 = vpack.c.b16 %v1468, %v1404
    %v2365 = vpack.c.b16 %v1469, %v1405
    %v2366 = vpack.c.b16 %v1470, %v1406
    %v2367 = vpack.c.b16 %v1471, %v1407
    %v2368 = vpack.c.b16 %v1472, %v1408
    %v2369 = vpack.c.b16 %v1473, %v1409
    %v2370 = vpack.c.b16 %v1474, %v1410
    %v2371 = vpack.c.b16 %v1475, %v1411
    %v2372 = vpack.c.b16 %v1476, %v1412
    %v2373 = vpack.c.b16 %v1477, %v1413
    %v2374 = vpack.c.b16 %v1478, %v1414
    %v2375 = vpack.c.b16 %v1479, %v1415
    %v2376 = vpack.c.b16 %v1480, %v1416
    %v2377 = vpack.c.b16 %v1481, %v1417
    %v2378 = vpack.c.b16 %v1482, %v1418
    %v2379 = vpack.c.b16 %v1483, %v1419
    %v2380 = vpack.c.b16 %v1484, %v1420
    %v2381 = vpack.c.b16 %v1549, %v1485
    %v2382 = vpack.c.b16 %v1550, %v1486
    %v2383 = vpack.c.b16 %v1551, %v1487
    %v2384 = vpack.c.b16 %v1552, %v1488
    %v2385 = vpack.c.b16 %v1553, %v1489
    %v2386 = vpack.c.b16 %v1554, %v1490
    %v2387 = vpack.c.b16 %v1555, %v1491
    %v2388 = vpack.c.b16 %v1556, %v1492
    %v2389 = vpack.c.b16 %v1557, %v1493
    %v2390 = vpack.c.b16 %v1558, %v1494
    %v2391 = vpack.c.b16 %v1559, %v1495
    %v2392 = vpack.c.b16 %v1560, %v1496
    %v2393 = vpack.c.b16 %v1561, %v1497
    %v2394 = vpack.c.b16 %v1562, %v1498
    %v2395 = vpack.c.b16 %v1563, %v1499
    %v2396 = vpack.c.b16 %v1564, %v1500
    %v2397 = vpack.c.b16 %v1565, %v1501
    %v2398 = vpack.c.b16 %v1566, %v1502
    %v2399 = vpack.c.b16 %v1567, %v1503
    %v2400 = vpack.c.b16 %v1568, %v1504
    %v2401 = vpack.c.b16 %v1569, %v1505
    %v2402 = vpack.c.b16 %v1570, %v1506
    %v2403 = vpack.c.b16 %v1571, %v1507
    %v2404 = vpack.c.b16 %v1572, %v1508
    %v2405 = vpack.c.b16 %v1573, %v1509
    %v2406 = vpack.c.b16 %v1574, %v1510
    %v2407 = vpack.c.b16 %v1575, %v1511
    %v2408 = vpack.c.b16 %v1576, %v1512
    %v2409 = vpack.c.b16 %v1577, %v1513
    %v2410 = vpack.c.b16 %v1578, %v1514
    %v2411 = vpack.c.b16 %v1579, %v1515
    %v2412 = vpack.c.b16 %v1580, %v1516
    %v2413 = vpack.c.b16 %v1581, %v1517
    %v2414 = vpack.c.b16 %v1582, %v1518
    %v2415 = vpack.c.b16 %v1583, %v1519
    %v2416 = vpack.c.b16 %v1584, %v1520
    %v2417 = vpack.c.b16 %v1585, %v1521
    %v2418 = vpack.c.b16 %v1586, %v1522
    %v2419 = vpack.c.b16 %v1587, %v1523
    %v2420 = vpack.c.b16 %v1588, %v1524
    %v2421 = vpack.c.b16 %v1589, %v1525
    %v2422 = vpack.c.b16 %v1590, %v1526
    %v2423 = vpack.c.b16 %v1591, %v1527
    %v2424 = vpack.c.b16 %v1592, %v1528
    %v2425 = vpack.c.b16 %v1593, %v1529
    %v2426 = vpack.c.b16 %v1594, %v1530
    %v2427 = vpack.c.b16 %v1595, %v1531
    %v2428 = vpack.c.b16 %v1596, %v1532
    %v2429 = vpack.c.b16 %v1597, %v1533
    %v2430 = vpack.c.b16 %v1598, %v1534
    %v2431 = vpack.c.b16 %v1599, %v1535
    %v2432 = vpack.c.b16 %v1600, %v1536
    %v2433 = vpack.c.b16 %v1601, %v1537
    %v2434 = vpack.c.b16 %v1602, %v1538
    %v2435 = vpack.c.b16 %v1603, %v1539
    %v2436 = vpack.c.b16 %v1604, %v1540
    %v2437 = vpack.c.b16 %v1605, %v1541
    %v2438 = vpack.c.b16 %v1606, %v1542
    %v2439 = vpack.c.b16 %v1607, %v1543
    %v2440 = vpack.c.b16 %v1608, %v1544
    %v2441 = vpack.c.b16 %v1609, %v1545
    %v2442 = vpack.c.b16 %v1610, %v1546
    %v2443 = vpack.c.b16 %v1611, %v1547
    %v2444 = vpack.c.b16 %v1612, %v1548
    %v2445 = vpack.c.b16 %v1677, %v1613
    %v2446 = vpack.c.b16 %v1678, %v1614
    %v2447 = vpack.c.b16 %v1679, %v1615
    %v2448 = vpack.c.b16 %v1680, %v1616
    %v2449 = vpack.c.b16 %v1681, %v1617
    %v2450 = vpack.c.b16 %v1682, %v1618
    %v2451 = vpack.c.b16 %v1683, %v1619
    %v2452 = vpack.c.b16 %v1684, %v1620
    %v2453 = vpack.c.b16 %v1685, %v1621
    %v2454 = vpack.c.b16 %v1686, %v1622
    %v2455 = vpack.c.b16 %v1687, %v1623
    %v2456 = vpack.c.b16 %v1688, %v1624
    %v2457 = vpack.c.b16 %v1689, %v1625
    %v2458 = vpack.c.b16 %v1690, %v1626
    %v2459 = vpack.c.b16 %v1691, %v1627
    %v2460 = vpack.c.b16 %v1692, %v1628
    %v2461 = vpack.c.b16 %v1693, %v1629
    %v2462 = vpack.c.b16 %v1694, %v1630
    %v2463 = vpack.c.b16 %v1695, %v1631
    %v2464 = vpack.c.b16 %v1696, %v1632
    %v2465 = vpack.c.b16 %v1697, %v1633
    %v2466 = vpack.c.b16 %v1698, %v1634
    %v2467 = vpack.c.b16 %v1699, %v1635
    %v2468 = vpack.c.b16 %v1700, %v1636
    %v2469 = vpack.c.b16 %v1701, %v1637
    %v2470 = vpack.c.b16 %v1702, %v1638
    %v2471 = vpack.c.b16 %v1703, %v1639
    %v2472 = vpack.c.b16 %v1704, %v1640
    %v2473 = vpack.c.b16 %v1705, %v1641
    %v2474 = vpack.c.b16 %v1706, %v1642
    %v2475 = vpack.c.b16 %v1707, %v1643
    %v2476 = vpack.c.b16 %v1708, %v1644
    %v2477 = vpack.c.b16 %v1709, %v1645
    %v2478 = vpack.c.b16 %v1710, %v1646
    %v2479 = vpack.c.b16 %v1711, %v1647
    %v2480 = vpack.c.b16 %v1712, %v1648
    %v2481 = vpack.c.b16 %v1713, %v1649
    %v2482 = vpack.c.b16 %v1714, %v1650
    %v2483 = vpack.c.b16 %v1715, %v1651
    %v2484 = vpack.c.b16 %v1716, %v1652
    %v2485 = vpack.c.b16 %v1717, %v1653
    %v2486 = vpack.c.b16 %v1718, %v1654
    %v2487 = vpack.c.b16 %v1719, %v1655
    %v2488 = vpack.c.b16 %v1720, %v1656
    %v2489 = vpack.c.b16 %v1721, %v1657
    %v2490 = vpack.c.b16 %v1722, %v1658
    %v2491 = vpack.c.b16 %v1723, %v1659
    %v2492 = vpack.c.b16 %v1724, %v1660
    %v2493 = vpack.c.b16 %v1725, %v1661
    %v2494 = vpack.c.b16 %v1726, %v1662
    %v2495 = vpack.c.b16 %v1727, %v1663
    %v2496 = vpack.c.b16 %v1728, %v1664
    %v2497 = vpack.c.b16 %v1729, %v1665
    %v2498 = vpack.c.b16 %v1730, %v1666
    %v2499 = vpack.c.b16 %v1731, %v1667
    %v2500 = vpack.c.b16 %v1732, %v1668
    %v2501 = vpack.c.b16 %v1733, %v1669
    %v2502 = vpack.c.b16 %v1734, %v1670
    %v2503 = vpack.c.b16 %v1735, %v1671
    %v2504 = vpack.c.b16 %v1736, %v1672
    %v2505 = vpack.c.b16 %v1737, %v1673
    %v2506 = vpack.c.b16 %v1738, %v1674
    %v2507 = vpack.c.b16 %v1739, %v1675
    %v2508 = vpack.c.b16 %v1740, %v1676
    %v2509 = vpack.c.b16 %v1805, %v1741
    %v2510 = vpack.c.b16 %v1806, %v1742
    %v2511 = vpack.c.b16 %v1807, %v1743
    %v2512 = vpack.c.b16 %v1808, %v1744
    %v2513 = vpack.c.b16 %v1809, %v1745
    %v2514 = vpack.c.b16 %v1810, %v1746
    %v2515 = vpack.c.b16 %v1811, %v1747
    %v2516 = vpack.c.b16 %v1812, %v1748
    %v2517 = vpack.c.b16 %v1813, %v1749
    %v2518 = vpack.c.b16 %v1814, %v1750
    %v2519 = vpack.c.b16 %v1815, %v1751
    %v2520 = vpack.c.b16 %v1816, %v1752
    %v2521 = vpack.c.b16 %v1817, %v1753
    %v2522 = vpack.c.b16 %v1818, %v1754
    %v2523 = vpack.c.b16 %v1819, %v1755
    %v2524 = vpack.c.b16 %v1820, %v1756
    %v2525 = vpack.c.b16 %v1821, %v1757
    %v2526 = vpack.c.b16 %v1822, %v1758
    %v2527 = vpack.c.b16 %v1823, %v1759
    %v2528 = vpack.c.b16 %v1824, %v1760
    %v2529 = vpack.c.b16 %v1825, %v1761
    %v2530 = vpack.c.b16 %v1826, %v1762
    %v2531 = vpack.c.b16 %v1827, %v1763
    %v2532 = vpack.c.b16 %v1828, %v1764
    %v2533 = vpack.c.b16 %v1829, %v1765
    %v2534 = vpack.c.b16 %v1830, %v1766
    %v2535 = vpack.c.b16 %v1831, %v1767
    %v2536 = vpack.c.b16 %v1832, %v1768
    %v2537 = vpack.c.b16 %v1833, %v1769
    %v2538 = vpack.c.b16 %v1834, %v1770
    %v2539 = vpack.c.b16 %v1835, %v1771
    %v2540 = vpack.c.b16 %v1836, %v1772
    %v2541 = vpack.c.b16 %v1837, %v1773
    %v2542 = vpack.c.b16 %v1838, %v1774
    %v2543 = vpack.c.b16 %v1839, %v1775
    %v2544 = vpack.c.b16 %v1840, %v1776
    %v2545 = vpack.c.b16 %v1841, %v1777
    %v2546 = vpack.c.b16 %v1842, %v1778
    %v2547 = vpack.c.b16 %v1843, %v1779
    %v2548 = vpack.c.b16 %v1844, %v1780
    %v2549 = vpack.c.b16 %v1845, %v1781
    %v2550 = vpack.c.b16 %v1846, %v1782
    %v2551 = vpack.c.b16 %v1847, %v1783
    %v2552 = vpack.c.b16 %v1848, %v1784
    %v2553 = vpack.c.b16 %v1849, %v1785
    %v2554 = vpack.c.b16 %v1850, %v1786
    %v2555 = vpack.c.b16 %v1851, %v1787
    %v2556 = vpack.c.b16 %v1852, %v1788
    %v2557 = vpack.c.b16 %v1853, %v1789
    %v2558 = vpack.c.b16 %v1854, %v1790
    %v2559 = vpack.c.b16 %v1855, %v1791
    %v2560 = vpack.c.b16 %v1856, %v1792
    %v2561 = vpack.c.b16 %v1857, %v1793
    %v2562 = vpack.c.b16 %v1858, %v1794
    %v2563 = vpack.c.b16 %v1859, %v1795
    %v2564 = vpack.c.b16 %v1860, %v1796
    %v2565 = vpack.c.b16 %v1861, %v1797
    %v2566 = vpack.c.b16 %v1862, %v1798
    %v2567 = vpack.c.b16 %v1863, %v1799
    %v2568 = vpack.c.b16 %v1864, %v1800
    %v2569 = vpack.c.b16 %v1865, %v1801
    %v2570 = vpack.c.b16 %v1866, %v1802
    %v2571 = vpack.c.b16 %v1867, %v1803
    %v2572 = vpack.c.b16 %v1868, %v1804
    %v2573 = vpack.c.b16 %v1933, %v1869
    %v2574 = vpack.c.b16 %v1934, %v1870
    %v2575 = vpack.c.b16 %v1935, %v1871
    %v2576 = vpack.c.b16 %v1936, %v1872
    %v2577 = vpack.c.b16 %v1937, %v1873
    %v2578 = vpack.c.b16 %v1938, %v1874
    %v2579 = vpack.c.b16 %v1939, %v1875
    %v2580 = vpack.c.b16 %v1940, %v1876
    %v2581 = vpack.c.b16 %v1941, %v1877
    %v2582 = vpack.c.b16 %v1942, %v1878
    %v2583 = vpack.c.b16 %v1943, %v1879
    %v2584 = vpack.c.b16 %v1944, %v1880
    %v2585 = vpack.c.b16 %v1945, %v1881
    %v2586 = vpack.c.b16 %v1946, %v1882
    %v2587 = vpack.c.b16 %v1947, %v1883
    %v2588 = vpack.c.b16 %v1948, %v1884
    %v2589 = vpack.c.b16 %v1949, %v1885
    %v2590 = vpack.c.b16 %v1950, %v1886
    %v2591 = vpack.c.b16 %v1951, %v1887
    %v2592 = vpack.c.b16 %v1952, %v1888
    %v2593 = vpack.c.b16 %v1953, %v1889
    %v2594 = vpack.c.b16 %v1954, %v1890
    %v2595 = vpack.c.b16 %v1955, %v1891
    %v2596 = vpack.c.b16 %v1956, %v1892
    %v2597 = vpack.c.b16 %v1957, %v1893
    %v2598 = vpack.c.b16 %v1958, %v1894
    %v2599 = vpack.c.b16 %v1959, %v1895
    %v2600 = vpack.c.b16 %v1960, %v1896
    %v2601 = vpack.c.b16 %v1961, %v1897
    %v2602 = vpack.c.b16 %v1962, %v1898
    %v2603 = vpack.c.b16 %v1963, %v1899
    %v2604 = vpack.c.b16 %v1964, %v1900
    %v2605 = vpack.c.b16 %v1965, %v1901
    %v2606 = vpack.c.b16 %v1966, %v1902
    %v2607 = vpack.c.b16 %v1967, %v1903
    %v2608 = vpack.c.b16 %v1968, %v1904
    %v2609 = vpack.c.b16 %v1969, %v1905
    %v2610 = vpack.c.b16 %v1970, %v1906
    %v2611 = vpack.c.b16 %v1971, %v1907
    %v2612 = vpack.c.b16 %v1972, %v1908
    %v2613 = vpack.c.b16 %v1973, %v1909
    %v2614 = vpack.c.b16 %v1974, %v1910
    %v2615 = vpack.c.b16 %v1975, %v1911
    %v2616 = vpack.c.b16 %v1976, %v1912
    %v2617 = vpack.c.b16 %v1977, %v1913
    %v2618 = vpack.c.b16 %v1978, %v1914
    %v2619 = vpack.c.b16 %v1979, %v1915
    %v2620 = vpack.c.b16 %v1980, %v1916
    %v2621 = vpack.c.b16 %v1981, %v1917
    %v2622 = vpack.c.b16 %v1982, %v1918
    %v2623 = vpack.c.b16 %v1983, %v1919
    %v2624 = vpack.c.b16 %v1984, %v1920
    %v2625 = vpack.c.b16 %v1985, %v1921
    %v2626 = vpack.c.b16 %v1986, %v1922
    %v2627 = vpack.c.b16 %v1987, %v1923
    %v2628 = vpack.c.b16 %v1988, %v1924
    %v2629 = vpack.c.b16 %v1989, %v1925
    %v2630 = vpack.c.b16 %v1990, %v1926
    %v2631 = vpack.c.b16 %v1991, %v1927
    %v2632 = vpack.c.b16 %v1992, %v1928
    %v2633 = vpack.c.b16 %v1993, %v1929
    %v2634 = vpack.c.b16 %v1994, %v1930
    %v2635 = vpack.c.b16 %v1995, %v1931
    %v2636 = vpack.c.b16 %v1996, %v1932
    %v2637 = vpack.c.b16 %v2061, %v1997
    %v2638 = vpack.c.b16 %v2062, %v1998
    %v2639 = vpack.c.b16 %v2063, %v1999
    %v2640 = vpack.c.b16 %v2064, %v2000
    %v2641 = vpack.c.b16 %v2065, %v2001
    %v2642 = vpack.c.b16 %v2066, %v2002
    %v2643 = vpack.c.b16 %v2067, %v2003
    %v2644 = vpack.c.b16 %v2068, %v2004
    %v2645 = vpack.c.b16 %v2069, %v2005
    %v2646 = vpack.c.b16 %v2070, %v2006
    %v2647 = vpack.c.b16 %v2071, %v2007
    %v2648 = vpack.c.b16 %v2072, %v2008
    %v2649 = vpack.c.b16 %v2073, %v2009
    %v2650 = vpack.c.b16 %v2074, %v2010
    %v2651 = vpack.c.b16 %v2075, %v2011
    %v2652 = vpack.c.b16 %v2076, %v2012
    %v2653 = vpack.c.b16 %v2077, %v2013
    %v2654 = vpack.c.b16 %v2078, %v2014
    %v2655 = vpack.c.b16 %v2079, %v2015
    %v2656 = vpack.c.b16 %v2080, %v2016
    %v2657 = vpack.c.b16 %v2081, %v2017
    %v2658 = vpack.c.b16 %v2082, %v2018
    %v2659 = vpack.c.b16 %v2083, %v2019
    %v2660 = vpack.c.b16 %v2084, %v2020
    %v2661 = vpack.c.b16 %v2085, %v2021
    %v2662 = vpack.c.b16 %v2086, %v2022
    %v2663 = vpack.c.b16 %v2087, %v2023
    %v2664 = vpack.c.b16 %v2088, %v2024
    %v2665 = vpack.c.b16 %v2089, %v2025
    %v2666 = vpack.c.b16 %v2090, %v2026
    %v2667 = vpack.c.b16 %v2091, %v2027
    %v2668 = vpack.c.b16 %v2092, %v2028
    %v2669 = vpack.c.b16 %v2093, %v2029
    %v2670 = vpack.c.b16 %v2094, %v2030
    %v2671 = vpack.c.b16 %v2095, %v2031
    %v2672 = vpack.c.b16 %v2096, %v2032
    %v2673 = vpack.c.b16 %v2097, %v2033
    %v2674 = vpack.c.b16 %v2098, %v2034
    %v2675 = vpack.c.b16 %v2099, %v2035
    %v2676 = vpack.c.b16 %v2100, %v2036
    %v2677 = vpack.c.b16 %v2101, %v2037
    %v2678 = vpack.c.b16 %v2102, %v2038
    %v2679 = vpack.c.b16 %v2103, %v2039
    %v2680 = vpack.c.b16 %v2104, %v2040
    %v2681 = vpack.c.b16 %v2105, %v2041
    %v2682 = vpack.c.b16 %v2106, %v2042
    %v2683 = vpack.c.b16 %v2107, %v2043
    %v2684 = vpack.c.b16 %v2108, %v2044
    %v2685 = vpack.c.b16 %v2109, %v2045
    %v2686 = vpack.c.b16 %v2110, %v2046
    %v2687 = vpack.c.b16 %v2111, %v2047
    %v2688 = vpack.c.b16 %v2112, %v2048
    %v2689 = vpack.c.b16 %v2113, %v2049
    %v2690 = vpack.c.b16 %v2114, %v2050
    %v2691 = vpack.c.b16 %v2115, %v2051
    %v2692 = vpack.c.b16 %v2116, %v2052
    %v2693 = vpack.c.b16 %v2117, %v2053
    %v2694 = vpack.c.b16 %v2118, %v2054
    %v2695 = vpack.c.b16 %v2119, %v2055
    %v2696 = vpack.c.b16 %v2120, %v2056
    %v2697 = vpack.c.b16 %v2121, %v2057
    %v2698 = vpack.c.b16 %v2122, %v2058
    %v2699 = vpack.c.b16 %v2123, %v2059
    %v2700 = vpack.c.b16 %v2124, %v2060
    %v2701 = vpack.c.b16 %v2189, %v2125
    %v2702 = vpack.c.b16 %v2190, %v2126
    %v2703 = vpack.c.b16 %v2191, %v2127
    %v2704 = vpack.c.b16 %v2192, %v2128
    %v2705 = vpack.c.b16 %v2193, %v2129
    %v2706 = vpack.c.b16 %v2194, %v2130
    %v2707 = vpack.c.b16 %v2195, %v2131
    %v2708 = vpack.c.b16 %v2196, %v2132
    %v2709 = vpack.c.b16 %v2197, %v2133
    %v2710 = vpack.c.b16 %v2198, %v2134
    %v2711 = vpack.c.b16 %v2199, %v2135
    %v2712 = vpack.c.b16 %v2200, %v2136
    %v2713 = vpack.c.b16 %v2201, %v2137
    %v2714 = vpack.c.b16 %v2202, %v2138
    %v2715 = vpack.c.b16 %v2203, %v2139
    %v2716 = vpack.c.b16 %v2204, %v2140
    %v2717 = vpack.c.b16 %v2205, %v2141
    %v2718 = vpack.c.b16 %v2206, %v2142
    %v2719 = vpack.c.b16 %v2207, %v2143
    %v2720 = vpack.c.b16 %v2208, %v2144
    %v2721 = vpack.c.b16 %v2209, %v2145
    %v2722 = vpack.c.b16 %v2210, %v2146
    %v2723 = vpack.c.b16 %v2211, %v2147
    %v2724 = vpack.c.b16 %v2212, %v2148
    %v2725 = vpack.c.b16 %v2213, %v2149
    %v2726 = vpack.c.b16 %v2214, %v2150
    %v2727 = vpack.c.b16 %v2215, %v2151
    %v2728 = vpack.c.b16 %v2216, %v2152
    %v2729 = vpack.c.b16 %v2217, %v2153
    %v2730 = vpack.c.b16 %v2218, %v2154
    %v2731 = vpack.c.b16 %v2219, %v2155
    %v2732 = vpack.c.b16 %v2220, %v2156
    %v2733 = vpack.c.b16 %v2221, %v2157
    %v2734 = vpack.c.b16 %v2222, %v2158
    %v2735 = vpack.c.b16 %v2223, %v2159
    %v2736 = vpack.c.b16 %v2224, %v2160
    %v2737 = vpack.c.b16 %v2225, %v2161
    %v2738 = vpack.c.b16 %v2226, %v2162
    %v2739 = vpack.c.b16 %v2227, %v2163
    %v2740 = vpack.c.b16 %v2228, %v2164
    %v2741 = vpack.c.b16 %v2229, %v2165
    %v2742 = vpack.c.b16 %v2230, %v2166
    %v2743 = vpack.c.b16 %v2231, %v2167
    %v2744 = vpack.c.b16 %v2232, %v2168
    %v2745 = vpack.c.b16 %v2233, %v2169
    %v2746 = vpack.c.b16 %v2234, %v2170
    %v2747 = vpack.c.b16 %v2235, %v2171
    %v2748 = vpack.c.b16 %v2236, %v2172
    %v2749 = vpack.c.b16 %v2237, %v2173
    %v2750 = vpack.c.b16 %v2238, %v2174
    %v2751 = vpack.c.b16 %v2239, %v2175
    %v2752 = vpack.c.b16 %v2240, %v2176
    %v2753 = vpack.c.b16 %v2241, %v2177
    %v2754 = vpack.c.b16 %v2242, %v2178
    %v2755 = vpack.c.b16 %v2243, %v2179
    %v2756 = vpack.c.b16 %v2244, %v2180
    %v2757 = vpack.c.b16 %v2245, %v2181
    %v2758 = vpack.c.b16 %v2246, %v2182
    %v2759 = vpack.c.b16 %v2247, %v2183
    %v2760 = vpack.c.b16 %v2248, %v2184
    %v2761 = vpack.c.b16 %v2249, %v2185
    %v2762 = vpack.c.b16 %v2250, %v2186
    %v2763 = vpack.c.b16 %v2251, %v2187
    %v2764 = vpack.c.b16 %v2252, %v2188
    %3277 = vmatpush.bf16.msra.mxu0 %v2701
    %3278 = vmatpush.bf16.msra.mxu0 %v2637
    %3279 = vmatpush.bf16.msra.mxu0 %v2573
    %3280 = vmatpush.bf16.msra.mxu0 %v2509
    %3281 = vmatpush.bf16.msra.mxu0 %v2445
    %3282 = vmatpush.bf16.msra.mxu0 %v2381
    %3283 = vmatpush.bf16.msra.mxu0 %v2317
    %3284 = vmatpush.bf16.msra.mxu0 %v2253
    %3285 = vmatmul.bf16.gmra.mxu0 %v60
    %v3286 = vpop.f32.mrf.mxu0
    %v3287 = vadd.f32 %v589, %v3286
    %v3288 = vpop.f32.mrf.mxu0
    %3289 = vdwg.mxu0
    %3290 = vmatpush.bf16.msra.mxu0 %v2702
    %3291 = vmatpush.bf16.msra.mxu0 %v2638
    %3292 = vmatpush.bf16.msra.mxu0 %v2574
    %3293 = vmatpush.bf16.msra.mxu0 %v2510
    %3294 = vmatpush.bf16.msra.mxu0 %v2446
    %3295 = vmatpush.bf16.msra.mxu0 %v2382
    %3296 = vmatpush.bf16.msra.mxu0 %v2318
    %3297 = vmatpush.bf16.msra.mxu0 %v2254
    %3298 = vmatmul.bf16.gmra.mxu0 %v60
    %v3299 = vpop.f32.mrf.mxu0
    %v3300 = vadd.f32 %v590, %v3299
    %v3301 = vpop.f32.mrf.mxu0
    %3302 = vdwg.mxu0
    %3303 = vmatpush.bf16.msra.mxu0 %v2703
    %3304 = vmatpush.bf16.msra.mxu0 %v2639
    %3305 = vmatpush.bf16.msra.mxu0 %v2575
    %3306 = vmatpush.bf16.msra.mxu0 %v2511
    %3307 = vmatpush.bf16.msra.mxu0 %v2447
    %3308 = vmatpush.bf16.msra.mxu0 %v2383
    %3309 = vmatpush.bf16.msra.mxu0 %v2319
    %3310 = vmatpush.bf16.msra.mxu0 %v2255
    %3311 = vmatmul.bf16.gmra.mxu0 %v60
    %v3312 = vpop.f32.mrf.mxu0
    %v3313 = vadd.f32 %v591, %v3312
    %v3314 = vpop.f32.mrf.mxu0
    %3315 = vdwg.mxu0
    %3316 = vmatpush.bf16.msra.mxu0 %v2704
    %3317 = vmatpush.bf16.msra.mxu0 %v2640
    %3318 = vmatpush.bf16.msra.mxu0 %v2576
    %3319 = vmatpush.bf16.msra.mxu0 %v2512
    %3320 = vmatpush.bf16.msra.mxu0 %v2448
    %3321 = vmatpush.bf16.msra.mxu0 %v2384
    %3322 = vmatpush.bf16.msra.mxu0 %v2320
    %3323 = vmatpush.bf16.msra.mxu0 %v2256
    %3324 = vmatmul.bf16.gmra.mxu0 %v60
    %v3325 = vpop.f32.mrf.mxu0
    %v3326 = vadd.f32 %v592, %v3325
    %v3327 = vpop.f32.mrf.mxu0
    %3328 = vdwg.mxu0
    %3329 = vmatpush.bf16.msra.mxu0 %v2705
    %3330 = vmatpush.bf16.msra.mxu0 %v2641
    %3331 = vmatpush.bf16.msra.mxu0 %v2577
    %3332 = vmatpush.bf16.msra.mxu0 %v2513
    %3333 = vmatpush.bf16.msra.mxu0 %v2449
    %3334 = vmatpush.bf16.msra.mxu0 %v2385
    %3335 = vmatpush.bf16.msra.mxu0 %v2321
    %3336 = vmatpush.bf16.msra.mxu0 %v2257
    %3337 = vmatmul.bf16.gmra.mxu0 %v60
    %v3338 = vpop.f32.mrf.mxu0
    %v3339 = vadd.f32 %v593, %v3338
    %v3340 = vpop.f32.mrf.mxu0
    %3341 = vdwg.mxu0
    %3342 = vmatpush.bf16.msra.mxu0 %v2706
    %3343 = vmatpush.bf16.msra.mxu0 %v2642
    %3344 = vmatpush.bf16.msra.mxu0 %v2578
    %3345 = vmatpush.bf16.msra.mxu0 %v2514
    %3346 = vmatpush.bf16.msra.mxu0 %v2450
    %3347 = vmatpush.bf16.msra.mxu0 %v2386
    %3348 = vmatpush.bf16.msra.mxu0 %v2322
    %3349 = vmatpush.bf16.msra.mxu0 %v2258
    %3350 = vmatmul.bf16.gmra.mxu0 %v60
    %v3351 = vpop.f32.mrf.mxu0
    %v3352 = vadd.f32 %v594, %v3351
    %v3353 = vpop.f32.mrf.mxu0
    %3354 = vdwg.mxu0
    %3355 = vmatpush.bf16.msra.mxu0 %v2707
    %3356 = vmatpush.bf16.msra.mxu0 %v2643
    %3357 = vmatpush.bf16.msra.mxu0 %v2579
    %3358 = vmatpush.bf16.msra.mxu0 %v2515
    %3359 = vmatpush.bf16.msra.mxu0 %v2451
    %3360 = vmatpush.bf16.msra.mxu0 %v2387
    %3361 = vmatpush.bf16.msra.mxu0 %v2323
    %3362 = vmatpush.bf16.msra.mxu0 %v2259
    %3363 = vmatmul.bf16.gmra.mxu0 %v60
    %v3364 = vpop.f32.mrf.mxu0
    %v3365 = vadd.f32 %v595, %v3364
    %v3366 = vpop.f32.mrf.mxu0
    %3367 = vdwg.mxu0
    %3368 = vmatpush.bf16.msra.mxu0 %v2708
    %3369 = vmatpush.bf16.msra.mxu0 %v2644
    %3370 = vmatpush.bf16.msra.mxu0 %v2580
    %3371 = vmatpush.bf16.msra.mxu0 %v2516
    %3372 = vmatpush.bf16.msra.mxu0 %v2452
    %3373 = vmatpush.bf16.msra.mxu0 %v2388
    %3374 = vmatpush.bf16.msra.mxu0 %v2324
    %3375 = vmatpush.bf16.msra.mxu0 %v2260
    %3376 = vmatmul.bf16.gmra.mxu0 %v60
    %v3377 = vpop.f32.mrf.mxu0
    %v3378 = vadd.f32 %v596, %v3377
    %v3379 = vpop.f32.mrf.mxu0
    %3380 = vdwg.mxu0
    %3381 = vmatpush.bf16.msra.mxu0 %v2709
    %3382 = vmatpush.bf16.msra.mxu0 %v2645
    %3383 = vmatpush.bf16.msra.mxu0 %v2581
    %3384 = vmatpush.bf16.msra.mxu0 %v2517
    %3385 = vmatpush.bf16.msra.mxu0 %v2453
    %3386 = vmatpush.bf16.msra.mxu0 %v2389
    %3387 = vmatpush.bf16.msra.mxu0 %v2325
    %3388 = vmatpush.bf16.msra.mxu0 %v2261
    %3389 = vmatmul.bf16.gmra.mxu0 %v60
    %v3390 = vpop.f32.mrf.mxu0
    %v3391 = vadd.f32 %v597, %v3390
    %v3392 = vpop.f32.mrf.mxu0
    %3393 = vdwg.mxu0
    %3394 = vmatpush.bf16.msra.mxu0 %v2710
    %3395 = vmatpush.bf16.msra.mxu0 %v2646
    %3396 = vmatpush.bf16.msra.mxu0 %v2582
    %3397 = vmatpush.bf16.msra.mxu0 %v2518
    %3398 = vmatpush.bf16.msra.mxu0 %v2454
    %3399 = vmatpush.bf16.msra.mxu0 %v2390
    %3400 = vmatpush.bf16.msra.mxu0 %v2326
    %3401 = vmatpush.bf16.msra.mxu0 %v2262
    %3402 = vmatmul.bf16.gmra.mxu0 %v60
    %v3403 = vpop.f32.mrf.mxu0
    %v3404 = vadd.f32 %v598, %v3403
    %v3405 = vpop.f32.mrf.mxu0
    %3406 = vdwg.mxu0
    %3407 = vmatpush.bf16.msra.mxu0 %v2711
    %3408 = vmatpush.bf16.msra.mxu0 %v2647
    %3409 = vmatpush.bf16.msra.mxu0 %v2583
    %3410 = vmatpush.bf16.msra.mxu0 %v2519
    %3411 = vmatpush.bf16.msra.mxu0 %v2455
    %3412 = vmatpush.bf16.msra.mxu0 %v2391
    %3413 = vmatpush.bf16.msra.mxu0 %v2327
    %3414 = vmatpush.bf16.msra.mxu0 %v2263
    %3415 = vmatmul.bf16.gmra.mxu0 %v60
    %v3416 = vpop.f32.mrf.mxu0
    %v3417 = vadd.f32 %v599, %v3416
    %v3418 = vpop.f32.mrf.mxu0
    %3419 = vdwg.mxu0
    %3420 = vmatpush.bf16.msra.mxu0 %v2712
    %3421 = vmatpush.bf16.msra.mxu0 %v2648
    %3422 = vmatpush.bf16.msra.mxu0 %v2584
    %3423 = vmatpush.bf16.msra.mxu0 %v2520
    %3424 = vmatpush.bf16.msra.mxu0 %v2456
    %3425 = vmatpush.bf16.msra.mxu0 %v2392
    %3426 = vmatpush.bf16.msra.mxu0 %v2328
    %3427 = vmatpush.bf16.msra.mxu0 %v2264
    %3428 = vmatmul.bf16.gmra.mxu0 %v60
    %v3429 = vpop.f32.mrf.mxu0
    %v3430 = vadd.f32 %v600, %v3429
    %v3431 = vpop.f32.mrf.mxu0
    %3432 = vdwg.mxu0
    %3433 = vmatpush.bf16.msra.mxu0 %v2713
    %3434 = vmatpush.bf16.msra.mxu0 %v2649
    %3435 = vmatpush.bf16.msra.mxu0 %v2585
    %3436 = vmatpush.bf16.msra.mxu0 %v2521
    %3437 = vmatpush.bf16.msra.mxu0 %v2457
    %3438 = vmatpush.bf16.msra.mxu0 %v2393
    %3439 = vmatpush.bf16.msra.mxu0 %v2329
    %3440 = vmatpush.bf16.msra.mxu0 %v2265
    %3441 = vmatmul.bf16.gmra.mxu0 %v60
    %v3442 = vpop.f32.mrf.mxu0
    %v3443 = vadd.f32 %v601, %v3442
    %v3444 = vpop.f32.mrf.mxu0
    %3445 = vdwg.mxu0
    %3446 = vmatpush.bf16.msra.mxu0 %v2714
    %3447 = vmatpush.bf16.msra.mxu0 %v2650
    %3448 = vmatpush.bf16.msra.mxu0 %v2586
    %3449 = vmatpush.bf16.msra.mxu0 %v2522
    %3450 = vmatpush.bf16.msra.mxu0 %v2458
    %3451 = vmatpush.bf16.msra.mxu0 %v2394
    %3452 = vmatpush.bf16.msra.mxu0 %v2330
    %3453 = vmatpush.bf16.msra.mxu0 %v2266
    %3454 = vmatmul.bf16.gmra.mxu0 %v60
    %v3455 = vpop.f32.mrf.mxu0
    %v3456 = vadd.f32 %v602, %v3455
    %v3457 = vpop.f32.mrf.mxu0
    %3458 = vdwg.mxu0
    %3459 = vmatpush.bf16.msra.mxu0 %v2715
    %3460 = vmatpush.bf16.msra.mxu0 %v2651
    %3461 = vmatpush.bf16.msra.mxu0 %v2587
    %3462 = vmatpush.bf16.msra.mxu0 %v2523
    %3463 = vmatpush.bf16.msra.mxu0 %v2459
    %3464 = vmatpush.bf16.msra.mxu0 %v2395
    %3465 = vmatpush.bf16.msra.mxu0 %v2331
    %3466 = vmatpush.bf16.msra.mxu0 %v2267
    %3467 = vmatmul.bf16.gmra.mxu0 %v60
    %v3468 = vpop.f32.mrf.mxu0
    %v3469 = vadd.f32 %v603, %v3468
    %v3470 = vpop.f32.mrf.mxu0
    %3471 = vdwg.mxu0
    %3472 = vmatpush.bf16.msra.mxu0 %v2716
    %3473 = vmatpush.bf16.msra.mxu0 %v2652
    %3474 = vmatpush.bf16.msra.mxu0 %v2588
    %3475 = vmatpush.bf16.msra.mxu0 %v2524
    %3476 = vmatpush.bf16.msra.mxu0 %v2460
    %3477 = vmatpush.bf16.msra.mxu0 %v2396
    %3478 = vmatpush.bf16.msra.mxu0 %v2332
    %3479 = vmatpush.bf16.msra.mxu0 %v2268
    %3480 = vmatmul.bf16.gmra.mxu0 %v60
    %v3481 = vpop.f32.mrf.mxu0
    %v3482 = vadd.f32 %v604, %v3481
    %v3483 = vpop.f32.mrf.mxu0
    %3484 = vdwg.mxu0
    %3485 = vmatpush.bf16.msra.mxu0 %v2717
    %3486 = vmatpush.bf16.msra.mxu0 %v2653
    %3487 = vmatpush.bf16.msra.mxu0 %v2589
    %3488 = vmatpush.bf16.msra.mxu0 %v2525
    %3489 = vmatpush.bf16.msra.mxu0 %v2461
    %3490 = vmatpush.bf16.msra.mxu0 %v2397
    %3491 = vmatpush.bf16.msra.mxu0 %v2333
    %3492 = vmatpush.bf16.msra.mxu0 %v2269
    %3493 = vmatmul.bf16.gmra.mxu0 %v60
    %v3494 = vpop.f32.mrf.mxu0
    %v3495 = vadd.f32 %v605, %v3494
    %v3496 = vpop.f32.mrf.mxu0
    %3497 = vdwg.mxu0
    %3498 = vmatpush.bf16.msra.mxu0 %v2718
    %3499 = vmatpush.bf16.msra.mxu0 %v2654
    %3500 = vmatpush.bf16.msra.mxu0 %v2590
    %3501 = vmatpush.bf16.msra.mxu0 %v2526
    %3502 = vmatpush.bf16.msra.mxu0 %v2462
    %3503 = vmatpush.bf16.msra.mxu0 %v2398
    %3504 = vmatpush.bf16.msra.mxu0 %v2334
    %3505 = vmatpush.bf16.msra.mxu0 %v2270
    %3506 = vmatmul.bf16.gmra.mxu0 %v60
    %v3507 = vpop.f32.mrf.mxu0
    %v3508 = vadd.f32 %v606, %v3507
    %v3509 = vpop.f32.mrf.mxu0
    %3510 = vdwg.mxu0
    %3511 = vmatpush.bf16.msra.mxu0 %v2719
    %3512 = vmatpush.bf16.msra.mxu0 %v2655
    %3513 = vmatpush.bf16.msra.mxu0 %v2591
    %3514 = vmatpush.bf16.msra.mxu0 %v2527
    %3515 = vmatpush.bf16.msra.mxu0 %v2463
    %3516 = vmatpush.bf16.msra.mxu0 %v2399
    %3517 = vmatpush.bf16.msra.mxu0 %v2335
    %3518 = vmatpush.bf16.msra.mxu0 %v2271
    %3519 = vmatmul.bf16.gmra.mxu0 %v60
    %v3520 = vpop.f32.mrf.mxu0
    %v3521 = vadd.f32 %v607, %v3520
    %v3522 = vpop.f32.mrf.mxu0
    %3523 = vdwg.mxu0
    %3524 = vmatpush.bf16.msra.mxu0 %v2720
    %3525 = vmatpush.bf16.msra.mxu0 %v2656
    %3526 = vmatpush.bf16.msra.mxu0 %v2592
    %3527 = vmatpush.bf16.msra.mxu0 %v2528
    %3528 = vmatpush.bf16.msra.mxu0 %v2464
    %3529 = vmatpush.bf16.msra.mxu0 %v2400
    %3530 = vmatpush.bf16.msra.mxu0 %v2336
    %3531 = vmatpush.bf16.msra.mxu0 %v2272
    %3532 = vmatmul.bf16.gmra.mxu0 %v60
    %v3533 = vpop.f32.mrf.mxu0
    %v3534 = vadd.f32 %v608, %v3533
    %v3535 = vpop.f32.mrf.mxu0
    %3536 = vdwg.mxu0
    %3537 = vmatpush.bf16.msra.mxu0 %v2721
    %3538 = vmatpush.bf16.msra.mxu0 %v2657
    %3539 = vmatpush.bf16.msra.mxu0 %v2593
    %3540 = vmatpush.bf16.msra.mxu0 %v2529
    %3541 = vmatpush.bf16.msra.mxu0 %v2465
    %3542 = vmatpush.bf16.msra.mxu0 %v2401
    %3543 = vmatpush.bf16.msra.mxu0 %v2337
    %3544 = vmatpush.bf16.msra.mxu0 %v2273
    %3545 = vmatmul.bf16.gmra.mxu0 %v60
    %v3546 = vpop.f32.mrf.mxu0
    %v3547 = vadd.f32 %v609, %v3546
    %v3548 = vpop.f32.mrf.mxu0
    %3549 = vdwg.mxu0
    %3550 = vmatpush.bf16.msra.mxu0 %v2722
    %3551 = vmatpush.bf16.msra.mxu0 %v2658
    %3552 = vmatpush.bf16.msra.mxu0 %v2594
    %3553 = vmatpush.bf16.msra.mxu0 %v2530
    %3554 = vmatpush.bf16.msra.mxu0 %v2466
    %3555 = vmatpush.bf16.msra.mxu0 %v2402
    %3556 = vmatpush.bf16.msra.mxu0 %v2338
    %3557 = vmatpush.bf16.msra.mxu0 %v2274
    %3558 = vmatmul.bf16.gmra.mxu0 %v60
    %v3559 = vpop.f32.mrf.mxu0
    %v3560 = vadd.f32 %v610, %v3559
    %v3561 = vpop.f32.mrf.mxu0
    %3562 = vdwg.mxu0
    %3563 = vmatpush.bf16.msra.mxu0 %v2723
    %3564 = vmatpush.bf16.msra.mxu0 %v2659
    %3565 = vmatpush.bf16.msra.mxu0 %v2595
    %3566 = vmatpush.bf16.msra.mxu0 %v2531
    %3567 = vmatpush.bf16.msra.mxu0 %v2467
    %3568 = vmatpush.bf16.msra.mxu0 %v2403
    %3569 = vmatpush.bf16.msra.mxu0 %v2339
    %3570 = vmatpush.bf16.msra.mxu0 %v2275
    %3571 = vmatmul.bf16.gmra.mxu0 %v60
    %v3572 = vpop.f32.mrf.mxu0
    %v3573 = vadd.f32 %v611, %v3572
    %v3574 = vpop.f32.mrf.mxu0
    %3575 = vdwg.mxu0
    %3576 = vmatpush.bf16.msra.mxu0 %v2724
    %3577 = vmatpush.bf16.msra.mxu0 %v2660
    %3578 = vmatpush.bf16.msra.mxu0 %v2596
    %3579 = vmatpush.bf16.msra.mxu0 %v2532
    %3580 = vmatpush.bf16.msra.mxu0 %v2468
    %3581 = vmatpush.bf16.msra.mxu0 %v2404
    %3582 = vmatpush.bf16.msra.mxu0 %v2340
    %3583 = vmatpush.bf16.msra.mxu0 %v2276
    %3584 = vmatmul.bf16.gmra.mxu0 %v60
    %v3585 = vpop.f32.mrf.mxu0
    %v3586 = vadd.f32 %v612, %v3585
    %v3587 = vpop.f32.mrf.mxu0
    %3588 = vdwg.mxu0
    %3589 = vmatpush.bf16.msra.mxu0 %v2725
    %3590 = vmatpush.bf16.msra.mxu0 %v2661
    %3591 = vmatpush.bf16.msra.mxu0 %v2597
    %3592 = vmatpush.bf16.msra.mxu0 %v2533
    %3593 = vmatpush.bf16.msra.mxu0 %v2469
    %3594 = vmatpush.bf16.msra.mxu0 %v2405
    %3595 = vmatpush.bf16.msra.mxu0 %v2341
    %3596 = vmatpush.bf16.msra.mxu0 %v2277
    %3597 = vmatmul.bf16.gmra.mxu0 %v60
    %v3598 = vpop.f32.mrf.mxu0
    %v3599 = vadd.f32 %v613, %v3598
    %v3600 = vpop.f32.mrf.mxu0
    %3601 = vdwg.mxu0
    %3602 = vmatpush.bf16.msra.mxu0 %v2726
    %3603 = vmatpush.bf16.msra.mxu0 %v2662
    %3604 = vmatpush.bf16.msra.mxu0 %v2598
    %3605 = vmatpush.bf16.msra.mxu0 %v2534
    %3606 = vmatpush.bf16.msra.mxu0 %v2470
    %3607 = vmatpush.bf16.msra.mxu0 %v2406
    %3608 = vmatpush.bf16.msra.mxu0 %v2342
    %3609 = vmatpush.bf16.msra.mxu0 %v2278
    %3610 = vmatmul.bf16.gmra.mxu0 %v60
    %v3611 = vpop.f32.mrf.mxu0
    %v3612 = vadd.f32 %v614, %v3611
    %v3613 = vpop.f32.mrf.mxu0
    %3614 = vdwg.mxu0
    %3615 = vmatpush.bf16.msra.mxu0 %v2727
    %3616 = vmatpush.bf16.msra.mxu0 %v2663
    %3617 = vmatpush.bf16.msra.mxu0 %v2599
    %3618 = vmatpush.bf16.msra.mxu0 %v2535
    %3619 = vmatpush.bf16.msra.mxu0 %v2471
    %3620 = vmatpush.bf16.msra.mxu0 %v2407
    %3621 = vmatpush.bf16.msra.mxu0 %v2343
    %3622 = vmatpush.bf16.msra.mxu0 %v2279
    %3623 = vmatmul.bf16.gmra.mxu0 %v60
    %v3624 = vpop.f32.mrf.mxu0
    %v3625 = vadd.f32 %v615, %v3624
    %v3626 = vpop.f32.mrf.mxu0
    %3627 = vdwg.mxu0
    %3628 = vmatpush.bf16.msra.mxu0 %v2728
    %3629 = vmatpush.bf16.msra.mxu0 %v2664
    %3630 = vmatpush.bf16.msra.mxu0 %v2600
    %3631 = vmatpush.bf16.msra.mxu0 %v2536
    %3632 = vmatpush.bf16.msra.mxu0 %v2472
    %3633 = vmatpush.bf16.msra.mxu0 %v2408
    %3634 = vmatpush.bf16.msra.mxu0 %v2344
    %3635 = vmatpush.bf16.msra.mxu0 %v2280
    %3636 = vmatmul.bf16.gmra.mxu0 %v60
    %v3637 = vpop.f32.mrf.mxu0
    %v3638 = vadd.f32 %v616, %v3637
    %v3639 = vpop.f32.mrf.mxu0
    %3640 = vdwg.mxu0
    %3641 = vmatpush.bf16.msra.mxu0 %v2729
    %3642 = vmatpush.bf16.msra.mxu0 %v2665
    %3643 = vmatpush.bf16.msra.mxu0 %v2601
    %3644 = vmatpush.bf16.msra.mxu0 %v2537
    %3645 = vmatpush.bf16.msra.mxu0 %v2473
    %3646 = vmatpush.bf16.msra.mxu0 %v2409
    %3647 = vmatpush.bf16.msra.mxu0 %v2345
    %3648 = vmatpush.bf16.msra.mxu0 %v2281
    %3649 = vmatmul.bf16.gmra.mxu0 %v60
    %v3650 = vpop.f32.mrf.mxu0
    %v3651 = vadd.f32 %v617, %v3650
    %v3652 = vpop.f32.mrf.mxu0
    %3653 = vdwg.mxu0
    %3654 = vmatpush.bf16.msra.mxu0 %v2730
    %3655 = vmatpush.bf16.msra.mxu0 %v2666
    %3656 = vmatpush.bf16.msra.mxu0 %v2602
    %3657 = vmatpush.bf16.msra.mxu0 %v2538
    %3658 = vmatpush.bf16.msra.mxu0 %v2474
    %3659 = vmatpush.bf16.msra.mxu0 %v2410
    %3660 = vmatpush.bf16.msra.mxu0 %v2346
    %3661 = vmatpush.bf16.msra.mxu0 %v2282
    %3662 = vmatmul.bf16.gmra.mxu0 %v60
    %v3663 = vpop.f32.mrf.mxu0
    %v3664 = vadd.f32 %v618, %v3663
    %v3665 = vpop.f32.mrf.mxu0
    %3666 = vdwg.mxu0
    %3667 = vmatpush.bf16.msra.mxu0 %v2731
    %3668 = vmatpush.bf16.msra.mxu0 %v2667
    %3669 = vmatpush.bf16.msra.mxu0 %v2603
    %3670 = vmatpush.bf16.msra.mxu0 %v2539
    %3671 = vmatpush.bf16.msra.mxu0 %v2475
    %3672 = vmatpush.bf16.msra.mxu0 %v2411
    %3673 = vmatpush.bf16.msra.mxu0 %v2347
    %3674 = vmatpush.bf16.msra.mxu0 %v2283
    %3675 = vmatmul.bf16.gmra.mxu0 %v60
    %v3676 = vpop.f32.mrf.mxu0
    %v3677 = vadd.f32 %v619, %v3676
    %v3678 = vpop.f32.mrf.mxu0
    %3679 = vdwg.mxu0
    %3680 = vmatpush.bf16.msra.mxu0 %v2732
    %3681 = vmatpush.bf16.msra.mxu0 %v2668
    %3682 = vmatpush.bf16.msra.mxu0 %v2604
    %3683 = vmatpush.bf16.msra.mxu0 %v2540
    %3684 = vmatpush.bf16.msra.mxu0 %v2476
    %3685 = vmatpush.bf16.msra.mxu0 %v2412
    %3686 = vmatpush.bf16.msra.mxu0 %v2348
    %3687 = vmatpush.bf16.msra.mxu0 %v2284
    %3688 = vmatmul.bf16.gmra.mxu0 %v60
    %v3689 = vpop.f32.mrf.mxu0
    %v3690 = vadd.f32 %v620, %v3689
    %v3691 = vpop.f32.mrf.mxu0
    %3692 = vdwg.mxu0
    %3693 = vmatpush.bf16.msra.mxu0 %v2733
    %3694 = vmatpush.bf16.msra.mxu0 %v2669
    %3695 = vmatpush.bf16.msra.mxu0 %v2605
    %3696 = vmatpush.bf16.msra.mxu0 %v2541
    %3697 = vmatpush.bf16.msra.mxu0 %v2477
    %3698 = vmatpush.bf16.msra.mxu0 %v2413
    %3699 = vmatpush.bf16.msra.mxu0 %v2349
    %3700 = vmatpush.bf16.msra.mxu0 %v2285
    %3701 = vmatmul.bf16.gmra.mxu0 %v60
    %v3702 = vpop.f32.mrf.mxu0
    %v3703 = vadd.f32 %v621, %v3702
    %v3704 = vpop.f32.mrf.mxu0
    %3705 = vdwg.mxu0
    %3706 = vmatpush.bf16.msra.mxu0 %v2734
    %3707 = vmatpush.bf16.msra.mxu0 %v2670
    %3708 = vmatpush.bf16.msra.mxu0 %v2606
    %3709 = vmatpush.bf16.msra.mxu0 %v2542
    %3710 = vmatpush.bf16.msra.mxu0 %v2478
    %3711 = vmatpush.bf16.msra.mxu0 %v2414
    %3712 = vmatpush.bf16.msra.mxu0 %v2350
    %3713 = vmatpush.bf16.msra.mxu0 %v2286
    %3714 = vmatmul.bf16.gmra.mxu0 %v60
    %v3715 = vpop.f32.mrf.mxu0
    %v3716 = vadd.f32 %v622, %v3715
    %v3717 = vpop.f32.mrf.mxu0
    %3718 = vdwg.mxu0
    %3719 = vmatpush.bf16.msra.mxu0 %v2735
    %3720 = vmatpush.bf16.msra.mxu0 %v2671
    %3721 = vmatpush.bf16.msra.mxu0 %v2607
    %3722 = vmatpush.bf16.msra.mxu0 %v2543
    %3723 = vmatpush.bf16.msra.mxu0 %v2479
    %3724 = vmatpush.bf16.msra.mxu0 %v2415
    %3725 = vmatpush.bf16.msra.mxu0 %v2351
    %3726 = vmatpush.bf16.msra.mxu0 %v2287
    %3727 = vmatmul.bf16.gmra.mxu0 %v60
    %v3728 = vpop.f32.mrf.mxu0
    %v3729 = vadd.f32 %v623, %v3728
    %v3730 = vpop.f32.mrf.mxu0
    %3731 = vdwg.mxu0
    %3732 = vmatpush.bf16.msra.mxu0 %v2736
    %3733 = vmatpush.bf16.msra.mxu0 %v2672
    %3734 = vmatpush.bf16.msra.mxu0 %v2608
    %3735 = vmatpush.bf16.msra.mxu0 %v2544
    %3736 = vmatpush.bf16.msra.mxu0 %v2480
    %3737 = vmatpush.bf16.msra.mxu0 %v2416
    %3738 = vmatpush.bf16.msra.mxu0 %v2352
    %3739 = vmatpush.bf16.msra.mxu0 %v2288
    %3740 = vmatmul.bf16.gmra.mxu0 %v60
    %v3741 = vpop.f32.mrf.mxu0
    %v3742 = vadd.f32 %v624, %v3741
    %v3743 = vpop.f32.mrf.mxu0
    %3744 = vdwg.mxu0
    %3745 = vmatpush.bf16.msra.mxu0 %v2737
    %3746 = vmatpush.bf16.msra.mxu0 %v2673
    %3747 = vmatpush.bf16.msra.mxu0 %v2609
    %3748 = vmatpush.bf16.msra.mxu0 %v2545
    %3749 = vmatpush.bf16.msra.mxu0 %v2481
    %3750 = vmatpush.bf16.msra.mxu0 %v2417
    %3751 = vmatpush.bf16.msra.mxu0 %v2353
    %3752 = vmatpush.bf16.msra.mxu0 %v2289
    %3753 = vmatmul.bf16.gmra.mxu0 %v60
    %v3754 = vpop.f32.mrf.mxu0
    %v3755 = vadd.f32 %v625, %v3754
    %v3756 = vpop.f32.mrf.mxu0
    %3757 = vdwg.mxu0
    %3758 = vmatpush.bf16.msra.mxu0 %v2738
    %3759 = vmatpush.bf16.msra.mxu0 %v2674
    %3760 = vmatpush.bf16.msra.mxu0 %v2610
    %3761 = vmatpush.bf16.msra.mxu0 %v2546
    %3762 = vmatpush.bf16.msra.mxu0 %v2482
    %3763 = vmatpush.bf16.msra.mxu0 %v2418
    %3764 = vmatpush.bf16.msra.mxu0 %v2354
    %3765 = vmatpush.bf16.msra.mxu0 %v2290
    %3766 = vmatmul.bf16.gmra.mxu0 %v60
    %v3767 = vpop.f32.mrf.mxu0
    %v3768 = vadd.f32 %v626, %v3767
    %v3769 = vpop.f32.mrf.mxu0
    %3770 = vdwg.mxu0
    %3771 = vmatpush.bf16.msra.mxu0 %v2739
    %3772 = vmatpush.bf16.msra.mxu0 %v2675
    %3773 = vmatpush.bf16.msra.mxu0 %v2611
    %3774 = vmatpush.bf16.msra.mxu0 %v2547
    %3775 = vmatpush.bf16.msra.mxu0 %v2483
    %3776 = vmatpush.bf16.msra.mxu0 %v2419
    %3777 = vmatpush.bf16.msra.mxu0 %v2355
    %3778 = vmatpush.bf16.msra.mxu0 %v2291
    %3779 = vmatmul.bf16.gmra.mxu0 %v60
    %v3780 = vpop.f32.mrf.mxu0
    %v3781 = vadd.f32 %v627, %v3780
    %v3782 = vpop.f32.mrf.mxu0
    %3783 = vdwg.mxu0
    %3784 = vmatpush.bf16.msra.mxu0 %v2740
    %3785 = vmatpush.bf16.msra.mxu0 %v2676
    %3786 = vmatpush.bf16.msra.mxu0 %v2612
    %3787 = vmatpush.bf16.msra.mxu0 %v2548
    %3788 = vmatpush.bf16.msra.mxu0 %v2484
    %3789 = vmatpush.bf16.msra.mxu0 %v2420
    %3790 = vmatpush.bf16.msra.mxu0 %v2356
    %3791 = vmatpush.bf16.msra.mxu0 %v2292
    %3792 = vmatmul.bf16.gmra.mxu0 %v60
    %v3793 = vpop.f32.mrf.mxu0
    %v3794 = vadd.f32 %v628, %v3793
    %v3795 = vpop.f32.mrf.mxu0
    %3796 = vdwg.mxu0
    %3797 = vmatpush.bf16.msra.mxu0 %v2741
    %3798 = vmatpush.bf16.msra.mxu0 %v2677
    %3799 = vmatpush.bf16.msra.mxu0 %v2613
    %3800 = vmatpush.bf16.msra.mxu0 %v2549
    %3801 = vmatpush.bf16.msra.mxu0 %v2485
    %3802 = vmatpush.bf16.msra.mxu0 %v2421
    %3803 = vmatpush.bf16.msra.mxu0 %v2357
    %3804 = vmatpush.bf16.msra.mxu0 %v2293
    %3805 = vmatmul.bf16.gmra.mxu0 %v60
    %v3806 = vpop.f32.mrf.mxu0
    %v3807 = vadd.f32 %v629, %v3806
    %v3808 = vpop.f32.mrf.mxu0
    %3809 = vdwg.mxu0
    %3810 = vmatpush.bf16.msra.mxu0 %v2742
    %3811 = vmatpush.bf16.msra.mxu0 %v2678
    %3812 = vmatpush.bf16.msra.mxu0 %v2614
    %3813 = vmatpush.bf16.msra.mxu0 %v2550
    %3814 = vmatpush.bf16.msra.mxu0 %v2486
    %3815 = vmatpush.bf16.msra.mxu0 %v2422
    %3816 = vmatpush.bf16.msra.mxu0 %v2358
    %3817 = vmatpush.bf16.msra.mxu0 %v2294
    %3818 = vmatmul.bf16.gmra.mxu0 %v60
    %v3819 = vpop.f32.mrf.mxu0
    %v3820 = vadd.f32 %v630, %v3819
    %v3821 = vpop.f32.mrf.mxu0
    %3822 = vdwg.mxu0
    %3823 = vmatpush.bf16.msra.mxu0 %v2743
    %3824 = vmatpush.bf16.msra.mxu0 %v2679
    %3825 = vmatpush.bf16.msra.mxu0 %v2615
    %3826 = vmatpush.bf16.msra.mxu0 %v2551
    %3827 = vmatpush.bf16.msra.mxu0 %v2487
    %3828 = vmatpush.bf16.msra.mxu0 %v2423
    %3829 = vmatpush.bf16.msra.mxu0 %v2359
    %3830 = vmatpush.bf16.msra.mxu0 %v2295
    %3831 = vmatmul.bf16.gmra.mxu0 %v60
    %v3832 = vpop.f32.mrf.mxu0
    %v3833 = vadd.f32 %v631, %v3832
    %v3834 = vpop.f32.mrf.mxu0
    %3835 = vdwg.mxu0
    %3836 = vmatpush.bf16.msra.mxu0 %v2744
    %3837 = vmatpush.bf16.msra.mxu0 %v2680
    %3838 = vmatpush.bf16.msra.mxu0 %v2616
    %3839 = vmatpush.bf16.msra.mxu0 %v2552
    %3840 = vmatpush.bf16.msra.mxu0 %v2488
    %3841 = vmatpush.bf16.msra.mxu0 %v2424
    %3842 = vmatpush.bf16.msra.mxu0 %v2360
    %3843 = vmatpush.bf16.msra.mxu0 %v2296
    %3844 = vmatmul.bf16.gmra.mxu0 %v60
    %v3845 = vpop.f32.mrf.mxu0
    %v3846 = vadd.f32 %v632, %v3845
    %v3847 = vpop.f32.mrf.mxu0
    %3848 = vdwg.mxu0
    %3849 = vmatpush.bf16.msra.mxu0 %v2745
    %3850 = vmatpush.bf16.msra.mxu0 %v2681
    %3851 = vmatpush.bf16.msra.mxu0 %v2617
    %3852 = vmatpush.bf16.msra.mxu0 %v2553
    %3853 = vmatpush.bf16.msra.mxu0 %v2489
    %3854 = vmatpush.bf16.msra.mxu0 %v2425
    %3855 = vmatpush.bf16.msra.mxu0 %v2361
    %3856 = vmatpush.bf16.msra.mxu0 %v2297
    %3857 = vmatmul.bf16.gmra.mxu0 %v60
    %v3858 = vpop.f32.mrf.mxu0
    %v3859 = vadd.f32 %v633, %v3858
    %v3860 = vpop.f32.mrf.mxu0
    %3861 = vdwg.mxu0
    %3862 = vmatpush.bf16.msra.mxu0 %v2746
    %3863 = vmatpush.bf16.msra.mxu0 %v2682
    %3864 = vmatpush.bf16.msra.mxu0 %v2618
    %3865 = vmatpush.bf16.msra.mxu0 %v2554
    %3866 = vmatpush.bf16.msra.mxu0 %v2490
    %3867 = vmatpush.bf16.msra.mxu0 %v2426
    %3868 = vmatpush.bf16.msra.mxu0 %v2362
    %3869 = vmatpush.bf16.msra.mxu0 %v2298
    %3870 = vmatmul.bf16.gmra.mxu0 %v60
    %v3871 = vpop.f32.mrf.mxu0
    %v3872 = vadd.f32 %v634, %v3871
    %v3873 = vpop.f32.mrf.mxu0
    %3874 = vdwg.mxu0
    %3875 = vmatpush.bf16.msra.mxu0 %v2747
    %3876 = vmatpush.bf16.msra.mxu0 %v2683
    %3877 = vmatpush.bf16.msra.mxu0 %v2619
    %3878 = vmatpush.bf16.msra.mxu0 %v2555
    %3879 = vmatpush.bf16.msra.mxu0 %v2491
    %3880 = vmatpush.bf16.msra.mxu0 %v2427
    %3881 = vmatpush.bf16.msra.mxu0 %v2363
    %3882 = vmatpush.bf16.msra.mxu0 %v2299
    %3883 = vmatmul.bf16.gmra.mxu0 %v60
    %v3884 = vpop.f32.mrf.mxu0
    %v3885 = vadd.f32 %v635, %v3884
    %v3886 = vpop.f32.mrf.mxu0
    %3887 = vdwg.mxu0
    %3888 = vmatpush.bf16.msra.mxu0 %v2748
    %3889 = vmatpush.bf16.msra.mxu0 %v2684
    %3890 = vmatpush.bf16.msra.mxu0 %v2620
    %3891 = vmatpush.bf16.msra.mxu0 %v2556
    %3892 = vmatpush.bf16.msra.mxu0 %v2492
    %3893 = vmatpush.bf16.msra.mxu0 %v2428
    %3894 = vmatpush.bf16.msra.mxu0 %v2364
    %3895 = vmatpush.bf16.msra.mxu0 %v2300
    %3896 = vmatmul.bf16.gmra.mxu0 %v60
    %v3897 = vpop.f32.mrf.mxu0
    %v3898 = vadd.f32 %v636, %v3897
    %v3899 = vpop.f32.mrf.mxu0
    %3900 = vdwg.mxu0
    %3901 = vmatpush.bf16.msra.mxu0 %v2749
    %3902 = vmatpush.bf16.msra.mxu0 %v2685
    %3903 = vmatpush.bf16.msra.mxu0 %v2621
    %3904 = vmatpush.bf16.msra.mxu0 %v2557
    %3905 = vmatpush.bf16.msra.mxu0 %v2493
    %3906 = vmatpush.bf16.msra.mxu0 %v2429
    %3907 = vmatpush.bf16.msra.mxu0 %v2365
    %3908 = vmatpush.bf16.msra.mxu0 %v2301
    %3909 = vmatmul.bf16.gmra.mxu0 %v60
    %v3910 = vpop.f32.mrf.mxu0
    %v3911 = vadd.f32 %v637, %v3910
    %v3912 = vpop.f32.mrf.mxu0
    %3913 = vdwg.mxu0
    %3914 = vmatpush.bf16.msra.mxu0 %v2750
    %3915 = vmatpush.bf16.msra.mxu0 %v2686
    %3916 = vmatpush.bf16.msra.mxu0 %v2622
    %3917 = vmatpush.bf16.msra.mxu0 %v2558
    %3918 = vmatpush.bf16.msra.mxu0 %v2494
    %3919 = vmatpush.bf16.msra.mxu0 %v2430
    %3920 = vmatpush.bf16.msra.mxu0 %v2366
    %3921 = vmatpush.bf16.msra.mxu0 %v2302
    %3922 = vmatmul.bf16.gmra.mxu0 %v60
    %v3923 = vpop.f32.mrf.mxu0
    %v3924 = vadd.f32 %v638, %v3923
    %v3925 = vpop.f32.mrf.mxu0
    %3926 = vdwg.mxu0
    %3927 = vmatpush.bf16.msra.mxu0 %v2751
    %3928 = vmatpush.bf16.msra.mxu0 %v2687
    %3929 = vmatpush.bf16.msra.mxu0 %v2623
    %3930 = vmatpush.bf16.msra.mxu0 %v2559
    %3931 = vmatpush.bf16.msra.mxu0 %v2495
    %3932 = vmatpush.bf16.msra.mxu0 %v2431
    %3933 = vmatpush.bf16.msra.mxu0 %v2367
    %3934 = vmatpush.bf16.msra.mxu0 %v2303
    %3935 = vmatmul.bf16.gmra.mxu0 %v60
    %v3936 = vpop.f32.mrf.mxu0
    %v3937 = vadd.f32 %v639, %v3936
    %v3938 = vpop.f32.mrf.mxu0
    %3939 = vdwg.mxu0
    %3940 = vmatpush.bf16.msra.mxu0 %v2752
    %3941 = vmatpush.bf16.msra.mxu0 %v2688
    %3942 = vmatpush.bf16.msra.mxu0 %v2624
    %3943 = vmatpush.bf16.msra.mxu0 %v2560
    %3944 = vmatpush.bf16.msra.mxu0 %v2496
    %3945 = vmatpush.bf16.msra.mxu0 %v2432
    %3946 = vmatpush.bf16.msra.mxu0 %v2368
    %3947 = vmatpush.bf16.msra.mxu0 %v2304
    %3948 = vmatmul.bf16.gmra.mxu0 %v60
    %v3949 = vpop.f32.mrf.mxu0
    %v3950 = vadd.f32 %v640, %v3949
    %v3951 = vpop.f32.mrf.mxu0
    %3952 = vdwg.mxu0
    %3953 = vmatpush.bf16.msra.mxu0 %v2753
    %3954 = vmatpush.bf16.msra.mxu0 %v2689
    %3955 = vmatpush.bf16.msra.mxu0 %v2625
    %3956 = vmatpush.bf16.msra.mxu0 %v2561
    %3957 = vmatpush.bf16.msra.mxu0 %v2497
    %3958 = vmatpush.bf16.msra.mxu0 %v2433
    %3959 = vmatpush.bf16.msra.mxu0 %v2369
    %3960 = vmatpush.bf16.msra.mxu0 %v2305
    %3961 = vmatmul.bf16.gmra.mxu0 %v60
    %v3962 = vpop.f32.mrf.mxu0
    %v3963 = vadd.f32 %v641, %v3962
    %v3964 = vpop.f32.mrf.mxu0
    %3965 = vdwg.mxu0
    %3966 = vmatpush.bf16.msra.mxu0 %v2754
    %3967 = vmatpush.bf16.msra.mxu0 %v2690
    %3968 = vmatpush.bf16.msra.mxu0 %v2626
    %3969 = vmatpush.bf16.msra.mxu0 %v2562
    %3970 = vmatpush.bf16.msra.mxu0 %v2498
    %3971 = vmatpush.bf16.msra.mxu0 %v2434
    %3972 = vmatpush.bf16.msra.mxu0 %v2370
    %3973 = vmatpush.bf16.msra.mxu0 %v2306
    %3974 = vmatmul.bf16.gmra.mxu0 %v60
    %v3975 = vpop.f32.mrf.mxu0
    %v3976 = vadd.f32 %v642, %v3975
    %v3977 = vpop.f32.mrf.mxu0
    %3978 = vdwg.mxu0
    %3979 = vmatpush.bf16.msra.mxu0 %v2755
    %3980 = vmatpush.bf16.msra.mxu0 %v2691
    %3981 = vmatpush.bf16.msra.mxu0 %v2627
    %3982 = vmatpush.bf16.msra.mxu0 %v2563
    %3983 = vmatpush.bf16.msra.mxu0 %v2499
    %3984 = vmatpush.bf16.msra.mxu0 %v2435
    %3985 = vmatpush.bf16.msra.mxu0 %v2371
    %3986 = vmatpush.bf16.msra.mxu0 %v2307
    %3987 = vmatmul.bf16.gmra.mxu0 %v60
    %v3988 = vpop.f32.mrf.mxu0
    %v3989 = vadd.f32 %v643, %v3988
    %v3990 = vpop.f32.mrf.mxu0
    %3991 = vdwg.mxu0
    %3992 = vmatpush.bf16.msra.mxu0 %v2756
    %3993 = vmatpush.bf16.msra.mxu0 %v2692
    %3994 = vmatpush.bf16.msra.mxu0 %v2628
    %3995 = vmatpush.bf16.msra.mxu0 %v2564
    %3996 = vmatpush.bf16.msra.mxu0 %v2500
    %3997 = vmatpush.bf16.msra.mxu0 %v2436
    %3998 = vmatpush.bf16.msra.mxu0 %v2372
    %3999 = vmatpush.bf16.msra.mxu0 %v2308
    %4000 = vmatmul.bf16.gmra.mxu0 %v60
    %v4001 = vpop.f32.mrf.mxu0
    %v4002 = vadd.f32 %v644, %v4001
    %v4003 = vpop.f32.mrf.mxu0
    %4004 = vdwg.mxu0
    %4005 = vmatpush.bf16.msra.mxu0 %v2757
    %4006 = vmatpush.bf16.msra.mxu0 %v2693
    %4007 = vmatpush.bf16.msra.mxu0 %v2629
    %4008 = vmatpush.bf16.msra.mxu0 %v2565
    %4009 = vmatpush.bf16.msra.mxu0 %v2501
    %4010 = vmatpush.bf16.msra.mxu0 %v2437
    %4011 = vmatpush.bf16.msra.mxu0 %v2373
    %4012 = vmatpush.bf16.msra.mxu0 %v2309
    %4013 = vmatmul.bf16.gmra.mxu0 %v60
    %v4014 = vpop.f32.mrf.mxu0
    %v4015 = vadd.f32 %v645, %v4014
    %v4016 = vpop.f32.mrf.mxu0
    %4017 = vdwg.mxu0
    %4018 = vmatpush.bf16.msra.mxu0 %v2758
    %4019 = vmatpush.bf16.msra.mxu0 %v2694
    %4020 = vmatpush.bf16.msra.mxu0 %v2630
    %4021 = vmatpush.bf16.msra.mxu0 %v2566
    %4022 = vmatpush.bf16.msra.mxu0 %v2502
    %4023 = vmatpush.bf16.msra.mxu0 %v2438
    %4024 = vmatpush.bf16.msra.mxu0 %v2374
    %4025 = vmatpush.bf16.msra.mxu0 %v2310
    %4026 = vmatmul.bf16.gmra.mxu0 %v60
    %v4027 = vpop.f32.mrf.mxu0
    %v4028 = vadd.f32 %v646, %v4027
    %v4029 = vpop.f32.mrf.mxu0
    %4030 = vdwg.mxu0
    %4031 = vmatpush.bf16.msra.mxu0 %v2759
    %4032 = vmatpush.bf16.msra.mxu0 %v2695
    %4033 = vmatpush.bf16.msra.mxu0 %v2631
    %4034 = vmatpush.bf16.msra.mxu0 %v2567
    %4035 = vmatpush.bf16.msra.mxu0 %v2503
    %4036 = vmatpush.bf16.msra.mxu0 %v2439
    %4037 = vmatpush.bf16.msra.mxu0 %v2375
    %4038 = vmatpush.bf16.msra.mxu0 %v2311
    %4039 = vmatmul.bf16.gmra.mxu0 %v60
    %v4040 = vpop.f32.mrf.mxu0
    %v4041 = vadd.f32 %v647, %v4040
    %v4042 = vpop.f32.mrf.mxu0
    %4043 = vdwg.mxu0
    %4044 = vmatpush.bf16.msra.mxu0 %v2760
    %4045 = vmatpush.bf16.msra.mxu0 %v2696
    %4046 = vmatpush.bf16.msra.mxu0 %v2632
    %4047 = vmatpush.bf16.msra.mxu0 %v2568
    %4048 = vmatpush.bf16.msra.mxu0 %v2504
    %4049 = vmatpush.bf16.msra.mxu0 %v2440
    %4050 = vmatpush.bf16.msra.mxu0 %v2376
    %4051 = vmatpush.bf16.msra.mxu0 %v2312
    %4052 = vmatmul.bf16.gmra.mxu0 %v60
    %v4053 = vpop.f32.mrf.mxu0
    %v4054 = vadd.f32 %v648, %v4053
    %v4055 = vpop.f32.mrf.mxu0
    %4056 = vdwg.mxu0
    %4057 = vmatpush.bf16.msra.mxu0 %v2761
    %4058 = vmatpush.bf16.msra.mxu0 %v2697
    %4059 = vmatpush.bf16.msra.mxu0 %v2633
    %4060 = vmatpush.bf16.msra.mxu0 %v2569
    %4061 = vmatpush.bf16.msra.mxu0 %v2505
    %4062 = vmatpush.bf16.msra.mxu0 %v2441
    %4063 = vmatpush.bf16.msra.mxu0 %v2377
    %4064 = vmatpush.bf16.msra.mxu0 %v2313
    %4065 = vmatmul.bf16.gmra.mxu0 %v60
    %v4066 = vpop.f32.mrf.mxu0
    %v4067 = vadd.f32 %v649, %v4066
    %v4068 = vpop.f32.mrf.mxu0
    %4069 = vdwg.mxu0
    %4070 = vmatpush.bf16.msra.mxu0 %v2762
    %4071 = vmatpush.bf16.msra.mxu0 %v2698
    %4072 = vmatpush.bf16.msra.mxu0 %v2634
    %4073 = vmatpush.bf16.msra.mxu0 %v2570
    %4074 = vmatpush.bf16.msra.mxu0 %v2506
    %4075 = vmatpush.bf16.msra.mxu0 %v2442
    %4076 = vmatpush.bf16.msra.mxu0 %v2378
    %4077 = vmatpush.bf16.msra.mxu0 %v2314
    %4078 = vmatmul.bf16.gmra.mxu0 %v60
    %v4079 = vpop.f32.mrf.mxu0
    %v4080 = vadd.f32 %v650, %v4079
    %v4081 = vpop.f32.mrf.mxu0
    %4082 = vdwg.mxu0
    %4083 = vmatpush.bf16.msra.mxu0 %v2763
    %4084 = vmatpush.bf16.msra.mxu0 %v2699
    %4085 = vmatpush.bf16.msra.mxu0 %v2635
    %4086 = vmatpush.bf16.msra.mxu0 %v2571
    %4087 = vmatpush.bf16.msra.mxu0 %v2507
    %4088 = vmatpush.bf16.msra.mxu0 %v2443
    %4089 = vmatpush.bf16.msra.mxu0 %v2379
    %4090 = vmatpush.bf16.msra.mxu0 %v2315
    %4091 = vmatmul.bf16.gmra.mxu0 %v60
    %v4092 = vpop.f32.mrf.mxu0
    %v4093 = vadd.f32 %v651, %v4092
    %v4094 = vpop.f32.mrf.mxu0
    %4095 = vdwg.mxu0
    %4096 = vmatpush.bf16.msra.mxu0 %v2764
    %4097 = vmatpush.bf16.msra.mxu0 %v2700
    %4098 = vmatpush.bf16.msra.mxu0 %v2636
    %4099 = vmatpush.bf16.msra.mxu0 %v2572
    %4100 = vmatpush.bf16.msra.mxu0 %v2508
    %4101 = vmatpush.bf16.msra.mxu0 %v2444
    %4102 = vmatpush.bf16.msra.mxu0 %v2380
    %4103 = vmatpush.bf16.msra.mxu0 %v2316
    %4104 = vmatmul.bf16.gmra.mxu0 %v60
    %v4105 = vpop.f32.mrf.mxu0
    %v4106 = vadd.f32 %v652, %v4105
    %v4107 = vpop.f32.mrf.mxu0
    %4108 = vdwg.mxu0
    %v4109 = vpack.c.bf16 %v3300, %v3287
    %v4110 = vpack.c.bf16 %v3326, %v3313
    %v4111 = vpack.c.bf16 %v3352, %v3339
    %v4112 = vpack.c.bf16 %v3378, %v3365
    %v4113 = vpack.c.bf16 %v3404, %v3391
    %v4114 = vpack.c.bf16 %v3430, %v3417
    %v4115 = vpack.c.bf16 %v3456, %v3443
    %v4116 = vpack.c.bf16 %v3482, %v3469
    %v4117 = vpack.c.bf16 %v3508, %v3495
    %v4118 = vpack.c.bf16 %v3534, %v3521
    %v4119 = vpack.c.bf16 %v3560, %v3547
    %v4120 = vpack.c.bf16 %v3586, %v3573
    %v4121 = vpack.c.bf16 %v3612, %v3599
    %v4122 = vpack.c.bf16 %v3638, %v3625
    %v4123 = vpack.c.bf16 %v3664, %v3651
    %v4124 = vpack.c.bf16 %v3690, %v3677
    %v4125 = vpack.c.bf16 %v3716, %v3703
    %v4126 = vpack.c.bf16 %v3742, %v3729
    %v4127 = vpack.c.bf16 %v3768, %v3755
    %v4128 = vpack.c.bf16 %v3794, %v3781
    %v4129 = vpack.c.bf16 %v3820, %v3807
    %v4130 = vpack.c.bf16 %v3846, %v3833
    %v4131 = vpack.c.bf16 %v3872, %v3859
    %v4132 = vpack.c.bf16 %v3898, %v3885
    %v4133 = vpack.c.bf16 %v3924, %v3911
    %v4134 = vpack.c.bf16 %v3950, %v3937
    %v4135 = vpack.c.bf16 %v3976, %v3963
    %v4136 = vpack.c.bf16 %v4002, %v3989
    %v4137 = vpack.c.bf16 %v4028, %v4015
    %v4138 = vpack.c.bf16 %v4054, %v4041
    %v4139 = vpack.c.bf16 %v4080, %v4067
    %v4140 = vpack.c.bf16 %v4106, %v4093
    %v4173 = vrot.slane %v4109, 3
    %v4174 = vrot.slane %v4110, 6
    %v4175 = vrot.slane %v4110, 1
    %v4176 = vrot.slane %v4111, 4
    %v4177 = vrot.slane %v4111, 7
    %v4178 = vrot.slane %v4112, 2
    %v4179 = vrot.slane %v4112, 5
    %v4180 = vrot.slane %v4113, 3
    %v4181 = vrot.slane %v4114, 6
    %v4182 = vrot.slane %v4114, 1
    %v4183 = vrot.slane %v4115, 4
    %v4184 = vrot.slane %v4115, 7
    %v4185 = vrot.slane %v4116, 2
    %v4186 = vrot.slane %v4116, 5
    %v4187 = vrot.slane %v4117, 3
    %v4188 = vrot.slane %v4118, 6
    %v4189 = vrot.slane %v4118, 1
    %v4190 = vrot.slane %v4119, 4
    %v4191 = vrot.slane %v4119, 7
    %v4192 = vrot.slane %v4120, 2
    %v4193 = vrot.slane %v4120, 5
    %v4194 = vrot.slane %v4121, 3
    %v4195 = vrot.slane %v4122, 6
    %v4196 = vrot.slane %v4122, 1
    %v4197 = vrot.slane %v4123, 4
    %v4198 = vrot.slane %v4123, 7
    %v4199 = vrot.slane %v4124, 2
    %v4200 = vrot.slane %v4124, 5
    %v4201 = vrot.slane %v4125, 3
    %v4202 = vrot.slane %v4126, 6
    %v4203 = vrot.slane %v4126, 1
    %v4204 = vrot.slane %v4127, 4
    %v4205 = vrot.slane %v4127, 7
    %v4206 = vrot.slane %v4128, 2
    %v4207 = vrot.slane %v4128, 5
    %v4208 = vrot.slane %v4129, 3
    %v4209 = vrot.slane %v4130, 6
    %v4210 = vrot.slane %v4130, 1
    %v4211 = vrot.slane %v4131, 4
    %v4212 = vrot.slane %v4131, 7
    %v4213 = vrot.slane %v4132, 2
    %v4214 = vrot.slane %v4132, 5
    %v4215 = vrot.slane %v4133, 3
    %v4216 = vrot.slane %v4134, 6
    %v4217 = vrot.slane %v4134, 1
    %v4218 = vrot.slane %v4135, 4
    %v4219 = vrot.slane %v4135, 7
    %v4220 = vrot.slane %v4136, 2
    %v4221 = vrot.slane %v4136, 5
    %v4222 = vrot.slane %v4137, 3
    %v4223 = vrot.slane %v4138, 6
    %v4224 = vrot.slane %v4138, 1
    %v4225 = vrot.slane %v4139, 4
    %v4226 = vrot.slane %v4139, 7
    %v4227 = vrot.slane %v4140, 2
    %v4228 = vrot.slane %v4140, 5
    %vm4229 = vcmask 1040384
    %v4232 = vsel %vm4229, %v4109, %v4173
    %vm4233 = vcmask 1042434
    %v4236 = vsel %vm4233, %v4174, %v4175
    %vm4237 = vcmask 1041408
    %v4238 = vsel %vm4237, %v4232, %v4236
    %vm4239 = vcmask 1044484
    %v4242 = vsel %vm4239, %v4176, %v4177
    %vm4243 = vcmask 1046534
    %v4246 = vsel %vm4243, %v4178, %v4179
    %vm4247 = vcmask 1045508
    %v4248 = vsel %vm4247, %v4242, %v4246
    %vm4249 = vcmask 1043456
    %v4250 = vsel %vm4249, %v4238, %v4248
    %v4253 = vsel %vm4229, %v4113, %v4180
    %v4256 = vsel %vm4233, %v4181, %v4182
    %v4257 = vsel %vm4237, %v4253, %v4256
    %v4260 = vsel %vm4239, %v4183, %v4184
    %v4263 = vsel %vm4243, %v4185, %v4186
    %v4264 = vsel %vm4247, %v4260, %v4263
    %v4265 = vsel %vm4249, %v4257, %v4264
    %v4268 = vsel %vm4229, %v4117, %v4187
    %v4271 = vsel %vm4233, %v4188, %v4189
    %v4272 = vsel %vm4237, %v4268, %v4271
    %v4275 = vsel %vm4239, %v4190, %v4191
    %v4278 = vsel %vm4243, %v4192, %v4193
    %v4279 = vsel %vm4247, %v4275, %v4278
    %v4280 = vsel %vm4249, %v4272, %v4279
    %v4283 = vsel %vm4229, %v4121, %v4194
    %v4286 = vsel %vm4233, %v4195, %v4196
    %v4287 = vsel %vm4237, %v4283, %v4286
    %v4290 = vsel %vm4239, %v4197, %v4198
    %v4293 = vsel %vm4243, %v4199, %v4200
    %v4294 = vsel %vm4247, %v4290, %v4293
    %v4295 = vsel %vm4249, %v4287, %v4294
    %v4298 = vsel %vm4229, %v4125, %v4201
    %v4301 = vsel %vm4233, %v4202, %v4203
    %v4302 = vsel %vm4237, %v4298, %v4301
    %v4305 = vsel %vm4239, %v4204, %v4205
    %v4308 = vsel %vm4243, %v4206, %v4207
    %v4309 = vsel %vm4247, %v4305, %v4308
    %v4310 = vsel %vm4249, %v4302, %v4309
    %v4313 = vsel %vm4229, %v4129, %v4208
    %v4316 = vsel %vm4233, %v4209, %v4210
    %v4317 = vsel %vm4237, %v4313, %v4316
    %v4320 = vsel %vm4239, %v4211, %v4212
    %v4323 = vsel %vm4243, %v4213, %v4214
    %v4324 = vsel %vm4247, %v4320, %v4323
    %v4325 = vsel %vm4249, %v4317, %v4324
    %v4328 = vsel %vm4229, %v4133, %v4215
    %v4331 = vsel %vm4233, %v4216, %v4217
    %v4332 = vsel %vm4237, %v4328, %v4331
    %v4335 = vsel %vm4239, %v4218, %v4219
    %v4338 = vsel %vm4243, %v4220, %v4221
    %v4339 = vsel %vm4247, %v4335, %v4338
    %v4340 = vsel %vm4249, %v4332, %v4339
    %v4343 = vsel %vm4229, %v4137, %v4222
    %v4346 = vsel %vm4233, %v4223, %v4224
    %v4347 = vsel %vm4237, %v4343, %v4346
    %v4350 = vsel %vm4239, %v4225, %v4226
    %v4353 = vsel %vm4243, %v4227, %v4228
    %v4354 = vsel %vm4247, %v4350, %v4353
    %v4355 = vsel %vm4249, %v4347, %v4354
    %4364 = vst [vmem:[%s3] sm:$0xff] %v4250
    %4365 = vst [vmem:[%s3 + $0x8] sm:$0xff] %v4265
    %4366 = vst [vmem:[%s3 + $0x10] sm:$0xff] %v4280
    %4367 = vst [vmem:[%s3 + $0x18] sm:$0xff] %v4295
    %4368 = vst [vmem:[%s3 + $0x20] sm:$0xff] %v4310
    %4369 = vst [vmem:[%s3 + $0x28] sm:$0xff] %v4325
    %4370 = vst [vmem:[%s3 + $0x30] sm:$0xff] %v4340
    %4371 = vst [vmem:[%s3 + $0x38] sm:$0xff] %v4355
    %v4372 = vsel %vm4237, %v3287, 0.0
    %v4373 = vrot.slane %v4372, 4
    %v4374 = vadd.f32 %v4372, %v4373
    %v4375 = vrot.slane %v4374, 2
    %v4376 = vadd.f32 %v4374, %v4375
    %v4377 = vrot.slane %v4376, 1
    %v4378 = vadd.f32 %v4376, %v4377
    %v4379 = vsel %vm4237, %v3300, 0.0
    %v4380 = vrot.slane %v4379, 4
    %v4381 = vadd.f32 %v4379, %v4380
    %v4382 = vrot.slane %v4381, 2
    %v4383 = vadd.f32 %v4381, %v4382
    %v4384 = vrot.slane %v4383, 1
    %v4385 = vadd.f32 %v4383, %v4384
    %v4386 = vsel %vm4237, %v3313, 0.0
    %v4387 = vrot.slane %v4386, 4
    %v4388 = vadd.f32 %v4386, %v4387
    %v4389 = vrot.slane %v4388, 2
    %v4390 = vadd.f32 %v4388, %v4389
    %v4391 = vrot.slane %v4390, 1
    %v4392 = vadd.f32 %v4390, %v4391
    %v4393 = vsel %vm4237, %v3326, 0.0
    %v4394 = vrot.slane %v4393, 4
    %v4395 = vadd.f32 %v4393, %v4394
    %v4396 = vrot.slane %v4395, 2
    %v4397 = vadd.f32 %v4395, %v4396
    %v4398 = vrot.slane %v4397, 1
    %v4399 = vadd.f32 %v4397, %v4398
    %v4400 = vsel %vm4237, %v3339, 0.0
    %v4401 = vrot.slane %v4400, 4
    %v4402 = vadd.f32 %v4400, %v4401
    %v4403 = vrot.slane %v4402, 2
    %v4404 = vadd.f32 %v4402, %v4403
    %v4405 = vrot.slane %v4404, 1
    %v4406 = vadd.f32 %v4404, %v4405
    %v4407 = vsel %vm4237, %v3352, 0.0
    %v4408 = vrot.slane %v4407, 4
    %v4409 = vadd.f32 %v4407, %v4408
    %v4410 = vrot.slane %v4409, 2
    %v4411 = vadd.f32 %v4409, %v4410
    %v4412 = vrot.slane %v4411, 1
    %v4413 = vadd.f32 %v4411, %v4412
    %v4414 = vsel %vm4237, %v3365, 0.0
    %v4415 = vrot.slane %v4414, 4
    %v4416 = vadd.f32 %v4414, %v4415
    %v4417 = vrot.slane %v4416, 2
    %v4418 = vadd.f32 %v4416, %v4417
    %v4419 = vrot.slane %v4418, 1
    %v4420 = vadd.f32 %v4418, %v4419
    %v4421 = vsel %vm4237, %v3378, 0.0
    %v4422 = vrot.slane %v4421, 4
    %v4423 = vadd.f32 %v4421, %v4422
    %v4424 = vrot.slane %v4423, 2
    %v4425 = vadd.f32 %v4423, %v4424
    %v4426 = vrot.slane %v4425, 1
    %v4427 = vadd.f32 %v4425, %v4426
    %v4428 = vsel %vm4237, %v3391, 0.0
    %v4429 = vrot.slane %v4428, 4
    %v4430 = vadd.f32 %v4428, %v4429
    %v4431 = vrot.slane %v4430, 2
    %v4432 = vadd.f32 %v4430, %v4431
    %v4433 = vrot.slane %v4432, 1
    %v4434 = vadd.f32 %v4432, %v4433
    %v4435 = vsel %vm4237, %v3404, 0.0
    %v4436 = vrot.slane %v4435, 4
    %v4437 = vadd.f32 %v4435, %v4436
    %v4438 = vrot.slane %v4437, 2
    %v4439 = vadd.f32 %v4437, %v4438
    %v4440 = vrot.slane %v4439, 1
    %v4441 = vadd.f32 %v4439, %v4440
    %v4442 = vsel %vm4237, %v3417, 0.0
    %v4443 = vrot.slane %v4442, 4
    %v4444 = vadd.f32 %v4442, %v4443
    %v4445 = vrot.slane %v4444, 2
    %v4446 = vadd.f32 %v4444, %v4445
    %v4447 = vrot.slane %v4446, 1
    %v4448 = vadd.f32 %v4446, %v4447
    %v4449 = vsel %vm4237, %v3430, 0.0
    %v4450 = vrot.slane %v4449, 4
    %v4451 = vadd.f32 %v4449, %v4450
    %v4452 = vrot.slane %v4451, 2
    %v4453 = vadd.f32 %v4451, %v4452
    %v4454 = vrot.slane %v4453, 1
    %v4455 = vadd.f32 %v4453, %v4454
    %v4456 = vsel %vm4237, %v3443, 0.0
    %v4457 = vrot.slane %v4456, 4
    %v4458 = vadd.f32 %v4456, %v4457
    %v4459 = vrot.slane %v4458, 2
    %v4460 = vadd.f32 %v4458, %v4459
    %v4461 = vrot.slane %v4460, 1
    %v4462 = vadd.f32 %v4460, %v4461
    %v4463 = vsel %vm4237, %v3456, 0.0
    %v4464 = vrot.slane %v4463, 4
    %v4465 = vadd.f32 %v4463, %v4464
    %v4466 = vrot.slane %v4465, 2
    %v4467 = vadd.f32 %v4465, %v4466
    %v4468 = vrot.slane %v4467, 1
    %v4469 = vadd.f32 %v4467, %v4468
    %v4470 = vsel %vm4237, %v3469, 0.0
    %v4471 = vrot.slane %v4470, 4
    %v4472 = vadd.f32 %v4470, %v4471
    %v4473 = vrot.slane %v4472, 2
    %v4474 = vadd.f32 %v4472, %v4473
    %v4475 = vrot.slane %v4474, 1
    %v4476 = vadd.f32 %v4474, %v4475
    %v4477 = vsel %vm4237, %v3482, 0.0
    %v4478 = vrot.slane %v4477, 4
    %v4479 = vadd.f32 %v4477, %v4478
    %v4480 = vrot.slane %v4479, 2
    %v4481 = vadd.f32 %v4479, %v4480
    %v4482 = vrot.slane %v4481, 1
    %v4483 = vadd.f32 %v4481, %v4482
    %v4484 = vsel %vm4237, %v3495, 0.0
    %v4485 = vrot.slane %v4484, 4
    %v4486 = vadd.f32 %v4484, %v4485
    %v4487 = vrot.slane %v4486, 2
    %v4488 = vadd.f32 %v4486, %v4487
    %v4489 = vrot.slane %v4488, 1
    %v4490 = vadd.f32 %v4488, %v4489
    %v4491 = vsel %vm4237, %v3508, 0.0
    %v4492 = vrot.slane %v4491, 4
    %v4493 = vadd.f32 %v4491, %v4492
    %v4494 = vrot.slane %v4493, 2
    %v4495 = vadd.f32 %v4493, %v4494
    %v4496 = vrot.slane %v4495, 1
    %v4497 = vadd.f32 %v4495, %v4496
    %v4498 = vsel %vm4237, %v3521, 0.0
    %v4499 = vrot.slane %v4498, 4
    %v4500 = vadd.f32 %v4498, %v4499
    %v4501 = vrot.slane %v4500, 2
    %v4502 = vadd.f32 %v4500, %v4501
    %v4503 = vrot.slane %v4502, 1
    %v4504 = vadd.f32 %v4502, %v4503
    %v4505 = vsel %vm4237, %v3534, 0.0
    %v4506 = vrot.slane %v4505, 4
    %v4507 = vadd.f32 %v4505, %v4506
    %v4508 = vrot.slane %v4507, 2
    %v4509 = vadd.f32 %v4507, %v4508
    %v4510 = vrot.slane %v4509, 1
    %v4511 = vadd.f32 %v4509, %v4510
    %v4512 = vsel %vm4237, %v3547, 0.0
    %v4513 = vrot.slane %v4512, 4
    %v4514 = vadd.f32 %v4512, %v4513
    %v4515 = vrot.slane %v4514, 2
    %v4516 = vadd.f32 %v4514, %v4515
    %v4517 = vrot.slane %v4516, 1
    %v4518 = vadd.f32 %v4516, %v4517
    %v4519 = vsel %vm4237, %v3560, 0.0
    %v4520 = vrot.slane %v4519, 4
    %v4521 = vadd.f32 %v4519, %v4520
    %v4522 = vrot.slane %v4521, 2
    %v4523 = vadd.f32 %v4521, %v4522
    %v4524 = vrot.slane %v4523, 1
    %v4525 = vadd.f32 %v4523, %v4524
    %v4526 = vsel %vm4237, %v3573, 0.0
    %v4527 = vrot.slane %v4526, 4
    %v4528 = vadd.f32 %v4526, %v4527
    %v4529 = vrot.slane %v4528, 2
    %v4530 = vadd.f32 %v4528, %v4529
    %v4531 = vrot.slane %v4530, 1
    %v4532 = vadd.f32 %v4530, %v4531
    %v4533 = vsel %vm4237, %v3586, 0.0
    %v4534 = vrot.slane %v4533, 4
    %v4535 = vadd.f32 %v4533, %v4534
    %v4536 = vrot.slane %v4535, 2
    %v4537 = vadd.f32 %v4535, %v4536
    %v4538 = vrot.slane %v4537, 1
    %v4539 = vadd.f32 %v4537, %v4538
    %v4540 = vsel %vm4237, %v3599, 0.0
    %v4541 = vrot.slane %v4540, 4
    %v4542 = vadd.f32 %v4540, %v4541
    %v4543 = vrot.slane %v4542, 2
    %v4544 = vadd.f32 %v4542, %v4543
    %v4545 = vrot.slane %v4544, 1
    %v4546 = vadd.f32 %v4544, %v4545
    %v4547 = vsel %vm4237, %v3612, 0.0
    %v4548 = vrot.slane %v4547, 4
    %v4549 = vadd.f32 %v4547, %v4548
    %v4550 = vrot.slane %v4549, 2
    %v4551 = vadd.f32 %v4549, %v4550
    %v4552 = vrot.slane %v4551, 1
    %v4553 = vadd.f32 %v4551, %v4552
    %v4554 = vsel %vm4237, %v3625, 0.0
    %v4555 = vrot.slane %v4554, 4
    %v4556 = vadd.f32 %v4554, %v4555
    %v4557 = vrot.slane %v4556, 2
    %v4558 = vadd.f32 %v4556, %v4557
    %v4559 = vrot.slane %v4558, 1
    %v4560 = vadd.f32 %v4558, %v4559
    %v4561 = vsel %vm4237, %v3638, 0.0
    %v4562 = vrot.slane %v4561, 4
    %v4563 = vadd.f32 %v4561, %v4562
    %v4564 = vrot.slane %v4563, 2
    %v4565 = vadd.f32 %v4563, %v4564
    %v4566 = vrot.slane %v4565, 1
    %v4567 = vadd.f32 %v4565, %v4566
    %v4568 = vsel %vm4237, %v3651, 0.0
    %v4569 = vrot.slane %v4568, 4
    %v4570 = vadd.f32 %v4568, %v4569
    %v4571 = vrot.slane %v4570, 2
    %v4572 = vadd.f32 %v4570, %v4571
    %v4573 = vrot.slane %v4572, 1
    %v4574 = vadd.f32 %v4572, %v4573
    %v4575 = vsel %vm4237, %v3664, 0.0
    %v4576 = vrot.slane %v4575, 4
    %v4577 = vadd.f32 %v4575, %v4576
    %v4578 = vrot.slane %v4577, 2
    %v4579 = vadd.f32 %v4577, %v4578
    %v4580 = vrot.slane %v4579, 1
    %v4581 = vadd.f32 %v4579, %v4580
    %v4582 = vsel %vm4237, %v3677, 0.0
    %v4583 = vrot.slane %v4582, 4
    %v4584 = vadd.f32 %v4582, %v4583
    %v4585 = vrot.slane %v4584, 2
    %v4586 = vadd.f32 %v4584, %v4585
    %v4587 = vrot.slane %v4586, 1
    %v4588 = vadd.f32 %v4586, %v4587
    %v4589 = vsel %vm4237, %v3690, 0.0
    %v4590 = vrot.slane %v4589, 4
    %v4591 = vadd.f32 %v4589, %v4590
    %v4592 = vrot.slane %v4591, 2
    %v4593 = vadd.f32 %v4591, %v4592
    %v4594 = vrot.slane %v4593, 1
    %v4595 = vadd.f32 %v4593, %v4594
    %v4596 = vsel %vm4237, %v3703, 0.0
    %v4597 = vrot.slane %v4596, 4
    %v4598 = vadd.f32 %v4596, %v4597
    %v4599 = vrot.slane %v4598, 2
    %v4600 = vadd.f32 %v4598, %v4599
    %v4601 = vrot.slane %v4600, 1
    %v4602 = vadd.f32 %v4600, %v4601
    %v4603 = vsel %vm4237, %v3716, 0.0
    %v4604 = vrot.slane %v4603, 4
    %v4605 = vadd.f32 %v4603, %v4604
    %v4606 = vrot.slane %v4605, 2
    %v4607 = vadd.f32 %v4605, %v4606
    %v4608 = vrot.slane %v4607, 1
    %v4609 = vadd.f32 %v4607, %v4608
    %v4610 = vsel %vm4237, %v3729, 0.0
    %v4611 = vrot.slane %v4610, 4
    %v4612 = vadd.f32 %v4610, %v4611
    %v4613 = vrot.slane %v4612, 2
    %v4614 = vadd.f32 %v4612, %v4613
    %v4615 = vrot.slane %v4614, 1
    %v4616 = vadd.f32 %v4614, %v4615
    %v4617 = vsel %vm4237, %v3742, 0.0
    %v4618 = vrot.slane %v4617, 4
    %v4619 = vadd.f32 %v4617, %v4618
    %v4620 = vrot.slane %v4619, 2
    %v4621 = vadd.f32 %v4619, %v4620
    %v4622 = vrot.slane %v4621, 1
    %v4623 = vadd.f32 %v4621, %v4622
    %v4624 = vsel %vm4237, %v3755, 0.0
    %v4625 = vrot.slane %v4624, 4
    %v4626 = vadd.f32 %v4624, %v4625
    %v4627 = vrot.slane %v4626, 2
    %v4628 = vadd.f32 %v4626, %v4627
    %v4629 = vrot.slane %v4628, 1
    %v4630 = vadd.f32 %v4628, %v4629
    %v4631 = vsel %vm4237, %v3768, 0.0
    %v4632 = vrot.slane %v4631, 4
    %v4633 = vadd.f32 %v4631, %v4632
    %v4634 = vrot.slane %v4633, 2
    %v4635 = vadd.f32 %v4633, %v4634
    %v4636 = vrot.slane %v4635, 1
    %v4637 = vadd.f32 %v4635, %v4636
    %v4638 = vsel %vm4237, %v3781, 0.0
    %v4639 = vrot.slane %v4638, 4
    %v4640 = vadd.f32 %v4638, %v4639
    %v4641 = vrot.slane %v4640, 2
    %v4642 = vadd.f32 %v4640, %v4641
    %v4643 = vrot.slane %v4642, 1
    %v4644 = vadd.f32 %v4642, %v4643
    %v4645 = vsel %vm4237, %v3794, 0.0
    %v4646 = vrot.slane %v4645, 4
    %v4647 = vadd.f32 %v4645, %v4646
    %v4648 = vrot.slane %v4647, 2
    %v4649 = vadd.f32 %v4647, %v4648
    %v4650 = vrot.slane %v4649, 1
    %v4651 = vadd.f32 %v4649, %v4650
    %v4652 = vsel %vm4237, %v3807, 0.0
    %v4653 = vrot.slane %v4652, 4
    %v4654 = vadd.f32 %v4652, %v4653
    %v4655 = vrot.slane %v4654, 2
    %v4656 = vadd.f32 %v4654, %v4655
    %v4657 = vrot.slane %v4656, 1
    %v4658 = vadd.f32 %v4656, %v4657
    %v4659 = vsel %vm4237, %v3820, 0.0
    %v4660 = vrot.slane %v4659, 4
    %v4661 = vadd.f32 %v4659, %v4660
    %v4662 = vrot.slane %v4661, 2
    %v4663 = vadd.f32 %v4661, %v4662
    %v4664 = vrot.slane %v4663, 1
    %v4665 = vadd.f32 %v4663, %v4664
    %v4666 = vsel %vm4237, %v3833, 0.0
    %v4667 = vrot.slane %v4666, 4
    %v4668 = vadd.f32 %v4666, %v4667
    %v4669 = vrot.slane %v4668, 2
    %v4670 = vadd.f32 %v4668, %v4669
    %v4671 = vrot.slane %v4670, 1
    %v4672 = vadd.f32 %v4670, %v4671
    %v4673 = vsel %vm4237, %v3846, 0.0
    %v4674 = vrot.slane %v4673, 4
    %v4675 = vadd.f32 %v4673, %v4674
    %v4676 = vrot.slane %v4675, 2
    %v4677 = vadd.f32 %v4675, %v4676
    %v4678 = vrot.slane %v4677, 1
    %v4679 = vadd.f32 %v4677, %v4678
    %v4680 = vsel %vm4237, %v3859, 0.0
    %v4681 = vrot.slane %v4680, 4
    %v4682 = vadd.f32 %v4680, %v4681
    %v4683 = vrot.slane %v4682, 2
    %v4684 = vadd.f32 %v4682, %v4683
    %v4685 = vrot.slane %v4684, 1
    %v4686 = vadd.f32 %v4684, %v4685
    %v4687 = vsel %vm4237, %v3872, 0.0
    %v4688 = vrot.slane %v4687, 4
    %v4689 = vadd.f32 %v4687, %v4688
    %v4690 = vrot.slane %v4689, 2
    %v4691 = vadd.f32 %v4689, %v4690
    %v4692 = vrot.slane %v4691, 1
    %v4693 = vadd.f32 %v4691, %v4692
    %v4694 = vsel %vm4237, %v3885, 0.0
    %v4695 = vrot.slane %v4694, 4
    %v4696 = vadd.f32 %v4694, %v4695
    %v4697 = vrot.slane %v4696, 2
    %v4698 = vadd.f32 %v4696, %v4697
    %v4699 = vrot.slane %v4698, 1
    %v4700 = vadd.f32 %v4698, %v4699
    %v4701 = vsel %vm4237, %v3898, 0.0
    %v4702 = vrot.slane %v4701, 4
    %v4703 = vadd.f32 %v4701, %v4702
    %v4704 = vrot.slane %v4703, 2
    %v4705 = vadd.f32 %v4703, %v4704
    %v4706 = vrot.slane %v4705, 1
    %v4707 = vadd.f32 %v4705, %v4706
    %v4708 = vsel %vm4237, %v3911, 0.0
    %v4709 = vrot.slane %v4708, 4
    %v4710 = vadd.f32 %v4708, %v4709
    %v4711 = vrot.slane %v4710, 2
    %v4712 = vadd.f32 %v4710, %v4711
    %v4713 = vrot.slane %v4712, 1
    %v4714 = vadd.f32 %v4712, %v4713
    %v4715 = vsel %vm4237, %v3924, 0.0
    %v4716 = vrot.slane %v4715, 4
    %v4717 = vadd.f32 %v4715, %v4716
    %v4718 = vrot.slane %v4717, 2
    %v4719 = vadd.f32 %v4717, %v4718
    %v4720 = vrot.slane %v4719, 1
    %v4721 = vadd.f32 %v4719, %v4720
    %v4722 = vsel %vm4237, %v3937, 0.0
    %v4723 = vrot.slane %v4722, 4
    %v4724 = vadd.f32 %v4722, %v4723
    %v4725 = vrot.slane %v4724, 2
    %v4726 = vadd.f32 %v4724, %v4725
    %v4727 = vrot.slane %v4726, 1
    %v4728 = vadd.f32 %v4726, %v4727
    %v4729 = vsel %vm4237, %v3950, 0.0
    %v4730 = vrot.slane %v4729, 4
    %v4731 = vadd.f32 %v4729, %v4730
    %v4732 = vrot.slane %v4731, 2
    %v4733 = vadd.f32 %v4731, %v4732
    %v4734 = vrot.slane %v4733, 1
    %v4735 = vadd.f32 %v4733, %v4734
    %v4736 = vsel %vm4237, %v3963, 0.0
    %v4737 = vrot.slane %v4736, 4
    %v4738 = vadd.f32 %v4736, %v4737
    %v4739 = vrot.slane %v4738, 2
    %v4740 = vadd.f32 %v4738, %v4739
    %v4741 = vrot.slane %v4740, 1
    %v4742 = vadd.f32 %v4740, %v4741
    %v4743 = vsel %vm4237, %v3976, 0.0
    %v4744 = vrot.slane %v4743, 4
    %v4745 = vadd.f32 %v4743, %v4744
    %v4746 = vrot.slane %v4745, 2
    %v4747 = vadd.f32 %v4745, %v4746
    %v4748 = vrot.slane %v4747, 1
    %v4749 = vadd.f32 %v4747, %v4748
    %v4750 = vsel %vm4237, %v3989, 0.0
    %v4751 = vrot.slane %v4750, 4
    %v4752 = vadd.f32 %v4750, %v4751
    %v4753 = vrot.slane %v4752, 2
    %v4754 = vadd.f32 %v4752, %v4753
    %v4755 = vrot.slane %v4754, 1
    %v4756 = vadd.f32 %v4754, %v4755
    %v4757 = vsel %vm4237, %v4002, 0.0
    %v4758 = vrot.slane %v4757, 4
    %v4759 = vadd.f32 %v4757, %v4758
    %v4760 = vrot.slane %v4759, 2
    %v4761 = vadd.f32 %v4759, %v4760
    %v4762 = vrot.slane %v4761, 1
    %v4763 = vadd.f32 %v4761, %v4762
    %v4764 = vsel %vm4237, %v4015, 0.0
    %v4765 = vrot.slane %v4764, 4
    %v4766 = vadd.f32 %v4764, %v4765
    %v4767 = vrot.slane %v4766, 2
    %v4768 = vadd.f32 %v4766, %v4767
    %v4769 = vrot.slane %v4768, 1
    %v4770 = vadd.f32 %v4768, %v4769
    %v4771 = vsel %vm4237, %v4028, 0.0
    %v4772 = vrot.slane %v4771, 4
    %v4773 = vadd.f32 %v4771, %v4772
    %v4774 = vrot.slane %v4773, 2
    %v4775 = vadd.f32 %v4773, %v4774
    %v4776 = vrot.slane %v4775, 1
    %v4777 = vadd.f32 %v4775, %v4776
    %v4778 = vsel %vm4237, %v4041, 0.0
    %v4779 = vrot.slane %v4778, 4
    %v4780 = vadd.f32 %v4778, %v4779
    %v4781 = vrot.slane %v4780, 2
    %v4782 = vadd.f32 %v4780, %v4781
    %v4783 = vrot.slane %v4782, 1
    %v4784 = vadd.f32 %v4782, %v4783
    %v4785 = vsel %vm4237, %v4054, 0.0
    %v4786 = vrot.slane %v4785, 4
    %v4787 = vadd.f32 %v4785, %v4786
    %v4788 = vrot.slane %v4787, 2
    %v4789 = vadd.f32 %v4787, %v4788
    %v4790 = vrot.slane %v4789, 1
    %v4791 = vadd.f32 %v4789, %v4790
    %v4792 = vsel %vm4237, %v4067, 0.0
    %v4793 = vrot.slane %v4792, 4
    %v4794 = vadd.f32 %v4792, %v4793
    %v4795 = vrot.slane %v4794, 2
    %v4796 = vadd.f32 %v4794, %v4795
    %v4797 = vrot.slane %v4796, 1
    %v4798 = vadd.f32 %v4796, %v4797
    %v4799 = vsel %vm4237, %v4080, 0.0
    %v4800 = vrot.slane %v4799, 4
    %v4801 = vadd.f32 %v4799, %v4800
    %v4802 = vrot.slane %v4801, 2
    %v4803 = vadd.f32 %v4801, %v4802
    %v4804 = vrot.slane %v4803, 1
    %v4805 = vadd.f32 %v4803, %v4804
    %v4806 = vsel %vm4237, %v4093, 0.0
    %v4807 = vrot.slane %v4806, 4
    %v4808 = vadd.f32 %v4806, %v4807
    %v4809 = vrot.slane %v4808, 2
    %v4810 = vadd.f32 %v4808, %v4809
    %v4811 = vrot.slane %v4810, 1
    %v4812 = vadd.f32 %v4810, %v4811
    %v4813 = vsel %vm4237, %v4106, 0.0
    %v4814 = vrot.slane %v4813, 4
    %v4815 = vadd.f32 %v4813, %v4814
    %v4816 = vrot.slane %v4815, 2
    %v4817 = vadd.f32 %v4815, %v4816
    %v4818 = vrot.slane %v4817, 1
    %v4819 = vadd.f32 %v4817, %v4818
    %v4820 = vmul.f32 %v3287, %v3287
    %v4821 = vmul.f32 %v3300, %v3300
    %v4822 = vmul.f32 %v3313, %v3313
    %v4823 = vmul.f32 %v3326, %v3326
    %v4824 = vmul.f32 %v3339, %v3339
    %v4825 = vmul.f32 %v3352, %v3352
    %v4826 = vmul.f32 %v3365, %v3365
    %v4827 = vmul.f32 %v3378, %v3378
    %v4828 = vmul.f32 %v3391, %v3391
    %v4829 = vmul.f32 %v3404, %v3404
    %v4830 = vmul.f32 %v3417, %v3417
    %v4831 = vmul.f32 %v3430, %v3430
    %v4832 = vmul.f32 %v3443, %v3443
    %v4833 = vmul.f32 %v3456, %v3456
    %v4834 = vmul.f32 %v3469, %v3469
    %v4835 = vmul.f32 %v3482, %v3482
    %v4836 = vmul.f32 %v3495, %v3495
    %v4837 = vmul.f32 %v3508, %v3508
    %v4838 = vmul.f32 %v3521, %v3521
    %v4839 = vmul.f32 %v3534, %v3534
    %v4840 = vmul.f32 %v3547, %v3547
    %v4841 = vmul.f32 %v3560, %v3560
    %v4842 = vmul.f32 %v3573, %v3573
    %v4843 = vmul.f32 %v3586, %v3586
    %v4844 = vmul.f32 %v3599, %v3599
    %v4845 = vmul.f32 %v3612, %v3612
    %v4846 = vmul.f32 %v3625, %v3625
    %v4847 = vmul.f32 %v3638, %v3638
    %v4848 = vmul.f32 %v3651, %v3651
    %v4849 = vmul.f32 %v3664, %v3664
    %v4850 = vmul.f32 %v3677, %v3677
    %v4851 = vmul.f32 %v3690, %v3690
    %v4852 = vmul.f32 %v3703, %v3703
    %v4853 = vmul.f32 %v3716, %v3716
    %v4854 = vmul.f32 %v3729, %v3729
    %v4855 = vmul.f32 %v3742, %v3742
    %v4856 = vmul.f32 %v3755, %v3755
    %v4857 = vmul.f32 %v3768, %v3768
    %v4858 = vmul.f32 %v3781, %v3781
    %v4859 = vmul.f32 %v3794, %v3794
    %v4860 = vmul.f32 %v3807, %v3807
    %v4861 = vmul.f32 %v3820, %v3820
    %v4862 = vmul.f32 %v3833, %v3833
    %v4863 = vmul.f32 %v3846, %v3846
    %v4864 = vmul.f32 %v3859, %v3859
    %v4865 = vmul.f32 %v3872, %v3872
    %v4866 = vmul.f32 %v3885, %v3885
    %v4867 = vmul.f32 %v3898, %v3898
    %v4868 = vmul.f32 %v3911, %v3911
    %v4869 = vmul.f32 %v3924, %v3924
    %v4870 = vmul.f32 %v3937, %v3937
    %v4871 = vmul.f32 %v3950, %v3950
    %v4872 = vmul.f32 %v3963, %v3963
    %v4873 = vmul.f32 %v3976, %v3976
    %v4874 = vmul.f32 %v3989, %v3989
    %v4875 = vmul.f32 %v4002, %v4002
    %v4876 = vmul.f32 %v4015, %v4015
    %v4877 = vmul.f32 %v4028, %v4028
    %v4878 = vmul.f32 %v4041, %v4041
    %v4879 = vmul.f32 %v4054, %v4054
    %v4880 = vmul.f32 %v4067, %v4067
    %v4881 = vmul.f32 %v4080, %v4080
    %v4882 = vmul.f32 %v4093, %v4093
    %v4883 = vmul.f32 %v4106, %v4106
    %v4884 = vsel %vm4237, %v4820, 0.0
    %v4885 = vrot.slane %v4884, 4
    %v4886 = vadd.f32 %v4884, %v4885
    %v4887 = vrot.slane %v4886, 2
    %v4888 = vadd.f32 %v4886, %v4887
    %v4889 = vrot.slane %v4888, 1
    %v4890 = vadd.f32 %v4888, %v4889
    %v4891 = vsel %vm4237, %v4821, 0.0
    %v4892 = vrot.slane %v4891, 4
    %v4893 = vadd.f32 %v4891, %v4892
    %v4894 = vrot.slane %v4893, 2
    %v4895 = vadd.f32 %v4893, %v4894
    %v4896 = vrot.slane %v4895, 1
    %v4897 = vadd.f32 %v4895, %v4896
    %v4898 = vsel %vm4237, %v4822, 0.0
    %v4899 = vrot.slane %v4898, 4
    %v4900 = vadd.f32 %v4898, %v4899
    %v4901 = vrot.slane %v4900, 2
    %v4902 = vadd.f32 %v4900, %v4901
    %v4903 = vrot.slane %v4902, 1
    %v4904 = vadd.f32 %v4902, %v4903
    %v4905 = vsel %vm4237, %v4823, 0.0
    %v4906 = vrot.slane %v4905, 4
    %v4907 = vadd.f32 %v4905, %v4906
    %v4908 = vrot.slane %v4907, 2
    %v4909 = vadd.f32 %v4907, %v4908
    %v4910 = vrot.slane %v4909, 1
    %v4911 = vadd.f32 %v4909, %v4910
    %v4912 = vsel %vm4237, %v4824, 0.0
    %v4913 = vrot.slane %v4912, 4
    %v4914 = vadd.f32 %v4912, %v4913
    %v4915 = vrot.slane %v4914, 2
    %v4916 = vadd.f32 %v4914, %v4915
    %v4917 = vrot.slane %v4916, 1
    %v4918 = vadd.f32 %v4916, %v4917
    %v4919 = vsel %vm4237, %v4825, 0.0
    %v4920 = vrot.slane %v4919, 4
    %v4921 = vadd.f32 %v4919, %v4920
    %v4922 = vrot.slane %v4921, 2
    %v4923 = vadd.f32 %v4921, %v4922
    %v4924 = vrot.slane %v4923, 1
    %v4925 = vadd.f32 %v4923, %v4924
    %v4926 = vsel %vm4237, %v4826, 0.0
    %v4927 = vrot.slane %v4926, 4
    %v4928 = vadd.f32 %v4926, %v4927
    %v4929 = vrot.slane %v4928, 2
    %v4930 = vadd.f32 %v4928, %v4929
    %v4931 = vrot.slane %v4930, 1
    %v4932 = vadd.f32 %v4930, %v4931
    %v4933 = vsel %vm4237, %v4827, 0.0
    %v4934 = vrot.slane %v4933, 4
    %v4935 = vadd.f32 %v4933, %v4934
    %v4936 = vrot.slane %v4935, 2
    %v4937 = vadd.f32 %v4935, %v4936
    %v4938 = vrot.slane %v4937, 1
    %v4939 = vadd.f32 %v4937, %v4938
    %v4940 = vsel %vm4237, %v4828, 0.0
    %v4941 = vrot.slane %v4940, 4
    %v4942 = vadd.f32 %v4940, %v4941
    %v4943 = vrot.slane %v4942, 2
    %v4944 = vadd.f32 %v4942, %v4943
    %v4945 = vrot.slane %v4944, 1
    %v4946 = vadd.f32 %v4944, %v4945
    %v4947 = vsel %vm4237, %v4829, 0.0
    %v4948 = vrot.slane %v4947, 4
    %v4949 = vadd.f32 %v4947, %v4948
    %v4950 = vrot.slane %v4949, 2
    %v4951 = vadd.f32 %v4949, %v4950
    %v4952 = vrot.slane %v4951, 1
    %v4953 = vadd.f32 %v4951, %v4952
    %v4954 = vsel %vm4237, %v4830, 0.0
    %v4955 = vrot.slane %v4954, 4
    %v4956 = vadd.f32 %v4954, %v4955
    %v4957 = vrot.slane %v4956, 2
    %v4958 = vadd.f32 %v4956, %v4957
    %v4959 = vrot.slane %v4958, 1
    %v4960 = vadd.f32 %v4958, %v4959
    %v4961 = vsel %vm4237, %v4831, 0.0
    %v4962 = vrot.slane %v4961, 4
    %v4963 = vadd.f32 %v4961, %v4962
    %v4964 = vrot.slane %v4963, 2
    %v4965 = vadd.f32 %v4963, %v4964
    %v4966 = vrot.slane %v4965, 1
    %v4967 = vadd.f32 %v4965, %v4966
    %v4968 = vsel %vm4237, %v4832, 0.0
    %v4969 = vrot.slane %v4968, 4
    %v4970 = vadd.f32 %v4968, %v4969
    %v4971 = vrot.slane %v4970, 2
    %v4972 = vadd.f32 %v4970, %v4971
    %v4973 = vrot.slane %v4972, 1
    %v4974 = vadd.f32 %v4972, %v4973
    %v4975 = vsel %vm4237, %v4833, 0.0
    %v4976 = vrot.slane %v4975, 4
    %v4977 = vadd.f32 %v4975, %v4976
    %v4978 = vrot.slane %v4977, 2
    %v4979 = vadd.f32 %v4977, %v4978
    %v4980 = vrot.slane %v4979, 1
    %v4981 = vadd.f32 %v4979, %v4980
    %v4982 = vsel %vm4237, %v4834, 0.0
    %v4983 = vrot.slane %v4982, 4
    %v4984 = vadd.f32 %v4982, %v4983
    %v4985 = vrot.slane %v4984, 2
    %v4986 = vadd.f32 %v4984, %v4985
    %v4987 = vrot.slane %v4986, 1
    %v4988 = vadd.f32 %v4986, %v4987
    %v4989 = vsel %vm4237, %v4835, 0.0
    %v4990 = vrot.slane %v4989, 4
    %v4991 = vadd.f32 %v4989, %v4990
    %v4992 = vrot.slane %v4991, 2
    %v4993 = vadd.f32 %v4991, %v4992
    %v4994 = vrot.slane %v4993, 1
    %v4995 = vadd.f32 %v4993, %v4994
    %v4996 = vsel %vm4237, %v4836, 0.0
    %v4997 = vrot.slane %v4996, 4
    %v4998 = vadd.f32 %v4996, %v4997
    %v4999 = vrot.slane %v4998, 2
    %v5000 = vadd.f32 %v4998, %v4999
    %v5001 = vrot.slane %v5000, 1
    %v5002 = vadd.f32 %v5000, %v5001
    %v5003 = vsel %vm4237, %v4837, 0.0
    %v5004 = vrot.slane %v5003, 4
    %v5005 = vadd.f32 %v5003, %v5004
    %v5006 = vrot.slane %v5005, 2
    %v5007 = vadd.f32 %v5005, %v5006
    %v5008 = vrot.slane %v5007, 1
    %v5009 = vadd.f32 %v5007, %v5008
    %v5010 = vsel %vm4237, %v4838, 0.0
    %v5011 = vrot.slane %v5010, 4
    %v5012 = vadd.f32 %v5010, %v5011
    %v5013 = vrot.slane %v5012, 2
    %v5014 = vadd.f32 %v5012, %v5013
    %v5015 = vrot.slane %v5014, 1
    %v5016 = vadd.f32 %v5014, %v5015
    %v5017 = vsel %vm4237, %v4839, 0.0
    %v5018 = vrot.slane %v5017, 4
    %v5019 = vadd.f32 %v5017, %v5018
    %v5020 = vrot.slane %v5019, 2
    %v5021 = vadd.f32 %v5019, %v5020
    %v5022 = vrot.slane %v5021, 1
    %v5023 = vadd.f32 %v5021, %v5022
    %v5024 = vsel %vm4237, %v4840, 0.0
    %v5025 = vrot.slane %v5024, 4
    %v5026 = vadd.f32 %v5024, %v5025
    %v5027 = vrot.slane %v5026, 2
    %v5028 = vadd.f32 %v5026, %v5027
    %v5029 = vrot.slane %v5028, 1
    %v5030 = vadd.f32 %v5028, %v5029
    %v5031 = vsel %vm4237, %v4841, 0.0
    %v5032 = vrot.slane %v5031, 4
    %v5033 = vadd.f32 %v5031, %v5032
    %v5034 = vrot.slane %v5033, 2
    %v5035 = vadd.f32 %v5033, %v5034
    %v5036 = vrot.slane %v5035, 1
    %v5037 = vadd.f32 %v5035, %v5036
    %v5038 = vsel %vm4237, %v4842, 0.0
    %v5039 = vrot.slane %v5038, 4
    %v5040 = vadd.f32 %v5038, %v5039
    %v5041 = vrot.slane %v5040, 2
    %v5042 = vadd.f32 %v5040, %v5041
    %v5043 = vrot.slane %v5042, 1
    %v5044 = vadd.f32 %v5042, %v5043
    %v5045 = vsel %vm4237, %v4843, 0.0
    %v5046 = vrot.slane %v5045, 4
    %v5047 = vadd.f32 %v5045, %v5046
    %v5048 = vrot.slane %v5047, 2
    %v5049 = vadd.f32 %v5047, %v5048
    %v5050 = vrot.slane %v5049, 1
    %v5051 = vadd.f32 %v5049, %v5050
    %v5052 = vsel %vm4237, %v4844, 0.0
    %v5053 = vrot.slane %v5052, 4
    %v5054 = vadd.f32 %v5052, %v5053
    %v5055 = vrot.slane %v5054, 2
    %v5056 = vadd.f32 %v5054, %v5055
    %v5057 = vrot.slane %v5056, 1
    %v5058 = vadd.f32 %v5056, %v5057
    %v5059 = vsel %vm4237, %v4845, 0.0
    %v5060 = vrot.slane %v5059, 4
    %v5061 = vadd.f32 %v5059, %v5060
    %v5062 = vrot.slane %v5061, 2
    %v5063 = vadd.f32 %v5061, %v5062
    %v5064 = vrot.slane %v5063, 1
    %v5065 = vadd.f32 %v5063, %v5064
    %v5066 = vsel %vm4237, %v4846, 0.0
    %v5067 = vrot.slane %v5066, 4
    %v5068 = vadd.f32 %v5066, %v5067
    %v5069 = vrot.slane %v5068, 2
    %v5070 = vadd.f32 %v5068, %v5069
    %v5071 = vrot.slane %v5070, 1
    %v5072 = vadd.f32 %v5070, %v5071
    %v5073 = vsel %vm4237, %v4847, 0.0
    %v5074 = vrot.slane %v5073, 4
    %v5075 = vadd.f32 %v5073, %v5074
    %v5076 = vrot.slane %v5075, 2
    %v5077 = vadd.f32 %v5075, %v5076
    %v5078 = vrot.slane %v5077, 1
    %v5079 = vadd.f32 %v5077, %v5078
    %v5080 = vsel %vm4237, %v4848, 0.0
    %v5081 = vrot.slane %v5080, 4
    %v5082 = vadd.f32 %v5080, %v5081
    %v5083 = vrot.slane %v5082, 2
    %v5084 = vadd.f32 %v5082, %v5083
    %v5085 = vrot.slane %v5084, 1
    %v5086 = vadd.f32 %v5084, %v5085
    %v5087 = vsel %vm4237, %v4849, 0.0
    %v5088 = vrot.slane %v5087, 4
    %v5089 = vadd.f32 %v5087, %v5088
    %v5090 = vrot.slane %v5089, 2
    %v5091 = vadd.f32 %v5089, %v5090
    %v5092 = vrot.slane %v5091, 1
    %v5093 = vadd.f32 %v5091, %v5092
    %v5094 = vsel %vm4237, %v4850, 0.0
    %v5095 = vrot.slane %v5094, 4
    %v5096 = vadd.f32 %v5094, %v5095
    %v5097 = vrot.slane %v5096, 2
    %v5098 = vadd.f32 %v5096, %v5097
    %v5099 = vrot.slane %v5098, 1
    %v5100 = vadd.f32 %v5098, %v5099
    %v5101 = vsel %vm4237, %v4851, 0.0
    %v5102 = vrot.slane %v5101, 4
    %v5103 = vadd.f32 %v5101, %v5102
    %v5104 = vrot.slane %v5103, 2
    %v5105 = vadd.f32 %v5103, %v5104
    %v5106 = vrot.slane %v5105, 1
    %v5107 = vadd.f32 %v5105, %v5106
    %v5108 = vsel %vm4237, %v4852, 0.0
    %v5109 = vrot.slane %v5108, 4
    %v5110 = vadd.f32 %v5108, %v5109
    %v5111 = vrot.slane %v5110, 2
    %v5112 = vadd.f32 %v5110, %v5111
    %v5113 = vrot.slane %v5112, 1
    %v5114 = vadd.f32 %v5112, %v5113
    %v5115 = vsel %vm4237, %v4853, 0.0
    %v5116 = vrot.slane %v5115, 4
    %v5117 = vadd.f32 %v5115, %v5116
    %v5118 = vrot.slane %v5117, 2
    %v5119 = vadd.f32 %v5117, %v5118
    %v5120 = vrot.slane %v5119, 1
    %v5121 = vadd.f32 %v5119, %v5120
    %v5122 = vsel %vm4237, %v4854, 0.0
    %v5123 = vrot.slane %v5122, 4
    %v5124 = vadd.f32 %v5122, %v5123
    %v5125 = vrot.slane %v5124, 2
    %v5126 = vadd.f32 %v5124, %v5125
    %v5127 = vrot.slane %v5126, 1
    %v5128 = vadd.f32 %v5126, %v5127
    %v5129 = vsel %vm4237, %v4855, 0.0
    %v5130 = vrot.slane %v5129, 4
    %v5131 = vadd.f32 %v5129, %v5130
    %v5132 = vrot.slane %v5131, 2
    %v5133 = vadd.f32 %v5131, %v5132
    %v5134 = vrot.slane %v5133, 1
    %v5135 = vadd.f32 %v5133, %v5134
    %v5136 = vsel %vm4237, %v4856, 0.0
    %v5137 = vrot.slane %v5136, 4
    %v5138 = vadd.f32 %v5136, %v5137
    %v5139 = vrot.slane %v5138, 2
    %v5140 = vadd.f32 %v5138, %v5139
    %v5141 = vrot.slane %v5140, 1
    %v5142 = vadd.f32 %v5140, %v5141
    %v5143 = vsel %vm4237, %v4857, 0.0
    %v5144 = vrot.slane %v5143, 4
    %v5145 = vadd.f32 %v5143, %v5144
    %v5146 = vrot.slane %v5145, 2
    %v5147 = vadd.f32 %v5145, %v5146
    %v5148 = vrot.slane %v5147, 1
    %v5149 = vadd.f32 %v5147, %v5148
    %v5150 = vsel %vm4237, %v4858, 0.0
    %v5151 = vrot.slane %v5150, 4
    %v5152 = vadd.f32 %v5150, %v5151
    %v5153 = vrot.slane %v5152, 2
    %v5154 = vadd.f32 %v5152, %v5153
    %v5155 = vrot.slane %v5154, 1
    %v5156 = vadd.f32 %v5154, %v5155
    %v5157 = vsel %vm4237, %v4859, 0.0
    %v5158 = vrot.slane %v5157, 4
    %v5159 = vadd.f32 %v5157, %v5158
    %v5160 = vrot.slane %v5159, 2
    %v5161 = vadd.f32 %v5159, %v5160
    %v5162 = vrot.slane %v5161, 1
    %v5163 = vadd.f32 %v5161, %v5162
    %v5164 = vsel %vm4237, %v4860, 0.0
    %v5165 = vrot.slane %v5164, 4
    %v5166 = vadd.f32 %v5164, %v5165
    %v5167 = vrot.slane %v5166, 2
    %v5168 = vadd.f32 %v5166, %v5167
    %v5169 = vrot.slane %v5168, 1
    %v5170 = vadd.f32 %v5168, %v5169
    %v5171 = vsel %vm4237, %v4861, 0.0
    %v5172 = vrot.slane %v5171, 4
    %v5173 = vadd.f32 %v5171, %v5172
    %v5174 = vrot.slane %v5173, 2
    %v5175 = vadd.f32 %v5173, %v5174
    %v5176 = vrot.slane %v5175, 1
    %v5177 = vadd.f32 %v5175, %v5176
    %v5178 = vsel %vm4237, %v4862, 0.0
    %v5179 = vrot.slane %v5178, 4
    %v5180 = vadd.f32 %v5178, %v5179
    %v5181 = vrot.slane %v5180, 2
    %v5182 = vadd.f32 %v5180, %v5181
    %v5183 = vrot.slane %v5182, 1
    %v5184 = vadd.f32 %v5182, %v5183
    %v5185 = vsel %vm4237, %v4863, 0.0
    %v5186 = vrot.slane %v5185, 4
    %v5187 = vadd.f32 %v5185, %v5186
    %v5188 = vrot.slane %v5187, 2
    %v5189 = vadd.f32 %v5187, %v5188
    %v5190 = vrot.slane %v5189, 1
    %v5191 = vadd.f32 %v5189, %v5190
    %v5192 = vsel %vm4237, %v4864, 0.0
    %v5193 = vrot.slane %v5192, 4
    %v5194 = vadd.f32 %v5192, %v5193
    %v5195 = vrot.slane %v5194, 2
    %v5196 = vadd.f32 %v5194, %v5195
    %v5197 = vrot.slane %v5196, 1
    %v5198 = vadd.f32 %v5196, %v5197
    %v5199 = vsel %vm4237, %v4865, 0.0
    %v5200 = vrot.slane %v5199, 4
    %v5201 = vadd.f32 %v5199, %v5200
    %v5202 = vrot.slane %v5201, 2
    %v5203 = vadd.f32 %v5201, %v5202
    %v5204 = vrot.slane %v5203, 1
    %v5205 = vadd.f32 %v5203, %v5204
    %v5206 = vsel %vm4237, %v4866, 0.0
    %v5207 = vrot.slane %v5206, 4
    %v5208 = vadd.f32 %v5206, %v5207
    %v5209 = vrot.slane %v5208, 2
    %v5210 = vadd.f32 %v5208, %v5209
    %v5211 = vrot.slane %v5210, 1
    %v5212 = vadd.f32 %v5210, %v5211
    %v5213 = vsel %vm4237, %v4867, 0.0
    %v5214 = vrot.slane %v5213, 4
    %v5215 = vadd.f32 %v5213, %v5214
    %v5216 = vrot.slane %v5215, 2
    %v5217 = vadd.f32 %v5215, %v5216
    %v5218 = vrot.slane %v5217, 1
    %v5219 = vadd.f32 %v5217, %v5218
    %v5220 = vsel %vm4237, %v4868, 0.0
    %v5221 = vrot.slane %v5220, 4
    %v5222 = vadd.f32 %v5220, %v5221
    %v5223 = vrot.slane %v5222, 2
    %v5224 = vadd.f32 %v5222, %v5223
    %v5225 = vrot.slane %v5224, 1
    %v5226 = vadd.f32 %v5224, %v5225
    %v5227 = vsel %vm4237, %v4869, 0.0
    %v5228 = vrot.slane %v5227, 4
    %v5229 = vadd.f32 %v5227, %v5228
    %v5230 = vrot.slane %v5229, 2
    %v5231 = vadd.f32 %v5229, %v5230
    %v5232 = vrot.slane %v5231, 1
    %v5233 = vadd.f32 %v5231, %v5232
    %v5234 = vsel %vm4237, %v4870, 0.0
    %v5235 = vrot.slane %v5234, 4
    %v5236 = vadd.f32 %v5234, %v5235
    %v5237 = vrot.slane %v5236, 2
    %v5238 = vadd.f32 %v5236, %v5237
    %v5239 = vrot.slane %v5238, 1
    %v5240 = vadd.f32 %v5238, %v5239
    %v5241 = vsel %vm4237, %v4871, 0.0
    %v5242 = vrot.slane %v5241, 4
    %v5243 = vadd.f32 %v5241, %v5242
    %v5244 = vrot.slane %v5243, 2
    %v5245 = vadd.f32 %v5243, %v5244
    %v5246 = vrot.slane %v5245, 1
    %v5247 = vadd.f32 %v5245, %v5246
    %v5248 = vsel %vm4237, %v4872, 0.0
    %v5249 = vrot.slane %v5248, 4
    %v5250 = vadd.f32 %v5248, %v5249
    %v5251 = vrot.slane %v5250, 2
    %v5252 = vadd.f32 %v5250, %v5251
    %v5253 = vrot.slane %v5252, 1
    %v5254 = vadd.f32 %v5252, %v5253
    %v5255 = vsel %vm4237, %v4873, 0.0
    %v5256 = vrot.slane %v5255, 4
    %v5257 = vadd.f32 %v5255, %v5256
    %v5258 = vrot.slane %v5257, 2
    %v5259 = vadd.f32 %v5257, %v5258
    %v5260 = vrot.slane %v5259, 1
    %v5261 = vadd.f32 %v5259, %v5260
    %v5262 = vsel %vm4237, %v4874, 0.0
    %v5263 = vrot.slane %v5262, 4
    %v5264 = vadd.f32 %v5262, %v5263
    %v5265 = vrot.slane %v5264, 2
    %v5266 = vadd.f32 %v5264, %v5265
    %v5267 = vrot.slane %v5266, 1
    %v5268 = vadd.f32 %v5266, %v5267
    %v5269 = vsel %vm4237, %v4875, 0.0
    %v5270 = vrot.slane %v5269, 4
    %v5271 = vadd.f32 %v5269, %v5270
    %v5272 = vrot.slane %v5271, 2
    %v5273 = vadd.f32 %v5271, %v5272
    %v5274 = vrot.slane %v5273, 1
    %v5275 = vadd.f32 %v5273, %v5274
    %v5276 = vsel %vm4237, %v4876, 0.0
    %v5277 = vrot.slane %v5276, 4
    %v5278 = vadd.f32 %v5276, %v5277
    %v5279 = vrot.slane %v5278, 2
    %v5280 = vadd.f32 %v5278, %v5279
    %v5281 = vrot.slane %v5280, 1
    %v5282 = vadd.f32 %v5280, %v5281
    %v5283 = vsel %vm4237, %v4877, 0.0
    %v5284 = vrot.slane %v5283, 4
    %v5285 = vadd.f32 %v5283, %v5284
    %v5286 = vrot.slane %v5285, 2
    %v5287 = vadd.f32 %v5285, %v5286
    %v5288 = vrot.slane %v5287, 1
    %v5289 = vadd.f32 %v5287, %v5288
    %v5290 = vsel %vm4237, %v4878, 0.0
    %v5291 = vrot.slane %v5290, 4
    %v5292 = vadd.f32 %v5290, %v5291
    %v5293 = vrot.slane %v5292, 2
    %v5294 = vadd.f32 %v5292, %v5293
    %v5295 = vrot.slane %v5294, 1
    %v5296 = vadd.f32 %v5294, %v5295
    %v5297 = vsel %vm4237, %v4879, 0.0
    %v5298 = vrot.slane %v5297, 4
    %v5299 = vadd.f32 %v5297, %v5298
    %v5300 = vrot.slane %v5299, 2
    %v5301 = vadd.f32 %v5299, %v5300
    %v5302 = vrot.slane %v5301, 1
    %v5303 = vadd.f32 %v5301, %v5302
    %v5304 = vsel %vm4237, %v4880, 0.0
    %v5305 = vrot.slane %v5304, 4
    %v5306 = vadd.f32 %v5304, %v5305
    %v5307 = vrot.slane %v5306, 2
    %v5308 = vadd.f32 %v5306, %v5307
    %v5309 = vrot.slane %v5308, 1
    %v5310 = vadd.f32 %v5308, %v5309
    %v5311 = vsel %vm4237, %v4881, 0.0
    %v5312 = vrot.slane %v5311, 4
    %v5313 = vadd.f32 %v5311, %v5312
    %v5314 = vrot.slane %v5313, 2
    %v5315 = vadd.f32 %v5313, %v5314
    %v5316 = vrot.slane %v5315, 1
    %v5317 = vadd.f32 %v5315, %v5316
    %v5318 = vsel %vm4237, %v4882, 0.0
    %v5319 = vrot.slane %v5318, 4
    %v5320 = vadd.f32 %v5318, %v5319
    %v5321 = vrot.slane %v5320, 2
    %v5322 = vadd.f32 %v5320, %v5321
    %v5323 = vrot.slane %v5322, 1
    %v5324 = vadd.f32 %v5322, %v5323
    %v5325 = vsel %vm4237, %v4883, 0.0
    %v5326 = vrot.slane %v5325, 4
    %v5327 = vadd.f32 %v5325, %v5326
    %v5328 = vrot.slane %v5327, 2
    %v5329 = vadd.f32 %v5327, %v5328
    %v5330 = vrot.slane %v5329, 1
    %v5331 = vadd.f32 %v5329, %v5330
    %v5332 = vsel %vm4229, %v4378, %v4890
    %v5333 = vsel %vm4229, %v4385, %v4897
    %v5334 = vsel %vm4229, %v4392, %v4904
    %v5335 = vsel %vm4229, %v4399, %v4911
    %v5336 = vsel %vm4229, %v4406, %v4918
    %v5337 = vsel %vm4229, %v4413, %v4925
    %v5338 = vsel %vm4229, %v4420, %v4932
    %v5339 = vsel %vm4229, %v4427, %v4939
    %v5340 = vsel %vm4229, %v4434, %v4946
    %v5341 = vsel %vm4229, %v4441, %v4953
    %v5342 = vsel %vm4229, %v4448, %v4960
    %v5343 = vsel %vm4229, %v4455, %v4967
    %v5344 = vsel %vm4229, %v4462, %v4974
    %v5345 = vsel %vm4229, %v4469, %v4981
    %v5346 = vsel %vm4229, %v4476, %v4988
    %v5347 = vsel %vm4229, %v4483, %v4995
    %v5348 = vsel %vm4229, %v4490, %v5002
    %v5349 = vsel %vm4229, %v4497, %v5009
    %v5350 = vsel %vm4229, %v4504, %v5016
    %v5351 = vsel %vm4229, %v4511, %v5023
    %v5352 = vsel %vm4229, %v4518, %v5030
    %v5353 = vsel %vm4229, %v4525, %v5037
    %v5354 = vsel %vm4229, %v4532, %v5044
    %v5355 = vsel %vm4229, %v4539, %v5051
    %v5356 = vsel %vm4229, %v4546, %v5058
    %v5357 = vsel %vm4229, %v4553, %v5065
    %v5358 = vsel %vm4229, %v4560, %v5072
    %v5359 = vsel %vm4229, %v4567, %v5079
    %v5360 = vsel %vm4229, %v4574, %v5086
    %v5361 = vsel %vm4229, %v4581, %v5093
    %v5362 = vsel %vm4229, %v4588, %v5100
    %v5363 = vsel %vm4229, %v4595, %v5107
    %v5364 = vsel %vm4229, %v4602, %v5114
    %v5365 = vsel %vm4229, %v4609, %v5121
    %v5366 = vsel %vm4229, %v4616, %v5128
    %v5367 = vsel %vm4229, %v4623, %v5135
    %v5368 = vsel %vm4229, %v4630, %v5142
    %v5369 = vsel %vm4229, %v4637, %v5149
    %v5370 = vsel %vm4229, %v4644, %v5156
    %v5371 = vsel %vm4229, %v4651, %v5163
    %v5372 = vsel %vm4229, %v4658, %v5170
    %v5373 = vsel %vm4229, %v4665, %v5177
    %v5374 = vsel %vm4229, %v4672, %v5184
    %v5375 = vsel %vm4229, %v4679, %v5191
    %v5376 = vsel %vm4229, %v4686, %v5198
    %v5377 = vsel %vm4229, %v4693, %v5205
    %v5378 = vsel %vm4229, %v4700, %v5212
    %v5379 = vsel %vm4229, %v4707, %v5219
    %v5380 = vsel %vm4229, %v4714, %v5226
    %v5381 = vsel %vm4229, %v4721, %v5233
    %v5382 = vsel %vm4229, %v4728, %v5240
    %v5383 = vsel %vm4229, %v4735, %v5247
    %v5384 = vsel %vm4229, %v4742, %v5254
    %v5385 = vsel %vm4229, %v4749, %v5261
    %v5386 = vsel %vm4229, %v4756, %v5268
    %v5387 = vsel %vm4229, %v4763, %v5275
    %v5388 = vsel %vm4229, %v4770, %v5282
    %v5389 = vsel %vm4229, %v4777, %v5289
    %v5390 = vsel %vm4229, %v4784, %v5296
    %v5391 = vsel %vm4229, %v4791, %v5303
    %v5392 = vsel %vm4229, %v4798, %v5310
    %v5393 = vsel %vm4229, %v4805, %v5317
    %v5394 = vsel %vm4229, %v4812, %v5324
    %v5395 = vsel %vm4229, %v4819, %v5331
    %v5460 = vrot.slane %v5333, 6
    %v5461 = vrot.slane %v5334, 4
    %v5462 = vrot.slane %v5335, 2
    %v5463 = vrot.slane %v5337, 6
    %v5464 = vrot.slane %v5338, 4
    %v5465 = vrot.slane %v5339, 2
    %v5466 = vrot.slane %v5341, 6
    %v5467 = vrot.slane %v5342, 4
    %v5468 = vrot.slane %v5343, 2
    %v5469 = vrot.slane %v5345, 6
    %v5470 = vrot.slane %v5346, 4
    %v5471 = vrot.slane %v5347, 2
    %v5472 = vrot.slane %v5349, 6
    %v5473 = vrot.slane %v5350, 4
    %v5474 = vrot.slane %v5351, 2
    %v5475 = vrot.slane %v5353, 6
    %v5476 = vrot.slane %v5354, 4
    %v5477 = vrot.slane %v5355, 2
    %v5478 = vrot.slane %v5357, 6
    %v5479 = vrot.slane %v5358, 4
    %v5480 = vrot.slane %v5359, 2
    %v5481 = vrot.slane %v5361, 6
    %v5482 = vrot.slane %v5362, 4
    %v5483 = vrot.slane %v5363, 2
    %v5484 = vrot.slane %v5365, 6
    %v5485 = vrot.slane %v5366, 4
    %v5486 = vrot.slane %v5367, 2
    %v5487 = vrot.slane %v5369, 6
    %v5488 = vrot.slane %v5370, 4
    %v5489 = vrot.slane %v5371, 2
    %v5490 = vrot.slane %v5373, 6
    %v5491 = vrot.slane %v5374, 4
    %v5492 = vrot.slane %v5375, 2
    %v5493 = vrot.slane %v5377, 6
    %v5494 = vrot.slane %v5378, 4
    %v5495 = vrot.slane %v5379, 2
    %v5496 = vrot.slane %v5381, 6
    %v5497 = vrot.slane %v5382, 4
    %v5498 = vrot.slane %v5383, 2
    %v5499 = vrot.slane %v5385, 6
    %v5500 = vrot.slane %v5386, 4
    %v5501 = vrot.slane %v5387, 2
    %v5502 = vrot.slane %v5389, 6
    %v5503 = vrot.slane %v5390, 4
    %v5504 = vrot.slane %v5391, 2
    %v5505 = vrot.slane %v5393, 6
    %v5506 = vrot.slane %v5394, 4
    %v5507 = vrot.slane %v5395, 2
    %v5508 = vsel %vm4237, %v5332, %v5460
    %v5509 = vsel %vm4247, %v5461, %v5462
    %v5510 = vsel %vm4249, %v5508, %v5509
    %v5511 = vsel %vm4237, %v5336, %v5463
    %v5512 = vsel %vm4247, %v5464, %v5465
    %v5513 = vsel %vm4249, %v5511, %v5512
    %v5514 = vsel %vm4237, %v5340, %v5466
    %v5515 = vsel %vm4247, %v5467, %v5468
    %v5516 = vsel %vm4249, %v5514, %v5515
    %v5517 = vsel %vm4237, %v5344, %v5469
    %v5518 = vsel %vm4247, %v5470, %v5471
    %v5519 = vsel %vm4249, %v5517, %v5518
    %v5520 = vsel %vm4237, %v5348, %v5472
    %v5521 = vsel %vm4247, %v5473, %v5474
    %v5522 = vsel %vm4249, %v5520, %v5521
    %v5523 = vsel %vm4237, %v5352, %v5475
    %v5524 = vsel %vm4247, %v5476, %v5477
    %v5525 = vsel %vm4249, %v5523, %v5524
    %v5526 = vsel %vm4237, %v5356, %v5478
    %v5527 = vsel %vm4247, %v5479, %v5480
    %v5528 = vsel %vm4249, %v5526, %v5527
    %v5529 = vsel %vm4237, %v5360, %v5481
    %v5530 = vsel %vm4247, %v5482, %v5483
    %v5531 = vsel %vm4249, %v5529, %v5530
    %v5532 = vsel %vm4237, %v5364, %v5484
    %v5533 = vsel %vm4247, %v5485, %v5486
    %v5534 = vsel %vm4249, %v5532, %v5533
    %v5535 = vsel %vm4237, %v5368, %v5487
    %v5536 = vsel %vm4247, %v5488, %v5489
    %v5537 = vsel %vm4249, %v5535, %v5536
    %v5538 = vsel %vm4237, %v5372, %v5490
    %v5539 = vsel %vm4247, %v5491, %v5492
    %v5540 = vsel %vm4249, %v5538, %v5539
    %v5541 = vsel %vm4237, %v5376, %v5493
    %v5542 = vsel %vm4247, %v5494, %v5495
    %v5543 = vsel %vm4249, %v5541, %v5542
    %v5544 = vsel %vm4237, %v5380, %v5496
    %v5545 = vsel %vm4247, %v5497, %v5498
    %v5546 = vsel %vm4249, %v5544, %v5545
    %v5547 = vsel %vm4237, %v5384, %v5499
    %v5548 = vsel %vm4247, %v5500, %v5501
    %v5549 = vsel %vm4249, %v5547, %v5548
    %v5550 = vsel %vm4237, %v5388, %v5502
    %v5551 = vsel %vm4247, %v5503, %v5504
    %v5552 = vsel %vm4249, %v5550, %v5551
    %v5553 = vsel %vm4237, %v5392, %v5505
    %v5554 = vsel %vm4247, %v5506, %v5507
    %v5555 = vsel %vm4249, %v5553, %v5554
    %5572 = vst [vmem:[%s4] sm:$0xff] %v5510
    %5573 = vst [vmem:[%s4 + $0x8] sm:$0xff] %v5513
    %5574 = vst [vmem:[%s4 + $0x10] sm:$0xff] %v5516
    %5575 = vst [vmem:[%s4 + $0x18] sm:$0xff] %v5519
    %5576 = vst [vmem:[%s4 + $0x20] sm:$0xff] %v5522
    %5577 = vst [vmem:[%s4 + $0x28] sm:$0xff] %v5525
    %5578 = vst [vmem:[%s4 + $0x30] sm:$0xff] %v5528
    %5579 = vst [vmem:[%s4 + $0x38] sm:$0xff] %v5531
    %5580 = vst [vmem:[%s4 + $0x40] sm:$0xff] %v5534
    %5581 = vst [vmem:[%s4 + $0x48] sm:$0xff] %v5537
    %5582 = vst [vmem:[%s4 + $0x50] sm:$0xff] %v5540
    %5583 = vst [vmem:[%s4 + $0x58] sm:$0xff] %v5543
    %5584 = vst [vmem:[%s4 + $0x60] sm:$0xff] %v5546
    %5585 = vst [vmem:[%s4 + $0x68] sm:$0xff] %v5549
    %5586 = vst [vmem:[%s4 + $0x70] sm:$0xff] %v5552
    %5587 = vst [vmem:[%s4 + $0x78] sm:$0xff] %v5555
    // Predicated region
    $region26: #{generator_forward.4} parent=1 // pred_check
      _
    $region27: #{generator_forward.4} parent=1 // pred_check_branch
      %5589 = sbr.rel (0) target = $region29
    $region28: #{generator_forward.4} parent=1 // pred_region
      _
    $region29: #{generator_forward.4} parent=1 // pred_fallthru
      _
    // Predicated region
    $region30: #{generator_forward.4} parent=1 // pred_check
      _
    $region31: #{generator_forward.4} parent=1 // pred_check_branch
      %5591 = sbr.rel (0) target = $region33
    $region32: #{generator_forward.4} parent=1 // pred_region
      _
    $region33: #{generator_forward.4} parent=1 // pred_fallthru
      _
    // Predicated region
    $region34: #{generator_forward.4} parent=1 // pred_check
      _
    $region35: #{generator_forward.4} parent=1 // pred_check_branch
      %5593 = sbr.rel (0) target = $region37
    $region36: #{generator_forward.4} parent=1 // pred_region
      _
    $region37: #{generator_forward.4} parent=1 // pred_fallthru
      _
    // Predicated region
    $region38: #{generator_forward.4} parent=1 // pred_check
      _
    $region39: #{generator_forward.4} parent=1 // pred_check_branch
      %5595 = sbr.rel (0) target = $region41
    $region40: #{generator_forward.4} parent=1 // pred_region
      _
    $region41: #{generator_forward.4} parent=1 // pred_fallthru
      _
    %5596 = vsyncpa [#allocation3], 1
    %5597 = vsyncpa [#allocation5], 1

// kernel: generator_forward.6
$region0: #{generator_forward.6}
  #allocation0 [shape = 'u32[]', space=smem, size = 0x4, offset = 0x4, fixed_abs, tag = 'smem constant byte address 0x4 - core index']
  #allocation1 [shape = 'u32[72,128]{1,0:T(1,128)}', space=vmem, size = 0x9000, scoped, tag = 'internal scratch']
  %s0 = inlined_call_operand.vmem [shape: bf16[128,256], index: 0, kind: input, shape index: {}]
  %s1 = inlined_call_operand.vmem [shape: bf16[256,512], index: 1, kind: input, shape index: {}]
  %s2 = inlined_call_operand.vmem [shape: f32[1,512], index: 2, kind: input, shape index: {}]
  %s3 = inlined_call_operand.vmem [shape: f32[1,256], index: 3, kind: input, shape index: {}]
  %s4 = inlined_call_operand.vmem [shape: f32[1,256], index: 4, kind: input, shape index: {}]
  %s5 = inlined_call_operand.vmem [shape: bf16[128,512], index: 5, kind: output, shape index: {0}]
  %s6 = inlined_call_operand.vmem [shape: f32[1,2,512], index: 6, kind: output, shape index: {1}]
  %7 = xla_tuple %s5, %s6
  %s8 = sld [smem:[#allocation0]]
  $region38: #{generator_forward.6} parent=0
    _
  %s10 = ssub.s32 1, %s8
  %s11 = scalar_select 0, %s10, %s8
  // Predicated region
  $region2: #{generator_forward.6} parent=0 // pred_check
    _
  $region3: #{generator_forward.6} parent=0 // pred_check_branch
    %13 = sbr.rel (0) target = $region5
  $region4: #{generator_forward.6} parent=0 // pred_region
    _
  $region5: #{generator_forward.6} parent=0 // pred_fallthru
    _
  // Predicated region
  $region6: #{generator_forward.6} parent=0 // pred_check
    _
  $region7: #{generator_forward.6} parent=0 // pred_check_branch
    %15 = sbr.rel (0) target = $region9
  $region8: #{generator_forward.6} parent=0 // pred_region
    _
  $region9: #{generator_forward.6} parent=0 // pred_fallthru
    _
  // Predicated region
  $region10: #{generator_forward.6} parent=0 // pred_check
    _
  $region11: #{generator_forward.6} parent=0 // pred_check_branch
    %17 = sbr.rel (0) target = $region13
  $region12: #{generator_forward.6} parent=0 // pred_region
    _
  $region13: #{generator_forward.6} parent=0 // pred_fallthru
    _
  // Predicated region
  $region14: #{generator_forward.6} parent=0 // pred_check
    _
  $region15: #{generator_forward.6} parent=0 // pred_check_branch
    %19 = sbr.rel (0) target = $region17
  $region16: #{generator_forward.6} parent=0 // pred_region
    _
  $region17: #{generator_forward.6} parent=0 // pred_fallthru
    _
  // Predicated region
  $region18: #{generator_forward.6} parent=0 // pred_check
    _
  $region19: #{generator_forward.6} parent=0 // pred_check_branch
    %21 = sbr.rel (0) target = $region21
  $region20: #{generator_forward.6} parent=0 // pred_region
    _
  $region21: #{generator_forward.6} parent=0 // pred_fallthru
    _
  %v22 = vld [vmem:[%s0] sm:$0xff]
  %v23 = vld [vmem:[%s0 + $0x8] sm:$0xff]
  %v24 = vld [vmem:[%s0 + $0x10] sm:$0xff]
  %v25 = vld [vmem:[%s0 + $0x18] sm:$0xff]
  %v26 = vld [vmem:[%s0 + $0x20] sm:$0xff]
  %v27 = vld [vmem:[%s0 + $0x28] sm:$0xff]
  %v28 = vld [vmem:[%s0 + $0x30] sm:$0xff]
  %v29 = vld [vmem:[%s0 + $0x38] sm:$0xff]
  %v30 = vld [vmem:[%s0 + $0x40] sm:$0xff]
  %v31 = vld [vmem:[%s0 + $0x48] sm:$0xff]
  %v32 = vld [vmem:[%s0 + $0x50] sm:$0xff]
  %v33 = vld [vmem:[%s0 + $0x58] sm:$0xff]
  %v34 = vld [vmem:[%s0 + $0x60] sm:$0xff]
  %v35 = vld [vmem:[%s0 + $0x68] sm:$0xff]
  %v36 = vld [vmem:[%s0 + $0x70] sm:$0xff]
  %v37 = vld [vmem:[%s0 + $0x78] sm:$0xff]
  %v38 = vunpack.c.l.bf16 %v22
  %v39 = vunpack.c.h.bf16 %v22
  %v40 = vunpack.c.l.bf16 %v23
  %v41 = vunpack.c.h.bf16 %v23
  %v42 = vunpack.c.l.bf16 %v24
  %v43 = vunpack.c.h.bf16 %v24
  %v44 = vunpack.c.l.bf16 %v25
  %v45 = vunpack.c.h.bf16 %v25
  %v46 = vunpack.c.l.bf16 %v26
  %v47 = vunpack.c.h.bf16 %v26
  %v48 = vunpack.c.l.bf16 %v27
  %v49 = vunpack.c.h.bf16 %v27
  %v50 = vunpack.c.l.bf16 %v28
  %v51 = vunpack.c.h.bf16 %v28
  %v52 = vunpack.c.l.bf16 %v29
  %v53 = vunpack.c.h.bf16 %v29
  %v54 = vunpack.c.l.bf16 %v30
  %v55 = vunpack.c.h.bf16 %v30
  %v56 = vunpack.c.l.bf16 %v31
  %v57 = vunpack.c.h.bf16 %v31
  %v58 = vunpack.c.l.bf16 %v32
  %v59 = vunpack.c.h.bf16 %v32
  %v60 = vunpack.c.l.bf16 %v33
  %v61 = vunpack.c.h.bf16 %v33
  %v62 = vunpack.c.l.bf16 %v34
  %v63 = vunpack.c.h.bf16 %v34
  %v64 = vunpack.c.l.bf16 %v35
  %v65 = vunpack.c.h.bf16 %v35
  %v66 = vunpack.c.l.bf16 %v36
  %v67 = vunpack.c.h.bf16 %v36
  %v68 = vunpack.c.l.bf16 %v37
  %v69 = vunpack.c.h.bf16 %v37
  %v70 = vld [vmem:[%s3] sm:$0x3]
  %v72 = vperm.slane %v70, 0
  %v73 = vperm.slane %v70, 1
  %v76 = vmul.f32 %v38, %v72
  %v77 = vmul.f32 %v39, %v73
  %v78 = vmul.f32 %v40, %v72
  %v79 = vmul.f32 %v41, %v73
  %v80 = vmul.f32 %v42, %v72
  %v81 = vmul.f32 %v43, %v73
  %v82 = vmul.f32 %v44, %v72
  %v83 = vmul.f32 %v45, %v73
  %v84 = vmul.f32 %v46, %v72
  %v85 = vmul.f32 %v47, %v73
  %v86 = vmul.f32 %v48, %v72
  %v87 = vmul.f32 %v49, %v73
  %v88 = vmul.f32 %v50, %v72
  %v89 = vmul.f32 %v51, %v73
  %v90 = vmul.f32 %v52, %v72
  %v91 = vmul.f32 %v53, %v73
  %v92 = vmul.f32 %v54, %v72
  %v93 = vmul.f32 %v55, %v73
  %v94 = vmul.f32 %v56, %v72
  %v95 = vmul.f32 %v57, %v73
  %v96 = vmul.f32 %v58, %v72
  %v97 = vmul.f32 %v59, %v73
  %v98 = vmul.f32 %v60, %v72
  %v99 = vmul.f32 %v61, %v73
  %v100 = vmul.f32 %v62, %v72
  %v101 = vmul.f32 %v63, %v73
  %v102 = vmul.f32 %v64, %v72
  %v103 = vmul.f32 %v65, %v73
  %v104 = vmul.f32 %v66, %v72
  %v105 = vmul.f32 %v67, %v73
  %v106 = vmul.f32 %v68, %v72
  %v107 = vmul.f32 %v69, %v73
  %v108 = vld [vmem:[%s4] sm:$0x3]
  %v110 = vperm.slane %v108, 0
  %v111 = vperm.slane %v108, 1
  %v114 = vadd.f32 %v76, %v110
  %v115 = vadd.f32 %v77, %v111
  %v116 = vadd.f32 %v78, %v110
  %v117 = vadd.f32 %v79, %v111
  %v118 = vadd.f32 %v80, %v110
  %v119 = vadd.f32 %v81, %v111
  %v120 = vadd.f32 %v82, %v110
  %v121 = vadd.f32 %v83, %v111
  %v122 = vadd.f32 %v84, %v110
  %v123 = vadd.f32 %v85, %v111
  %v124 = vadd.f32 %v86, %v110
  %v125 = vadd.f32 %v87, %v111
  %v126 = vadd.f32 %v88, %v110
  %v127 = vadd.f32 %v89, %v111
  %v128 = vadd.f32 %v90, %v110
  %v129 = vadd.f32 %v91, %v111
  %v130 = vadd.f32 %v92, %v110
  %v131 = vadd.f32 %v93, %v111
  %v132 = vadd.f32 %v94, %v110
  %v133 = vadd.f32 %v95, %v111
  %v134 = vadd.f32 %v96, %v110
  %v135 = vadd.f32 %v97, %v111
  %v136 = vadd.f32 %v98, %v110
  %v137 = vadd.f32 %v99, %v111
  %v138 = vadd.f32 %v100, %v110
  %v139 = vadd.f32 %v101, %v111
  %v140 = vadd.f32 %v102, %v110
  %v141 = vadd.f32 %v103, %v111
  %v142 = vadd.f32 %v104, %v110
  %v143 = vadd.f32 %v105, %v111
  %v144 = vadd.f32 %v106, %v110
  %v145 = vadd.f32 %v107, %v111
  %v146 = vmax.f32 %v114, 0.0
  %v147 = vmax.f32 %v115, 0.0
  %v148 = vmax.f32 %v116, 0.0
  %v149 = vmax.f32 %v117, 0.0
  %v150 = vmax.f32 %v118, 0.0
  %v151 = vmax.f32 %v119, 0.0
  %v152 = vmax.f32 %v120, 0.0
  %v153 = vmax.f32 %v121, 0.0
  %v154 = vmax.f32 %v122, 0.0
  %v155 = vmax.f32 %v123, 0.0
  %v156 = vmax.f32 %v124, 0.0
  %v157 = vmax.f32 %v125, 0.0
  %v158 = vmax.f32 %v126, 0.0
  %v159 = vmax.f32 %v127, 0.0
  %v160 = vmax.f32 %v128, 0.0
  %v161 = vmax.f32 %v129, 0.0
  %v162 = vmax.f32 %v130, 0.0
  %v163 = vmax.f32 %v131, 0.0
  %v164 = vmax.f32 %v132, 0.0
  %v165 = vmax.f32 %v133, 0.0
  %v166 = vmax.f32 %v134, 0.0
  %v167 = vmax.f32 %v135, 0.0
  %v168 = vmax.f32 %v136, 0.0
  %v169 = vmax.f32 %v137, 0.0
  %v170 = vmax.f32 %v138, 0.0
  %v171 = vmax.f32 %v139, 0.0
  %v172 = vmax.f32 %v140, 0.0
  %v173 = vmax.f32 %v141, 0.0
  %v174 = vmax.f32 %v142, 0.0
  %v175 = vmax.f32 %v143, 0.0
  %v176 = vmax.f32 %v144, 0.0
  %v177 = vmax.f32 %v145, 0.0
  %v178 = vpack.c.bf16 %v148, %v146
  %v179 = vpack.c.bf16 %v149, %v147
  %v180 = vpack.c.bf16 %v152, %v150
  %v181 = vpack.c.bf16 %v153, %v151
  %v182 = vpack.c.bf16 %v156, %v154
  %v183 = vpack.c.bf16 %v157, %v155
  %v184 = vpack.c.bf16 %v160, %v158
  %v185 = vpack.c.bf16 %v161, %v159
  %v186 = vpack.c.bf16 %v164, %v162
  %v187 = vpack.c.bf16 %v165, %v163
  %v188 = vpack.c.bf16 %v168, %v166
  %v189 = vpack.c.bf16 %v169, %v167
  %v190 = vpack.c.bf16 %v172, %v170
  %v191 = vpack.c.bf16 %v173, %v171
  %v192 = vpack.c.bf16 %v176, %v174
  %v193 = vpack.c.bf16 %v177, %v175
  %v194 = vld [vmem:[%s1] sm:$0xff]
  %v195 = vld [vmem:[%s1 + $0x8] sm:$0xff]
  %v196 = vld [vmem:[%s1 + $0x10] sm:$0xff]
  %v197 = vld [vmem:[%s1 + $0x18] sm:$0xff]
  %v198 = vld [vmem:[%s1 + $0x20] sm:$0xff]
  %v199 = vld [vmem:[%s1 + $0x28] sm:$0xff]
  %v200 = vld [vmem:[%s1 + $0x30] sm:$0xff]
  %v201 = vld [vmem:[%s1 + $0x38] sm:$0xff]
  %v202 = vld [vmem:[%s1 + $0x40] sm:$0xff]
  %v203 = vld [vmem:[%s1 + $0x48] sm:$0xff]
  %v204 = vld [vmem:[%s1 + $0x50] sm:$0xff]
  %v205 = vld [vmem:[%s1 + $0x58] sm:$0xff]
  %v206 = vld [vmem:[%s1 + $0x60] sm:$0xff]
  %v207 = vld [vmem:[%s1 + $0x68] sm:$0xff]
  %v208 = vld [vmem:[%s1 + $0x70] sm:$0xff]
  %v209 = vld [vmem:[%s1 + $0x78] sm:$0xff]
  %v210 = vld [vmem:[%s1 + $0x80] sm:$0xff]
  %v211 = vld [vmem:[%s1 + $0x88] sm:$0xff]
  %v212 = vld [vmem:[%s1 + $0x90] sm:$0xff]
  %v213 = vld [vmem:[%s1 + $0x98] sm:$0xff]
  %v214 = vld [vmem:[%s1 + $0xa0] sm:$0xff]
  %v215 = vld [vmem:[%s1 + $0xa8] sm:$0xff]
  %v216 = vld [vmem:[%s1 + $0xb0] sm:$0xff]
  %v217 = vld [vmem:[%s1 + $0xb8] sm:$0xff]
  %v218 = vld [vmem:[%s1 + $0xc0] sm:$0xff]
  %v219 = vld [vmem:[%s1 + $0xc8] sm:$0xff]
  %v220 = vld [vmem:[%s1 + $0xd0] sm:$0xff]
  %v221 = vld [vmem:[%s1 + $0xd8] sm:$0xff]
  %v222 = vld [vmem:[%s1 + $0xe0] sm:$0xff]
  %v223 = vld [vmem:[%s1 + $0xe8] sm:$0xff]
  %v224 = vld [vmem:[%s1 + $0xf0] sm:$0xff]
  %v225 = vld [vmem:[%s1 + $0xf8] sm:$0xff]
  %v226 = vld [vmem:[%s1 + $0x100] sm:$0xff]
  %v227 = vld [vmem:[%s1 + $0x108] sm:$0xff]
  %v228 = vld [vmem:[%s1 + $0x110] sm:$0xff]
  %v229 = vld [vmem:[%s1 + $0x118] sm:$0xff]
  %v230 = vld [vmem:[%s1 + $0x120] sm:$0xff]
  %v231 = vld [vmem:[%s1 + $0x128] sm:$0xff]
  %v232 = vld [vmem:[%s1 + $0x130] sm:$0xff]
  %v233 = vld [vmem:[%s1 + $0x138] sm:$0xff]
  %v234 = vld [vmem:[%s1 + $0x140] sm:$0xff]
  %v235 = vld [vmem:[%s1 + $0x148] sm:$0xff]
  %v236 = vld [vmem:[%s1 + $0x150] sm:$0xff]
  %v237 = vld [vmem:[%s1 + $0x158] sm:$0xff]
  %v238 = vld [vmem:[%s1 + $0x160] sm:$0xff]
  %v239 = vld [vmem:[%s1 + $0x168] sm:$0xff]
  %v240 = vld [vmem:[%s1 + $0x170] sm:$0xff]
  %v241 = vld [vmem:[%s1 + $0x178] sm:$0xff]
  %v242 = vld [vmem:[%s1 + $0x180] sm:$0xff]
  %v243 = vld [vmem:[%s1 + $0x188] sm:$0xff]
  %v244 = vld [vmem:[%s1 + $0x190] sm:$0xff]
  %v245 = vld [vmem:[%s1 + $0x198] sm:$0xff]
  %v246 = vld [vmem:[%s1 + $0x1a0] sm:$0xff]
  %v247 = vld [vmem:[%s1 + $0x1a8] sm:$0xff]
  %v248 = vld [vmem:[%s1 + $0x1b0] sm:$0xff]
  %v249 = vld [vmem:[%s1 + $0x1b8] sm:$0xff]
  %v250 = vld [vmem:[%s1 + $0x1c0] sm:$0xff]
  %v251 = vld [vmem:[%s1 + $0x1c8] sm:$0xff]
  %v252 = vld [vmem:[%s1 + $0x1d0] sm:$0xff]
  %v253 = vld [vmem:[%s1 + $0x1d8] sm:$0xff]
  %v254 = vld [vmem:[%s1 + $0x1e0] sm:$0xff]
  %v255 = vld [vmem:[%s1 + $0x1e8] sm:$0xff]
  %v256 = vld [vmem:[%s1 + $0x1f0] sm:$0xff]
  %v257 = vld [vmem:[%s1 + $0x1f8] sm:$0xff]
  %v258 = vld [vmem:[%s2] sm:$0xf]
  %v260 = vperm.slane %v258, 0
  %v261 = vperm.slane %v258, 1
  %v262 = vperm.slane %v258, 2
  %v263 = vperm.slane %v258, 3
  %v332 = vunpack.c.l.b16 %v194
  %v333 = vunpack.c.h.b16 %v194
  %v334 = vunpack.c.l.b16 %v195
  %v335 = vunpack.c.h.b16 %v195
  %v336 = vunpack.c.l.b16 %v196
  %v337 = vunpack.c.h.b16 %v196
  %v338 = vunpack.c.l.b16 %v197
  %v339 = vunpack.c.h.b16 %v197
  %v340 = vunpack.c.l.b16 %v198
  %v341 = vunpack.c.h.b16 %v198
  %v342 = vunpack.c.l.b16 %v199
  %v343 = vunpack.c.h.b16 %v199
  %v344 = vunpack.c.l.b16 %v200
  %v345 = vunpack.c.h.b16 %v200
  %v346 = vunpack.c.l.b16 %v201
  %v347 = vunpack.c.h.b16 %v201
  %v348 = vunpack.c.l.b16 %v202
  %v349 = vunpack.c.h.b16 %v202
  %v350 = vunpack.c.l.b16 %v203
  %v351 = vunpack.c.h.b16 %v203
  %v352 = vunpack.c.l.b16 %v204
  %v353 = vunpack.c.h.b16 %v204
  %v354 = vunpack.c.l.b16 %v205
  %v355 = vunpack.c.h.b16 %v205
  %v356 = vunpack.c.l.b16 %v206
  %v357 = vunpack.c.h.b16 %v206
  %v358 = vunpack.c.l.b16 %v207
  %v359 = vunpack.c.h.b16 %v207
  %v360 = vunpack.c.l.b16 %v208
  %v361 = vunpack.c.h.b16 %v208
  %v362 = vunpack.c.l.b16 %v209
  %v363 = vunpack.c.h.b16 %v209
  %v364 = vunpack.c.l.b16 %v210
  %v365 = vunpack.c.h.b16 %v210
  %v366 = vunpack.c.l.b16 %v211
  %v367 = vunpack.c.h.b16 %v211
  %v368 = vunpack.c.l.b16 %v212
  %v369 = vunpack.c.h.b16 %v212
  %v370 = vunpack.c.l.b16 %v213
  %v371 = vunpack.c.h.b16 %v213
  %v372 = vunpack.c.l.b16 %v214
  %v373 = vunpack.c.h.b16 %v214
  %v374 = vunpack.c.l.b16 %v215
  %v375 = vunpack.c.h.b16 %v215
  %v376 = vunpack.c.l.b16 %v216
  %v377 = vunpack.c.h.b16 %v216
  %v378 = vunpack.c.l.b16 %v217
  %v379 = vunpack.c.h.b16 %v217
  %v380 = vunpack.c.l.b16 %v218
  %v381 = vunpack.c.h.b16 %v218
  %v382 = vunpack.c.l.b16 %v219
  %v383 = vunpack.c.h.b16 %v219
  %v384 = vunpack.c.l.b16 %v220
  %v385 = vunpack.c.h.b16 %v220
  %v386 = vunpack.c.l.b16 %v221
  %v387 = vunpack.c.h.b16 %v221
  %v388 = vunpack.c.l.b16 %v222
  %v389 = vunpack.c.h.b16 %v222
  %v390 = vunpack.c.l.b16 %v223
  %v391 = vunpack.c.h.b16 %v223
  %v392 = vunpack.c.l.b16 %v224
  %v393 = vunpack.c.h.b16 %v224
  %v394 = vunpack.c.l.b16 %v225
  %v395 = vunpack.c.h.b16 %v225
  %v396 = vunpack.c.l.b16 %v226
  %v397 = vunpack.c.h.b16 %v226
  %v398 = vunpack.c.l.b16 %v227
  %v399 = vunpack.c.h.b16 %v227
  %v400 = vunpack.c.l.b16 %v228
  %v401 = vunpack.c.h.b16 %v228
  %v402 = vunpack.c.l.b16 %v229
  %v403 = vunpack.c.h.b16 %v229
  %v404 = vunpack.c.l.b16 %v230
  %v405 = vunpack.c.h.b16 %v230
  %v406 = vunpack.c.l.b16 %v231
  %v407 = vunpack.c.h.b16 %v231
  %v408 = vunpack.c.l.b16 %v232
  %v409 = vunpack.c.h.b16 %v232
  %v410 = vunpack.c.l.b16 %v233
  %v411 = vunpack.c.h.b16 %v233
  %v412 = vunpack.c.l.b16 %v234
  %v413 = vunpack.c.h.b16 %v234
  %v414 = vunpack.c.l.b16 %v235
  %v415 = vunpack.c.h.b16 %v235
  %v416 = vunpack.c.l.b16 %v236
  %v417 = vunpack.c.h.b16 %v236
  %v418 = vunpack.c.l.b16 %v237
  %v419 = vunpack.c.h.b16 %v237
  %v420 = vunpack.c.l.b16 %v238
  %v421 = vunpack.c.h.b16 %v238
  %v422 = vunpack.c.l.b16 %v239
  %v423 = vunpack.c.h.b16 %v239
  %v424 = vunpack.c.l.b16 %v240
  %v425 = vunpack.c.h.b16 %v240
  %v426 = vunpack.c.l.b16 %v241
  %v427 = vunpack.c.h.b16 %v241
  %v428 = vunpack.c.l.b16 %v242
  %v429 = vunpack.c.h.b16 %v242
  %v430 = vunpack.c.l.b16 %v243
  %v431 = vunpack.c.h.b16 %v243
  %v432 = vunpack.c.l.b16 %v244
  %v433 = vunpack.c.h.b16 %v244
  %v434 = vunpack.c.l.b16 %v245
  %v435 = vunpack.c.h.b16 %v245
  %v436 = vunpack.c.l.b16 %v246
  %v437 = vunpack.c.h.b16 %v246
  %v438 = vunpack.c.l.b16 %v247
  %v439 = vunpack.c.h.b16 %v247
  %v440 = vunpack.c.l.b16 %v248
  %v441 = vunpack.c.h.b16 %v248
  %v442 = vunpack.c.l.b16 %v249
  %v443 = vunpack.c.h.b16 %v249
  %v444 = vunpack.c.l.b16 %v250
  %v445 = vunpack.c.h.b16 %v250
  %v446 = vunpack.c.l.b16 %v251
  %v447 = vunpack.c.h.b16 %v251
  %v448 = vunpack.c.l.b16 %v252
  %v449 = vunpack.c.h.b16 %v252
  %v450 = vunpack.c.l.b16 %v253
  %v451 = vunpack.c.h.b16 %v253
  %v452 = vunpack.c.l.b16 %v254
  %v453 = vunpack.c.h.b16 %v254
  %v454 = vunpack.c.l.b16 %v255
  %v455 = vunpack.c.h.b16 %v255
  %v456 = vunpack.c.l.b16 %v256
  %v457 = vunpack.c.h.b16 %v256
  %v458 = vunpack.c.l.b16 %v257
  %v459 = vunpack.c.h.b16 %v257
  %v460 = vpack.c.b16 %v336, %v332
  %v461 = vpack.c.b16 %v337, %v333
  %v462 = vpack.c.b16 %v338, %v334
  %v463 = vpack.c.b16 %v339, %v335
  %v464 = vpack.c.b16 %v344, %v340
  %v465 = vpack.c.b16 %v345, %v341
  %v466 = vpack.c.b16 %v346, %v342
  %v467 = vpack.c.b16 %v347, %v343
  %v468 = vpack.c.b16 %v352, %v348
  %v469 = vpack.c.b16 %v353, %v349
  %v470 = vpack.c.b16 %v354, %v350
  %v471 = vpack.c.b16 %v355, %v351
  %v472 = vpack.c.b16 %v360, %v356
  %v473 = vpack.c.b16 %v361, %v357
  %v474 = vpack.c.b16 %v362, %v358
  %v475 = vpack.c.b16 %v363, %v359
  %v476 = vpack.c.b16 %v368, %v364
  %v477 = vpack.c.b16 %v369, %v365
  %v478 = vpack.c.b16 %v370, %v366
  %v479 = vpack.c.b16 %v371, %v367
  %v480 = vpack.c.b16 %v376, %v372
  %v481 = vpack.c.b16 %v377, %v373
  %v482 = vpack.c.b16 %v378, %v374
  %v483 = vpack.c.b16 %v379, %v375
  %v484 = vpack.c.b16 %v384, %v380
  %v485 = vpack.c.b16 %v385, %v381
  %v486 = vpack.c.b16 %v386, %v382
  %v487 = vpack.c.b16 %v387, %v383
  %v488 = vpack.c.b16 %v392, %v388
  %v489 = vpack.c.b16 %v393, %v389
  %v490 = vpack.c.b16 %v394, %v390
  %v491 = vpack.c.b16 %v395, %v391
  %v492 = vpack.c.b16 %v400, %v396
  %v493 = vpack.c.b16 %v401, %v397
  %v494 = vpack.c.b16 %v402, %v398
  %v495 = vpack.c.b16 %v403, %v399
  %v496 = vpack.c.b16 %v408, %v404
  %v497 = vpack.c.b16 %v409, %v405
  %v498 = vpack.c.b16 %v410, %v406
  %v499 = vpack.c.b16 %v411, %v407
  %v500 = vpack.c.b16 %v416, %v412
  %v501 = vpack.c.b16 %v417, %v413
  %v502 = vpack.c.b16 %v418, %v414
  %v503 = vpack.c.b16 %v419, %v415
  %v504 = vpack.c.b16 %v424, %v420
  %v505 = vpack.c.b16 %v425, %v421
  %v506 = vpack.c.b16 %v426, %v422
  %v507 = vpack.c.b16 %v427, %v423
  %v508 = vpack.c.b16 %v432, %v428
  %v509 = vpack.c.b16 %v433, %v429
  %v510 = vpack.c.b16 %v434, %v430
  %v511 = vpack.c.b16 %v435, %v431
  %v512 = vpack.c.b16 %v440, %v436
  %v513 = vpack.c.b16 %v441, %v437
  %v514 = vpack.c.b16 %v442, %v438
  %v515 = vpack.c.b16 %v443, %v439
  %v516 = vpack.c.b16 %v448, %v444
  %v517 = vpack.c.b16 %v449, %v445
  %v518 = vpack.c.b16 %v450, %v446
  %v519 = vpack.c.b16 %v451, %v447
  %v520 = vpack.c.b16 %v456, %v452
  %v521 = vpack.c.b16 %v457, %v453
  %v522 = vpack.c.b16 %v458, %v454
  %v523 = vpack.c.b16 %v459, %v455
  %588 = vmatpush.bf16.msra.mxu0 %v488
  %589 = vmatpush.bf16.msra.mxu0 %v484
  %590 = vmatpush.bf16.msra.mxu0 %v480
  %591 = vmatpush.bf16.msra.mxu0 %v476
  %592 = vmatpush.bf16.msra.mxu0 %v472
  %593 = vmatpush.bf16.msra.mxu0 %v468
  %594 = vmatpush.bf16.msra.mxu0 %v464
  %595 = vmatpush.bf16.msra.mxu0 %v460
  %596 = vmatmul.bf16.gmra.mxu0 %v178
  %v597 = vpop.f32.mrf.mxu0
  %v598 = vadd.f32 %v260, %v597
  %v599 = vpop.f32.mrf.mxu0
  %v600 = vadd.f32 %v260, %v599
  %601 = vmatmul.bf16.gmra.mxu0 %v180
  %v602 = vpop.f32.mrf.mxu0
  %v603 = vadd.f32 %v260, %v602
  %v604 = vpop.f32.mrf.mxu0
  %v605 = vadd.f32 %v260, %v604
  %606 = vmatmul.bf16.gmra.mxu0 %v182
  %v607 = vpop.f32.mrf.mxu0
  %v608 = vadd.f32 %v260, %v607
  %v609 = vpop.f32.mrf.mxu0
  %v610 = vadd.f32 %v260, %v609
  %611 = vmatmul.bf16.gmra.mxu0 %v184
  %v612 = vpop.f32.mrf.mxu0
  %v613 = vadd.f32 %v260, %v612
  %v614 = vpop.f32.mrf.mxu0
  %v615 = vadd.f32 %v260, %v614
  %616 = vmatmul.bf16.gmra.mxu0 %v186
  %v617 = vpop.f32.mrf.mxu0
  %v618 = vadd.f32 %v260, %v617
  %v619 = vpop.f32.mrf.mxu0
  %v620 = vadd.f32 %v260, %v619
  %621 = vmatmul.bf16.gmra.mxu0 %v188
  %v622 = vpop.f32.mrf.mxu0
  %v623 = vadd.f32 %v260, %v622
  %v624 = vpop.f32.mrf.mxu0
  %v625 = vadd.f32 %v260, %v624
  %626 = vmatmul.bf16.gmra.mxu0 %v190
  %v627 = vpop.f32.mrf.mxu0
  %v628 = vadd.f32 %v260, %v627
  %v629 = vpop.f32.mrf.mxu0
  %v630 = vadd.f32 %v260, %v629
  %631 = vmatmul.bf16.gmra.mxu0 %v192
  %v632 = vpop.f32.mrf.mxu0
  %v633 = vadd.f32 %v260, %v632
  %v634 = vpop.f32.mrf.mxu0
  %v635 = vadd.f32 %v260, %v634
  %636 = vdwg.mxu0
  %637 = vmatpush.bf16.msra.mxu0 %v520
  %638 = vmatpush.bf16.msra.mxu0 %v516
  %639 = vmatpush.bf16.msra.mxu0 %v512
  %640 = vmatpush.bf16.msra.mxu0 %v508
  %641 = vmatpush.bf16.msra.mxu0 %v504
  %642 = vmatpush.bf16.msra.mxu0 %v500
  %643 = vmatpush.bf16.msra.mxu0 %v496
  %644 = vmatpush.bf16.msra.mxu0 %v492
  %645 = vmatmul.bf16.gmra.mxu0 %v179
  %v646 = vpop.f32.mrf.mxu0
  %v647 = vadd.f32 %v598, %v646
  %v648 = vpop.f32.mrf.mxu0
  %v649 = vadd.f32 %v600, %v648
  %650 = vmatmul.bf16.gmra.mxu0 %v181
  %v651 = vpop.f32.mrf.mxu0
  %v652 = vadd.f32 %v603, %v651
  %v653 = vpop.f32.mrf.mxu0
  %v654 = vadd.f32 %v605, %v653
  %655 = vmatmul.bf16.gmra.mxu0 %v183
  %v656 = vpop.f32.mrf.mxu0
  %v657 = vadd.f32 %v608, %v656
  %v658 = vpop.f32.mrf.mxu0
  %v659 = vadd.f32 %v610, %v658
  %660 = vmatmul.bf16.gmra.mxu0 %v185
  %v661 = vpop.f32.mrf.mxu0
  %v662 = vadd.f32 %v613, %v661
  %v663 = vpop.f32.mrf.mxu0
  %v664 = vadd.f32 %v615, %v663
  %665 = vmatmul.bf16.gmra.mxu0 %v187
  %v666 = vpop.f32.mrf.mxu0
  %v667 = vadd.f32 %v618, %v666
  %v668 = vpop.f32.mrf.mxu0
  %v669 = vadd.f32 %v620, %v668
  %670 = vmatmul.bf16.gmra.mxu0 %v189
  %v671 = vpop.f32.mrf.mxu0
  %v672 = vadd.f32 %v623, %v671
  %v673 = vpop.f32.mrf.mxu0
  %v674 = vadd.f32 %v625, %v673
  %675 = vmatmul.bf16.gmra.mxu0 %v191
  %v676 = vpop.f32.mrf.mxu0
  %v677 = vadd.f32 %v628, %v676
  %v678 = vpop.f32.mrf.mxu0
  %v679 = vadd.f32 %v630, %v678
  %680 = vmatmul.bf16.gmra.mxu0 %v193
  %v681 = vpop.f32.mrf.mxu0
  %v682 = vadd.f32 %v633, %v681
  %v683 = vpop.f32.mrf.mxu0
  %v684 = vadd.f32 %v635, %v683
  %685 = vdwg.mxu0
  %686 = vmatpush.bf16.msra.mxu0 %v489
  %687 = vmatpush.bf16.msra.mxu0 %v485
  %688 = vmatpush.bf16.msra.mxu0 %v481
  %689 = vmatpush.bf16.msra.mxu0 %v477
  %690 = vmatpush.bf16.msra.mxu0 %v473
  %691 = vmatpush.bf16.msra.mxu0 %v469
  %692 = vmatpush.bf16.msra.mxu0 %v465
  %693 = vmatpush.bf16.msra.mxu0 %v461
  %694 = vmatmul.bf16.gmra.mxu0 %v178
  %v695 = vpop.f32.mrf.mxu0
  %v696 = vadd.f32 %v261, %v695
  %v697 = vpop.f32.mrf.mxu0
  %v698 = vadd.f32 %v261, %v697
  %699 = vmatmul.bf16.gmra.mxu0 %v180
  %v700 = vpop.f32.mrf.mxu0
  %v701 = vadd.f32 %v261, %v700
  %v702 = vpop.f32.mrf.mxu0
  %v703 = vadd.f32 %v261, %v702
  %704 = vmatmul.bf16.gmra.mxu0 %v182
  %v705 = vpop.f32.mrf.mxu0
  %v706 = vadd.f32 %v261, %v705
  %v707 = vpop.f32.mrf.mxu0
  %v708 = vadd.f32 %v261, %v707
  %709 = vmatmul.bf16.gmra.mxu0 %v184
  %v710 = vpop.f32.mrf.mxu0
  %v711 = vadd.f32 %v261, %v710
  %v712 = vpop.f32.mrf.mxu0
  %v713 = vadd.f32 %v261, %v712
  %714 = vmatmul.bf16.gmra.mxu0 %v186
  %v715 = vpop.f32.mrf.mxu0
  %v716 = vadd.f32 %v261, %v715
  %v717 = vpop.f32.mrf.mxu0
  %v718 = vadd.f32 %v261, %v717
  %719 = vmatmul.bf16.gmra.mxu0 %v188
  %v720 = vpop.f32.mrf.mxu0
  %v721 = vadd.f32 %v261, %v720
  %v722 = vpop.f32.mrf.mxu0
  %v723 = vadd.f32 %v261, %v722
  %724 = vmatmul.bf16.gmra.mxu0 %v190
  %v725 = vpop.f32.mrf.mxu0
  %v726 = vadd.f32 %v261, %v725
  %v727 = vpop.f32.mrf.mxu0
  %v728 = vadd.f32 %v261, %v727
  %729 = vmatmul.bf16.gmra.mxu0 %v192
  %v730 = vpop.f32.mrf.mxu0
  %v731 = vadd.f32 %v261, %v730
  %v732 = vpop.f32.mrf.mxu0
  %v733 = vadd.f32 %v261, %v732
  %734 = vdwg.mxu0
  %735 = vmatpush.bf16.msra.mxu0 %v521
  %736 = vmatpush.bf16.msra.mxu0 %v517
  %737 = vmatpush.bf16.msra.mxu0 %v513
  %738 = vmatpush.bf16.msra.mxu0 %v509
  %739 = vmatpush.bf16.msra.mxu0 %v505
  %740 = vmatpush.bf16.msra.mxu0 %v501
  %741 = vmatpush.bf16.msra.mxu0 %v497
  %742 = vmatpush.bf16.msra.mxu0 %v493
  %743 = vmatmul.bf16.gmra.mxu0 %v179
  %v744 = vpop.f32.mrf.mxu0
  %v745 = vadd.f32 %v696, %v744
  %v746 = vpop.f32.mrf.mxu0
  %v747 = vadd.f32 %v698, %v746
  %748 = vmatmul.bf16.gmra.mxu0 %v181
  %v749 = vpop.f32.mrf.mxu0
  %v750 = vadd.f32 %v701, %v749
  %v751 = vpop.f32.mrf.mxu0
  %v752 = vadd.f32 %v703, %v751
  %753 = vmatmul.bf16.gmra.mxu0 %v183
  %v754 = vpop.f32.mrf.mxu0
  %v755 = vadd.f32 %v706, %v754
  %v756 = vpop.f32.mrf.mxu0
  %v757 = vadd.f32 %v708, %v756
  %758 = vmatmul.bf16.gmra.mxu0 %v185
  %v759 = vpop.f32.mrf.mxu0
  %v760 = vadd.f32 %v711, %v759
  %v761 = vpop.f32.mrf.mxu0
  %v762 = vadd.f32 %v713, %v761
  %763 = vmatmul.bf16.gmra.mxu0 %v187
  %v764 = vpop.f32.mrf.mxu0
  %v765 = vadd.f32 %v716, %v764
  %v766 = vpop.f32.mrf.mxu0
  %v767 = vadd.f32 %v718, %v766
  %768 = vmatmul.bf16.gmra.mxu0 %v189
  %v769 = vpop.f32.mrf.mxu0
  %v770 = vadd.f32 %v721, %v769
  %v771 = vpop.f32.mrf.mxu0
  %v772 = vadd.f32 %v723, %v771
  %773 = vmatmul.bf16.gmra.mxu0 %v191
  %v774 = vpop.f32.mrf.mxu0
  %v775 = vadd.f32 %v726, %v774
  %v776 = vpop.f32.mrf.mxu0
  %v777 = vadd.f32 %v728, %v776
  %778 = vmatmul.bf16.gmra.mxu0 %v193
  %v779 = vpop.f32.mrf.mxu0
  %v780 = vadd.f32 %v731, %v779
  %v781 = vpop.f32.mrf.mxu0
  %v782 = vadd.f32 %v733, %v781
  %783 = vdwg.mxu0
  %784 = vmatpush.bf16.msra.mxu0 %v490
  %785 = vmatpush.bf16.msra.mxu0 %v486
  %786 = vmatpush.bf16.msra.mxu0 %v482
  %787 = vmatpush.bf16.msra.mxu0 %v478
  %788 = vmatpush.bf16.msra.mxu0 %v474
  %789 = vmatpush.bf16.msra.mxu0 %v470
  %790 = vmatpush.bf16.msra.mxu0 %v466
  %791 = vmatpush.bf16.msra.mxu0 %v462
  %792 = vmatmul.bf16.gmra.mxu0 %v178
  %v793 = vpop.f32.mrf.mxu0
  %v794 = vadd.f32 %v262, %v793
  %v795 = vpop.f32.mrf.mxu0
  %v796 = vadd.f32 %v262, %v795
  %797 = vmatmul.bf16.gmra.mxu0 %v180
  %v798 = vpop.f32.mrf.mxu0
  %v799 = vadd.f32 %v262, %v798
  %v800 = vpop.f32.mrf.mxu0
  %v801 = vadd.f32 %v262, %v800
  %802 = vmatmul.bf16.gmra.mxu0 %v182
  %v803 = vpop.f32.mrf.mxu0
  %v804 = vadd.f32 %v262, %v803
  %v805 = vpop.f32.mrf.mxu0
  %v806 = vadd.f32 %v262, %v805
  %807 = vmatmul.bf16.gmra.mxu0 %v184
  %v808 = vpop.f32.mrf.mxu0
  %v809 = vadd.f32 %v262, %v808
  %v810 = vpop.f32.mrf.mxu0
  %v811 = vadd.f32 %v262, %v810
  %812 = vmatmul.bf16.gmra.mxu0 %v186
  %v813 = vpop.f32.mrf.mxu0
  %v814 = vadd.f32 %v262, %v813
  %v815 = vpop.f32.mrf.mxu0
  %v816 = vadd.f32 %v262, %v815
  %817 = vmatmul.bf16.gmra.mxu0 %v188
  %v818 = vpop.f32.mrf.mxu0
  %v819 = vadd.f32 %v262, %v818
  %v820 = vpop.f32.mrf.mxu0
  %v821 = vadd.f32 %v262, %v820
  %822 = vmatmul.bf16.gmra.mxu0 %v190
  %v823 = vpop.f32.mrf.mxu0
  %v824 = vadd.f32 %v262, %v823
  %v825 = vpop.f32.mrf.mxu0
  %v826 = vadd.f32 %v262, %v825
  %827 = vmatmul.bf16.gmra.mxu0 %v192
  %v828 = vpop.f32.mrf.mxu0
  %v829 = vadd.f32 %v262, %v828
  %v830 = vpop.f32.mrf.mxu0
  %v831 = vadd.f32 %v262, %v830
  %832 = vdwg.mxu0
  %833 = vmatpush.bf16.msra.mxu0 %v522
  %834 = vmatpush.bf16.msra.mxu0 %v518
  %835 = vmatpush.bf16.msra.mxu0 %v514
  %836 = vmatpush.bf16.msra.mxu0 %v510
  %837 = vmatpush.bf16.msra.mxu0 %v506
  %838 = vmatpush.bf16.msra.mxu0 %v502
  %839 = vmatpush.bf16.msra.mxu0 %v498
  %840 = vmatpush.bf16.msra.mxu0 %v494
  %841 = vmatmul.bf16.gmra.mxu0 %v179
  %v842 = vpop.f32.mrf.mxu0
  %v843 = vadd.f32 %v794, %v842
  %v844 = vpop.f32.mrf.mxu0
  %v845 = vadd.f32 %v796, %v844
  %846 = vmatmul.bf16.gmra.mxu0 %v181
  %v847 = vpop.f32.mrf.mxu0
  %v848 = vadd.f32 %v799, %v847
  %v849 = vpop.f32.mrf.mxu0
  %v850 = vadd.f32 %v801, %v849
  %851 = vmatmul.bf16.gmra.mxu0 %v183
  %v852 = vpop.f32.mrf.mxu0
  %v853 = vadd.f32 %v804, %v852
  %v854 = vpop.f32.mrf.mxu0
  %v855 = vadd.f32 %v806, %v854
  %856 = vmatmul.bf16.gmra.mxu0 %v185
  %v857 = vpop.f32.mrf.mxu0
  %v858 = vadd.f32 %v809, %v857
  %v859 = vpop.f32.mrf.mxu0
  %v860 = vadd.f32 %v811, %v859
  %861 = vmatmul.bf16.gmra.mxu0 %v187
  %v862 = vpop.f32.mrf.mxu0
  %v863 = vadd.f32 %v814, %v862
  %v864 = vpop.f32.mrf.mxu0
  %v865 = vadd.f32 %v816, %v864
  %866 = vmatmul.bf16.gmra.mxu0 %v189
  %v867 = vpop.f32.mrf.mxu0
  %v868 = vadd.f32 %v819, %v867
  %v869 = vpop.f32.mrf.mxu0
  %v870 = vadd.f32 %v821, %v869
  %871 = vmatmul.bf16.gmra.mxu0 %v191
  %v872 = vpop.f32.mrf.mxu0
  %v873 = vadd.f32 %v824, %v872
  %v874 = vpop.f32.mrf.mxu0
  %v875 = vadd.f32 %v826, %v874
  %876 = vmatmul.bf16.gmra.mxu0 %v193
  %v877 = vpop.f32.mrf.mxu0
  %v878 = vadd.f32 %v829, %v877
  %v879 = vpop.f32.mrf.mxu0
  %v880 = vadd.f32 %v831, %v879
  %881 = vdwg.mxu0
  %882 = vmatpush.bf16.msra.mxu0 %v491
  %883 = vmatpush.bf16.msra.mxu0 %v487
  %884 = vmatpush.bf16.msra.mxu0 %v483
  %885 = vmatpush.bf16.msra.mxu0 %v479
  %886 = vmatpush.bf16.msra.mxu0 %v475
  %887 = vmatpush.bf16.msra.mxu0 %v471
  %888 = vmatpush.bf16.msra.mxu0 %v467
  %889 = vmatpush.bf16.msra.mxu0 %v463
  %890 = vmatmul.bf16.gmra.mxu0 %v178
  %v891 = vpop.f32.mrf.mxu0
  %v892 = vadd.f32 %v263, %v891
  %v893 = vpop.f32.mrf.mxu0
  %v894 = vadd.f32 %v263, %v893
  %895 = vmatmul.bf16.gmra.mxu0 %v180
  %v896 = vpop.f32.mrf.mxu0
  %v897 = vadd.f32 %v263, %v896
  %v898 = vpop.f32.mrf.mxu0
  %v899 = vadd.f32 %v263, %v898
  %900 = vmatmul.bf16.gmra.mxu0 %v182
  %v901 = vpop.f32.mrf.mxu0
  %v902 = vadd.f32 %v263, %v901
  %v903 = vpop.f32.mrf.mxu0
  %v904 = vadd.f32 %v263, %v903
  %905 = vmatmul.bf16.gmra.mxu0 %v184
  %v906 = vpop.f32.mrf.mxu0
  %v907 = vadd.f32 %v263, %v906
  %v908 = vpop.f32.mrf.mxu0
  %v909 = vadd.f32 %v263, %v908
  %910 = vmatmul.bf16.gmra.mxu0 %v186
  %v911 = vpop.f32.mrf.mxu0
  %v912 = vadd.f32 %v263, %v911
  %v913 = vpop.f32.mrf.mxu0
  %v914 = vadd.f32 %v263, %v913
  %915 = vmatmul.bf16.gmra.mxu0 %v188
  %v916 = vpop.f32.mrf.mxu0
  %v917 = vadd.f32 %v263, %v916
  %v918 = vpop.f32.mrf.mxu0
  %v919 = vadd.f32 %v263, %v918
  %920 = vmatmul.bf16.gmra.mxu0 %v190
  %v921 = vpop.f32.mrf.mxu0
  %v922 = vadd.f32 %v263, %v921
  %v923 = vpop.f32.mrf.mxu0
  %v924 = vadd.f32 %v263, %v923
  %925 = vmatmul.bf16.gmra.mxu0 %v192
  %v926 = vpop.f32.mrf.mxu0
  %v927 = vadd.f32 %v263, %v926
  %v928 = vpop.f32.mrf.mxu0
  %v929 = vadd.f32 %v263, %v928
  %930 = vdwg.mxu0
  %931 = vmatpush.bf16.msra.mxu0 %v523
  %932 = vmatpush.bf16.msra.mxu0 %v519
  %933 = vmatpush.bf16.msra.mxu0 %v515
  %934 = vmatpush.bf16.msra.mxu0 %v511
  %935 = vmatpush.bf16.msra.mxu0 %v507
  %936 = vmatpush.bf16.msra.mxu0 %v503
  %937 = vmatpush.bf16.msra.mxu0 %v499
  %938 = vmatpush.bf16.msra.mxu0 %v495
  %939 = vmatmul.bf16.gmra.mxu0 %v179
  %v940 = vpop.f32.mrf.mxu0
  %v941 = vadd.f32 %v892, %v940
  %v942 = vpop.f32.mrf.mxu0
  %v943 = vadd.f32 %v894, %v942
  %944 = vmatmul.bf16.gmra.mxu0 %v181
  %v945 = vpop.f32.mrf.mxu0
  %v946 = vadd.f32 %v897, %v945
  %v947 = vpop.f32.mrf.mxu0
  %v948 = vadd.f32 %v899, %v947
  %949 = vmatmul.bf16.gmra.mxu0 %v183
  %v950 = vpop.f32.mrf.mxu0
  %v951 = vadd.f32 %v902, %v950
  %v952 = vpop.f32.mrf.mxu0
  %v953 = vadd.f32 %v904, %v952
  %954 = vmatmul.bf16.gmra.mxu0 %v185
  %v955 = vpop.f32.mrf.mxu0
  %v956 = vadd.f32 %v907, %v955
  %v957 = vpop.f32.mrf.mxu0
  %v958 = vadd.f32 %v909, %v957
  %959 = vmatmul.bf16.gmra.mxu0 %v187
  %v960 = vpop.f32.mrf.mxu0
  %v961 = vadd.f32 %v912, %v960
  %v962 = vpop.f32.mrf.mxu0
  %v963 = vadd.f32 %v914, %v962
  %964 = vmatmul.bf16.gmra.mxu0 %v189
  %v965 = vpop.f32.mrf.mxu0
  %v966 = vadd.f32 %v917, %v965
  %v967 = vpop.f32.mrf.mxu0
  %v968 = vadd.f32 %v919, %v967
  %969 = vmatmul.bf16.gmra.mxu0 %v191
  %v970 = vpop.f32.mrf.mxu0
  %v971 = vadd.f32 %v922, %v970
  %v972 = vpop.f32.mrf.mxu0
  %v973 = vadd.f32 %v924, %v972
  %974 = vmatmul.bf16.gmra.mxu0 %v193
  %v975 = vpop.f32.mrf.mxu0
  %v976 = vadd.f32 %v927, %v975
  %v977 = vpop.f32.mrf.mxu0
  %v978 = vadd.f32 %v929, %v977
  %979 = vdwg.mxu0
  %v980 = vpack.c.bf16 %v745, %v647
  %v981 = vpack.c.bf16 %v941, %v843
  %v982 = vpack.c.bf16 %v747, %v649
  %v983 = vpack.c.bf16 %v943, %v845
  %v984 = vpack.c.bf16 %v750, %v652
  %v985 = vpack.c.bf16 %v946, %v848
  %v986 = vpack.c.bf16 %v752, %v654
  %v987 = vpack.c.bf16 %v948, %v850
  %v988 = vpack.c.bf16 %v755, %v657
  %v989 = vpack.c.bf16 %v951, %v853
  %v990 = vpack.c.bf16 %v757, %v659
  %v991 = vpack.c.bf16 %v953, %v855
  %v992 = vpack.c.bf16 %v760, %v662
  %v993 = vpack.c.bf16 %v956, %v858
  %v994 = vpack.c.bf16 %v762, %v664
  %v995 = vpack.c.bf16 %v958, %v860
  %v996 = vpack.c.bf16 %v765, %v667
  %v997 = vpack.c.bf16 %v961, %v863
  %v998 = vpack.c.bf16 %v767, %v669
  %v999 = vpack.c.bf16 %v963, %v865
  %v1000 = vpack.c.bf16 %v770, %v672
  %v1001 = vpack.c.bf16 %v966, %v868
  %v1002 = vpack.c.bf16 %v772, %v674
  %v1003 = vpack.c.bf16 %v968, %v870
  %v1004 = vpack.c.bf16 %v775, %v677
  %v1005 = vpack.c.bf16 %v971, %v873
  %v1006 = vpack.c.bf16 %v777, %v679
  %v1007 = vpack.c.bf16 %v973, %v875
  %v1008 = vpack.c.bf16 %v780, %v682
  %v1009 = vpack.c.bf16 %v976, %v878
  %v1010 = vpack.c.bf16 %v782, %v684
  %v1011 = vpack.c.bf16 %v978, %v880
  %1012 = vst [vmem:[%s5] sm:$0xff] %v980
  %1013 = vst [vmem:[%s5 + $0x8] sm:$0xff] %v981
  %1014 = vst [vmem:[%s5 + $0x10] sm:$0xff] %v982
  %1015 = vst [vmem:[%s5 + $0x18] sm:$0xff] %v983
  %1016 = vst [vmem:[%s5 + $0x20] sm:$0xff] %v984
  %1017 = vst [vmem:[%s5 + $0x28] sm:$0xff] %v985
  %1018 = vst [vmem:[%s5 + $0x30] sm:$0xff] %v986
  %1019 = vst [vmem:[%s5 + $0x38] sm:$0xff] %v987
  %1020 = vst [vmem:[%s5 + $0x40] sm:$0xff] %v988
  %1021 = vst [vmem:[%s5 + $0x48] sm:$0xff] %v989
  %1022 = vst [vmem:[%s5 + $0x50] sm:$0xff] %v990
  %1023 = vst [vmem:[%s5 + $0x58] sm:$0xff] %v991
  %1024 = vst [vmem:[%s5 + $0x60] sm:$0xff] %v992
  %1025 = vst [vmem:[%s5 + $0x68] sm:$0xff] %v993
  %1026 = vst [vmem:[%s5 + $0x70] sm:$0xff] %v994
  %1027 = vst [vmem:[%s5 + $0x78] sm:$0xff] %v995
  %1028 = vst [vmem:[%s5 + $0x80] sm:$0xff] %v996
  %1029 = vst [vmem:[%s5 + $0x88] sm:$0xff] %v997
  %1030 = vst [vmem:[%s5 + $0x90] sm:$0xff] %v998
  %1031 = vst [vmem:[%s5 + $0x98] sm:$0xff] %v999
  %1032 = vst [vmem:[%s5 + $0xa0] sm:$0xff] %v1000
  %1033 = vst [vmem:[%s5 + $0xa8] sm:$0xff] %v1001
  %1034 = vst [vmem:[%s5 + $0xb0] sm:$0xff] %v1002
  %1035 = vst [vmem:[%s5 + $0xb8] sm:$0xff] %v1003
  %1036 = vst [vmem:[%s5 + $0xc0] sm:$0xff] %v1004
  %1037 = vst [vmem:[%s5 + $0xc8] sm:$0xff] %v1005
  %1038 = vst [vmem:[%s5 + $0xd0] sm:$0xff] %v1006
  %1039 = vst [vmem:[%s5 + $0xd8] sm:$0xff] %v1007
  %1040 = vst [vmem:[%s5 + $0xe0] sm:$0xff] %v1008
  %1041 = vst [vmem:[%s5 + $0xe8] sm:$0xff] %v1009
  %1042 = vst [vmem:[%s5 + $0xf0] sm:$0xff] %v1010
  %1043 = vst [vmem:[%s5 + $0xf8] sm:$0xff] %v1011
  %v1044 = vadd.f32 %v647, %v649
  %v1045 = vadd.f32 %v1044, %v652
  %v1046 = vadd.f32 %v1045, %v654
  %v1047 = vadd.f32 %v1046, %v657
  %v1048 = vadd.f32 %v1047, %v659
  %v1049 = vadd.f32 %v1048, %v662
  %v1050 = vadd.f32 %v1049, %v664
  %v1051 = vadd.f32 %v1050, %v667
  %v1052 = vadd.f32 %v1051, %v669
  %v1053 = vadd.f32 %v1052, %v672
  %v1054 = vadd.f32 %v1053, %v674
  %v1055 = vadd.f32 %v1054, %v677
  %v1056 = vadd.f32 %v1055, %v679
  %v1057 = vadd.f32 %v1056, %v682
  %v1058 = vadd.f32 %v1057, %v684
  %v1059 = vrot.slane %v1058, 4
  %v1060 = vadd.f32 %v1058, %v1059
  %v1061 = vrot.slane %v1060, 2
  %v1062 = vadd.f32 %v1060, %v1061
  %v1063 = vrot.slane %v1062, 1
  %v1064 = vadd.f32 %v1062, %v1063
  %v1065 = vadd.f32 %v745, %v747
  %v1066 = vadd.f32 %v1065, %v750
  %v1067 = vadd.f32 %v1066, %v752
  %v1068 = vadd.f32 %v1067, %v755
  %v1069 = vadd.f32 %v1068, %v757
  %v1070 = vadd.f32 %v1069, %v760
  %v1071 = vadd.f32 %v1070, %v762
  %v1072 = vadd.f32 %v1071, %v765
  %v1073 = vadd.f32 %v1072, %v767
  %v1074 = vadd.f32 %v1073, %v770
  %v1075 = vadd.f32 %v1074, %v772
  %v1076 = vadd.f32 %v1075, %v775
  %v1077 = vadd.f32 %v1076, %v777
  %v1078 = vadd.f32 %v1077, %v780
  %v1079 = vadd.f32 %v1078, %v782
  %v1080 = vrot.slane %v1079, 4
  %v1081 = vadd.f32 %v1079, %v1080
  %v1082 = vrot.slane %v1081, 2
  %v1083 = vadd.f32 %v1081, %v1082
  %v1084 = vrot.slane %v1083, 1
  %v1085 = vadd.f32 %v1083, %v1084
  %v1086 = vadd.f32 %v843, %v845
  %v1087 = vadd.f32 %v1086, %v848
  %v1088 = vadd.f32 %v1087, %v850
  %v1089 = vadd.f32 %v1088, %v853
  %v1090 = vadd.f32 %v1089, %v855
  %v1091 = vadd.f32 %v1090, %v858
  %v1092 = vadd.f32 %v1091, %v860
  %v1093 = vadd.f32 %v1092, %v863
  %v1094 = vadd.f32 %v1093, %v865
  %v1095 = vadd.f32 %v1094, %v868
  %v1096 = vadd.f32 %v1095, %v870
  %v1097 = vadd.f32 %v1096, %v873
  %v1098 = vadd.f32 %v1097, %v875
  %v1099 = vadd.f32 %v1098, %v878
  %v1100 = vadd.f32 %v1099, %v880
  %v1101 = vrot.slane %v1100, 4
  %v1102 = vadd.f32 %v1100, %v1101
  %v1103 = vrot.slane %v1102, 2
  %v1104 = vadd.f32 %v1102, %v1103
  %v1105 = vrot.slane %v1104, 1
  %v1106 = vadd.f32 %v1104, %v1105
  %v1107 = vadd.f32 %v941, %v943
  %v1108 = vadd.f32 %v1107, %v946
  %v1109 = vadd.f32 %v1108, %v948
  %v1110 = vadd.f32 %v1109, %v951
  %v1111 = vadd.f32 %v1110, %v953
  %v1112 = vadd.f32 %v1111, %v956
  %v1113 = vadd.f32 %v1112, %v958
  %v1114 = vadd.f32 %v1113, %v961
  %v1115 = vadd.f32 %v1114, %v963
  %v1116 = vadd.f32 %v1115, %v966
  %v1117 = vadd.f32 %v1116, %v968
  %v1118 = vadd.f32 %v1117, %v971
  %v1119 = vadd.f32 %v1118, %v973
  %v1120 = vadd.f32 %v1119, %v976
  %v1121 = vadd.f32 %v1120, %v978
  %v1122 = vrot.slane %v1121, 4
  %v1123 = vadd.f32 %v1121, %v1122
  %v1124 = vrot.slane %v1123, 2
  %v1125 = vadd.f32 %v1123, %v1124
  %v1126 = vrot.slane %v1125, 1
  %v1127 = vadd.f32 %v1125, %v1126
  %v1128 = vmul.f32 %v647, %v647
  %v1129 = vmul.f32 %v745, %v745
  %v1130 = vmul.f32 %v843, %v843
  %v1131 = vmul.f32 %v941, %v941
  %v1132 = vmul.f32 %v649, %v649
  %v1133 = vmul.f32 %v747, %v747
  %v1134 = vmul.f32 %v845, %v845
  %v1135 = vmul.f32 %v943, %v943
  %v1136 = vmul.f32 %v652, %v652
  %v1137 = vmul.f32 %v750, %v750
  %v1138 = vmul.f32 %v848, %v848
  %v1139 = vmul.f32 %v946, %v946
  %v1140 = vmul.f32 %v654, %v654
  %v1141 = vmul.f32 %v752, %v752
  %v1142 = vmul.f32 %v850, %v850
  %v1143 = vmul.f32 %v948, %v948
  %v1144 = vmul.f32 %v657, %v657
  %v1145 = vmul.f32 %v755, %v755
  %v1146 = vmul.f32 %v853, %v853
  %v1147 = vmul.f32 %v951, %v951
  %v1148 = vmul.f32 %v659, %v659
  %v1149 = vmul.f32 %v757, %v757
  %v1150 = vmul.f32 %v855, %v855
  %v1151 = vmul.f32 %v953, %v953
  %v1152 = vmul.f32 %v662, %v662
  %v1153 = vmul.f32 %v760, %v760
  %v1154 = vmul.f32 %v858, %v858
  %v1155 = vmul.f32 %v956, %v956
  %v1156 = vmul.f32 %v664, %v664
  %v1157 = vmul.f32 %v762, %v762
  %v1158 = vmul.f32 %v860, %v860
  %v1159 = vmul.f32 %v958, %v958
  %v1160 = vmul.f32 %v667, %v667
  %v1161 = vmul.f32 %v765, %v765
  %v1162 = vmul.f32 %v863, %v863
  %v1163 = vmul.f32 %v961, %v961
  %v1164 = vmul.f32 %v669, %v669
  %v1165 = vmul.f32 %v767, %v767
  %v1166 = vmul.f32 %v865, %v865
  %v1167 = vmul.f32 %v963, %v963
  %v1168 = vmul.f32 %v672, %v672
  %v1169 = vmul.f32 %v770, %v770
  %v1170 = vmul.f32 %v868, %v868
  %v1171 = vmul.f32 %v966, %v966
  %v1172 = vmul.f32 %v674, %v674
  %v1173 = vmul.f32 %v772, %v772
  %v1174 = vmul.f32 %v870, %v870
  %v1175 = vmul.f32 %v968, %v968
  %v1176 = vmul.f32 %v677, %v677
  %v1177 = vmul.f32 %v775, %v775
  %v1178 = vmul.f32 %v873, %v873
  %v1179 = vmul.f32 %v971, %v971
  %v1180 = vmul.f32 %v679, %v679
  %v1181 = vmul.f32 %v777, %v777
  %v1182 = vmul.f32 %v875, %v875
  %v1183 = vmul.f32 %v973, %v973
  %v1184 = vmul.f32 %v682, %v682
  %v1185 = vmul.f32 %v780, %v780
  %v1186 = vmul.f32 %v878, %v878
  %v1187 = vmul.f32 %v976, %v976
  %v1188 = vmul.f32 %v684, %v684
  %v1189 = vmul.f32 %v782, %v782
  %v1190 = vmul.f32 %v880, %v880
  %v1191 = vmul.f32 %v978, %v978
  %v1192 = vadd.f32 %v1128, %v1132
  %v1193 = vadd.f32 %v1192, %v1136
  %v1194 = vadd.f32 %v1193, %v1140
  %v1195 = vadd.f32 %v1194, %v1144
  %v1196 = vadd.f32 %v1195, %v1148
  %v1197 = vadd.f32 %v1196, %v1152
  %v1198 = vadd.f32 %v1197, %v1156
  %v1199 = vadd.f32 %v1198, %v1160
  %v1200 = vadd.f32 %v1199, %v1164
  %v1201 = vadd.f32 %v1200, %v1168
  %v1202 = vadd.f32 %v1201, %v1172
  %v1203 = vadd.f32 %v1202, %v1176
  %v1204 = vadd.f32 %v1203, %v1180
  %v1205 = vadd.f32 %v1204, %v1184
  %v1206 = vadd.f32 %v1205, %v1188
  %v1207 = vrot.slane %v1206, 4
  %v1208 = vadd.f32 %v1206, %v1207
  %v1209 = vrot.slane %v1208, 2
  %v1210 = vadd.f32 %v1208, %v1209
  %v1211 = vrot.slane %v1210, 1
  %v1212 = vadd.f32 %v1210, %v1211
  %v1213 = vadd.f32 %v1129, %v1133
  %v1214 = vadd.f32 %v1213, %v1137
  %v1215 = vadd.f32 %v1214, %v1141
  %v1216 = vadd.f32 %v1215, %v1145
  %v1217 = vadd.f32 %v1216, %v1149
  %v1218 = vadd.f32 %v1217, %v1153
  %v1219 = vadd.f32 %v1218, %v1157
  %v1220 = vadd.f32 %v1219, %v1161
  %v1221 = vadd.f32 %v1220, %v1165
  %v1222 = vadd.f32 %v1221, %v1169
  %v1223 = vadd.f32 %v1222, %v1173
  %v1224 = vadd.f32 %v1223, %v1177
  %v1225 = vadd.f32 %v1224, %v1181
  %v1226 = vadd.f32 %v1225, %v1185
  %v1227 = vadd.f32 %v1226, %v1189
  %v1228 = vrot.slane %v1227, 4
  %v1229 = vadd.f32 %v1227, %v1228
  %v1230 = vrot.slane %v1229, 2
  %v1231 = vadd.f32 %v1229, %v1230
  %v1232 = vrot.slane %v1231, 1
  %v1233 = vadd.f32 %v1231, %v1232
  %v1234 = vadd.f32 %v1130, %v1134
  %v1235 = vadd.f32 %v1234, %v1138
  %v1236 = vadd.f32 %v1235, %v1142
  %v1237 = vadd.f32 %v1236, %v1146
  %v1238 = vadd.f32 %v1237, %v1150
  %v1239 = vadd.f32 %v1238, %v1154
  %v1240 = vadd.f32 %v1239, %v1158
  %v1241 = vadd.f32 %v1240, %v1162
  %v1242 = vadd.f32 %v1241, %v1166
  %v1243 = vadd.f32 %v1242, %v1170
  %v1244 = vadd.f32 %v1243, %v1174
  %v1245 = vadd.f32 %v1244, %v1178
  %v1246 = vadd.f32 %v1245, %v1182
  %v1247 = vadd.f32 %v1246, %v1186
  %v1248 = vadd.f32 %v1247, %v1190
  %v1249 = vrot.slane %v1248, 4
  %v1250 = vadd.f32 %v1248, %v1249
  %v1251 = vrot.slane %v1250, 2
  %v1252 = vadd.f32 %v1250, %v1251
  %v1253 = vrot.slane %v1252, 1
  %v1254 = vadd.f32 %v1252, %v1253
  %v1255 = vadd.f32 %v1131, %v1135
  %v1256 = vadd.f32 %v1255, %v1139
  %v1257 = vadd.f32 %v1256, %v1143
  %v1258 = vadd.f32 %v1257, %v1147
  %v1259 = vadd.f32 %v1258, %v1151
  %v1260 = vadd.f32 %v1259, %v1155
  %v1261 = vadd.f32 %v1260, %v1159
  %v1262 = vadd.f32 %v1261, %v1163
  %v1263 = vadd.f32 %v1262, %v1167
  %v1264 = vadd.f32 %v1263, %v1171
  %v1265 = vadd.f32 %v1264, %v1175
  %v1266 = vadd.f32 %v1265, %v1179
  %v1267 = vadd.f32 %v1266, %v1183
  %v1268 = vadd.f32 %v1267, %v1187
  %v1269 = vadd.f32 %v1268, %v1191
  %v1270 = vrot.slane %v1269, 4
  %v1271 = vadd.f32 %v1269, %v1270
  %v1272 = vrot.slane %v1271, 2
  %v1273 = vadd.f32 %v1271, %v1272
  %v1274 = vrot.slane %v1273, 1
  %v1275 = vadd.f32 %v1273, %v1274
  %vm1276 = vcmask 1040384
  %v1277 = vsel %vm1276, %v1064, %v1212
  %v1278 = vsel %vm1276, %v1085, %v1233
  %v1279 = vsel %vm1276, %v1106, %v1254
  %v1280 = vsel %vm1276, %v1127, %v1275
  %v1285 = vrot.slane %v1278, 6
  %v1286 = vrot.slane %v1279, 4
  %v1287 = vrot.slane %v1280, 2
  %vm1288 = vcmask 1041408
  %v1289 = vsel %vm1288, %v1277, %v1285
  %vm1290 = vcmask 1045508
  %v1291 = vsel %vm1290, %v1286, %v1287
  %vm1292 = vcmask 1043456
  %v1293 = vsel %vm1292, %v1289, %v1291
  %1295 = vst [vmem:[%s6] sm:$0xff] %v1293
  // Predicated region
  $region22: #{generator_forward.6} parent=0 // pred_check
    _
  $region23: #{generator_forward.6} parent=0 // pred_check_branch
    %1297 = sbr.rel (0) target = $region25
  $region24: #{generator_forward.6} parent=0 // pred_region
    _
  $region25: #{generator_forward.6} parent=0 // pred_fallthru
    _
  // Predicated region
  $region26: #{generator_forward.6} parent=0 // pred_check
    _
  $region27: #{generator_forward.6} parent=0 // pred_check_branch
    %1299 = sbr.rel (0) target = $region29
  $region28: #{generator_forward.6} parent=0 // pred_region
    _
  $region29: #{generator_forward.6} parent=0 // pred_fallthru
    _
  // Predicated region
  $region30: #{generator_forward.6} parent=0 // pred_check
    _
  $region31: #{generator_forward.6} parent=0 // pred_check_branch
    %1301 = sbr.rel (0) target = $region33
  $region32: #{generator_forward.6} parent=0 // pred_region
    _
  $region33: #{generator_forward.6} parent=0 // pred_fallthru
    _
  // Predicated region
  $region34: #{generator_forward.6} parent=0 // pred_check
    _
  $region35: #{generator_forward.6} parent=0 // pred_check_branch
    %1303 = sbr.rel (0) target = $region37
  $region36: #{generator_forward.6} parent=0 // pred_region
    _
  $region37: #{generator_forward.6} parent=0 // pred_fallthru
    _

// kernel: generator_forward.7
$region0: #{generator_forward.7}
  #allocation0 [shape = 'u32[]', space=smem, size = 0x4, offset = 0x4, fixed_abs, tag = 'smem constant byte address 0x4 - core index']
  #allocation1 [shape = 'u32[72,128]{1,0:T(1,128)}', space=vmem, size = 0x9000, scoped, tag = 'internal scratch']
  %s0 = inlined_call_operand.vmem [shape: bf16[512,128], index: 0, kind: input, shape index: {}]
  %s1 = inlined_call_operand.vmem [shape: bf16[128,128], index: 1, kind: input, shape index: {}]
  %s2 = inlined_call_operand.vmem [shape: f32[1,128], index: 2, kind: input, shape index: {}]
  %s3 = inlined_call_operand.vmem [shape: f32[1,128], index: 3, kind: input, shape index: {}]
  %s4 = inlined_call_operand.vmem [shape: f32[1,128], index: 4, kind: input, shape index: {}]
  %s5 = inlined_call_operand.vmem [shape: f32[512,128], index: 5, kind: output, shape index: {}]
  %s6 = sld [smem:[#allocation0]]
  $region30: #{generator_forward.7} parent=0
    _
  %s8 = ssub.s32 1, %s6
  %s9 = scalar_select 0, %s8, %s6
  // Predicated region
  $region2: #{generator_forward.7} parent=0 // pred_check
    _
  $region3: #{generator_forward.7} parent=0 // pred_check_branch
    %11 = sbr.rel (0) target = $region5
  $region4: #{generator_forward.7} parent=0 // pred_region
    _
  $region5: #{generator_forward.7} parent=0 // pred_fallthru
    _
  // Predicated region
  $region6: #{generator_forward.7} parent=0 // pred_check
    _
  $region7: #{generator_forward.7} parent=0 // pred_check_branch
    %13 = sbr.rel (0) target = $region9
  $region8: #{generator_forward.7} parent=0 // pred_region
    _
  $region9: #{generator_forward.7} parent=0 // pred_fallthru
    _
  // Predicated region
  $region10: #{generator_forward.7} parent=0 // pred_check
    _
  $region11: #{generator_forward.7} parent=0 // pred_check_branch
    %15 = sbr.rel (0) target = $region13
  $region12: #{generator_forward.7} parent=0 // pred_region
    _
  $region13: #{generator_forward.7} parent=0 // pred_fallthru
    _
  // Predicated region
  $region14: #{generator_forward.7} parent=0 // pred_check
    _
  $region15: #{generator_forward.7} parent=0 // pred_check_branch
    %17 = sbr.rel (0) target = $region17
  $region16: #{generator_forward.7} parent=0 // pred_region
    _
  $region17: #{generator_forward.7} parent=0 // pred_fallthru
    _
  // Predicated region
  $region18: #{generator_forward.7} parent=0 // pred_check
    _
  $region19: #{generator_forward.7} parent=0 // pred_check_branch
    %19 = sbr.rel (0) target = $region21
  $region20: #{generator_forward.7} parent=0 // pred_region
    _
  $region21: #{generator_forward.7} parent=0 // pred_fallthru
    _
  %v20 = vld [vmem:[%s0] sm:$0xf]
  %v21 = vld [vmem:[%s0 + $0x4] sm:$0xf]
  %v22 = vld [vmem:[%s0 + $0x8] sm:$0xf]
  %v23 = vld [vmem:[%s0 + $0xc] sm:$0xf]
  %v24 = vld [vmem:[%s0 + $0x10] sm:$0xf]
  %v25 = vld [vmem:[%s0 + $0x14] sm:$0xf]
  %v26 = vld [vmem:[%s0 + $0x18] sm:$0xf]
  %v27 = vld [vmem:[%s0 + $0x1c] sm:$0xf]
  %v28 = vld [vmem:[%s0 + $0x20] sm:$0xf]
  %v29 = vld [vmem:[%s0 + $0x24] sm:$0xf]
  %v30 = vld [vmem:[%s0 + $0x28] sm:$0xf]
  %v31 = vld [vmem:[%s0 + $0x2c] sm:$0xf]
  %v32 = vld [vmem:[%s0 + $0x30] sm:$0xf]
  %v33 = vld [vmem:[%s0 + $0x34] sm:$0xf]
  %v34 = vld [vmem:[%s0 + $0x38] sm:$0xf]
  %v35 = vld [vmem:[%s0 + $0x3c] sm:$0xf]
  %v36 = vld [vmem:[%s0 + $0x40] sm:$0xf]
  %v37 = vld [vmem:[%s0 + $0x44] sm:$0xf]
  %v38 = vld [vmem:[%s0 + $0x48] sm:$0xf]
  %v39 = vld [vmem:[%s0 + $0x4c] sm:$0xf]
  %v40 = vld [vmem:[%s0 + $0x50] sm:$0xf]
  %v41 = vld [vmem:[%s0 + $0x54] sm:$0xf]
  %v42 = vld [vmem:[%s0 + $0x58] sm:$0xf]
  %v43 = vld [vmem:[%s0 + $0x5c] sm:$0xf]
  %v44 = vld [vmem:[%s0 + $0x60] sm:$0xf]
  %v45 = vld [vmem:[%s0 + $0x64] sm:$0xf]
  %v46 = vld [vmem:[%s0 + $0x68] sm:$0xf]
  %v47 = vld [vmem:[%s0 + $0x6c] sm:$0xf]
  %v48 = vld [vmem:[%s0 + $0x70] sm:$0xf]
  %v49 = vld [vmem:[%s0 + $0x74] sm:$0xf]
  %v50 = vld [vmem:[%s0 + $0x78] sm:$0xf]
  %v51 = vld [vmem:[%s0 + $0x7c] sm:$0xf]
  %v52 = vld [vmem:[%s0 + $0x80] sm:$0xf]
  %v53 = vld [vmem:[%s0 + $0x84] sm:$0xf]
  %v54 = vld [vmem:[%s0 + $0x88] sm:$0xf]
  %v55 = vld [vmem:[%s0 + $0x8c] sm:$0xf]
  %v56 = vld [vmem:[%s0 + $0x90] sm:$0xf]
  %v57 = vld [vmem:[%s0 + $0x94] sm:$0xf]
  %v58 = vld [vmem:[%s0 + $0x98] sm:$0xf]
  %v59 = vld [vmem:[%s0 + $0x9c] sm:$0xf]
  %v60 = vld [vmem:[%s0 + $0xa0] sm:$0xf]
  %v61 = vld [vmem:[%s0 + $0xa4] sm:$0xf]
  %v62 = vld [vmem:[%s0 + $0xa8] sm:$0xf]
  %v63 = vld [vmem:[%s0 + $0xac] sm:$0xf]
  %v64 = vld [vmem:[%s0 + $0xb0] sm:$0xf]
  %v65 = vld [vmem:[%s0 + $0xb4] sm:$0xf]
  %v66 = vld [vmem:[%s0 + $0xb8] sm:$0xf]
  %v67 = vld [vmem:[%s0 + $0xbc] sm:$0xf]
  %v68 = vld [vmem:[%s0 + $0xc0] sm:$0xf]
  %v69 = vld [vmem:[%s0 + $0xc4] sm:$0xf]
  %v70 = vld [vmem:[%s0 + $0xc8] sm:$0xf]
  %v71 = vld [vmem:[%s0 + $0xcc] sm:$0xf]
  %v72 = vld [vmem:[%s0 + $0xd0] sm:$0xf]
  %v73 = vld [vmem:[%s0 + $0xd4] sm:$0xf]
  %v74 = vld [vmem:[%s0 + $0xd8] sm:$0xf]
  %v75 = vld [vmem:[%s0 + $0xdc] sm:$0xf]
  %v76 = vld [vmem:[%s0 + $0xe0] sm:$0xf]
  %v77 = vld [vmem:[%s0 + $0xe4] sm:$0xf]
  %v78 = vld [vmem:[%s0 + $0xe8] sm:$0xf]
  %v79 = vld [vmem:[%s0 + $0xec] sm:$0xf]
  %v80 = vld [vmem:[%s0 + $0xf0] sm:$0xf]
  %v81 = vld [vmem:[%s0 + $0xf4] sm:$0xf]
  %v82 = vld [vmem:[%s0 + $0xf8] sm:$0xf]
  %v83 = vld [vmem:[%s0 + $0xfc] sm:$0xf]
  %v84 = vunpack.c.l.bf16 %v20
  %v85 = vunpack.c.l.bf16 %v21
  %v86 = vunpack.c.l.bf16 %v22
  %v87 = vunpack.c.l.bf16 %v23
  %v88 = vunpack.c.l.bf16 %v24
  %v89 = vunpack.c.l.bf16 %v25
  %v90 = vunpack.c.l.bf16 %v26
  %v91 = vunpack.c.l.bf16 %v27
  %v92 = vunpack.c.l.bf16 %v28
  %v93 = vunpack.c.l.bf16 %v29
  %v94 = vunpack.c.l.bf16 %v30
  %v95 = vunpack.c.l.bf16 %v31
  %v96 = vunpack.c.l.bf16 %v32
  %v97 = vunpack.c.l.bf16 %v33
  %v98 = vunpack.c.l.bf16 %v34
  %v99 = vunpack.c.l.bf16 %v35
  %v100 = vunpack.c.l.bf16 %v36
  %v101 = vunpack.c.l.bf16 %v37
  %v102 = vunpack.c.l.bf16 %v38
  %v103 = vunpack.c.l.bf16 %v39
  %v104 = vunpack.c.l.bf16 %v40
  %v105 = vunpack.c.l.bf16 %v41
  %v106 = vunpack.c.l.bf16 %v42
  %v107 = vunpack.c.l.bf16 %v43
  %v108 = vunpack.c.l.bf16 %v44
  %v109 = vunpack.c.l.bf16 %v45
  %v110 = vunpack.c.l.bf16 %v46
  %v111 = vunpack.c.l.bf16 %v47
  %v112 = vunpack.c.l.bf16 %v48
  %v113 = vunpack.c.l.bf16 %v49
  %v114 = vunpack.c.l.bf16 %v50
  %v115 = vunpack.c.l.bf16 %v51
  %v116 = vunpack.c.l.bf16 %v52
  %v117 = vunpack.c.l.bf16 %v53
  %v118 = vunpack.c.l.bf16 %v54
  %v119 = vunpack.c.l.bf16 %v55
  %v120 = vunpack.c.l.bf16 %v56
  %v121 = vunpack.c.l.bf16 %v57
  %v122 = vunpack.c.l.bf16 %v58
  %v123 = vunpack.c.l.bf16 %v59
  %v124 = vunpack.c.l.bf16 %v60
  %v125 = vunpack.c.l.bf16 %v61
  %v126 = vunpack.c.l.bf16 %v62
  %v127 = vunpack.c.l.bf16 %v63
  %v128 = vunpack.c.l.bf16 %v64
  %v129 = vunpack.c.l.bf16 %v65
  %v130 = vunpack.c.l.bf16 %v66
  %v131 = vunpack.c.l.bf16 %v67
  %v132 = vunpack.c.l.bf16 %v68
  %v133 = vunpack.c.l.bf16 %v69
  %v134 = vunpack.c.l.bf16 %v70
  %v135 = vunpack.c.l.bf16 %v71
  %v136 = vunpack.c.l.bf16 %v72
  %v137 = vunpack.c.l.bf16 %v73
  %v138 = vunpack.c.l.bf16 %v74
  %v139 = vunpack.c.l.bf16 %v75
  %v140 = vunpack.c.l.bf16 %v76
  %v141 = vunpack.c.l.bf16 %v77
  %v142 = vunpack.c.l.bf16 %v78
  %v143 = vunpack.c.l.bf16 %v79
  %v144 = vunpack.c.l.bf16 %v80
  %v145 = vunpack.c.l.bf16 %v81
  %v146 = vunpack.c.l.bf16 %v82
  %v147 = vunpack.c.l.bf16 %v83
  %v148 = vld [vmem:[%s3] sm:$0x1]
  %v150 = vperm.slane %v148, 0
  %v152 = vmul.f32 %v84, %v150
  %v153 = vmul.f32 %v85, %v150
  %v154 = vmul.f32 %v86, %v150
  %v155 = vmul.f32 %v87, %v150
  %v156 = vmul.f32 %v88, %v150
  %v157 = vmul.f32 %v89, %v150
  %v158 = vmul.f32 %v90, %v150
  %v159 = vmul.f32 %v91, %v150
  %v160 = vmul.f32 %v92, %v150
  %v161 = vmul.f32 %v93, %v150
  %v162 = vmul.f32 %v94, %v150
  %v163 = vmul.f32 %v95, %v150
  %v164 = vmul.f32 %v96, %v150
  %v165 = vmul.f32 %v97, %v150
  %v166 = vmul.f32 %v98, %v150
  %v167 = vmul.f32 %v99, %v150
  %v168 = vmul.f32 %v100, %v150
  %v169 = vmul.f32 %v101, %v150
  %v170 = vmul.f32 %v102, %v150
  %v171 = vmul.f32 %v103, %v150
  %v172 = vmul.f32 %v104, %v150
  %v173 = vmul.f32 %v105, %v150
  %v174 = vmul.f32 %v106, %v150
  %v175 = vmul.f32 %v107, %v150
  %v176 = vmul.f32 %v108, %v150
  %v177 = vmul.f32 %v109, %v150
  %v178 = vmul.f32 %v110, %v150
  %v179 = vmul.f32 %v111, %v150
  %v180 = vmul.f32 %v112, %v150
  %v181 = vmul.f32 %v113, %v150
  %v182 = vmul.f32 %v114, %v150
  %v183 = vmul.f32 %v115, %v150
  %v184 = vmul.f32 %v116, %v150
  %v185 = vmul.f32 %v117, %v150
  %v186 = vmul.f32 %v118, %v150
  %v187 = vmul.f32 %v119, %v150
  %v188 = vmul.f32 %v120, %v150
  %v189 = vmul.f32 %v121, %v150
  %v190 = vmul.f32 %v122, %v150
  %v191 = vmul.f32 %v123, %v150
  %v192 = vmul.f32 %v124, %v150
  %v193 = vmul.f32 %v125, %v150
  %v194 = vmul.f32 %v126, %v150
  %v195 = vmul.f32 %v127, %v150
  %v196 = vmul.f32 %v128, %v150
  %v197 = vmul.f32 %v129, %v150
  %v198 = vmul.f32 %v130, %v150
  %v199 = vmul.f32 %v131, %v150
  %v200 = vmul.f32 %v132, %v150
  %v201 = vmul.f32 %v133, %v150
  %v202 = vmul.f32 %v134, %v150
  %v203 = vmul.f32 %v135, %v150
  %v204 = vmul.f32 %v136, %v150
  %v205 = vmul.f32 %v137, %v150
  %v206 = vmul.f32 %v138, %v150
  %v207 = vmul.f32 %v139, %v150
  %v208 = vmul.f32 %v140, %v150
  %v209 = vmul.f32 %v141, %v150
  %v210 = vmul.f32 %v142, %v150
  %v211 = vmul.f32 %v143, %v150
  %v212 = vmul.f32 %v144, %v150
  %v213 = vmul.f32 %v145, %v150
  %v214 = vmul.f32 %v146, %v150
  %v215 = vmul.f32 %v147, %v150
  %v216 = vld [vmem:[%s4] sm:$0x1]
  %v218 = vperm.slane %v216, 0
  %v220 = vadd.f32 %v152, %v218
  %v221 = vadd.f32 %v153, %v218
  %v222 = vadd.f32 %v154, %v218
  %v223 = vadd.f32 %v155, %v218
  %v224 = vadd.f32 %v156, %v218
  %v225 = vadd.f32 %v157, %v218
  %v226 = vadd.f32 %v158, %v218
  %v227 = vadd.f32 %v159, %v218
  %v228 = vadd.f32 %v160, %v218
  %v229 = vadd.f32 %v161, %v218
  %v230 = vadd.f32 %v162, %v218
  %v231 = vadd.f32 %v163, %v218
  %v232 = vadd.f32 %v164, %v218
  %v233 = vadd.f32 %v165, %v218
  %v234 = vadd.f32 %v166, %v218
  %v235 = vadd.f32 %v167, %v218
  %v236 = vadd.f32 %v168, %v218
  %v237 = vadd.f32 %v169, %v218
  %v238 = vadd.f32 %v170, %v218
  %v239 = vadd.f32 %v171, %v218
  %v240 = vadd.f32 %v172, %v218
  %v241 = vadd.f32 %v173, %v218
  %v242 = vadd.f32 %v174, %v218
  %v243 = vadd.f32 %v175, %v218
  %v244 = vadd.f32 %v176, %v218
  %v245 = vadd.f32 %v177, %v218
  %v246 = vadd.f32 %v178, %v218
  %v247 = vadd.f32 %v179, %v218
  %v248 = vadd.f32 %v180, %v218
  %v249 = vadd.f32 %v181, %v218
  %v250 = vadd.f32 %v182, %v218
  %v251 = vadd.f32 %v183, %v218
  %v252 = vadd.f32 %v184, %v218
  %v253 = vadd.f32 %v185, %v218
  %v254 = vadd.f32 %v186, %v218
  %v255 = vadd.f32 %v187, %v218
  %v256 = vadd.f32 %v188, %v218
  %v257 = vadd.f32 %v189, %v218
  %v258 = vadd.f32 %v190, %v218
  %v259 = vadd.f32 %v191, %v218
  %v260 = vadd.f32 %v192, %v218
  %v261 = vadd.f32 %v193, %v218
  %v262 = vadd.f32 %v194, %v218
  %v263 = vadd.f32 %v195, %v218
  %v264 = vadd.f32 %v196, %v218
  %v265 = vadd.f32 %v197, %v218
  %v266 = vadd.f32 %v198, %v218
  %v267 = vadd.f32 %v199, %v218
  %v268 = vadd.f32 %v200, %v218
  %v269 = vadd.f32 %v201, %v218
  %v270 = vadd.f32 %v202, %v218
  %v271 = vadd.f32 %v203, %v218
  %v272 = vadd.f32 %v204, %v218
  %v273 = vadd.f32 %v205, %v218
  %v274 = vadd.f32 %v206, %v218
  %v275 = vadd.f32 %v207, %v218
  %v276 = vadd.f32 %v208, %v218
  %v277 = vadd.f32 %v209, %v218
  %v278 = vadd.f32 %v210, %v218
  %v279 = vadd.f32 %v211, %v218
  %v280 = vadd.f32 %v212, %v218
  %v281 = vadd.f32 %v213, %v218
  %v282 = vadd.f32 %v214, %v218
  %v283 = vadd.f32 %v215, %v218
  %v284 = vmax.f32 %v220, 0.0
  %v285 = vmax.f32 %v221, 0.0
  %v286 = vmax.f32 %v222, 0.0
  %v287 = vmax.f32 %v223, 0.0
  %v288 = vmax.f32 %v224, 0.0
  %v289 = vmax.f32 %v225, 0.0
  %v290 = vmax.f32 %v226, 0.0
  %v291 = vmax.f32 %v227, 0.0
  %v292 = vmax.f32 %v228, 0.0
  %v293 = vmax.f32 %v229, 0.0
  %v294 = vmax.f32 %v230, 0.0
  %v295 = vmax.f32 %v231, 0.0
  %v296 = vmax.f32 %v232, 0.0
  %v297 = vmax.f32 %v233, 0.0
  %v298 = vmax.f32 %v234, 0.0
  %v299 = vmax.f32 %v235, 0.0
  %v300 = vmax.f32 %v236, 0.0
  %v301 = vmax.f32 %v237, 0.0
  %v302 = vmax.f32 %v238, 0.0
  %v303 = vmax.f32 %v239, 0.0
  %v304 = vmax.f32 %v240, 0.0
  %v305 = vmax.f32 %v241, 0.0
  %v306 = vmax.f32 %v242, 0.0
  %v307 = vmax.f32 %v243, 0.0
  %v308 = vmax.f32 %v244, 0.0
  %v309 = vmax.f32 %v245, 0.0
  %v310 = vmax.f32 %v246, 0.0
  %v311 = vmax.f32 %v247, 0.0
  %v312 = vmax.f32 %v248, 0.0
  %v313 = vmax.f32 %v249, 0.0
  %v314 = vmax.f32 %v250, 0.0
  %v315 = vmax.f32 %v251, 0.0
  %v316 = vmax.f32 %v252, 0.0
  %v317 = vmax.f32 %v253, 0.0
  %v318 = vmax.f32 %v254, 0.0
  %v319 = vmax.f32 %v255, 0.0
  %v320 = vmax.f32 %v256, 0.0
  %v321 = vmax.f32 %v257, 0.0
  %v322 = vmax.f32 %v258, 0.0
  %v323 = vmax.f32 %v259, 0.0
  %v324 = vmax.f32 %v260, 0.0
  %v325 = vmax.f32 %v261, 0.0
  %v326 = vmax.f32 %v262, 0.0
  %v327 = vmax.f32 %v263, 0.0
  %v328 = vmax.f32 %v264, 0.0
  %v329 = vmax.f32 %v265, 0.0
  %v330 = vmax.f32 %v266, 0.0
  %v331 = vmax.f32 %v267, 0.0
  %v332 = vmax.f32 %v268, 0.0
  %v333 = vmax.f32 %v269, 0.0
  %v334 = vmax.f32 %v270, 0.0
  %v335 = vmax.f32 %v271, 0.0
  %v336 = vmax.f32 %v272, 0.0
  %v337 = vmax.f32 %v273, 0.0
  %v338 = vmax.f32 %v274, 0.0
  %v339 = vmax.f32 %v275, 0.0
  %v340 = vmax.f32 %v276, 0.0
  %v341 = vmax.f32 %v277, 0.0
  %v342 = vmax.f32 %v278, 0.0
  %v343 = vmax.f32 %v279, 0.0
  %v344 = vmax.f32 %v280, 0.0
  %v345 = vmax.f32 %v281, 0.0
  %v346 = vmax.f32 %v282, 0.0
  %v347 = vmax.f32 %v283, 0.0
  %v348 = vpack.c.bf16 %v285, %v284
  %v349 = vpack.c.bf16 %v287, %v286
  %v350 = vpack.c.bf16 %v289, %v288
  %v351 = vpack.c.bf16 %v291, %v290
  %v352 = vpack.c.bf16 %v293, %v292
  %v353 = vpack.c.bf16 %v295, %v294
  %v354 = vpack.c.bf16 %v297, %v296
  %v355 = vpack.c.bf16 %v299, %v298
  %v356 = vpack.c.bf16 %v301, %v300
  %v357 = vpack.c.bf16 %v303, %v302
  %v358 = vpack.c.bf16 %v305, %v304
  %v359 = vpack.c.bf16 %v307, %v306
  %v360 = vpack.c.bf16 %v309, %v308
  %v361 = vpack.c.bf16 %v311, %v310
  %v362 = vpack.c.bf16 %v313, %v312
  %v363 = vpack.c.bf16 %v315, %v314
  %v364 = vpack.c.bf16 %v317, %v316
  %v365 = vpack.c.bf16 %v319, %v318
  %v366 = vpack.c.bf16 %v321, %v320
  %v367 = vpack.c.bf16 %v323, %v322
  %v368 = vpack.c.bf16 %v325, %v324
  %v369 = vpack.c.bf16 %v327, %v326
  %v370 = vpack.c.bf16 %v329, %v328
  %v371 = vpack.c.bf16 %v331, %v330
  %v372 = vpack.c.bf16 %v333, %v332
  %v373 = vpack.c.bf16 %v335, %v334
  %v374 = vpack.c.bf16 %v337, %v336
  %v375 = vpack.c.bf16 %v339, %v338
  %v376 = vpack.c.bf16 %v341, %v340
  %v377 = vpack.c.bf16 %v343, %v342
  %v378 = vpack.c.bf16 %v345, %v344
  %v379 = vpack.c.bf16 %v347, %v346
  %v380 = vld [vmem:[%s1] sm:$0xf]
  %v381 = vld [vmem:[%s1 + $0x4] sm:$0xf]
  %v382 = vld [vmem:[%s1 + $0x8] sm:$0xf]
  %v383 = vld [vmem:[%s1 + $0xc] sm:$0xf]
  %v384 = vld [vmem:[%s1 + $0x10] sm:$0xf]
  %v385 = vld [vmem:[%s1 + $0x14] sm:$0xf]
  %v386 = vld [vmem:[%s1 + $0x18] sm:$0xf]
  %v387 = vld [vmem:[%s1 + $0x1c] sm:$0xf]
  %v388 = vld [vmem:[%s1 + $0x20] sm:$0xf]
  %v389 = vld [vmem:[%s1 + $0x24] sm:$0xf]
  %v390 = vld [vmem:[%s1 + $0x28] sm:$0xf]
  %v391 = vld [vmem:[%s1 + $0x2c] sm:$0xf]
  %v392 = vld [vmem:[%s1 + $0x30] sm:$0xf]
  %v393 = vld [vmem:[%s1 + $0x34] sm:$0xf]
  %v394 = vld [vmem:[%s1 + $0x38] sm:$0xf]
  %v395 = vld [vmem:[%s1 + $0x3c] sm:$0xf]
  %v396 = vld [vmem:[%s2] sm:$0x1]
  %v398 = vperm.slane %v396, 0
  %v416 = vunpack.c.l.b16 %v380
  %v417 = vunpack.c.l.b16 %v381
  %v418 = vunpack.c.l.b16 %v382
  %v419 = vunpack.c.l.b16 %v383
  %v420 = vunpack.c.l.b16 %v384
  %v421 = vunpack.c.l.b16 %v385
  %v422 = vunpack.c.l.b16 %v386
  %v423 = vunpack.c.l.b16 %v387
  %v424 = vunpack.c.l.b16 %v388
  %v425 = vunpack.c.l.b16 %v389
  %v426 = vunpack.c.l.b16 %v390
  %v427 = vunpack.c.l.b16 %v391
  %v428 = vunpack.c.l.b16 %v392
  %v429 = vunpack.c.l.b16 %v393
  %v430 = vunpack.c.l.b16 %v394
  %v431 = vunpack.c.l.b16 %v395
  %v432 = vpack.c.b16 %v417, %v416
  %v433 = vpack.c.b16 %v419, %v418
  %v434 = vpack.c.b16 %v421, %v420
  %v435 = vpack.c.b16 %v423, %v422
  %v436 = vpack.c.b16 %v425, %v424
  %v437 = vpack.c.b16 %v427, %v426
  %v438 = vpack.c.b16 %v429, %v428
  %v439 = vpack.c.b16 %v431, %v430
  %448 = vmatpush.bf16.msra.mxu0 %v439
  %449 = vmatpush.bf16.msra.mxu0 %v438
  %450 = vmatpush.bf16.msra.mxu0 %v437
  %451 = vmatpush.bf16.msra.mxu0 %v436
  %452 = vmatpush.bf16.msra.mxu0 %v435
  %453 = vmatpush.bf16.msra.mxu0 %v434
  %454 = vmatpush.bf16.msra.mxu0 %v433
  %455 = vmatpush.bf16.msra.mxu0 %v432
  %456 = vmatmul.bf16.gmra.mxu0 %v348
  %v457 = vpop.f32.mrf.mxu0
  %v458 = vadd.f32 %v398, %v457
  %v459 = vpop.f32.mrf.mxu0
  %v460 = vadd.f32 %v398, %v459
  %461 = vmatmul.bf16.gmra.mxu0 %v349
  %v462 = vpop.f32.mrf.mxu0
  %v463 = vadd.f32 %v398, %v462
  %v464 = vpop.f32.mrf.mxu0
  %v465 = vadd.f32 %v398, %v464
  %466 = vmatmul.bf16.gmra.mxu0 %v350
  %v467 = vpop.f32.mrf.mxu0
  %v468 = vadd.f32 %v398, %v467
  %v469 = vpop.f32.mrf.mxu0
  %v470 = vadd.f32 %v398, %v469
  %471 = vmatmul.bf16.gmra.mxu0 %v351
  %v472 = vpop.f32.mrf.mxu0
  %v473 = vadd.f32 %v398, %v472
  %v474 = vpop.f32.mrf.mxu0
  %v475 = vadd.f32 %v398, %v474
  %476 = vmatmul.bf16.gmra.mxu0 %v352
  %v477 = vpop.f32.mrf.mxu0
  %v478 = vadd.f32 %v398, %v477
  %v479 = vpop.f32.mrf.mxu0
  %v480 = vadd.f32 %v398, %v479
  %481 = vmatmul.bf16.gmra.mxu0 %v353
  %v482 = vpop.f32.mrf.mxu0
  %v483 = vadd.f32 %v398, %v482
  %v484 = vpop.f32.mrf.mxu0
  %v485 = vadd.f32 %v398, %v484
  %486 = vmatmul.bf16.gmra.mxu0 %v354
  %v487 = vpop.f32.mrf.mxu0
  %v488 = vadd.f32 %v398, %v487
  %v489 = vpop.f32.mrf.mxu0
  %v490 = vadd.f32 %v398, %v489
  %491 = vmatmul.bf16.gmra.mxu0 %v355
  %v492 = vpop.f32.mrf.mxu0
  %v493 = vadd.f32 %v398, %v492
  %v494 = vpop.f32.mrf.mxu0
  %v495 = vadd.f32 %v398, %v494
  %496 = vmatmul.bf16.gmra.mxu0 %v356
  %v497 = vpop.f32.mrf.mxu0
  %v498 = vadd.f32 %v398, %v497
  %v499 = vpop.f32.mrf.mxu0
  %v500 = vadd.f32 %v398, %v499
  %501 = vmatmul.bf16.gmra.mxu0 %v357
  %v502 = vpop.f32.mrf.mxu0
  %v503 = vadd.f32 %v398, %v502
  %v504 = vpop.f32.mrf.mxu0
  %v505 = vadd.f32 %v398, %v504
  %506 = vmatmul.bf16.gmra.mxu0 %v358
  %v507 = vpop.f32.mrf.mxu0
  %v508 = vadd.f32 %v398, %v507
  %v509 = vpop.f32.mrf.mxu0
  %v510 = vadd.f32 %v398, %v509
  %511 = vmatmul.bf16.gmra.mxu0 %v359
  %v512 = vpop.f32.mrf.mxu0
  %v513 = vadd.f32 %v398, %v512
  %v514 = vpop.f32.mrf.mxu0
  %v515 = vadd.f32 %v398, %v514
  %516 = vmatmul.bf16.gmra.mxu0 %v360
  %v517 = vpop.f32.mrf.mxu0
  %v518 = vadd.f32 %v398, %v517
  %v519 = vpop.f32.mrf.mxu0
  %v520 = vadd.f32 %v398, %v519
  %521 = vmatmul.bf16.gmra.mxu0 %v361
  %v522 = vpop.f32.mrf.mxu0
  %v523 = vadd.f32 %v398, %v522
  %v524 = vpop.f32.mrf.mxu0
  %v525 = vadd.f32 %v398, %v524
  %526 = vmatmul.bf16.gmra.mxu0 %v362
  %v527 = vpop.f32.mrf.mxu0
  %v528 = vadd.f32 %v398, %v527
  %v529 = vpop.f32.mrf.mxu0
  %v530 = vadd.f32 %v398, %v529
  %531 = vmatmul.bf16.gmra.mxu0 %v363
  %v532 = vpop.f32.mrf.mxu0
  %v533 = vadd.f32 %v398, %v532
  %v534 = vpop.f32.mrf.mxu0
  %v535 = vadd.f32 %v398, %v534
  %536 = vmatmul.bf16.gmra.mxu0 %v364
  %v537 = vpop.f32.mrf.mxu0
  %v538 = vadd.f32 %v398, %v537
  %v539 = vpop.f32.mrf.mxu0
  %v540 = vadd.f32 %v398, %v539
  %541 = vmatmul.bf16.gmra.mxu0 %v365
  %v542 = vpop.f32.mrf.mxu0
  %v543 = vadd.f32 %v398, %v542
  %v544 = vpop.f32.mrf.mxu0
  %v545 = vadd.f32 %v398, %v544
  %546 = vmatmul.bf16.gmra.mxu0 %v366
  %v547 = vpop.f32.mrf.mxu0
  %v548 = vadd.f32 %v398, %v547
  %v549 = vpop.f32.mrf.mxu0
  %v550 = vadd.f32 %v398, %v549
  %551 = vmatmul.bf16.gmra.mxu0 %v367
  %v552 = vpop.f32.mrf.mxu0
  %v553 = vadd.f32 %v398, %v552
  %v554 = vpop.f32.mrf.mxu0
  %v555 = vadd.f32 %v398, %v554
  %556 = vmatmul.bf16.gmra.mxu0 %v368
  %v557 = vpop.f32.mrf.mxu0
  %v558 = vadd.f32 %v398, %v557
  %v559 = vpop.f32.mrf.mxu0
  %v560 = vadd.f32 %v398, %v559
  %561 = vmatmul.bf16.gmra.mxu0 %v369
  %v562 = vpop.f32.mrf.mxu0
  %v563 = vadd.f32 %v398, %v562
  %v564 = vpop.f32.mrf.mxu0
  %v565 = vadd.f32 %v398, %v564
  %566 = vmatmul.bf16.gmra.mxu0 %v370
  %v567 = vpop.f32.mrf.mxu0
  %v568 = vadd.f32 %v398, %v567
  %v569 = vpop.f32.mrf.mxu0
  %v570 = vadd.f32 %v398, %v569
  %571 = vmatmul.bf16.gmra.mxu0 %v371
  %v572 = vpop.f32.mrf.mxu0
  %v573 = vadd.f32 %v398, %v572
  %v574 = vpop.f32.mrf.mxu0
  %v575 = vadd.f32 %v398, %v574
  %576 = vmatmul.bf16.gmra.mxu0 %v372
  %v577 = vpop.f32.mrf.mxu0
  %v578 = vadd.f32 %v398, %v577
  %v579 = vpop.f32.mrf.mxu0
  %v580 = vadd.f32 %v398, %v579
  %581 = vmatmul.bf16.gmra.mxu0 %v373
  %v582 = vpop.f32.mrf.mxu0
  %v583 = vadd.f32 %v398, %v582
  %v584 = vpop.f32.mrf.mxu0
  %v585 = vadd.f32 %v398, %v584
  %586 = vmatmul.bf16.gmra.mxu0 %v374
  %v587 = vpop.f32.mrf.mxu0
  %v588 = vadd.f32 %v398, %v587
  %v589 = vpop.f32.mrf.mxu0
  %v590 = vadd.f32 %v398, %v589
  %591 = vmatmul.bf16.gmra.mxu0 %v375
  %v592 = vpop.f32.mrf.mxu0
  %v593 = vadd.f32 %v398, %v592
  %v594 = vpop.f32.mrf.mxu0
  %v595 = vadd.f32 %v398, %v594
  %596 = vmatmul.bf16.gmra.mxu0 %v376
  %v597 = vpop.f32.mrf.mxu0
  %v598 = vadd.f32 %v398, %v597
  %v599 = vpop.f32.mrf.mxu0
  %v600 = vadd.f32 %v398, %v599
  %601 = vmatmul.bf16.gmra.mxu0 %v377
  %v602 = vpop.f32.mrf.mxu0
  %v603 = vadd.f32 %v398, %v602
  %v604 = vpop.f32.mrf.mxu0
  %v605 = vadd.f32 %v398, %v604
  %606 = vmatmul.bf16.gmra.mxu0 %v378
  %v607 = vpop.f32.mrf.mxu0
  %v608 = vadd.f32 %v398, %v607
  %v609 = vpop.f32.mrf.mxu0
  %v610 = vadd.f32 %v398, %v609
  %611 = vmatmul.bf16.gmra.mxu0 %v379
  %v612 = vpop.f32.mrf.mxu0
  %v613 = vadd.f32 %v398, %v612
  %v614 = vpop.f32.mrf.mxu0
  %v615 = vadd.f32 %v398, %v614
  %616 = vdwg.mxu0
  %v617 = vtanh.pop %v458
  %v618 = vtanh.pop %v460
  %v619 = vtanh.pop %v463
  %v620 = vtanh.pop %v465
  %v621 = vtanh.pop %v468
  %v622 = vtanh.pop %v470
  %v623 = vtanh.pop %v473
  %v624 = vtanh.pop %v475
  %v625 = vtanh.pop %v478
  %v626 = vtanh.pop %v480
  %v627 = vtanh.pop %v483
  %v628 = vtanh.pop %v485
  %v629 = vtanh.pop %v488
  %v630 = vtanh.pop %v490
  %v631 = vtanh.pop %v493
  %v632 = vtanh.pop %v495
  %v633 = vtanh.pop %v498
  %v634 = vtanh.pop %v500
  %v635 = vtanh.pop %v503
  %v636 = vtanh.pop %v505
  %v637 = vtanh.pop %v508
  %v638 = vtanh.pop %v510
  %v639 = vtanh.pop %v513
  %v640 = vtanh.pop %v515
  %v641 = vtanh.pop %v518
  %v642 = vtanh.pop %v520
  %v643 = vtanh.pop %v523
  %v644 = vtanh.pop %v525
  %v645 = vtanh.pop %v528
  %v646 = vtanh.pop %v530
  %v647 = vtanh.pop %v533
  %v648 = vtanh.pop %v535
  %v649 = vtanh.pop %v538
  %v650 = vtanh.pop %v540
  %v651 = vtanh.pop %v543
  %v652 = vtanh.pop %v545
  %v653 = vtanh.pop %v548
  %v654 = vtanh.pop %v550
  %v655 = vtanh.pop %v553
  %v656 = vtanh.pop %v555
  %v657 = vtanh.pop %v558
  %v658 = vtanh.pop %v560
  %v659 = vtanh.pop %v563
  %v660 = vtanh.pop %v565
  %v661 = vtanh.pop %v568
  %v662 = vtanh.pop %v570
  %v663 = vtanh.pop %v573
  %v664 = vtanh.pop %v575
  %v665 = vtanh.pop %v578
  %v666 = vtanh.pop %v580
  %v667 = vtanh.pop %v583
  %v668 = vtanh.pop %v585
  %v669 = vtanh.pop %v588
  %v670 = vtanh.pop %v590
  %v671 = vtanh.pop %v593
  %v672 = vtanh.pop %v595
  %v673 = vtanh.pop %v598
  %v674 = vtanh.pop %v600
  %v675 = vtanh.pop %v603
  %v676 = vtanh.pop %v605
  %v677 = vtanh.pop %v608
  %v678 = vtanh.pop %v610
  %v679 = vtanh.pop %v613
  %v680 = vtanh.pop %v615
  %681 = vst [vmem:[%s5] sm:$0xff] %v617
  %682 = vst [vmem:[%s5 + $0x8] sm:$0xff] %v618
  %683 = vst [vmem:[%s5 + $0x10] sm:$0xff] %v619
  %684 = vst [vmem:[%s5 + $0x18] sm:$0xff] %v620
  %685 = vst [vmem:[%s5 + $0x20] sm:$0xff] %v621
  %686 = vst [vmem:[%s5 + $0x28] sm:$0xff] %v622
  %687 = vst [vmem:[%s5 + $0x30] sm:$0xff] %v623
  %688 = vst [vmem:[%s5 + $0x38] sm:$0xff] %v624
  %689 = vst [vmem:[%s5 + $0x40] sm:$0xff] %v625
  %690 = vst [vmem:[%s5 + $0x48] sm:$0xff] %v626
  %691 = vst [vmem:[%s5 + $0x50] sm:$0xff] %v627
  %692 = vst [vmem:[%s5 + $0x58] sm:$0xff] %v628
  %693 = vst [vmem:[%s5 + $0x60] sm:$0xff] %v629
  %694 = vst [vmem:[%s5 + $0x68] sm:$0xff] %v630
  %695 = vst [vmem:[%s5 + $0x70] sm:$0xff] %v631
  %696 = vst [vmem:[%s5 + $0x78] sm:$0xff] %v632
  %697 = vst [vmem:[%s5 + $0x80] sm:$0xff] %v633
  %698 = vst [vmem:[%s5 + $0x88] sm:$0xff] %v634
  %699 = vst [vmem:[%s5 + $0x90] sm:$0xff] %v635
  %700 = vst [vmem:[%s5 + $0x98] sm:$0xff] %v636
  %701 = vst [vmem:[%s5 + $0xa0] sm:$0xff] %v637
  %702 = vst [vmem:[%s5 + $0xa8] sm:$0xff] %v638
  %703 = vst [vmem:[%s5 + $0xb0] sm:$0xff] %v639
  %704 = vst [vmem:[%s5 + $0xb8] sm:$0xff] %v640
  %705 = vst [vmem:[%s5 + $0xc0] sm:$0xff] %v641
  %706 = vst [vmem:[%s5 + $0xc8] sm:$0xff] %v642
  %707 = vst [vmem:[%s5 + $0xd0] sm:$0xff] %v643
  %708 = vst [vmem:[%s5 + $0xd8] sm:$0xff] %v644
  %709 = vst [vmem:[%s5 + $0xe0] sm:$0xff] %v645
  %710 = vst [vmem:[%s5 + $0xe8] sm:$0xff] %v646
  %711 = vst [vmem:[%s5 + $0xf0] sm:$0xff] %v647
  %712 = vst [vmem:[%s5 + $0xf8] sm:$0xff] %v648
  %713 = vst [vmem:[%s5 + $0x100] sm:$0xff] %v649
  %714 = vst [vmem:[%s5 + $0x108] sm:$0xff] %v650
  %715 = vst [vmem:[%s5 + $0x110] sm:$0xff] %v651
  %716 = vst [vmem:[%s5 + $0x118] sm:$0xff] %v652
  %717 = vst [vmem:[%s5 + $0x120] sm:$0xff] %v653
  %718 = vst [vmem:[%s5 + $0x128] sm:$0xff] %v654
  %719 = vst [vmem:[%s5 + $0x130] sm:$0xff] %v655
  %720 = vst [vmem:[%s5 + $0x138] sm:$0xff] %v656
  %721 = vst [vmem:[%s5 + $0x140] sm:$0xff] %v657
  %722 = vst [vmem:[%s5 + $0x148] sm:$0xff] %v658
  %723 = vst [vmem:[%s5 + $0x150] sm:$0xff] %v659
  %724 = vst [vmem:[%s5 + $0x158] sm:$0xff] %v660
  %725 = vst [vmem:[%s5 + $0x160] sm:$0xff] %v661
  %726 = vst [vmem:[%s5 + $0x168] sm:$0xff] %v662
  %727 = vst [vmem:[%s5 + $0x170] sm:$0xff] %v663
  %728 = vst [vmem:[%s5 + $0x178] sm:$0xff] %v664
  %729 = vst [vmem:[%s5 + $0x180] sm:$0xff] %v665
  %730 = vst [vmem:[%s5 + $0x188] sm:$0xff] %v666
  %731 = vst [vmem:[%s5 + $0x190] sm:$0xff] %v667
  %732 = vst [vmem:[%s5 + $0x198] sm:$0xff] %v668
  %733 = vst [vmem:[%s5 + $0x1a0] sm:$0xff] %v669
  %734 = vst [vmem:[%s5 + $0x1a8] sm:$0xff] %v670
  %735 = vst [vmem:[%s5 + $0x1b0] sm:$0xff] %v671
  %736 = vst [vmem:[%s5 + $0x1b8] sm:$0xff] %v672
  %737 = vst [vmem:[%s5 + $0x1c0] sm:$0xff] %v673
  %738 = vst [vmem:[%s5 + $0x1c8] sm:$0xff] %v674
  %739 = vst [vmem:[%s5 + $0x1d0] sm:$0xff] %v675
  %740 = vst [vmem:[%s5 + $0x1d8] sm:$0xff] %v676
  %741 = vst [vmem:[%s5 + $0x1e0] sm:$0xff] %v677
  %742 = vst [vmem:[%s5 + $0x1e8] sm:$0xff] %v678
  %743 = vst [vmem:[%s5 + $0x1f0] sm:$0xff] %v679
  %744 = vst [vmem:[%s5 + $0x1f8] sm:$0xff] %v680
  // Predicated region
  $region22: #{generator_forward.7} parent=0 // pred_check
    _
  $region23: #{generator_forward.7} parent=0 // pred_check_branch
    %746 = sbr.rel (0) target = $region25
  $region24: #{generator_forward.7} parent=0 // pred_region
    _
  $region25: #{generator_forward.7} parent=0 // pred_fallthru
    _
  // Predicated region
  $region26: #{generator_forward.7} parent=0 // pred_check
    _
  $region27: #{generator_forward.7} parent=0 // pred_check_branch
    %748 = sbr.rel (0) target = $region29
  $region28: #{generator_forward.7} parent=0 // pred_region
    _
  $region29: #{generator_forward.7} parent=0 // pred_fallthru
    _

</llo_original>
